<compile_context>
chip_gen: v7x
topology: tpu7x:2x2x1
jax: 0.10.0
libtpu: 0.0.40
codegen_flags: <defaults>
</compile_context>

<pallas_src>
import jax
import jax.numpy as jnp
from jax.experimental import pallas as pl
from jax.experimental.pallas import tpu as pltpu


# ----------------------------------------------------------------------------
# Fused kernel: conv1+relu+pool1 -> conv2+relu+pool2 -> fc, B samples / step.
# ----------------------------------------------------------------------------
def _cnn_kernel(xp_ref, cb1_ref, b1_ref, mt1_ref, mb1_ref,
                srp1_ref, cpe1_ref, cpo1_ref,
                cb2_ref, b2_ref, mt2_ref, mb2_ref,
                srp2_ref, cpe2_ref, cpo2_ref,
                wb_ref, msk_ref, sel_ref, rs_ref, fcb_ref, o_ref):
    f32 = jnp.float32
    bf16 = jnp.bfloat16

    def mm(a, b):
        return jnp.dot(a, b, preferred_element_type=f32)

    # ---- layer 1: Conv3x3(pad=1) as banded MXU matmuls + ReLU ---------------
    # Row taps via sublane roll (XLU) + boundary-row mask (VPU); width taps and
    # the left/right zero padding live inside the banded matrices cb1[dy].
    xp = xp_ref[...]                                   # (B*112, 336) f32
    r1 = xp.shape[0]
    x_up = pltpu.roll(xp, 1, 0) * mt1_ref[...]         # input row r-1 (0 at sample top)
    x_dn = pltpu.roll(xp, r1 - 1, 0) * mb1_ref[...]    # input row r+1 (0 at sample bottom)
    y = mm(x_up.astype(bf16), cb1_ref[0])
    y = y + mm(xp.astype(bf16), cb1_ref[1])
    y = y + mm(x_dn.astype(bf16), cb1_ref[2])
    y = jnp.maximum(y + b1_ref[...], 0.0)              # (B*112, 336) f32, channel-packed

    # ---- maxpool 2x2/2: roll+max for the row pair, one even-row selection ---
    ym = jnp.maximum(y, pltpu.roll(y, r1 - 1, 0))      # pair row r with r+1 (odd rows dropped)
    rm = mm(srp1_ref[...], ym.astype(bf16)).astype(bf16)   # even rows  (B*56, 336)
    h1 = jnp.maximum(mm(rm, cpe1_ref[...]),
                     mm(rm, cpo1_ref[...]))            # column pool  (B*56, 168) f32

    # ---- layer 2: same structure on the already channel-packed input --------
    r2 = h1.shape[0]
    h_up = pltpu.roll(h1, 1, 0) * mt2_ref[...]
    h_dn = pltpu.roll(h1, r2 - 1, 0) * mb2_ref[...]
    y2 = mm(h_up.astype(bf16), cb2_ref[0])
    y2 = y2 + mm(h1.astype(bf16), cb2_ref[1])
    y2 = y2 + mm(h_dn.astype(bf16), cb2_ref[2])
    y2 = jnp.maximum(y2 + b2_ref[...], 0.0)            # (B*56, 168) f32

    ym2 = jnp.maximum(y2, pltpu.roll(y2, r2 - 1, 0))
    rm2 = mm(srp2_ref[...], ym2.astype(bf16)).astype(bf16)  # (B*28, 168)
    h2 = jnp.maximum(mm(rm2, cpe2_ref[...]),
                     mm(rm2, cpo2_ref[...]))           # (B*28, 84) f32

    # ---- fully connected (masked block-matmul, no in-kernel flatten) --------
    # Tiny (~1% of FLOPs): kept in f32 for accuracy.
    p = mm(h2, wb_ref[...]) * msk_ref[...]             # (B*28, 28*ncls) f32
    colsum = mm(rs_ref[...], p)                        # (B_out, 28*ncls) per-sample row sums
    o_ref[...] = mm(colsum, sel_ref[...]) + fcb_ref[...]   # (B_out, 128) lane-dense store


# ----------------------------------------------------------------------------
# Wrapper: build banded / selection matrices (weight-only work) and launch.
# ----------------------------------------------------------------------------
def _pick_batch_block(n):
    # Biggest per-step mini-batch that still leaves >= 2 grid steps (v7x cores).
    for cand in (8, 4, 2):
        if n % cand == 0 and n // cand >= 2:
            return cand
    return 1


@jax.jit
def cnn_forward(x, w1, b1, w2, b2, fcw, fcb):
    f32, bf16 = jnp.float32, jnp.bfloat16
    n, cin, hh, ww = x.shape
    assert hh == ww, "square input expected"
    L1, L2, L3 = hh, hh // 2, hh // 4            # 112, 56, 28
    c1, c2 = w1.shape[0], w2.shape[0]            # 3, 3
    ncls = fcw.shape[0]
    ncls_pad = ((ncls + 127) // 128) * 128       # lane-dense output store

    B = _pick_batch_block(n)
    G = n // B
    B_out = ((B + 7) // 8) * 8                   # sublane-aligned output rows per step

    # Input: channels packed on the lane axis, samples stacked on sublanes.
    xp = jnp.transpose(x.astype(f32), (0, 2, 1, 3)).reshape(n * L1, cin * L1)

    # Banded conv matrices: cb[dy][ci*L+k, co*L+c] = w[co,ci,dy,k-c+1] (0 off band).
    def banded(w, L):
        k = jnp.arange(L)[:, None]
        c = jnp.arange(L)[None, :]
        m = jnp.stack([(k - c + 1 == dx) for dx in range(3)]).astype(f32)   # (3,L,L)
        t = jnp.einsum("oiyx,xkc->yikoc", w.astype(f32), m)                 # (3,ci,L,co,L)
        return t.reshape(3, w.shape[1] * L, w.shape[0] * L).astype(bf16)

    cb1 = banded(w1, L1)                                  # (3, 336, 336)
    cb2 = banded(w2, L2)                                  # (3, 168, 168)
    bias1 = jnp.repeat(b1.astype(f32), L1)[None, :]       # (1, 336)
    bias2 = jnp.repeat(b2.astype(f32), L2)[None, :]       # (1, 168)

    # Per-row boundary masks: zero the wrapped-in row after the sublane roll.
    def row_masks(bb, L):
        r = jnp.arange(bb * L) % L
        return ((r != 0).astype(f32)[:, None],            # kills r-1 tap at top row
                (r != L - 1).astype(f32)[:, None])        # kills r+1 tap at bottom row
    mt1, mb1 = row_masks(B, L1)
    mt2, mb2 = row_masks(B, L2)

    # Even-row pool selector (block diagonal over the B samples of a step).
    def row_pool(bb, L):
        r = jnp.arange(bb * (L // 2))
        c = jnp.arange(bb * L)
        same = (r[:, None] // (L // 2)) == (c[None, :] // L)
        return (same & ((c[None, :] % L) == 2 * (r[:, None] % (L // 2)))).astype(bf16)
    srp1 = row_pool(B, L1)                                # (B*56, B*112)
    srp2 = row_pool(B, L2)                                # (B*28, B*56)

    # Even / odd column-pool compaction matrices (channel-packed layout).
    def col_pool(C, L):
        rr = jnp.arange(C * L)[:, None]
        cc = jnp.arange(C * (L // 2))[None, :]
        same = (rr // L) == (cc // (L // 2))
        k, q = rr % L, cc % (L // 2)
        return ((same & (k == 2 * q)).astype(bf16),
                (same & (k == 2 * q + 1)).astype(bf16))
    cpe1, cpo1 = col_pool(c1, L1)                         # (336, 168) x2
    cpe2, cpo2 = col_pool(c2, L2)                         # (168, 84)  x2

    # FC: weight pre-permuted to the packed (row, ch*28+col) layout (f32 tail).
    #   wb[ch*28+c, r*ncls+nn] = fcw[nn, ch*784 + r*28 + c]
    fcw4 = fcw.astype(f32).reshape(ncls, c2, L3, L3)
    wb = jnp.transpose(fcw4, (1, 3, 2, 0)).reshape(c2 * L3, L3 * ncls)
    row = jnp.arange(B * L3)[:, None]
    col = jnp.arange(L3 * ncls)[None, :]
    msk = ((col // ncls) == (row % L3)).astype(f32)                       # (B*28, 28*ncls)
    sel = ((jnp.arange(L3 * ncls)[:, None] % ncls)
           == jnp.arange(ncls_pad)[None, :]).astype(f32)                  # (28*ncls, 128)
    rs = ((jnp.arange(B * L3)[None, :] // L3)
          == jnp.arange(B_out)[:, None]).astype(f32)                      # (B_out, B*28)
    fcb_pad = jnp.zeros((1, ncls_pad), f32).at[0, :ncls].set(fcb.astype(f32))

    def full(a):
        return pl.BlockSpec(a.shape, lambda i, _nd=a.ndim: (0,) * _nd)

    out_pad = pl.pallas_call(
        _cnn_kernel,
        out_shape=jax.ShapeDtypeStruct((G * B_out, ncls_pad), f32),
        grid=(G,),
        in_specs=[
            pl.BlockSpec((B * L1, cin * L1), lambda i: (i, 0)),
            full(cb1), full(bias1), full(mt1), full(mb1),
            full(srp1), full(cpe1), full(cpo1),
            full(cb2), full(bias2), full(mt2), full(mb2),
            full(srp2), full(cpe2), full(cpo2),
            full(wb), full(msk), full(sel), full(rs), full(fcb_pad),
        ],
        out_specs=pl.BlockSpec((B_out, ncls_pad), lambda i: (i, 0)),
        compiler_params=pltpu.CompilerParams(
            dimension_semantics=("parallel",)),
    )(xp, cb1, bias1, mt1, mb1, srp1, cpe1, cpo1,
      cb2, bias2, mt2, mb2, srp2, cpe2, cpo2,
      wb, msk, sel, rs, fcb_pad)

    return out_pad.reshape(G, B_out, ncls_pad)[:, :B, :ncls].reshape(n, ncls)


# ----------------------------------------------------------------------------
# Pure-JAX f32 reference (for a loose tolerance check; kernel uses bf16 MXU).
# ----------------------------------------------------------------------------
def _reference(x, w1, b1, w2, b2, fcw, fcb):
    def block(h, w, b):
        y = jax.lax.conv_general_dilated(
            h, w, window_strides=(1, 1), padding=((1, 1), (1, 1)),
            dimension_numbers=("NCHW", "OIHW", "NCHW"))
        y = jax.nn.relu(y + b[None, :, None, None])
        return jax.lax.reduce_window(y, -jnp.inf, jax.lax.max,
                                     (1, 1, 2, 2), (1, 1, 2, 2), "VALID")

    h = block(block(x, w1, b1), w2, b2)
    h = h.reshape(h.shape[0], -1)
    return h @ fcw.T + fcb[None, :]


if __name__ == "__main__":
    key = jax.random.PRNGKey(0)
    k_x, k_w1, k_b1, k_w2, k_b2, k_fw, k_fb = jax.random.split(key, 7)

    N = 4
    num_classes = 10
    H = W = 112                              # required by fc = Linear(3*28*28, .)

    x = jax.random.normal(k_x, (N, 3, H, W), jnp.float32)

    # Conv2d(3, 3, 3) params: kaiming-uniform-ish deterministic init.
    fan_in_conv = 3 * 3 * 3
    lim_c = 1.0 / (fan_in_conv ** 0.5)
    w1 = jax.random.uniform(k_w1, (3, 3, 3, 3), jnp.float32, -lim_c, lim_c)
    b1 = jax.random.uniform(k_b1, (3,), jnp.float32, -lim_c, lim_c)
    w2 = jax.random.uniform(k_w2, (3, 3, 3, 3), jnp.float32, -lim_c, lim_c)
    b2 = jax.random.uniform(k_b2, (3,), jnp.float32, -lim_c, lim_c)

    # Linear(3*28*28, num_classes): xavier_uniform weight, uniform bias.
    fan_in_fc = 3 * 28 * 28
    lim_w = (6.0 / (fan_in_fc + num_classes)) ** 0.5
    fcw = jax.random.uniform(k_fw, (num_classes, fan_in_fc), jnp.float32, -lim_w, lim_w)
    lim_b = 1.0 / (fan_in_fc ** 0.5)
    fcb = jax.random.uniform(k_fb, (num_classes,), jnp.float32, -lim_b, lim_b)

    out = cnn_forward(x, w1, b1, w2, b2, fcw, fcb)
    out = jax.block_until_ready(out)
    assert out.shape == (N, num_classes), out.shape
    assert bool(jnp.all(jnp.isfinite(out)))

    # Loose tolerance vs f32 XLA reference (bf16 MXU operands => small drift).
    ref = _reference(x, w1, b1, w2, b2, fcw, fcb)
    err = float(jnp.max(jnp.abs(out - ref)))
    assert err < 0.1, f"max abs error vs f32 reference too large: {err}"
    print("KERNEL_OK")
</pallas_src>

<mosaic_0001>
module attributes {stable_mosaic.version = 11 : i64} {
  func.func @_cnn_kernel(%arg0: i32, %arg1: memref<224x336xf32, #tpu.memory_space<vmem>>, %arg2: memref<3x336x336xbf16, #tpu.memory_space<vmem>>, %arg3: memref<1x336xf32, #tpu.memory_space<vmem>>, %arg4: memref<224x1xf32, #tpu.memory_space<vmem>>, %arg5: memref<224x1xf32, #tpu.memory_space<vmem>>, %arg6: memref<112x224xbf16, #tpu.memory_space<vmem>>, %arg7: memref<336x168xbf16, #tpu.memory_space<vmem>>, %arg8: memref<336x168xbf16, #tpu.memory_space<vmem>>, %arg9: memref<3x168x168xbf16, #tpu.memory_space<vmem>>, %arg10: memref<1x168xf32, #tpu.memory_space<vmem>>, %arg11: memref<112x1xf32, #tpu.memory_space<vmem>>, %arg12: memref<112x1xf32, #tpu.memory_space<vmem>>, %arg13: memref<56x112xbf16, #tpu.memory_space<vmem>>, %arg14: memref<168x84xbf16, #tpu.memory_space<vmem>>, %arg15: memref<168x84xbf16, #tpu.memory_space<vmem>>, %arg16: memref<84x280xf32, #tpu.memory_space<vmem>>, %arg17: memref<56x280xf32, #tpu.memory_space<vmem>>, %arg18: memref<280x128xf32, #tpu.memory_space<vmem>>, %arg19: memref<8x56xf32, #tpu.memory_space<vmem>>, %arg20: memref<1x128xf32, #tpu.memory_space<vmem>>, %arg21: memref<8x128xf32, #tpu.memory_space<vmem>>) attributes {dimension_semantics = [#tpu.dimension_semantics<parallel>], iteration_bounds = array<i64: 2>, scalar_prefetch = 0 : i64, scratch_operands = 0 : i64, tpu.core_type = #tpu.core_type<tc>, window_params = [{transform_indices = @transform_0, window_bounds = array<i64: 224, 336>}, {pipeline_mode = #tpu.pipeline_mode<synchronous>, transform_indices = @transform_1, window_bounds = array<i64: 3, 336, 336>}, {pipeline_mode = #tpu.pipeline_mode<synchronous>, transform_indices = @transform_2, window_bounds = array<i64: 1, 336>}, {pipeline_mode = #tpu.pipeline_mode<synchronous>, transform_indices = @transform_3, window_bounds = array<i64: 224, 1>}, {pipeline_mode = #tpu.pipeline_mode<synchronous>, transform_indices = @transform_4, window_bounds = array<i64: 224, 1>}, {pipeline_mode = #tpu.pipeline_mode<synchronous>, transform_indices = @transform_5, window_bounds = array<i64: 112, 224>}, {pipeline_mode = #tpu.pipeline_mode<synchronous>, transform_indices = @transform_6, window_bounds = array<i64: 336, 168>}, {pipeline_mode = #tpu.pipeline_mode<synchronous>, transform_indices = @transform_7, window_bounds = array<i64: 336, 168>}, {pipeline_mode = #tpu.pipeline_mode<synchronous>, transform_indices = @transform_8, window_bounds = array<i64: 3, 168, 168>}, {pipeline_mode = #tpu.pipeline_mode<synchronous>, transform_indices = @transform_9, window_bounds = array<i64: 1, 168>}, {pipeline_mode = #tpu.pipeline_mode<synchronous>, transform_indices = @transform_10, window_bounds = array<i64: 112, 1>}, {pipeline_mode = #tpu.pipeline_mode<synchronous>, transform_indices = @transform_11, window_bounds = array<i64: 112, 1>}, {pipeline_mode = #tpu.pipeline_mode<synchronous>, transform_indices = @transform_12, window_bounds = array<i64: 56, 112>}, {pipeline_mode = #tpu.pipeline_mode<synchronous>, transform_indices = @transform_13, window_bounds = array<i64: 168, 84>}, {pipeline_mode = #tpu.pipeline_mode<synchronous>, transform_indices = @transform_14, window_bounds = array<i64: 168, 84>}, {pipeline_mode = #tpu.pipeline_mode<synchronous>, transform_indices = @transform_15, window_bounds = array<i64: 84, 280>}, {pipeline_mode = #tpu.pipeline_mode<synchronous>, transform_indices = @transform_16, window_bounds = array<i64: 56, 280>}, {pipeline_mode = #tpu.pipeline_mode<synchronous>, transform_indices = @transform_17, window_bounds = array<i64: 280, 128>}, {pipeline_mode = #tpu.pipeline_mode<synchronous>, transform_indices = @transform_18, window_bounds = array<i64: 8, 56>}, {pipeline_mode = #tpu.pipeline_mode<synchronous>, transform_indices = @transform_19, window_bounds = array<i64: 1, 128>}, {transform_indices = @transform_20, window_bounds = array<i64: 8, 128>}]} {
    %c0 = arith.constant 0 : index
    %c0_0 = arith.constant 0 : index
    %0 = vector.load %arg1[%c0, %c0_0] : memref<224x336xf32, #tpu.memory_space<vmem>>, vector<224x336xf32>
    %c1_i32 = arith.constant 1 : i32
    %1 = tpu.dynamic_rotate %0 by %c1_i32 dim 0 : vector<224x336xf32>, i32 -> vector<224x336xf32>
    %c0_1 = arith.constant 0 : index
    %c0_2 = arith.constant 0 : index
    %2 = vector.load %arg4[%c0_1, %c0_2] : memref<224x1xf32, #tpu.memory_space<vmem>>, vector<224x1xf32>
    %3 = vector.broadcast %2 : vector<224x1xf32> to vector<224x336xf32>
    %4 = arith.mulf %1, %3 : vector<224x336xf32>
    %c223_i32 = arith.constant 223 : i32
    %5 = tpu.dynamic_rotate %0 by %c223_i32 dim 0 : vector<224x336xf32>, i32 -> vector<224x336xf32>
    %c0_3 = arith.constant 0 : index
    %c0_4 = arith.constant 0 : index
    %6 = vector.load %arg5[%c0_3, %c0_4] : memref<224x1xf32, #tpu.memory_space<vmem>>, vector<224x1xf32>
    %7 = vector.broadcast %6 : vector<224x1xf32> to vector<224x336xf32>
    %8 = arith.mulf %5, %7 : vector<224x336xf32>
    %9 = arith.truncf %4 : vector<224x336xf32> to vector<224x336xbf16>
    %c0_5 = arith.constant 0 : index
    %c0_6 = arith.constant 0 : index
    %c0_7 = arith.constant 0 : index
    %10 = vector.load %arg2[%c0_5, %c0_6, %c0_7] : memref<3x336x336xbf16, #tpu.memory_space<vmem>>, vector<1x336x336xbf16>
    %11 = vector.shape_cast %10 : vector<1x336x336xbf16> to vector<336x336xbf16>
    %cst = arith.constant dense<0.000000e+00> : vector<224x336xf32>
    %12 = tpu.matmul %9, %11, %cst {dimension_numbers = #tpu.dot_dimension_numbers<[1], [0], [0], [1], [0, 0, 1, 1], [], []>} : vector<224x336xbf16>, vector<336x336xbf16>, vector<224x336xf32> -> vector<224x336xf32>
    %13 = arith.truncf %0 : vector<224x336xf32> to vector<224x336xbf16>
    %c1 = arith.constant 1 : index
    %c0_8 = arith.constant 0 : index
    %c0_9 = arith.constant 0 : index
    %14 = vector.load %arg2[%c1, %c0_8, %c0_9] : memref<3x336x336xbf16, #tpu.memory_space<vmem>>, vector<1x336x336xbf16>
    %15 = vector.shape_cast %14 : vector<1x336x336xbf16> to vector<336x336xbf16>
    %cst_10 = arith.constant dense<0.000000e+00> : vector<224x336xf32>
    %16 = tpu.matmul %13, %15, %cst_10 {dimension_numbers = #tpu.dot_dimension_numbers<[1], [0], [0], [1], [0, 0, 1, 1], [], []>} : vector<224x336xbf16>, vector<336x336xbf16>, vector<224x336xf32> -> vector<224x336xf32>
    %17 = arith.addf %12, %16 : vector<224x336xf32>
    %18 = arith.truncf %8 : vector<224x336xf32> to vector<224x336xbf16>
    %c2 = arith.constant 2 : index
    %c0_11 = arith.constant 0 : index
    %c0_12 = arith.constant 0 : index
    %19 = vector.load %arg2[%c2, %c0_11, %c0_12] : memref<3x336x336xbf16, #tpu.memory_space<vmem>>, vector<1x336x336xbf16>
    %20 = vector.shape_cast %19 : vector<1x336x336xbf16> to vector<336x336xbf16>
    %cst_13 = arith.constant dense<0.000000e+00> : vector<224x336xf32>
    %21 = tpu.matmul %18, %20, %cst_13 {dimension_numbers = #tpu.dot_dimension_numbers<[1], [0], [0], [1], [0, 0, 1, 1], [], []>} : vector<224x336xbf16>, vector<336x336xbf16>, vector<224x336xf32> -> vector<224x336xf32>
    %22 = arith.addf %17, %21 : vector<224x336xf32>
    %c0_14 = arith.constant 0 : index
    %c0_15 = arith.constant 0 : index
    %23 = vector.load %arg3[%c0_14, %c0_15] : memref<1x336xf32, #tpu.memory_space<vmem>>, vector<1x336xf32>
    %24 = vector.broadcast %23 : vector<1x336xf32> to vector<224x336xf32>
    %25 = arith.addf %22, %24 : vector<224x336xf32>
    %cst_16 = arith.constant 0.000000e+00 : f32
    %26 = vector.broadcast %cst_16 : f32 to vector<224x336xf32>
    %27 = arith.maximumf %25, %26 : vector<224x336xf32>
    %c223_i32_17 = arith.constant 223 : i32
    %28 = tpu.dynamic_rotate %27 by %c223_i32_17 dim 0 : vector<224x336xf32>, i32 -> vector<224x336xf32>
    %29 = arith.maximumf %27, %28 : vector<224x336xf32>
    %c0_18 = arith.constant 0 : index
    %c0_19 = arith.constant 0 : index
    %30 = vector.load %arg6[%c0_18, %c0_19] : memref<112x224xbf16, #tpu.memory_space<vmem>>, vector<112x224xbf16>
    %31 = arith.truncf %29 : vector<224x336xf32> to vector<224x336xbf16>
    %cst_20 = arith.constant dense<0.000000e+00> : vector<112x336xf32>
    %32 = tpu.matmul %30, %31, %cst_20 {dimension_numbers = #tpu.dot_dimension_numbers<[1], [0], [0], [1], [0, 0, 1, 1], [], []>} : vector<112x224xbf16>, vector<224x336xbf16>, vector<112x336xf32> -> vector<112x336xf32>
    %33 = arith.truncf %32 : vector<112x336xf32> to vector<112x336xbf16>
    %c0_21 = arith.constant 0 : index
    %c0_22 = arith.constant 0 : index
    %34 = vector.load %arg7[%c0_21, %c0_22] : memref<336x168xbf16, #tpu.memory_space<vmem>>, vector<336x168xbf16>
    %cst_23 = arith.constant dense<0.000000e+00> : vector<112x168xf32>
    %35 = tpu.matmul %33, %34, %cst_23 {dimension_numbers = #tpu.dot_dimension_numbers<[1], [0], [0], [1], [0, 0, 1, 1], [], []>} : vector<112x336xbf16>, vector<336x168xbf16>, vector<112x168xf32> -> vector<112x168xf32>
    %c0_24 = arith.constant 0 : index
    %c0_25 = arith.constant 0 : index
    %36 = vector.load %arg8[%c0_24, %c0_25] : memref<336x168xbf16, #tpu.memory_space<vmem>>, vector<336x168xbf16>
    %cst_26 = arith.constant dense<0.000000e+00> : vector<112x168xf32>
    %37 = tpu.matmul %33, %36, %cst_26 {dimension_numbers = #tpu.dot_dimension_numbers<[1], [0], [0], [1], [0, 0, 1, 1], [], []>} : vector<112x336xbf16>, vector<336x168xbf16>, vector<112x168xf32> -> vector<112x168xf32>
    %38 = arith.maximumf %35, %37 : vector<112x168xf32>
    %c1_i32_27 = arith.constant 1 : i32
    %39 = tpu.dynamic_rotate %38 by %c1_i32_27 dim 0 : vector<112x168xf32>, i32 -> vector<112x168xf32>
    %c0_28 = arith.constant 0 : index
    %c0_29 = arith.constant 0 : index
    %40 = vector.load %arg11[%c0_28, %c0_29] : memref<112x1xf32, #tpu.memory_space<vmem>>, vector<112x1xf32>
    %41 = vector.broadcast %40 : vector<112x1xf32> to vector<112x168xf32>
    %42 = arith.mulf %39, %41 : vector<112x168xf32>
    %c111_i32 = arith.constant 111 : i32
    %43 = tpu.dynamic_rotate %38 by %c111_i32 dim 0 : vector<112x168xf32>, i32 -> vector<112x168xf32>
    %c0_30 = arith.constant 0 : index
    %c0_31 = arith.constant 0 : index
    %44 = vector.load %arg12[%c0_30, %c0_31] : memref<112x1xf32, #tpu.memory_space<vmem>>, vector<112x1xf32>
    %45 = vector.broadcast %44 : vector<112x1xf32> to vector<112x168xf32>
    %46 = arith.mulf %43, %45 : vector<112x168xf32>
    %47 = arith.truncf %42 : vector<112x168xf32> to vector<112x168xbf16>
    %c0_32 = arith.constant 0 : index
    %c0_33 = arith.constant 0 : index
    %c0_34 = arith.constant 0 : index
    %48 = vector.load %arg9[%c0_32, %c0_33, %c0_34] : memref<3x168x168xbf16, #tpu.memory_space<vmem>>, vector<1x168x168xbf16>
    %49 = vector.shape_cast %48 : vector<1x168x168xbf16> to vector<168x168xbf16>
    %cst_35 = arith.constant dense<0.000000e+00> : vector<112x168xf32>
    %50 = tpu.matmul %47, %49, %cst_35 {dimension_numbers = #tpu.dot_dimension_numbers<[1], [0], [0], [1], [0, 0, 1, 1], [], []>} : vector<112x168xbf16>, vector<168x168xbf16>, vector<112x168xf32> -> vector<112x168xf32>
    %51 = arith.truncf %38 : vector<112x168xf32> to vector<112x168xbf16>
    %c1_36 = arith.constant 1 : index
    %c0_37 = arith.constant 0 : index
    %c0_38 = arith.constant 0 : index
    %52 = vector.load %arg9[%c1_36, %c0_37, %c0_38] : memref<3x168x168xbf16, #tpu.memory_space<vmem>>, vector<1x168x168xbf16>
    %53 = vector.shape_cast %52 : vector<1x168x168xbf16> to vector<168x168xbf16>
    %cst_39 = arith.constant dense<0.000000e+00> : vector<112x168xf32>
    %54 = tpu.matmul %51, %53, %cst_39 {dimension_numbers = #tpu.dot_dimension_numbers<[1], [0], [0], [1], [0, 0, 1, 1], [], []>} : vector<112x168xbf16>, vector<168x168xbf16>, vector<112x168xf32> -> vector<112x168xf32>
    %55 = arith.addf %50, %54 : vector<112x168xf32>
    %56 = arith.truncf %46 : vector<112x168xf32> to vector<112x168xbf16>
    %c2_40 = arith.constant 2 : index
    %c0_41 = arith.constant 0 : index
    %c0_42 = arith.constant 0 : index
    %57 = vector.load %arg9[%c2_40, %c0_41, %c0_42] : memref<3x168x168xbf16, #tpu.memory_space<vmem>>, vector<1x168x168xbf16>
    %58 = vector.shape_cast %57 : vector<1x168x168xbf16> to vector<168x168xbf16>
    %cst_43 = arith.constant dense<0.000000e+00> : vector<112x168xf32>
    %59 = tpu.matmul %56, %58, %cst_43 {dimension_numbers = #tpu.dot_dimension_numbers<[1], [0], [0], [1], [0, 0, 1, 1], [], []>} : vector<112x168xbf16>, vector<168x168xbf16>, vector<112x168xf32> -> vector<112x168xf32>
    %60 = arith.addf %55, %59 : vector<112x168xf32>
    %c0_44 = arith.constant 0 : index
    %c0_45 = arith.constant 0 : index
    %61 = vector.load %arg10[%c0_44, %c0_45] : memref<1x168xf32, #tpu.memory_space<vmem>>, vector<1x168xf32>
    %62 = vector.broadcast %61 : vector<1x168xf32> to vector<112x168xf32>
    %63 = arith.addf %60, %62 : vector<112x168xf32>
    %cst_46 = arith.constant 0.000000e+00 : f32
    %64 = vector.broadcast %cst_46 : f32 to vector<112x168xf32>
    %65 = arith.maximumf %63, %64 : vector<112x168xf32>
    %c111_i32_47 = arith.constant 111 : i32
    %66 = tpu.dynamic_rotate %65 by %c111_i32_47 dim 0 : vector<112x168xf32>, i32 -> vector<112x168xf32>
    %67 = arith.maximumf %65, %66 : vector<112x168xf32>
    %c0_48 = arith.constant 0 : index
    %c0_49 = arith.constant 0 : index
    %68 = vector.load %arg13[%c0_48, %c0_49] : memref<56x112xbf16, #tpu.memory_space<vmem>>, vector<56x112xbf16>
    %69 = arith.truncf %67 : vector<112x168xf32> to vector<112x168xbf16>
    %cst_50 = arith.constant dense<0.000000e+00> : vector<56x168xf32>
    %70 = tpu.matmul %68, %69, %cst_50 {dimension_numbers = #tpu.dot_dimension_numbers<[1], [0], [0], [1], [0, 0, 1, 1], [], []>} : vector<56x112xbf16>, vector<112x168xbf16>, vector<56x168xf32> -> vector<56x168xf32>
    %71 = arith.truncf %70 : vector<56x168xf32> to vector<56x168xbf16>
    %c0_51 = arith.constant 0 : index
    %c0_52 = arith.constant 0 : index
    %72 = vector.load %arg14[%c0_51, %c0_52] : memref<168x84xbf16, #tpu.memory_space<vmem>>, vector<168x84xbf16>
    %cst_53 = arith.constant dense<0.000000e+00> : vector<56x84xf32>
    %73 = tpu.matmul %71, %72, %cst_53 {dimension_numbers = #tpu.dot_dimension_numbers<[1], [0], [0], [1], [0, 0, 1, 1], [], []>} : vector<56x168xbf16>, vector<168x84xbf16>, vector<56x84xf32> -> vector<56x84xf32>
    %c0_54 = arith.constant 0 : index
    %c0_55 = arith.constant 0 : index
    %74 = vector.load %arg15[%c0_54, %c0_55] : memref<168x84xbf16, #tpu.memory_space<vmem>>, vector<168x84xbf16>
    %cst_56 = arith.constant dense<0.000000e+00> : vector<56x84xf32>
    %75 = tpu.matmul %71, %74, %cst_56 {dimension_numbers = #tpu.dot_dimension_numbers<[1], [0], [0], [1], [0, 0, 1, 1], [], []>} : vector<56x168xbf16>, vector<168x84xbf16>, vector<56x84xf32> -> vector<56x84xf32>
    %76 = arith.maximumf %73, %75 : vector<56x84xf32>
    %c0_57 = arith.constant 0 : index
    %c0_58 = arith.constant 0 : index
    %77 = vector.load %arg16[%c0_57, %c0_58] : memref<84x280xf32, #tpu.memory_space<vmem>>, vector<84x280xf32>
    %cst_59 = arith.constant dense<0.000000e+00> : vector<56x280xf32>
    %78 = tpu.matmul %76, %77, %cst_59 {dimension_numbers = #tpu.dot_dimension_numbers<[1], [0], [0], [1], [0, 0, 1, 1], [], []>} : vector<56x84xf32>, vector<84x280xf32>, vector<56x280xf32> -> vector<56x280xf32>
    %c0_60 = arith.constant 0 : index
    %c0_61 = arith.constant 0 : index
    %79 = vector.load %arg17[%c0_60, %c0_61] : memref<56x280xf32, #tpu.memory_space<vmem>>, vector<56x280xf32>
    %80 = arith.mulf %78, %79 : vector<56x280xf32>
    %c0_62 = arith.constant 0 : index
    %c0_63 = arith.constant 0 : index
    %81 = vector.load %arg19[%c0_62, %c0_63] : memref<8x56xf32, #tpu.memory_space<vmem>>, vector<8x56xf32>
    %cst_64 = arith.constant dense<0.000000e+00> : vector<8x280xf32>
    %82 = tpu.matmul %81, %80, %cst_64 {dimension_numbers = #tpu.dot_dimension_numbers<[1], [0], [0], [1], [0, 0, 1, 1], [], []>} : vector<8x56xf32>, vector<56x280xf32>, vector<8x280xf32> -> vector<8x280xf32>
    %c0_65 = arith.constant 0 : index
    %c0_66 = arith.constant 0 : index
    %83 = vector.load %arg18[%c0_65, %c0_66] : memref<280x128xf32, #tpu.memory_space<vmem>>, vector<280x128xf32>
    %cst_67 = arith.constant dense<0.000000e+00> : vector<8x128xf32>
    %84 = tpu.matmul %82, %83, %cst_67 {dimension_numbers = #tpu.dot_dimension_numbers<[1], [0], [0], [1], [0, 0, 1, 1], [], []>} : vector<8x280xf32>, vector<280x128xf32>, vector<8x128xf32> -> vector<8x128xf32>
    %c0_68 = arith.constant 0 : index
    %c0_69 = arith.constant 0 : index
    %85 = vector.load %arg20[%c0_68, %c0_69] : memref<1x128xf32, #tpu.memory_space<vmem>>, vector<1x128xf32>
    %86 = vector.broadcast %85 : vector<1x128xf32> to vector<8x128xf32>
    %87 = arith.addf %84, %86 : vector<8x128xf32>
    %c0_70 = arith.constant 0 : index
    %c0_71 = arith.constant 0 : index
    %88 = vector.load %arg21[%c0_70, %c0_71] : memref<8x128xf32, #tpu.memory_space<vmem>>, vector<8x128xf32>
    tpu.vector_store %arg21[%c0_70, %c0_71], %87 {strides = array<i32>} : memref<8x128xf32, #tpu.memory_space<vmem>>, vector<8x128xf32>,
    return
  }
  func.func @transform_0(%arg0: i32) -> (i32, i32) {
    %c0_i32 = arith.constant 0 : i32
    %c0_i32_0 = arith.constant 0 : i32
    return %arg0, %c0_i32 : i32, i32
  }
  func.func @transform_1(%arg0: i32) -> (i32, i32, i32) {
    %c0_i32 = arith.constant 0 : i32
    %c0_i32_0 = arith.constant 0 : i32
    %c0_i32_1 = arith.constant 0 : i32
    %c0_i32_2 = arith.constant 0 : i32
    return %c0_i32, %c0_i32_0, %c0_i32_1 : i32, i32, i32
  }
  func.func @transform_2(%arg0: i32) -> (i32, i32) {
    %c0_i32 = arith.constant 0 : i32
    %c0_i32_0 = arith.constant 0 : i32
    %c0_i32_1 = arith.constant 0 : i32
    return %c0_i32, %c0_i32_0 : i32, i32
  }
  func.func @transform_3(%arg0: i32) -> (i32, i32) {
    %c0_i32 = arith.constant 0 : i32
    %c0_i32_0 = arith.constant 0 : i32
    %c0_i32_1 = arith.constant 0 : i32
    return %c0_i32, %c0_i32_0 : i32, i32
  }
  func.func @transform_4(%arg0: i32) -> (i32, i32) {
    %c0_i32 = arith.constant 0 : i32
    %c0_i32_0 = arith.constant 0 : i32
    %c0_i32_1 = arith.constant 0 : i32
    return %c0_i32, %c0_i32_0 : i32, i32
  }
  func.func @transform_5(%arg0: i32) -> (i32, i32) {
    %c0_i32 = arith.constant 0 : i32
    %c0_i32_0 = arith.constant 0 : i32
    %c0_i32_1 = arith.constant 0 : i32
    return %c0_i32, %c0_i32_0 : i32, i32
  }
  func.func @transform_6(%arg0: i32) -> (i32, i32) {
    %c0_i32 = arith.constant 0 : i32
    %c0_i32_0 = arith.constant 0 : i32
    %c0_i32_1 = arith.constant 0 : i32
    return %c0_i32, %c0_i32_0 : i32, i32
  }
  func.func @transform_7(%arg0: i32) -> (i32, i32) {
    %c0_i32 = arith.constant 0 : i32
    %c0_i32_0 = arith.constant 0 : i32
    %c0_i32_1 = arith.constant 0 : i32
    return %c0_i32, %c0_i32_0 : i32, i32
  }
  func.func @transform_8(%arg0: i32) -> (i32, i32, i32) {
    %c0_i32 = arith.constant 0 : i32
    %c0_i32_0 = arith.constant 0 : i32
    %c0_i32_1 = arith.constant 0 : i32
    %c0_i32_2 = arith.constant 0 : i32
    return %c0_i32, %c0_i32_0, %c0_i32_1 : i32, i32, i32
  }
  func.func @transform_9(%arg0: i32) -> (i32, i32) {
    %c0_i32 = arith.constant 0 : i32
    %c0_i32_0 = arith.constant 0 : i32
    %c0_i32_1 = arith.constant 0 : i32
    return %c0_i32, %c0_i32_0 : i32, i32
  }
  func.func @transform_10(%arg0: i32) -> (i32, i32) {
    %c0_i32 = arith.constant 0 : i32
    %c0_i32_0 = arith.constant 0 : i32
    %c0_i32_1 = arith.constant 0 : i32
    return %c0_i32, %c0_i32_0 : i32, i32
  }
  func.func @transform_11(%arg0: i32) -> (i32, i32) {
    %c0_i32 = arith.constant 0 : i32
    %c0_i32_0 = arith.constant 0 : i32
    %c0_i32_1 = arith.constant 0 : i32
    return %c0_i32, %c0_i32_0 : i32, i32
  }
  func.func @transform_12(%arg0: i32) -> (i32, i32) {
    %c0_i32 = arith.constant 0 : i32
    %c0_i32_0 = arith.constant 0 : i32
    %c0_i32_1 = arith.constant 0 : i32
    return %c0_i32, %c0_i32_0 : i32, i32
  }
  func.func @transform_13(%arg0: i32) -> (i32, i32) {
    %c0_i32 = arith.constant 0 : i32
    %c0_i32_0 = arith.constant 0 : i32
    %c0_i32_1 = arith.constant 0 : i32
    return %c0_i32, %c0_i32_0 : i32, i32
  }
  func.func @transform_14(%arg0: i32) -> (i32, i32) {
    %c0_i32 = arith.constant 0 : i32
    %c0_i32_0 = arith.constant 0 : i32
    %c0_i32_1 = arith.constant 0 : i32
    return %c0_i32, %c0_i32_0 : i32, i32
  }
  func.func @transform_15(%arg0: i32) -> (i32, i32) {
    %c0_i32 = arith.constant 0 : i32
    %c0_i32_0 = arith.constant 0 : i32
    %c0_i32_1 = arith.constant 0 : i32
    return %c0_i32, %c0_i32_0 : i32, i32
  }
  func.func @transform_16(%arg0: i32) -> (i32, i32) {
    %c0_i32 = arith.constant 0 : i32
    %c0_i32_0 = arith.constant 0 : i32
    %c0_i32_1 = arith.constant 0 : i32
    return %c0_i32, %c0_i32_0 : i32, i32
  }
  func.func @transform_17(%arg0: i32) -> (i32, i32) {
    %c0_i32 = arith.constant 0 : i32
    %c0_i32_0 = arith.constant 0 : i32
    %c0_i32_1 = arith.constant 0 : i32
    return %c0_i32, %c0_i32_0 : i32, i32
  }
  func.func @transform_18(%arg0: i32) -> (i32, i32) {
    %c0_i32 = arith.constant 0 : i32
    %c0_i32_0 = arith.constant 0 : i32
    %c0_i32_1 = arith.constant 0 : i32
    return %c0_i32, %c0_i32_0 : i32, i32
  }
  func.func @transform_19(%arg0: i32) -> (i32, i32) {
    %c0_i32 = arith.constant 0 : i32
    %c0_i32_0 = arith.constant 0 : i32
    %c0_i32_1 = arith.constant 0 : i32
    return %c0_i32, %c0_i32_0 : i32, i32
  }
  func.func @transform_20(%arg0: i32) -> (i32, i32) {
    %c0_i32 = arith.constant 0 : i32
    %c0_i32_0 = arith.constant 0 : i32
    return %arg0, %c0_i32 : i32, i32
  }
}

</mosaic_0001>

<llo_original>
// kernel: cnn_forward.1
$region0: #{cnn_forward.1}
  #allocation0 [shape = 'u32[]', space=smem, size = 0x4, offset = 0x4, fixed_abs, tag = 'smem constant byte address 0x4 - core index']
  #allocation1 [shape = 'u32[144,128]{1,0:T(1,128)}', space=vmem, size = 0x12000, scoped, tag = 'internal scratch']
  %s0 = inlined_call_operand.vmem [shape: f32[448,336], index: 0, kind: input, shape index: {}]
  %s1 = inlined_call_operand.vmem [shape: bf16[3,336,336], index: 1, kind: input, shape index: {}]
  %s2 = inlined_call_operand.vmem [shape: f32[1,336], index: 2, kind: input, shape index: {}]
  %s3 = inlined_call_operand.vmem [shape: f32[224,1], index: 3, kind: input, shape index: {}]
  %s4 = inlined_call_operand.vmem [shape: f32[224,1], index: 4, kind: input, shape index: {}]
  %s5 = inlined_call_operand.vmem [shape: bf16[112,224], index: 5, kind: input, shape index: {}]
  %s6 = inlined_call_operand.vmem [shape: bf16[336,168], index: 6, kind: input, shape index: {}]
  %s7 = inlined_call_operand.vmem [shape: bf16[336,168], index: 7, kind: input, shape index: {}]
  %s8 = inlined_call_operand.vmem [shape: bf16[3,168,168], index: 8, kind: input, shape index: {}]
  %s9 = inlined_call_operand.vmem [shape: f32[1,168], index: 9, kind: input, shape index: {}]
  %s10 = inlined_call_operand.vmem [shape: f32[112,1], index: 10, kind: input, shape index: {}]
  %s11 = inlined_call_operand.vmem [shape: f32[112,1], index: 11, kind: input, shape index: {}]
  %s12 = inlined_call_operand.vmem [shape: bf16[56,112], index: 12, kind: input, shape index: {}]
  %s13 = inlined_call_operand.vmem [shape: bf16[168,84], index: 13, kind: input, shape index: {}]
  %s14 = inlined_call_operand.vmem [shape: bf16[168,84], index: 14, kind: input, shape index: {}]
  %s15 = inlined_call_operand.vmem [shape: f32[84,280], index: 15, kind: input, shape index: {}]
  %s16 = inlined_call_operand.vmem [shape: f32[56,280], index: 16, kind: input, shape index: {}]
  %s17 = inlined_call_operand.vmem [shape: f32[280,128], index: 17, kind: input, shape index: {}]
  %s18 = inlined_call_operand.vmem [shape: f32[8,56], index: 18, kind: input, shape index: {}]
  %s19 = inlined_call_operand.vmem [shape: f32[1,128], index: 19, kind: input, shape index: {}]
  %s20 = inlined_call_operand.vmem [shape: f32[16,128], index: 20, kind: output, shape index: {}]
  %s21 = sld [smem:[#allocation0]]
  $region113: #{cnn_forward.1} parent=0
    _
  %s23 = ssub.s32 1, %s21
  %s24 = scalar_select 0, %s23, %s21
  loop: start=0, step=1, limit=4
  $region2: #{cnn_forward.1} parent=0 // loop_pre_header
    _
  $region3: #{cnn_forward.1} parent=0 // loop_header
    %s26 = sphi 0, %s30
    %p27 = scmp.ge.s32.totalorder %s26, 4
    %s36 = sphi 0, %s38
    %s39 = sphi 0, %s36
    %s40 = sphi 0, %s39
    %s56 = sphi 0, %s40
    %s60 = sphi 0, %s60
    %s62 = sphi 0, %s60
    %s63 = sphi 0, %s62
    %s77 = sphi 0, %s63
    %s81 = sphi 0, %s81
    %s83 = sphi 0, %s81
    %s84 = sphi 0, %s83
    %s98 = sphi 0, %s84
    %s102 = sphi 0, %s102
    %s104 = sphi 0, %s102
    %s105 = sphi 0, %s104
    %s119 = sphi 0, %s105
    %s123 = sphi 0, %s123
    %s125 = sphi 0, %s123
    %s126 = sphi 0, %s125
    %s140 = sphi 0, %s126
    %s144 = sphi 0, %s144
    %s146 = sphi 0, %s144
    %s147 = sphi 0, %s146
    %s161 = sphi 0, %s147
    %s165 = sphi 0, %s165
    %s167 = sphi 0, %s165
    %s168 = sphi 0, %s167
    %s182 = sphi 0, %s168
    %s186 = sphi 0, %s186
    %s188 = sphi 0, %s186
    %s189 = sphi 0, %s188
    %s203 = sphi 0, %s189
    %s207 = sphi 0, %s207
    %s209 = sphi 0, %s207
    %s210 = sphi 0, %s209
    %s224 = sphi 0, %s210
    %s228 = sphi 0, %s228
    %s230 = sphi 0, %s228
    %s231 = sphi 0, %s230
    %s245 = sphi 0, %s231
    %s249 = sphi 0, %s249
    %s251 = sphi 0, %s249
    %s252 = sphi 0, %s251
    %s266 = sphi 0, %s252
    %s270 = sphi 0, %s270
    %s272 = sphi 0, %s270
    %s273 = sphi 0, %s272
    %s287 = sphi 0, %s273
    %s291 = sphi 0, %s291
    %s293 = sphi 0, %s291
    %s294 = sphi 0, %s293
    %s308 = sphi 0, %s294
    %s312 = sphi 0, %s312
    %s314 = sphi 0, %s312
    %s315 = sphi 0, %s314
    %s329 = sphi 0, %s315
    %s333 = sphi 0, %s333
    %s335 = sphi 0, %s333
    %s336 = sphi 0, %s335
    %s350 = sphi 0, %s336
    %s354 = sphi 0, %s354
    %s356 = sphi 0, %s354
    %s357 = sphi 0, %s356
    %s371 = sphi 0, %s357
    %s375 = sphi 0, %s375
    %s377 = sphi 0, %s375
    %s378 = sphi 0, %s377
    %s392 = sphi 0, %s378
    %s396 = sphi 0, %s396
    %s398 = sphi 0, %s396
    %s399 = sphi 0, %s398
    %s413 = sphi 0, %s399
    %s417 = sphi 0, %s417
    %s419 = sphi 0, %s417
    %s420 = sphi 0, %s419
    %s434 = sphi 0, %s420
    %s438 = sphi 0, %s438
    %s440 = sphi 0, %s438
    %s441 = sphi 0, %s440
    %s455 = sphi 0, %s441
    %s461 = sphi 0, %s463
    %s464 = sphi 0, %s461
    %s465 = sphi 0, %s464
    %s481 = sphi 0, %s465
  $region4: #{cnn_forward.1} parent=0 // loop_header_branch
    %29 = sbr.rel (%p27) target = $region8
  $region5: #{cnn_forward.1} parent=0 // loop_body
    %s31 = ssub.s32 %s26, 1
    %s32 = ssub.s32 %s26, 2
    %s33 = sadd.s32 %s26, 1
    %s34 = ssub.s32 %s26, %s33
    %p35 = scmp.eq.s32.totalorder %s34, 0
    %s37 = sadd.s32 %s36, 1
    %s38 = scalar_select %p35, %s36, %s37
    %p41 = pneg %p35
    %p42 = scmp.eq.s32.totalorder %s26, 1
    %p43 = por %p41, %p42
    %p44 = scmp.ne.s32.totalorder %s36, %s39
    %p45 = scmp.eq.s32.totalorder %s26, 0
    %p46 = por %p44, %p45
    %p47 = scmp.ne.s32.totalorder %s36, %s39
    %p48 = scmp.eq.s32.totalorder %s31, 1
    %p49 = por %p47, %p48
    %p50 = scmp.ne.s32.totalorder %s39, %s40
    %p51 = scmp.eq.s32.totalorder %s31, 0
    %p52 = por %p50, %p51
    %p53 = scmp.ne.s32.totalorder %s39, %s40
    %p54 = scmp.eq.s32.totalorder %s32, 1
    %p55 = por %p53, %p54
    %p57 = scmp.ne.s32.totalorder %s40, %s56
    %p58 = scmp.eq.s32.totalorder %s32, 0
    %p59 = por %p57, %p58
    %s61 = sadd.s32 %s60, 1
    %p64 = scmp.eq.s32.totalorder %s26, 1
    %p65 = scmp.ne.s32.totalorder %s60, %s62
    %p66 = scmp.eq.s32.totalorder %s26, 0
    %p67 = por %p65, %p66
    %p68 = scmp.ne.s32.totalorder %s60, %s62
    %p69 = scmp.eq.s32.totalorder %s31, 1
    %p70 = por %p68, %p69
    %p71 = scmp.ne.s32.totalorder %s62, %s63
    %p72 = scmp.eq.s32.totalorder %s31, 0
    %p73 = por %p71, %p72
    %p74 = scmp.ne.s32.totalorder %s62, %s63
    %p75 = scmp.eq.s32.totalorder %s32, 1
    %p76 = por %p74, %p75
    %p78 = scmp.ne.s32.totalorder %s63, %s77
    %p79 = scmp.eq.s32.totalorder %s32, 0
    %p80 = por %p78, %p79
    %s82 = sadd.s32 %s81, 1
    %p85 = scmp.eq.s32.totalorder %s26, 1
    %p86 = scmp.ne.s32.totalorder %s81, %s83
    %p87 = scmp.eq.s32.totalorder %s26, 0
    %p88 = por %p86, %p87
    %p89 = scmp.ne.s32.totalorder %s81, %s83
    %p90 = scmp.eq.s32.totalorder %s31, 1
    %p91 = por %p89, %p90
    %p92 = scmp.ne.s32.totalorder %s83, %s84
    %p93 = scmp.eq.s32.totalorder %s31, 0
    %p94 = por %p92, %p93
    %p95 = scmp.ne.s32.totalorder %s83, %s84
    %p96 = scmp.eq.s32.totalorder %s32, 1
    %p97 = por %p95, %p96
    %p99 = scmp.ne.s32.totalorder %s84, %s98
    %p100 = scmp.eq.s32.totalorder %s32, 0
    %p101 = por %p99, %p100
    %s103 = sadd.s32 %s102, 1
    %p106 = scmp.eq.s32.totalorder %s26, 1
    %p107 = scmp.ne.s32.totalorder %s102, %s104
    %p108 = scmp.eq.s32.totalorder %s26, 0
    %p109 = por %p107, %p108
    %p110 = scmp.ne.s32.totalorder %s102, %s104
    %p111 = scmp.eq.s32.totalorder %s31, 1
    %p112 = por %p110, %p111
    %p113 = scmp.ne.s32.totalorder %s104, %s105
    %p114 = scmp.eq.s32.totalorder %s31, 0
    %p115 = por %p113, %p114
    %p116 = scmp.ne.s32.totalorder %s104, %s105
    %p117 = scmp.eq.s32.totalorder %s32, 1
    %p118 = por %p116, %p117
    %p120 = scmp.ne.s32.totalorder %s105, %s119
    %p121 = scmp.eq.s32.totalorder %s32, 0
    %p122 = por %p120, %p121
    %s124 = sadd.s32 %s123, 1
    %p127 = scmp.eq.s32.totalorder %s26, 1
    %p128 = scmp.ne.s32.totalorder %s123, %s125
    %p129 = scmp.eq.s32.totalorder %s26, 0
    %p130 = por %p128, %p129
    %p131 = scmp.ne.s32.totalorder %s123, %s125
    %p132 = scmp.eq.s32.totalorder %s31, 1
    %p133 = por %p131, %p132
    %p134 = scmp.ne.s32.totalorder %s125, %s126
    %p135 = scmp.eq.s32.totalorder %s31, 0
    %p136 = por %p134, %p135
    %p137 = scmp.ne.s32.totalorder %s125, %s126
    %p138 = scmp.eq.s32.totalorder %s32, 1
    %p139 = por %p137, %p138
    %p141 = scmp.ne.s32.totalorder %s126, %s140
    %p142 = scmp.eq.s32.totalorder %s32, 0
    %p143 = por %p141, %p142
    %s145 = sadd.s32 %s144, 1
    %p148 = scmp.eq.s32.totalorder %s26, 1
    %p149 = scmp.ne.s32.totalorder %s144, %s146
    %p150 = scmp.eq.s32.totalorder %s26, 0
    %p151 = por %p149, %p150
    %p152 = scmp.ne.s32.totalorder %s144, %s146
    %p153 = scmp.eq.s32.totalorder %s31, 1
    %p154 = por %p152, %p153
    %p155 = scmp.ne.s32.totalorder %s146, %s147
    %p156 = scmp.eq.s32.totalorder %s31, 0
    %p157 = por %p155, %p156
    %p158 = scmp.ne.s32.totalorder %s146, %s147
    %p159 = scmp.eq.s32.totalorder %s32, 1
    %p160 = por %p158, %p159
    %p162 = scmp.ne.s32.totalorder %s147, %s161
    %p163 = scmp.eq.s32.totalorder %s32, 0
    %p164 = por %p162, %p163
    %s166 = sadd.s32 %s165, 1
    %p169 = scmp.eq.s32.totalorder %s26, 1
    %p170 = scmp.ne.s32.totalorder %s165, %s167
    %p171 = scmp.eq.s32.totalorder %s26, 0
    %p172 = por %p170, %p171
    %p173 = scmp.ne.s32.totalorder %s165, %s167
    %p174 = scmp.eq.s32.totalorder %s31, 1
    %p175 = por %p173, %p174
    %p176 = scmp.ne.s32.totalorder %s167, %s168
    %p177 = scmp.eq.s32.totalorder %s31, 0
    %p178 = por %p176, %p177
    %p179 = scmp.ne.s32.totalorder %s167, %s168
    %p180 = scmp.eq.s32.totalorder %s32, 1
    %p181 = por %p179, %p180
    %p183 = scmp.ne.s32.totalorder %s168, %s182
    %p184 = scmp.eq.s32.totalorder %s32, 0
    %p185 = por %p183, %p184
    %s187 = sadd.s32 %s186, 1
    %p190 = scmp.eq.s32.totalorder %s26, 1
    %p191 = scmp.ne.s32.totalorder %s186, %s188
    %p192 = scmp.eq.s32.totalorder %s26, 0
    %p193 = por %p191, %p192
    %p194 = scmp.ne.s32.totalorder %s186, %s188
    %p195 = scmp.eq.s32.totalorder %s31, 1
    %p196 = por %p194, %p195
    %p197 = scmp.ne.s32.totalorder %s188, %s189
    %p198 = scmp.eq.s32.totalorder %s31, 0
    %p199 = por %p197, %p198
    %p200 = scmp.ne.s32.totalorder %s188, %s189
    %p201 = scmp.eq.s32.totalorder %s32, 1
    %p202 = por %p200, %p201
    %p204 = scmp.ne.s32.totalorder %s189, %s203
    %p205 = scmp.eq.s32.totalorder %s32, 0
    %p206 = por %p204, %p205
    %s208 = sadd.s32 %s207, 1
    %p211 = scmp.eq.s32.totalorder %s26, 1
    %p212 = scmp.ne.s32.totalorder %s207, %s209
    %p213 = scmp.eq.s32.totalorder %s26, 0
    %p214 = por %p212, %p213
    %p215 = scmp.ne.s32.totalorder %s207, %s209
    %p216 = scmp.eq.s32.totalorder %s31, 1
    %p217 = por %p215, %p216
    %p218 = scmp.ne.s32.totalorder %s209, %s210
    %p219 = scmp.eq.s32.totalorder %s31, 0
    %p220 = por %p218, %p219
    %p221 = scmp.ne.s32.totalorder %s209, %s210
    %p222 = scmp.eq.s32.totalorder %s32, 1
    %p223 = por %p221, %p222
    %p225 = scmp.ne.s32.totalorder %s210, %s224
    %p226 = scmp.eq.s32.totalorder %s32, 0
    %p227 = por %p225, %p226
    %s229 = sadd.s32 %s228, 1
    %p232 = scmp.eq.s32.totalorder %s26, 1
    %p233 = scmp.ne.s32.totalorder %s228, %s230
    %p234 = scmp.eq.s32.totalorder %s26, 0
    %p235 = por %p233, %p234
    %p236 = scmp.ne.s32.totalorder %s228, %s230
    %p237 = scmp.eq.s32.totalorder %s31, 1
    %p238 = por %p236, %p237
    %p239 = scmp.ne.s32.totalorder %s230, %s231
    %p240 = scmp.eq.s32.totalorder %s31, 0
    %p241 = por %p239, %p240
    %p242 = scmp.ne.s32.totalorder %s230, %s231
    %p243 = scmp.eq.s32.totalorder %s32, 1
    %p244 = por %p242, %p243
    %p246 = scmp.ne.s32.totalorder %s231, %s245
    %p247 = scmp.eq.s32.totalorder %s32, 0
    %p248 = por %p246, %p247
    %s250 = sadd.s32 %s249, 1
    %p253 = scmp.eq.s32.totalorder %s26, 1
    %p254 = scmp.ne.s32.totalorder %s249, %s251
    %p255 = scmp.eq.s32.totalorder %s26, 0
    %p256 = por %p254, %p255
    %p257 = scmp.ne.s32.totalorder %s249, %s251
    %p258 = scmp.eq.s32.totalorder %s31, 1
    %p259 = por %p257, %p258
    %p260 = scmp.ne.s32.totalorder %s251, %s252
    %p261 = scmp.eq.s32.totalorder %s31, 0
    %p262 = por %p260, %p261
    %p263 = scmp.ne.s32.totalorder %s251, %s252
    %p264 = scmp.eq.s32.totalorder %s32, 1
    %p265 = por %p263, %p264
    %p267 = scmp.ne.s32.totalorder %s252, %s266
    %p268 = scmp.eq.s32.totalorder %s32, 0
    %p269 = por %p267, %p268
    %s271 = sadd.s32 %s270, 1
    %p274 = scmp.eq.s32.totalorder %s26, 1
    %p275 = scmp.ne.s32.totalorder %s270, %s272
    %p276 = scmp.eq.s32.totalorder %s26, 0
    %p277 = por %p275, %p276
    %p278 = scmp.ne.s32.totalorder %s270, %s272
    %p279 = scmp.eq.s32.totalorder %s31, 1
    %p280 = por %p278, %p279
    %p281 = scmp.ne.s32.totalorder %s272, %s273
    %p282 = scmp.eq.s32.totalorder %s31, 0
    %p283 = por %p281, %p282
    %p284 = scmp.ne.s32.totalorder %s272, %s273
    %p285 = scmp.eq.s32.totalorder %s32, 1
    %p286 = por %p284, %p285
    %p288 = scmp.ne.s32.totalorder %s273, %s287
    %p289 = scmp.eq.s32.totalorder %s32, 0
    %p290 = por %p288, %p289
    %s292 = sadd.s32 %s291, 1
    %p295 = scmp.eq.s32.totalorder %s26, 1
    %p296 = scmp.ne.s32.totalorder %s291, %s293
    %p297 = scmp.eq.s32.totalorder %s26, 0
    %p298 = por %p296, %p297
    %p299 = scmp.ne.s32.totalorder %s291, %s293
    %p300 = scmp.eq.s32.totalorder %s31, 1
    %p301 = por %p299, %p300
    %p302 = scmp.ne.s32.totalorder %s293, %s294
    %p303 = scmp.eq.s32.totalorder %s31, 0
    %p304 = por %p302, %p303
    %p305 = scmp.ne.s32.totalorder %s293, %s294
    %p306 = scmp.eq.s32.totalorder %s32, 1
    %p307 = por %p305, %p306
    %p309 = scmp.ne.s32.totalorder %s294, %s308
    %p310 = scmp.eq.s32.totalorder %s32, 0
    %p311 = por %p309, %p310
    %s313 = sadd.s32 %s312, 1
    %p316 = scmp.eq.s32.totalorder %s26, 1
    %p317 = scmp.ne.s32.totalorder %s312, %s314
    %p318 = scmp.eq.s32.totalorder %s26, 0
    %p319 = por %p317, %p318
    %p320 = scmp.ne.s32.totalorder %s312, %s314
    %p321 = scmp.eq.s32.totalorder %s31, 1
    %p322 = por %p320, %p321
    %p323 = scmp.ne.s32.totalorder %s314, %s315
    %p324 = scmp.eq.s32.totalorder %s31, 0
    %p325 = por %p323, %p324
    %p326 = scmp.ne.s32.totalorder %s314, %s315
    %p327 = scmp.eq.s32.totalorder %s32, 1
    %p328 = por %p326, %p327
    %p330 = scmp.ne.s32.totalorder %s315, %s329
    %p331 = scmp.eq.s32.totalorder %s32, 0
    %p332 = por %p330, %p331
    %s334 = sadd.s32 %s333, 1
    %p337 = scmp.eq.s32.totalorder %s26, 1
    %p338 = scmp.ne.s32.totalorder %s333, %s335
    %p339 = scmp.eq.s32.totalorder %s26, 0
    %p340 = por %p338, %p339
    %p341 = scmp.ne.s32.totalorder %s333, %s335
    %p342 = scmp.eq.s32.totalorder %s31, 1
    %p343 = por %p341, %p342
    %p344 = scmp.ne.s32.totalorder %s335, %s336
    %p345 = scmp.eq.s32.totalorder %s31, 0
    %p346 = por %p344, %p345
    %p347 = scmp.ne.s32.totalorder %s335, %s336
    %p348 = scmp.eq.s32.totalorder %s32, 1
    %p349 = por %p347, %p348
    %p351 = scmp.ne.s32.totalorder %s336, %s350
    %p352 = scmp.eq.s32.totalorder %s32, 0
    %p353 = por %p351, %p352
    %s355 = sadd.s32 %s354, 1
    %p358 = scmp.eq.s32.totalorder %s26, 1
    %p359 = scmp.ne.s32.totalorder %s354, %s356
    %p360 = scmp.eq.s32.totalorder %s26, 0
    %p361 = por %p359, %p360
    %p362 = scmp.ne.s32.totalorder %s354, %s356
    %p363 = scmp.eq.s32.totalorder %s31, 1
    %p364 = por %p362, %p363
    %p365 = scmp.ne.s32.totalorder %s356, %s357
    %p366 = scmp.eq.s32.totalorder %s31, 0
    %p367 = por %p365, %p366
    %p368 = scmp.ne.s32.totalorder %s356, %s357
    %p369 = scmp.eq.s32.totalorder %s32, 1
    %p370 = por %p368, %p369
    %p372 = scmp.ne.s32.totalorder %s357, %s371
    %p373 = scmp.eq.s32.totalorder %s32, 0
    %p374 = por %p372, %p373
    %s376 = sadd.s32 %s375, 1
    %p379 = scmp.eq.s32.totalorder %s26, 1
    %p380 = scmp.ne.s32.totalorder %s375, %s377
    %p381 = scmp.eq.s32.totalorder %s26, 0
    %p382 = por %p380, %p381
    %p383 = scmp.ne.s32.totalorder %s375, %s377
    %p384 = scmp.eq.s32.totalorder %s31, 1
    %p385 = por %p383, %p384
    %p386 = scmp.ne.s32.totalorder %s377, %s378
    %p387 = scmp.eq.s32.totalorder %s31, 0
    %p388 = por %p386, %p387
    %p389 = scmp.ne.s32.totalorder %s377, %s378
    %p390 = scmp.eq.s32.totalorder %s32, 1
    %p391 = por %p389, %p390
    %p393 = scmp.ne.s32.totalorder %s378, %s392
    %p394 = scmp.eq.s32.totalorder %s32, 0
    %p395 = por %p393, %p394
    %s397 = sadd.s32 %s396, 1
    %p400 = scmp.eq.s32.totalorder %s26, 1
    %p401 = scmp.ne.s32.totalorder %s396, %s398
    %p402 = scmp.eq.s32.totalorder %s26, 0
    %p403 = por %p401, %p402
    %p404 = scmp.ne.s32.totalorder %s396, %s398
    %p405 = scmp.eq.s32.totalorder %s31, 1
    %p406 = por %p404, %p405
    %p407 = scmp.ne.s32.totalorder %s398, %s399
    %p408 = scmp.eq.s32.totalorder %s31, 0
    %p409 = por %p407, %p408
    %p410 = scmp.ne.s32.totalorder %s398, %s399
    %p411 = scmp.eq.s32.totalorder %s32, 1
    %p412 = por %p410, %p411
    %p414 = scmp.ne.s32.totalorder %s399, %s413
    %p415 = scmp.eq.s32.totalorder %s32, 0
    %p416 = por %p414, %p415
    %s418 = sadd.s32 %s417, 1
    %p421 = scmp.eq.s32.totalorder %s26, 1
    %p422 = scmp.ne.s32.totalorder %s417, %s419
    %p423 = scmp.eq.s32.totalorder %s26, 0
    %p424 = por %p422, %p423
    %p425 = scmp.ne.s32.totalorder %s417, %s419
    %p426 = scmp.eq.s32.totalorder %s31, 1
    %p427 = por %p425, %p426
    %p428 = scmp.ne.s32.totalorder %s419, %s420
    %p429 = scmp.eq.s32.totalorder %s31, 0
    %p430 = por %p428, %p429
    %p431 = scmp.ne.s32.totalorder %s419, %s420
    %p432 = scmp.eq.s32.totalorder %s32, 1
    %p433 = por %p431, %p432
    %p435 = scmp.ne.s32.totalorder %s420, %s434
    %p436 = scmp.eq.s32.totalorder %s32, 0
    %p437 = por %p435, %p436
    %s439 = sadd.s32 %s438, 1
    %p442 = scmp.eq.s32.totalorder %s26, 1
    %p443 = scmp.ne.s32.totalorder %s438, %s440
    %p444 = scmp.eq.s32.totalorder %s26, 0
    %p445 = por %p443, %p444
    %p446 = scmp.ne.s32.totalorder %s438, %s440
    %p447 = scmp.eq.s32.totalorder %s31, 1
    %p448 = por %p446, %p447
    %p449 = scmp.ne.s32.totalorder %s440, %s441
    %p450 = scmp.eq.s32.totalorder %s31, 0
    %p451 = por %p449, %p450
    %p452 = scmp.ne.s32.totalorder %s440, %s441
    %p453 = scmp.eq.s32.totalorder %s32, 1
    %p454 = por %p452, %p453
    %p456 = scmp.ne.s32.totalorder %s441, %s455
    %p457 = scmp.eq.s32.totalorder %s32, 0
    %p458 = por %p456, %p457
    %s459 = ssub.s32 %s26, %s33
    %p460 = scmp.eq.s32.totalorder %s459, 0
    %s462 = sadd.s32 %s461, 1
    %s463 = scalar_select %p460, %s461, %s462
    %p466 = pneg %p460
    %p467 = scmp.eq.s32.totalorder %s26, 1
    %p468 = por %p466, %p467
    %p469 = scmp.ne.s32.totalorder %s461, %s464
    %p470 = scmp.eq.s32.totalorder %s26, 0
    %p471 = por %p469, %p470
    %p472 = scmp.ne.s32.totalorder %s461, %s464
    %p473 = scmp.eq.s32.totalorder %s31, 1
    %p474 = por %p472, %p473
    %p475 = scmp.ne.s32.totalorder %s464, %s465
    %p476 = scmp.eq.s32.totalorder %s31, 0
    %p477 = por %p475, %p476
    %p478 = scmp.ne.s32.totalorder %s464, %s465
    %p479 = scmp.eq.s32.totalorder %s32, 1
    %p480 = por %p478, %p479
    %p482 = scmp.ne.s32.totalorder %s465, %s481
    %p483 = scmp.eq.s32.totalorder %s32, 0
    %p484 = por %p482, %p483
    %p485 = scmp.le.s32.totalorder 1, %s26
    %p486 = scmp.lt.s32.totalorder %s26, 3
    %p487 = pnand %p485, %p486
    %p488 = pneg %p487
    // Predicated region
    $region9: #{cnn_forward.1} parent=5 // pred_check
      _
    $region10: #{cnn_forward.1} parent=5 // pred_check_branch
      %490 = sbr.rel (%p487) target = $region12
    $region11: #{cnn_forward.1} parent=5 // pred_region
      %s491 = ssub.s32 %s26, 1
      // Predicated region
      $region13: #{cnn_forward.1} parent=11 // pred_check
        %p492 = pneg %p73
      $region14: #{cnn_forward.1} parent=11 // pred_check_branch
        %494 = sbr.rel (%p492) target = $region16
      $region15: #{cnn_forward.1} parent=11 // pred_region
        _
      $region16: #{cnn_forward.1} parent=11 // pred_fallthru
        _
      // Predicated region
      $region17: #{cnn_forward.1} parent=11 // pred_check
        %p495 = pneg %p94
      $region18: #{cnn_forward.1} parent=11 // pred_check_branch
        %497 = sbr.rel (%p495) target = $region20
      $region19: #{cnn_forward.1} parent=11 // pred_region
        _
      $region20: #{cnn_forward.1} parent=11 // pred_fallthru
        _
      // Predicated region
      $region21: #{cnn_forward.1} parent=11 // pred_check
        %p498 = pneg %p115
      $region22: #{cnn_forward.1} parent=11 // pred_check_branch
        %500 = sbr.rel (%p498) target = $region24
      $region23: #{cnn_forward.1} parent=11 // pred_region
        _
      $region24: #{cnn_forward.1} parent=11 // pred_fallthru
        _
      // Predicated region
      $region25: #{cnn_forward.1} parent=11 // pred_check
        %p501 = pneg %p136
      $region26: #{cnn_forward.1} parent=11 // pred_check_branch
        %503 = sbr.rel (%p501) target = $region28
      $region27: #{cnn_forward.1} parent=11 // pred_region
        _
      $region28: #{cnn_forward.1} parent=11 // pred_fallthru
        _
      // Predicated region
      $region29: #{cnn_forward.1} parent=11 // pred_check
        %p504 = pneg %p157
      $region30: #{cnn_forward.1} parent=11 // pred_check_branch
        %506 = sbr.rel (%p504) target = $region32
      $region31: #{cnn_forward.1} parent=11 // pred_region
        _
      $region32: #{cnn_forward.1} parent=11 // pred_fallthru
        _
      // Predicated region
      $region33: #{cnn_forward.1} parent=11 // pred_check
        %p507 = pneg %p178
      $region34: #{cnn_forward.1} parent=11 // pred_check_branch
        %509 = sbr.rel (%p507) target = $region36
      $region35: #{cnn_forward.1} parent=11 // pred_region
        _
      $region36: #{cnn_forward.1} parent=11 // pred_fallthru
        _
      // Predicated region
      $region37: #{cnn_forward.1} parent=11 // pred_check
        %p510 = pneg %p199
      $region38: #{cnn_forward.1} parent=11 // pred_check_branch
        %512 = sbr.rel (%p510) target = $region40
      $region39: #{cnn_forward.1} parent=11 // pred_region
        _
      $region40: #{cnn_forward.1} parent=11 // pred_fallthru
        _
      // Predicated region
      $region41: #{cnn_forward.1} parent=11 // pred_check
        %p513 = pneg %p220
      $region42: #{cnn_forward.1} parent=11 // pred_check_branch
        %515 = sbr.rel (%p513) target = $region44
      $region43: #{cnn_forward.1} parent=11 // pred_region
        _
      $region44: #{cnn_forward.1} parent=11 // pred_fallthru
        _
      // Predicated region
      $region45: #{cnn_forward.1} parent=11 // pred_check
        %p516 = pneg %p241
      $region46: #{cnn_forward.1} parent=11 // pred_check_branch
        %518 = sbr.rel (%p516) target = $region48
      $region47: #{cnn_forward.1} parent=11 // pred_region
        _
      $region48: #{cnn_forward.1} parent=11 // pred_fallthru
        _
      // Predicated region
      $region49: #{cnn_forward.1} parent=11 // pred_check
        %p519 = pneg %p262
      $region50: #{cnn_forward.1} parent=11 // pred_check_branch
        %521 = sbr.rel (%p519) target = $region52
      $region51: #{cnn_forward.1} parent=11 // pred_region
        _
      $region52: #{cnn_forward.1} parent=11 // pred_fallthru
        _
      // Predicated region
      $region53: #{cnn_forward.1} parent=11 // pred_check
        %p522 = pneg %p283
      $region54: #{cnn_forward.1} parent=11 // pred_check_branch
        %524 = sbr.rel (%p522) target = $region56
      $region55: #{cnn_forward.1} parent=11 // pred_region
        _
      $region56: #{cnn_forward.1} parent=11 // pred_fallthru
        _
      // Predicated region
      $region57: #{cnn_forward.1} parent=11 // pred_check
        %p525 = pneg %p304
      $region58: #{cnn_forward.1} parent=11 // pred_check_branch
        %527 = sbr.rel (%p525) target = $region60
      $region59: #{cnn_forward.1} parent=11 // pred_region
        _
      $region60: #{cnn_forward.1} parent=11 // pred_fallthru
        _
      // Predicated region
      $region61: #{cnn_forward.1} parent=11 // pred_check
        %p528 = pneg %p325
      $region62: #{cnn_forward.1} parent=11 // pred_check_branch
        %530 = sbr.rel (%p528) target = $region64
      $region63: #{cnn_forward.1} parent=11 // pred_region
        _
      $region64: #{cnn_forward.1} parent=11 // pred_fallthru
        _
      // Predicated region
      $region65: #{cnn_forward.1} parent=11 // pred_check
        %p531 = pneg %p346
      $region66: #{cnn_forward.1} parent=11 // pred_check_branch
        %533 = sbr.rel (%p531) target = $region68
      $region67: #{cnn_forward.1} parent=11 // pred_region
        _
      $region68: #{cnn_forward.1} parent=11 // pred_fallthru
        _
      // Predicated region
      $region69: #{cnn_forward.1} parent=11 // pred_check
        %p534 = pneg %p367
      $region70: #{cnn_forward.1} parent=11 // pred_check_branch
        %536 = sbr.rel (%p534) target = $region72
      $region71: #{cnn_forward.1} parent=11 // pred_region
        _
      $region72: #{cnn_forward.1} parent=11 // pred_fallthru
        _
      // Predicated region
      $region73: #{cnn_forward.1} parent=11 // pred_check
        %p537 = pneg %p388
      $region74: #{cnn_forward.1} parent=11 // pred_check_branch
        %539 = sbr.rel (%p537) target = $region76
      $region75: #{cnn_forward.1} parent=11 // pred_region
        _
      $region76: #{cnn_forward.1} parent=11 // pred_fallthru
        _
      // Predicated region
      $region77: #{cnn_forward.1} parent=11 // pred_check
        %p540 = pneg %p409
      $region78: #{cnn_forward.1} parent=11 // pred_check_branch
        %542 = sbr.rel (%p540) target = $region80
      $region79: #{cnn_forward.1} parent=11 // pred_region
        _
      $region80: #{cnn_forward.1} parent=11 // pred_fallthru
        _
      // Predicated region
      $region81: #{cnn_forward.1} parent=11 // pred_check
        %p543 = pneg %p430
      $region82: #{cnn_forward.1} parent=11 // pred_check_branch
        %545 = sbr.rel (%p543) target = $region84
      $region83: #{cnn_forward.1} parent=11 // pred_region
        _
      $region84: #{cnn_forward.1} parent=11 // pred_fallthru
        _
      // Predicated region
      $region85: #{cnn_forward.1} parent=11 // pred_check
        %p546 = pneg %p451
      $region86: #{cnn_forward.1} parent=11 // pred_check_branch
        %548 = sbr.rel (%p546) target = $region88
      $region87: #{cnn_forward.1} parent=11 // pred_region
        _
      $region88: #{cnn_forward.1} parent=11 // pred_fallthru
        _
    $region12: #{cnn_forward.1} parent=5 // pred_fallthru
      _
    %p549 = scmp.lt.s32.totalorder %s26, 2
    // Predicated region
    $region89: #{cnn_forward.1} parent=5 // pred_check
      %p550 = pneg %p549
    $region90: #{cnn_forward.1} parent=5 // pred_check_branch
      %552 = sbr.rel (%p550) target = $region92
    $region91: #{cnn_forward.1} parent=5 // pred_region
      // Predicated region
      $region93: #{cnn_forward.1} parent=91 // pred_check
        %p553 = pneg %p46
      $region94: #{cnn_forward.1} parent=91 // pred_check_branch
        %555 = sbr.rel (%p553) target = $region96
      $region95: #{cnn_forward.1} parent=91 // pred_region
        %s556 = smul.u32 28, %s26
        %p557 = scmp.lt.s32.totalorder %s556, 55
        %s558 = scalar_select %p557, %s556, 55
        %s559 = smul.addr %s558, 3
        %s560 = smul.addr %s559, 8
        %s561 = scalar_lea.vmem %s0, %s560
        %s562 = smul.u32 28, %s26
      $region96: #{cnn_forward.1} parent=91 // pred_fallthru
        _
    $region92: #{cnn_forward.1} parent=5 // pred_fallthru
      _
    %p563 = scmp.le.s32.totalorder 1, %s26
    %p564 = scmp.lt.s32.totalorder %s26, 3
    %p565 = pnand %p563, %p564
    %p566 = pneg %p565
    // Predicated region
    $region97: #{cnn_forward.1} parent=5 // pred_check
      _
    $region98: #{cnn_forward.1} parent=5 // pred_check_branch
      %568 = sbr.rel (%p565) target = $region100
    $region99: #{cnn_forward.1} parent=5 // pred_region
      %s569 = ssub.s32 %s26, 1
      %s570 = smul.u32 28, %s31
      %p571 = scmp.lt.s32.totalorder %s570, 55
      %s572 = scalar_select %p571, %s570, 55
      %s573 = smul.addr %s572, 3
      %s574 = smul.addr %s573, 8
      %s575 = scalar_lea.vmem %s0, %s574
      %p576 = pneg %p52
      %p577 = pneg %p49
      %p578 = pneg %p73
      %p579 = pneg %p70
      %p580 = pneg %p94
      %p581 = pneg %p91
      %p582 = pneg %p115
      %p583 = pneg %p112
      %p584 = pneg %p136
      %p585 = pneg %p133
      %p586 = pneg %p157
      %p587 = pneg %p154
      %p588 = pneg %p178
      %p589 = pneg %p175
      %p590 = pneg %p199
      %p591 = pneg %p196
      %p592 = pneg %p220
      %p593 = pneg %p217
      %p594 = pneg %p241
      %p595 = pneg %p238
      %p596 = pneg %p262
      %p597 = pneg %p259
      %p598 = pneg %p283
      %p599 = pneg %p280
      %p600 = pneg %p304
      %p601 = pneg %p301
      %p602 = pneg %p325
      %p603 = pneg %p322
      %p604 = pneg %p346
      %p605 = pneg %p343
      %p606 = pneg %p367
      %p607 = pneg %p364
      %p608 = pneg %p388
      %p609 = pneg %p385
      %p610 = pneg %p409
      %p611 = pneg %p406
      %p612 = pneg %p430
      %p613 = pneg %p427
      %p614 = pneg %p451
      %p615 = pneg %p448
      %p616 = pneg %p477
      %p617 = pneg %p474
      %p618 = scmp.lt.s32.totalorder %s31, 1
      %s619 = scalar_select %p618, %s31, 1
      %s620 = smul.addr %s619, 8
      %s621 = scalar_lea.vmem %s20, %s620
      %s622 = smul.u32 28, %s31
      %p623 = scmp.lt.s32.totalorder %s622, 55
      %s624 = scalar_select %p623, %s622, 55
      %s625 = smul.addr %s624, 3
      %s626 = smul.addr %s625, 8
      %s627 = scalar_lea.vmem %s0, %s626
      %s628 = smul.u32 28, %s31
      %p629 = scmp.lt.s32.totalorder %s31, 1
      %s630 = scalar_select %p629, %s31, 1
      %s631 = smul.addr %s630, 8
      %s632 = scalar_lea.vmem %s20, %s631
      %v634 = vld [vmem:[%s627] sm:$0xff]
      %v635 = vld [vmem:[%s627 + $0x8] sm:$0xff]
      %v636 = vld [vmem:[%s627 + $0x10] sm:$0xff]
      %v637 = vld [vmem:[%s627 + $0x18] sm:$0xff]
      %v638 = vld [vmem:[%s627 + $0x20] sm:$0xff]
      %v639 = vld [vmem:[%s627 + $0x28] sm:$0xff]
      %v640 = vld [vmem:[%s627 + $0x30] sm:$0xff]
      %v641 = vld [vmem:[%s627 + $0x38] sm:$0xff]
      %v642 = vld [vmem:[%s627 + $0x40] sm:$0xff]
      %v643 = vld [vmem:[%s627 + $0x48] sm:$0xff]
      %v644 = vld [vmem:[%s627 + $0x50] sm:$0xff]
      %v645 = vld [vmem:[%s627 + $0x58] sm:$0xff]
      %v646 = vld [vmem:[%s627 + $0x60] sm:$0xff]
      %v647 = vld [vmem:[%s627 + $0x68] sm:$0xff]
      %v648 = vld [vmem:[%s627 + $0x70] sm:$0xff]
      %v649 = vld [vmem:[%s627 + $0x78] sm:$0xff]
      %v650 = vld [vmem:[%s627 + $0x80] sm:$0xff]
      %v651 = vld [vmem:[%s627 + $0x88] sm:$0xff]
      %v652 = vld [vmem:[%s627 + $0x90] sm:$0xff]
      %v653 = vld [vmem:[%s627 + $0x98] sm:$0xff]
      %v654 = vld [vmem:[%s627 + $0xa0] sm:$0xff]
      %v655 = vld [vmem:[%s627 + $0xa8] sm:$0xff]
      %v656 = vld [vmem:[%s627 + $0xb0] sm:$0xff]
      %v657 = vld [vmem:[%s627 + $0xb8] sm:$0xff]
      %v658 = vld [vmem:[%s627 + $0xc0] sm:$0xff]
      %v659 = vld [vmem:[%s627 + $0xc8] sm:$0xff]
      %v660 = vld [vmem:[%s627 + $0xd0] sm:$0xff]
      %v661 = vld [vmem:[%s627 + $0xd8] sm:$0xff]
      %v662 = vld [vmem:[%s627 + $0xe0] sm:$0xff]
      %v663 = vld [vmem:[%s627 + $0xe8] sm:$0xff]
      %v664 = vld [vmem:[%s627 + $0xf0] sm:$0xff]
      %v665 = vld [vmem:[%s627 + $0xf8] sm:$0xff]
      %v666 = vld [vmem:[%s627 + $0x100] sm:$0xff]
      %v667 = vld [vmem:[%s627 + $0x108] sm:$0xff]
      %v668 = vld [vmem:[%s627 + $0x110] sm:$0xff]
      %v669 = vld [vmem:[%s627 + $0x118] sm:$0xff]
      %v670 = vld [vmem:[%s627 + $0x120] sm:$0xff]
      %v671 = vld [vmem:[%s627 + $0x128] sm:$0xff]
      %v672 = vld [vmem:[%s627 + $0x130] sm:$0xff]
      %v673 = vld [vmem:[%s627 + $0x138] sm:$0xff]
      %v674 = vld [vmem:[%s627 + $0x140] sm:$0xff]
      %v675 = vld [vmem:[%s627 + $0x148] sm:$0xff]
      %v676 = vld [vmem:[%s627 + $0x150] sm:$0xff]
      %v677 = vld [vmem:[%s627 + $0x158] sm:$0xff]
      %v678 = vld [vmem:[%s627 + $0x160] sm:$0xff]
      %v679 = vld [vmem:[%s627 + $0x168] sm:$0xff]
      %v680 = vld [vmem:[%s627 + $0x170] sm:$0xff]
      %v681 = vld [vmem:[%s627 + $0x178] sm:$0xff]
      %v682 = vld [vmem:[%s627 + $0x180] sm:$0xff]
      %v683 = vld [vmem:[%s627 + $0x188] sm:$0xff]
      %v684 = vld [vmem:[%s627 + $0x190] sm:$0xff]
      %v685 = vld [vmem:[%s627 + $0x198] sm:$0xff]
      %v686 = vld [vmem:[%s627 + $0x1a0] sm:$0xff]
      %v687 = vld [vmem:[%s627 + $0x1a8] sm:$0xff]
      %v688 = vld [vmem:[%s627 + $0x1b0] sm:$0xff]
      %v689 = vld [vmem:[%s627 + $0x1b8] sm:$0xff]
      %v690 = vld [vmem:[%s627 + $0x1c0] sm:$0xff]
      %v691 = vld [vmem:[%s627 + $0x1c8] sm:$0xff]
      %v692 = vld [vmem:[%s627 + $0x1d0] sm:$0xff]
      %v693 = vld [vmem:[%s627 + $0x1d8] sm:$0xff]
      %v694 = vld [vmem:[%s627 + $0x1e0] sm:$0xff]
      %v695 = vld [vmem:[%s627 + $0x1e8] sm:$0xff]
      %v696 = vld [vmem:[%s627 + $0x1f0] sm:$0xff]
      %v697 = vld [vmem:[%s627 + $0x1f8] sm:$0xff]
      %v698 = vld [vmem:[%s627 + $0x200] sm:$0xff]
      %v699 = vld [vmem:[%s627 + $0x208] sm:$0xff]
      %v700 = vld [vmem:[%s627 + $0x210] sm:$0xff]
      %v701 = vld [vmem:[%s627 + $0x218] sm:$0xff]
      %v702 = vld [vmem:[%s627 + $0x220] sm:$0xff]
      %v703 = vld [vmem:[%s627 + $0x228] sm:$0xff]
      %v704 = vld [vmem:[%s627 + $0x230] sm:$0xff]
      %v705 = vld [vmem:[%s627 + $0x238] sm:$0xff]
      %v706 = vld [vmem:[%s627 + $0x240] sm:$0xff]
      %v707 = vld [vmem:[%s627 + $0x248] sm:$0xff]
      %v708 = vld [vmem:[%s627 + $0x250] sm:$0xff]
      %v709 = vld [vmem:[%s627 + $0x258] sm:$0xff]
      %v710 = vld [vmem:[%s627 + $0x260] sm:$0xff]
      %v711 = vld [vmem:[%s627 + $0x268] sm:$0xff]
      %v712 = vld [vmem:[%s627 + $0x270] sm:$0xff]
      %v713 = vld [vmem:[%s627 + $0x278] sm:$0xff]
      %v714 = vld [vmem:[%s627 + $0x280] sm:$0xff]
      %v715 = vld [vmem:[%s627 + $0x288] sm:$0xff]
      %v716 = vld [vmem:[%s627 + $0x290] sm:$0xff]
      %v717 = vld [vmem:[%s627 + $0x298] sm:$0xff]
      %v718 = vrot.slane %v634, 7
      %v719 = vrot.slane %v635, 7
      %v720 = vrot.slane %v636, 7
      %v721 = vrot.slane %v637, 7
      %v722 = vrot.slane %v638, 7
      %v723 = vrot.slane %v639, 7
      %v724 = vrot.slane %v640, 7
      %v725 = vrot.slane %v641, 7
      %v726 = vrot.slane %v642, 7
      %v727 = vrot.slane %v643, 7
      %v728 = vrot.slane %v644, 7
      %v729 = vrot.slane %v645, 7
      %v730 = vrot.slane %v646, 7
      %v731 = vrot.slane %v647, 7
      %v732 = vrot.slane %v648, 7
      %v733 = vrot.slane %v649, 7
      %v734 = vrot.slane %v650, 7
      %v735 = vrot.slane %v651, 7
      %v736 = vrot.slane %v652, 7
      %v737 = vrot.slane %v653, 7
      %v738 = vrot.slane %v654, 7
      %v739 = vrot.slane %v655, 7
      %v740 = vrot.slane %v656, 7
      %v741 = vrot.slane %v657, 7
      %v742 = vrot.slane %v658, 7
      %v743 = vrot.slane %v659, 7
      %v744 = vrot.slane %v660, 7
      %v745 = vrot.slane %v661, 7
      %v746 = vrot.slane %v662, 7
      %v747 = vrot.slane %v663, 7
      %v748 = vrot.slane %v664, 7
      %v749 = vrot.slane %v665, 7
      %v750 = vrot.slane %v666, 7
      %v751 = vrot.slane %v667, 7
      %v752 = vrot.slane %v668, 7
      %v753 = vrot.slane %v669, 7
      %v754 = vrot.slane %v670, 7
      %v755 = vrot.slane %v671, 7
      %v756 = vrot.slane %v672, 7
      %v757 = vrot.slane %v673, 7
      %v758 = vrot.slane %v674, 7
      %v759 = vrot.slane %v675, 7
      %v760 = vrot.slane %v676, 7
      %v761 = vrot.slane %v677, 7
      %v762 = vrot.slane %v678, 7
      %v763 = vrot.slane %v679, 7
      %v764 = vrot.slane %v680, 7
      %v765 = vrot.slane %v681, 7
      %v766 = vrot.slane %v682, 7
      %v767 = vrot.slane %v683, 7
      %v768 = vrot.slane %v684, 7
      %v769 = vrot.slane %v685, 7
      %v770 = vrot.slane %v686, 7
      %v771 = vrot.slane %v687, 7
      %v772 = vrot.slane %v688, 7
      %v773 = vrot.slane %v689, 7
      %v774 = vrot.slane %v690, 7
      %v775 = vrot.slane %v691, 7
      %v776 = vrot.slane %v692, 7
      %v777 = vrot.slane %v693, 7
      %v778 = vrot.slane %v694, 7
      %v779 = vrot.slane %v695, 7
      %v780 = vrot.slane %v696, 7
      %v781 = vrot.slane %v697, 7
      %v782 = vrot.slane %v698, 7
      %v783 = vrot.slane %v699, 7
      %v784 = vrot.slane %v700, 7
      %v785 = vrot.slane %v701, 7
      %v786 = vrot.slane %v702, 7
      %v787 = vrot.slane %v703, 7
      %v788 = vrot.slane %v704, 7
      %v789 = vrot.slane %v705, 7
      %v790 = vrot.slane %v706, 7
      %v791 = vrot.slane %v707, 7
      %v792 = vrot.slane %v708, 7
      %v793 = vrot.slane %v709, 7
      %v794 = vrot.slane %v710, 7
      %v795 = vrot.slane %v711, 7
      %v796 = vrot.slane %v712, 7
      %v797 = vrot.slane %v713, 7
      %v798 = vrot.slane %v714, 7
      %v799 = vrot.slane %v715, 7
      %v800 = vrot.slane %v716, 7
      %v801 = vrot.slane %v717, 7
      %v802 = vlaneseq
      %v803 = vshrl.u32 %v802, 7
      %vm804 = vcmp.lt.s32.totalorder %v803, 1
      %v805 = vsel %vm804, %v796, %v799
      %v806 = vsel %vm804, %v797, %v800
      %v807 = vsel %vm804, %v798, %v801
      %v808 = vsel %vm804, %v793, %v796
      %v809 = vsel %vm804, %v794, %v797
      %v810 = vsel %vm804, %v795, %v798
      %v811 = vsel %vm804, %v790, %v793
      %v812 = vsel %vm804, %v791, %v794
      %v813 = vsel %vm804, %v792, %v795
      %v814 = vsel %vm804, %v787, %v790
      %v815 = vsel %vm804, %v788, %v791
      %v816 = vsel %vm804, %v789, %v792
      %v817 = vsel %vm804, %v784, %v787
      %v818 = vsel %vm804, %v785, %v788
      %v819 = vsel %vm804, %v786, %v789
      %v820 = vsel %vm804, %v781, %v784
      %v821 = vsel %vm804, %v782, %v785
      %v822 = vsel %vm804, %v783, %v786
      %v823 = vsel %vm804, %v778, %v781
      %v824 = vsel %vm804, %v779, %v782
      %v825 = vsel %vm804, %v780, %v783
      %v826 = vsel %vm804, %v775, %v778
      %v827 = vsel %vm804, %v776, %v779
      %v828 = vsel %vm804, %v777, %v780
      %v829 = vsel %vm804, %v772, %v775
      %v830 = vsel %vm804, %v773, %v776
      %v831 = vsel %vm804, %v774, %v777
      %v832 = vsel %vm804, %v769, %v772
      %v833 = vsel %vm804, %v770, %v773
      %v834 = vsel %vm804, %v771, %v774
      %v835 = vsel %vm804, %v766, %v769
      %v836 = vsel %vm804, %v767, %v770
      %v837 = vsel %vm804, %v768, %v771
      %v838 = vsel %vm804, %v763, %v766
      %v839 = vsel %vm804, %v764, %v767
      %v840 = vsel %vm804, %v765, %v768
      %v841 = vsel %vm804, %v760, %v763
      %v842 = vsel %vm804, %v761, %v764
      %v843 = vsel %vm804, %v762, %v765
      %v844 = vsel %vm804, %v757, %v760
      %v845 = vsel %vm804, %v758, %v761
      %v846 = vsel %vm804, %v759, %v762
      %v847 = vsel %vm804, %v754, %v757
      %v848 = vsel %vm804, %v755, %v758
      %v849 = vsel %vm804, %v756, %v759
      %v850 = vsel %vm804, %v751, %v754
      %v851 = vsel %vm804, %v752, %v755
      %v852 = vsel %vm804, %v753, %v756
      %v853 = vsel %vm804, %v748, %v751
      %v854 = vsel %vm804, %v749, %v752
      %v855 = vsel %vm804, %v750, %v753
      %v856 = vsel %vm804, %v745, %v748
      %v857 = vsel %vm804, %v746, %v749
      %v858 = vsel %vm804, %v747, %v750
      %v859 = vsel %vm804, %v742, %v745
      %v860 = vsel %vm804, %v743, %v746
      %v861 = vsel %vm804, %v744, %v747
      %v862 = vsel %vm804, %v739, %v742
      %v863 = vsel %vm804, %v740, %v743
      %v864 = vsel %vm804, %v741, %v744
      %v865 = vsel %vm804, %v736, %v739
      %v866 = vsel %vm804, %v737, %v740
      %v867 = vsel %vm804, %v738, %v741
      %v868 = vsel %vm804, %v733, %v736
      %v869 = vsel %vm804, %v734, %v737
      %v870 = vsel %vm804, %v735, %v738
      %v871 = vsel %vm804, %v730, %v733
      %v872 = vsel %vm804, %v731, %v734
      %v873 = vsel %vm804, %v732, %v735
      %v874 = vsel %vm804, %v727, %v730
      %v875 = vsel %vm804, %v728, %v731
      %v876 = vsel %vm804, %v729, %v732
      %v877 = vsel %vm804, %v724, %v727
      %v878 = vsel %vm804, %v725, %v728
      %v879 = vsel %vm804, %v726, %v729
      %v880 = vsel %vm804, %v721, %v724
      %v881 = vsel %vm804, %v722, %v725
      %v882 = vsel %vm804, %v723, %v726
      %v883 = vsel %vm804, %v718, %v721
      %v884 = vsel %vm804, %v719, %v722
      %v885 = vsel %vm804, %v720, %v723
      %v886 = vsel %vm804, %v799, %v718
      %v887 = vsel %vm804, %v800, %v719
      %v888 = vsel %vm804, %v801, %v720
      %v889 = vld [vmem:[%s3] sm:$0xff]
      %v890 = vld [vmem:[%s3 + $0x8] sm:$0xff]
      %v891 = vld [vmem:[%s3 + $0x10] sm:$0xff]
      %v892 = vld [vmem:[%s3 + $0x18] sm:$0xff]
      %v893 = vld [vmem:[%s3 + $0x20] sm:$0xff]
      %v894 = vld [vmem:[%s3 + $0x28] sm:$0xff]
      %v895 = vld [vmem:[%s3 + $0x30] sm:$0xff]
      %v896 = vld [vmem:[%s3 + $0x38] sm:$0xff]
      %v897 = vld [vmem:[%s3 + $0x40] sm:$0xff]
      %v898 = vld [vmem:[%s3 + $0x48] sm:$0xff]
      %v899 = vld [vmem:[%s3 + $0x50] sm:$0xff]
      %v900 = vld [vmem:[%s3 + $0x58] sm:$0xff]
      %v901 = vld [vmem:[%s3 + $0x60] sm:$0xff]
      %v902 = vld [vmem:[%s3 + $0x68] sm:$0xff]
      %v903 = vld [vmem:[%s3 + $0x70] sm:$0xff]
      %v904 = vld [vmem:[%s3 + $0x78] sm:$0xff]
      %v905 = vld [vmem:[%s3 + $0x80] sm:$0xff]
      %v906 = vld [vmem:[%s3 + $0x88] sm:$0xff]
      %v907 = vld [vmem:[%s3 + $0x90] sm:$0xff]
      %v908 = vld [vmem:[%s3 + $0x98] sm:$0xff]
      %v909 = vld [vmem:[%s3 + $0xa0] sm:$0xff]
      %v910 = vld [vmem:[%s3 + $0xa8] sm:$0xff]
      %v911 = vld [vmem:[%s3 + $0xb0] sm:$0xff]
      %v912 = vld [vmem:[%s3 + $0xb8] sm:$0xff]
      %v913 = vld [vmem:[%s3 + $0xc0] sm:$0xff]
      %v914 = vld [vmem:[%s3 + $0xc8] sm:$0xff]
      %v915 = vld [vmem:[%s3 + $0xd0] sm:$0xff]
      %v916 = vld [vmem:[%s3 + $0xd8] sm:$0xff]
      %918 = vset.pattern.permute.xlu0 0
      %919 = vperm.xlu0 %918, %v889
      %v920 = vpop.permute.xlu0 %919
      %923 = vset.pattern.permute.xlu0 0
      %924 = vperm.xlu0 %923, %v890
      %v925 = vpop.permute.xlu0 %924
      %928 = vset.pattern.permute.xlu0 0
      %929 = vperm.xlu0 %928, %v891
      %v930 = vpop.permute.xlu0 %929
      %933 = vset.pattern.permute.xlu0 0
      %934 = vperm.xlu0 %933, %v892
      %v935 = vpop.permute.xlu0 %934
      %938 = vset.pattern.permute.xlu0 0
      %939 = vperm.xlu0 %938, %v893
      %v940 = vpop.permute.xlu0 %939
      %943 = vset.pattern.permute.xlu0 0
      %944 = vperm.xlu0 %943, %v894
      %v945 = vpop.permute.xlu0 %944
      %948 = vset.pattern.permute.xlu0 0
      %949 = vperm.xlu0 %948, %v895
      %v950 = vpop.permute.xlu0 %949
      %953 = vset.pattern.permute.xlu0 0
      %954 = vperm.xlu0 %953, %v896
      %v955 = vpop.permute.xlu0 %954
      %958 = vset.pattern.permute.xlu0 0
      %959 = vperm.xlu0 %958, %v897
      %v960 = vpop.permute.xlu0 %959
      %963 = vset.pattern.permute.xlu0 0
      %964 = vperm.xlu0 %963, %v898
      %v965 = vpop.permute.xlu0 %964
      %968 = vset.pattern.permute.xlu0 0
      %969 = vperm.xlu0 %968, %v899
      %v970 = vpop.permute.xlu0 %969
      %973 = vset.pattern.permute.xlu0 0
      %974 = vperm.xlu0 %973, %v900
      %v975 = vpop.permute.xlu0 %974
      %978 = vset.pattern.permute.xlu0 0
      %979 = vperm.xlu0 %978, %v901
      %v980 = vpop.permute.xlu0 %979
      %983 = vset.pattern.permute.xlu0 0
      %984 = vperm.xlu0 %983, %v902
      %v985 = vpop.permute.xlu0 %984
      %988 = vset.pattern.permute.xlu0 0
      %989 = vperm.xlu0 %988, %v903
      %v990 = vpop.permute.xlu0 %989
      %993 = vset.pattern.permute.xlu0 0
      %994 = vperm.xlu0 %993, %v904
      %v995 = vpop.permute.xlu0 %994
      %998 = vset.pattern.permute.xlu0 0
      %999 = vperm.xlu0 %998, %v905
      %v1000 = vpop.permute.xlu0 %999
      %1003 = vset.pattern.permute.xlu0 0
      %1004 = vperm.xlu0 %1003, %v906
      %v1005 = vpop.permute.xlu0 %1004
      %1008 = vset.pattern.permute.xlu0 0
      %1009 = vperm.xlu0 %1008, %v907
      %v1010 = vpop.permute.xlu0 %1009
      %1013 = vset.pattern.permute.xlu0 0
      %1014 = vperm.xlu0 %1013, %v908
      %v1015 = vpop.permute.xlu0 %1014
      %1018 = vset.pattern.permute.xlu0 0
      %1019 = vperm.xlu0 %1018, %v909
      %v1020 = vpop.permute.xlu0 %1019
      %1023 = vset.pattern.permute.xlu0 0
      %1024 = vperm.xlu0 %1023, %v910
      %v1025 = vpop.permute.xlu0 %1024
      %1028 = vset.pattern.permute.xlu0 0
      %1029 = vperm.xlu0 %1028, %v911
      %v1030 = vpop.permute.xlu0 %1029
      %1033 = vset.pattern.permute.xlu0 0
      %1034 = vperm.xlu0 %1033, %v912
      %v1035 = vpop.permute.xlu0 %1034
      %1038 = vset.pattern.permute.xlu0 0
      %1039 = vperm.xlu0 %1038, %v913
      %v1040 = vpop.permute.xlu0 %1039
      %1043 = vset.pattern.permute.xlu0 0
      %1044 = vperm.xlu0 %1043, %v914
      %v1045 = vpop.permute.xlu0 %1044
      %1048 = vset.pattern.permute.xlu0 0
      %1049 = vperm.xlu0 %1048, %v915
      %v1050 = vpop.permute.xlu0 %1049
      %1053 = vset.pattern.permute.xlu0 0
      %1054 = vperm.xlu0 %1053, %v916
      %v1055 = vpop.permute.xlu0 %1054
      %v1057 = vmul.f32 %v886, %v920
      %v1058 = vmul.f32 %v887, %v920
      %v1059 = vmul.f32 %v888, %v920
      %v1060 = vmul.f32 %v883, %v925
      %v1061 = vmul.f32 %v884, %v925
      %v1062 = vmul.f32 %v885, %v925
      %v1063 = vmul.f32 %v880, %v930
      %v1064 = vmul.f32 %v881, %v930
      %v1065 = vmul.f32 %v882, %v930
      %v1066 = vmul.f32 %v877, %v935
      %v1067 = vmul.f32 %v878, %v935
      %v1068 = vmul.f32 %v879, %v935
      %v1069 = vmul.f32 %v874, %v940
      %v1070 = vmul.f32 %v875, %v940
      %v1071 = vmul.f32 %v876, %v940
      %v1072 = vmul.f32 %v871, %v945
      %v1073 = vmul.f32 %v872, %v945
      %v1074 = vmul.f32 %v873, %v945
      %v1075 = vmul.f32 %v868, %v950
      %v1076 = vmul.f32 %v869, %v950
      %v1077 = vmul.f32 %v870, %v950
      %v1078 = vmul.f32 %v865, %v955
      %v1079 = vmul.f32 %v866, %v955
      %v1080 = vmul.f32 %v867, %v955
      %v1081 = vmul.f32 %v862, %v960
      %v1082 = vmul.f32 %v863, %v960
      %v1083 = vmul.f32 %v864, %v960
      %v1084 = vmul.f32 %v859, %v965
      %v1085 = vmul.f32 %v860, %v965
      %v1086 = vmul.f32 %v861, %v965
      %v1087 = vmul.f32 %v856, %v970
      %v1088 = vmul.f32 %v857, %v970
      %v1089 = vmul.f32 %v858, %v970
      %v1090 = vmul.f32 %v853, %v975
      %v1091 = vmul.f32 %v854, %v975
      %v1092 = vmul.f32 %v855, %v975
      %v1093 = vmul.f32 %v850, %v980
      %v1094 = vmul.f32 %v851, %v980
      %v1095 = vmul.f32 %v852, %v980
      %v1096 = vmul.f32 %v847, %v985
      %v1097 = vmul.f32 %v848, %v985
      %v1098 = vmul.f32 %v849, %v985
      %v1099 = vmul.f32 %v844, %v990
      %v1100 = vmul.f32 %v845, %v990
      %v1101 = vmul.f32 %v846, %v990
      %v1102 = vmul.f32 %v841, %v995
      %v1103 = vmul.f32 %v842, %v995
      %v1104 = vmul.f32 %v843, %v995
      %v1105 = vmul.f32 %v838, %v1000
      %v1106 = vmul.f32 %v839, %v1000
      %v1107 = vmul.f32 %v840, %v1000
      %v1108 = vmul.f32 %v835, %v1005
      %v1109 = vmul.f32 %v836, %v1005
      %v1110 = vmul.f32 %v837, %v1005
      %v1111 = vmul.f32 %v832, %v1010
      %v1112 = vmul.f32 %v833, %v1010
      %v1113 = vmul.f32 %v834, %v1010
      %v1114 = vmul.f32 %v829, %v1015
      %v1115 = vmul.f32 %v830, %v1015
      %v1116 = vmul.f32 %v831, %v1015
      %v1117 = vmul.f32 %v826, %v1020
      %v1118 = vmul.f32 %v827, %v1020
      %v1119 = vmul.f32 %v828, %v1020
      %v1120 = vmul.f32 %v823, %v1025
      %v1121 = vmul.f32 %v824, %v1025
      %v1122 = vmul.f32 %v825, %v1025
      %v1123 = vmul.f32 %v820, %v1030
      %v1124 = vmul.f32 %v821, %v1030
      %v1125 = vmul.f32 %v822, %v1030
      %v1126 = vmul.f32 %v817, %v1035
      %v1127 = vmul.f32 %v818, %v1035
      %v1128 = vmul.f32 %v819, %v1035
      %v1129 = vmul.f32 %v814, %v1040
      %v1130 = vmul.f32 %v815, %v1040
      %v1131 = vmul.f32 %v816, %v1040
      %v1132 = vmul.f32 %v811, %v1045
      %v1133 = vmul.f32 %v812, %v1045
      %v1134 = vmul.f32 %v813, %v1045
      %v1135 = vmul.f32 %v808, %v1050
      %v1136 = vmul.f32 %v809, %v1050
      %v1137 = vmul.f32 %v810, %v1050
      %v1138 = vmul.f32 %v805, %v1055
      %v1139 = vmul.f32 %v806, %v1055
      %v1140 = vmul.f32 %v807, %v1055
      %v1141 = vrot.slane %v634, 1
      %v1142 = vrot.slane %v635, 1
      %v1143 = vrot.slane %v636, 1
      %v1144 = vrot.slane %v637, 1
      %v1145 = vrot.slane %v638, 1
      %v1146 = vrot.slane %v639, 1
      %v1147 = vrot.slane %v640, 1
      %v1148 = vrot.slane %v641, 1
      %v1149 = vrot.slane %v642, 1
      %v1150 = vrot.slane %v643, 1
      %v1151 = vrot.slane %v644, 1
      %v1152 = vrot.slane %v645, 1
      %v1153 = vrot.slane %v646, 1
      %v1154 = vrot.slane %v647, 1
      %v1155 = vrot.slane %v648, 1
      %v1156 = vrot.slane %v649, 1
      %v1157 = vrot.slane %v650, 1
      %v1158 = vrot.slane %v651, 1
      %v1159 = vrot.slane %v652, 1
      %v1160 = vrot.slane %v653, 1
      %v1161 = vrot.slane %v654, 1
      %v1162 = vrot.slane %v655, 1
      %v1163 = vrot.slane %v656, 1
      %v1164 = vrot.slane %v657, 1
      %v1165 = vrot.slane %v658, 1
      %v1166 = vrot.slane %v659, 1
      %v1167 = vrot.slane %v660, 1
      %v1168 = vrot.slane %v661, 1
      %v1169 = vrot.slane %v662, 1
      %v1170 = vrot.slane %v663, 1
      %v1171 = vrot.slane %v664, 1
      %v1172 = vrot.slane %v665, 1
      %v1173 = vrot.slane %v666, 1
      %v1174 = vrot.slane %v667, 1
      %v1175 = vrot.slane %v668, 1
      %v1176 = vrot.slane %v669, 1
      %v1177 = vrot.slane %v670, 1
      %v1178 = vrot.slane %v671, 1
      %v1179 = vrot.slane %v672, 1
      %v1180 = vrot.slane %v673, 1
      %v1181 = vrot.slane %v674, 1
      %v1182 = vrot.slane %v675, 1
      %v1183 = vrot.slane %v676, 1
      %v1184 = vrot.slane %v677, 1
      %v1185 = vrot.slane %v678, 1
      %v1186 = vrot.slane %v679, 1
      %v1187 = vrot.slane %v680, 1
      %v1188 = vrot.slane %v681, 1
      %v1189 = vrot.slane %v682, 1
      %v1190 = vrot.slane %v683, 1
      %v1191 = vrot.slane %v684, 1
      %v1192 = vrot.slane %v685, 1
      %v1193 = vrot.slane %v686, 1
      %v1194 = vrot.slane %v687, 1
      %v1195 = vrot.slane %v688, 1
      %v1196 = vrot.slane %v689, 1
      %v1197 = vrot.slane %v690, 1
      %v1198 = vrot.slane %v691, 1
      %v1199 = vrot.slane %v692, 1
      %v1200 = vrot.slane %v693, 1
      %v1201 = vrot.slane %v694, 1
      %v1202 = vrot.slane %v695, 1
      %v1203 = vrot.slane %v696, 1
      %v1204 = vrot.slane %v697, 1
      %v1205 = vrot.slane %v698, 1
      %v1206 = vrot.slane %v699, 1
      %v1207 = vrot.slane %v700, 1
      %v1208 = vrot.slane %v701, 1
      %v1209 = vrot.slane %v702, 1
      %v1210 = vrot.slane %v703, 1
      %v1211 = vrot.slane %v704, 1
      %v1212 = vrot.slane %v705, 1
      %v1213 = vrot.slane %v706, 1
      %v1214 = vrot.slane %v707, 1
      %v1215 = vrot.slane %v708, 1
      %v1216 = vrot.slane %v709, 1
      %v1217 = vrot.slane %v710, 1
      %v1218 = vrot.slane %v711, 1
      %v1219 = vrot.slane %v712, 1
      %v1220 = vrot.slane %v713, 1
      %v1221 = vrot.slane %v714, 1
      %v1222 = vrot.slane %v715, 1
      %v1223 = vrot.slane %v716, 1
      %v1224 = vrot.slane %v717, 1
      %vm1225 = vcmp.lt.s32.totalorder %v803, 7
      %v1226 = vsel %vm1225, %v1219, %v1222
      %v1227 = vsel %vm1225, %v1220, %v1223
      %v1228 = vsel %vm1225, %v1221, %v1224
      %v1229 = vsel %vm1225, %v1216, %v1219
      %v1230 = vsel %vm1225, %v1217, %v1220
      %v1231 = vsel %vm1225, %v1218, %v1221
      %v1232 = vsel %vm1225, %v1213, %v1216
      %v1233 = vsel %vm1225, %v1214, %v1217
      %v1234 = vsel %vm1225, %v1215, %v1218
      %v1235 = vsel %vm1225, %v1210, %v1213
      %v1236 = vsel %vm1225, %v1211, %v1214
      %v1237 = vsel %vm1225, %v1212, %v1215
      %v1238 = vsel %vm1225, %v1207, %v1210
      %v1239 = vsel %vm1225, %v1208, %v1211
      %v1240 = vsel %vm1225, %v1209, %v1212
      %v1241 = vsel %vm1225, %v1204, %v1207
      %v1242 = vsel %vm1225, %v1205, %v1208
      %v1243 = vsel %vm1225, %v1206, %v1209
      %v1244 = vsel %vm1225, %v1201, %v1204
      %v1245 = vsel %vm1225, %v1202, %v1205
      %v1246 = vsel %vm1225, %v1203, %v1206
      %v1247 = vsel %vm1225, %v1198, %v1201
      %v1248 = vsel %vm1225, %v1199, %v1202
      %v1249 = vsel %vm1225, %v1200, %v1203
      %v1250 = vsel %vm1225, %v1195, %v1198
      %v1251 = vsel %vm1225, %v1196, %v1199
      %v1252 = vsel %vm1225, %v1197, %v1200
      %v1253 = vsel %vm1225, %v1192, %v1195
      %v1254 = vsel %vm1225, %v1193, %v1196
      %v1255 = vsel %vm1225, %v1194, %v1197
      %v1256 = vsel %vm1225, %v1189, %v1192
      %v1257 = vsel %vm1225, %v1190, %v1193
      %v1258 = vsel %vm1225, %v1191, %v1194
      %v1259 = vsel %vm1225, %v1186, %v1189
      %v1260 = vsel %vm1225, %v1187, %v1190
      %v1261 = vsel %vm1225, %v1188, %v1191
      %v1262 = vsel %vm1225, %v1183, %v1186
      %v1263 = vsel %vm1225, %v1184, %v1187
      %v1264 = vsel %vm1225, %v1185, %v1188
      %v1265 = vsel %vm1225, %v1180, %v1183
      %v1266 = vsel %vm1225, %v1181, %v1184
      %v1267 = vsel %vm1225, %v1182, %v1185
      %v1268 = vsel %vm1225, %v1177, %v1180
      %v1269 = vsel %vm1225, %v1178, %v1181
      %v1270 = vsel %vm1225, %v1179, %v1182
      %v1271 = vsel %vm1225, %v1174, %v1177
      %v1272 = vsel %vm1225, %v1175, %v1178
      %v1273 = vsel %vm1225, %v1176, %v1179
      %v1274 = vsel %vm1225, %v1171, %v1174
      %v1275 = vsel %vm1225, %v1172, %v1175
      %v1276 = vsel %vm1225, %v1173, %v1176
      %v1277 = vsel %vm1225, %v1168, %v1171
      %v1278 = vsel %vm1225, %v1169, %v1172
      %v1279 = vsel %vm1225, %v1170, %v1173
      %v1280 = vsel %vm1225, %v1165, %v1168
      %v1281 = vsel %vm1225, %v1166, %v1169
      %v1282 = vsel %vm1225, %v1167, %v1170
      %v1283 = vsel %vm1225, %v1162, %v1165
      %v1284 = vsel %vm1225, %v1163, %v1166
      %v1285 = vsel %vm1225, %v1164, %v1167
      %v1286 = vsel %vm1225, %v1159, %v1162
      %v1287 = vsel %vm1225, %v1160, %v1163
      %v1288 = vsel %vm1225, %v1161, %v1164
      %v1289 = vsel %vm1225, %v1156, %v1159
      %v1290 = vsel %vm1225, %v1157, %v1160
      %v1291 = vsel %vm1225, %v1158, %v1161
      %v1292 = vsel %vm1225, %v1153, %v1156
      %v1293 = vsel %vm1225, %v1154, %v1157
      %v1294 = vsel %vm1225, %v1155, %v1158
      %v1295 = vsel %vm1225, %v1150, %v1153
      %v1296 = vsel %vm1225, %v1151, %v1154
      %v1297 = vsel %vm1225, %v1152, %v1155
      %v1298 = vsel %vm1225, %v1147, %v1150
      %v1299 = vsel %vm1225, %v1148, %v1151
      %v1300 = vsel %vm1225, %v1149, %v1152
      %v1301 = vsel %vm1225, %v1144, %v1147
      %v1302 = vsel %vm1225, %v1145, %v1148
      %v1303 = vsel %vm1225, %v1146, %v1149
      %v1304 = vsel %vm1225, %v1141, %v1144
      %v1305 = vsel %vm1225, %v1142, %v1145
      %v1306 = vsel %vm1225, %v1143, %v1146
      %v1307 = vsel %vm1225, %v1222, %v1141
      %v1308 = vsel %vm1225, %v1223, %v1142
      %v1309 = vsel %vm1225, %v1224, %v1143
      %v1310 = vld [vmem:[%s4] sm:$0xff]
      %v1311 = vld [vmem:[%s4 + $0x8] sm:$0xff]
      %v1312 = vld [vmem:[%s4 + $0x10] sm:$0xff]
      %v1313 = vld [vmem:[%s4 + $0x18] sm:$0xff]
      %v1314 = vld [vmem:[%s4 + $0x20] sm:$0xff]
      %v1315 = vld [vmem:[%s4 + $0x28] sm:$0xff]
      %v1316 = vld [vmem:[%s4 + $0x30] sm:$0xff]
      %v1317 = vld [vmem:[%s4 + $0x38] sm:$0xff]
      %v1318 = vld [vmem:[%s4 + $0x40] sm:$0xff]
      %v1319 = vld [vmem:[%s4 + $0x48] sm:$0xff]
      %v1320 = vld [vmem:[%s4 + $0x50] sm:$0xff]
      %v1321 = vld [vmem:[%s4 + $0x58] sm:$0xff]
      %v1322 = vld [vmem:[%s4 + $0x60] sm:$0xff]
      %v1323 = vld [vmem:[%s4 + $0x68] sm:$0xff]
      %v1324 = vld [vmem:[%s4 + $0x70] sm:$0xff]
      %v1325 = vld [vmem:[%s4 + $0x78] sm:$0xff]
      %v1326 = vld [vmem:[%s4 + $0x80] sm:$0xff]
      %v1327 = vld [vmem:[%s4 + $0x88] sm:$0xff]
      %v1328 = vld [vmem:[%s4 + $0x90] sm:$0xff]
      %v1329 = vld [vmem:[%s4 + $0x98] sm:$0xff]
      %v1330 = vld [vmem:[%s4 + $0xa0] sm:$0xff]
      %v1331 = vld [vmem:[%s4 + $0xa8] sm:$0xff]
      %v1332 = vld [vmem:[%s4 + $0xb0] sm:$0xff]
      %v1333 = vld [vmem:[%s4 + $0xb8] sm:$0xff]
      %v1334 = vld [vmem:[%s4 + $0xc0] sm:$0xff]
      %v1335 = vld [vmem:[%s4 + $0xc8] sm:$0xff]
      %v1336 = vld [vmem:[%s4 + $0xd0] sm:$0xff]
      %v1337 = vld [vmem:[%s4 + $0xd8] sm:$0xff]
      %1339 = vset.pattern.permute.xlu0 0
      %1340 = vperm.xlu0 %1339, %v1310
      %v1341 = vpop.permute.xlu0 %1340
      %1344 = vset.pattern.permute.xlu0 0
      %1345 = vperm.xlu0 %1344, %v1311
      %v1346 = vpop.permute.xlu0 %1345
      %1349 = vset.pattern.permute.xlu0 0
      %1350 = vperm.xlu0 %1349, %v1312
      %v1351 = vpop.permute.xlu0 %1350
      %1354 = vset.pattern.permute.xlu0 0
      %1355 = vperm.xlu0 %1354, %v1313
      %v1356 = vpop.permute.xlu0 %1355
      %1359 = vset.pattern.permute.xlu0 0
      %1360 = vperm.xlu0 %1359, %v1314
      %v1361 = vpop.permute.xlu0 %1360
      %1364 = vset.pattern.permute.xlu0 0
      %1365 = vperm.xlu0 %1364, %v1315
      %v1366 = vpop.permute.xlu0 %1365
      %1369 = vset.pattern.permute.xlu0 0
      %1370 = vperm.xlu0 %1369, %v1316
      %v1371 = vpop.permute.xlu0 %1370
      %1374 = vset.pattern.permute.xlu0 0
      %1375 = vperm.xlu0 %1374, %v1317
      %v1376 = vpop.permute.xlu0 %1375
      %1379 = vset.pattern.permute.xlu0 0
      %1380 = vperm.xlu0 %1379, %v1318
      %v1381 = vpop.permute.xlu0 %1380
      %1384 = vset.pattern.permute.xlu0 0
      %1385 = vperm.xlu0 %1384, %v1319
      %v1386 = vpop.permute.xlu0 %1385
      %1389 = vset.pattern.permute.xlu0 0
      %1390 = vperm.xlu0 %1389, %v1320
      %v1391 = vpop.permute.xlu0 %1390
      %1394 = vset.pattern.permute.xlu0 0
      %1395 = vperm.xlu0 %1394, %v1321
      %v1396 = vpop.permute.xlu0 %1395
      %1399 = vset.pattern.permute.xlu0 0
      %1400 = vperm.xlu0 %1399, %v1322
      %v1401 = vpop.permute.xlu0 %1400
      %1404 = vset.pattern.permute.xlu0 0
      %1405 = vperm.xlu0 %1404, %v1323
      %v1406 = vpop.permute.xlu0 %1405
      %1409 = vset.pattern.permute.xlu0 0
      %1410 = vperm.xlu0 %1409, %v1324
      %v1411 = vpop.permute.xlu0 %1410
      %1414 = vset.pattern.permute.xlu0 0
      %1415 = vperm.xlu0 %1414, %v1325
      %v1416 = vpop.permute.xlu0 %1415
      %1419 = vset.pattern.permute.xlu0 0
      %1420 = vperm.xlu0 %1419, %v1326
      %v1421 = vpop.permute.xlu0 %1420
      %1424 = vset.pattern.permute.xlu0 0
      %1425 = vperm.xlu0 %1424, %v1327
      %v1426 = vpop.permute.xlu0 %1425
      %1429 = vset.pattern.permute.xlu0 0
      %1430 = vperm.xlu0 %1429, %v1328
      %v1431 = vpop.permute.xlu0 %1430
      %1434 = vset.pattern.permute.xlu0 0
      %1435 = vperm.xlu0 %1434, %v1329
      %v1436 = vpop.permute.xlu0 %1435
      %1439 = vset.pattern.permute.xlu0 0
      %1440 = vperm.xlu0 %1439, %v1330
      %v1441 = vpop.permute.xlu0 %1440
      %1444 = vset.pattern.permute.xlu0 0
      %1445 = vperm.xlu0 %1444, %v1331
      %v1446 = vpop.permute.xlu0 %1445
      %1449 = vset.pattern.permute.xlu0 0
      %1450 = vperm.xlu0 %1449, %v1332
      %v1451 = vpop.permute.xlu0 %1450
      %1454 = vset.pattern.permute.xlu0 0
      %1455 = vperm.xlu0 %1454, %v1333
      %v1456 = vpop.permute.xlu0 %1455
      %1459 = vset.pattern.permute.xlu0 0
      %1460 = vperm.xlu0 %1459, %v1334
      %v1461 = vpop.permute.xlu0 %1460
      %1464 = vset.pattern.permute.xlu0 0
      %1465 = vperm.xlu0 %1464, %v1335
      %v1466 = vpop.permute.xlu0 %1465
      %1469 = vset.pattern.permute.xlu0 0
      %1470 = vperm.xlu0 %1469, %v1336
      %v1471 = vpop.permute.xlu0 %1470
      %1474 = vset.pattern.permute.xlu0 0
      %1475 = vperm.xlu0 %1474, %v1337
      %v1476 = vpop.permute.xlu0 %1475
      %v1478 = vmul.f32 %v1304, %v1341
      %v1479 = vmul.f32 %v1305, %v1341
      %v1480 = vmul.f32 %v1306, %v1341
      %v1481 = vmul.f32 %v1301, %v1346
      %v1482 = vmul.f32 %v1302, %v1346
      %v1483 = vmul.f32 %v1303, %v1346
      %v1484 = vmul.f32 %v1298, %v1351
      %v1485 = vmul.f32 %v1299, %v1351
      %v1486 = vmul.f32 %v1300, %v1351
      %v1487 = vmul.f32 %v1295, %v1356
      %v1488 = vmul.f32 %v1296, %v1356
      %v1489 = vmul.f32 %v1297, %v1356
      %v1490 = vmul.f32 %v1292, %v1361
      %v1491 = vmul.f32 %v1293, %v1361
      %v1492 = vmul.f32 %v1294, %v1361
      %v1493 = vmul.f32 %v1289, %v1366
      %v1494 = vmul.f32 %v1290, %v1366
      %v1495 = vmul.f32 %v1291, %v1366
      %v1496 = vmul.f32 %v1286, %v1371
      %v1497 = vmul.f32 %v1287, %v1371
      %v1498 = vmul.f32 %v1288, %v1371
      %v1499 = vmul.f32 %v1283, %v1376
      %v1500 = vmul.f32 %v1284, %v1376
      %v1501 = vmul.f32 %v1285, %v1376
      %v1502 = vmul.f32 %v1280, %v1381
      %v1503 = vmul.f32 %v1281, %v1381
      %v1504 = vmul.f32 %v1282, %v1381
      %v1505 = vmul.f32 %v1277, %v1386
      %v1506 = vmul.f32 %v1278, %v1386
      %v1507 = vmul.f32 %v1279, %v1386
      %v1508 = vmul.f32 %v1274, %v1391
      %v1509 = vmul.f32 %v1275, %v1391
      %v1510 = vmul.f32 %v1276, %v1391
      %v1511 = vmul.f32 %v1271, %v1396
      %v1512 = vmul.f32 %v1272, %v1396
      %v1513 = vmul.f32 %v1273, %v1396
      %v1514 = vmul.f32 %v1268, %v1401
      %v1515 = vmul.f32 %v1269, %v1401
      %v1516 = vmul.f32 %v1270, %v1401
      %v1517 = vmul.f32 %v1265, %v1406
      %v1518 = vmul.f32 %v1266, %v1406
      %v1519 = vmul.f32 %v1267, %v1406
      %v1520 = vmul.f32 %v1262, %v1411
      %v1521 = vmul.f32 %v1263, %v1411
      %v1522 = vmul.f32 %v1264, %v1411
      %v1523 = vmul.f32 %v1259, %v1416
      %v1524 = vmul.f32 %v1260, %v1416
      %v1525 = vmul.f32 %v1261, %v1416
      %v1526 = vmul.f32 %v1256, %v1421
      %v1527 = vmul.f32 %v1257, %v1421
      %v1528 = vmul.f32 %v1258, %v1421
      %v1529 = vmul.f32 %v1253, %v1426
      %v1530 = vmul.f32 %v1254, %v1426
      %v1531 = vmul.f32 %v1255, %v1426
      %v1532 = vmul.f32 %v1250, %v1431
      %v1533 = vmul.f32 %v1251, %v1431
      %v1534 = vmul.f32 %v1252, %v1431
      %v1535 = vmul.f32 %v1247, %v1436
      %v1536 = vmul.f32 %v1248, %v1436
      %v1537 = vmul.f32 %v1249, %v1436
      %v1538 = vmul.f32 %v1244, %v1441
      %v1539 = vmul.f32 %v1245, %v1441
      %v1540 = vmul.f32 %v1246, %v1441
      %v1541 = vmul.f32 %v1241, %v1446
      %v1542 = vmul.f32 %v1242, %v1446
      %v1543 = vmul.f32 %v1243, %v1446
      %v1544 = vmul.f32 %v1238, %v1451
      %v1545 = vmul.f32 %v1239, %v1451
      %v1546 = vmul.f32 %v1240, %v1451
      %v1547 = vmul.f32 %v1235, %v1456
      %v1548 = vmul.f32 %v1236, %v1456
      %v1549 = vmul.f32 %v1237, %v1456
      %v1550 = vmul.f32 %v1232, %v1461
      %v1551 = vmul.f32 %v1233, %v1461
      %v1552 = vmul.f32 %v1234, %v1461
      %v1553 = vmul.f32 %v1229, %v1466
      %v1554 = vmul.f32 %v1230, %v1466
      %v1555 = vmul.f32 %v1231, %v1466
      %v1556 = vmul.f32 %v1226, %v1471
      %v1557 = vmul.f32 %v1227, %v1471
      %v1558 = vmul.f32 %v1228, %v1471
      %v1559 = vmul.f32 %v1307, %v1476
      %v1560 = vmul.f32 %v1308, %v1476
      %v1561 = vmul.f32 %v1309, %v1476
      %v1562 = vpack.c.bf16 %v1060, %v1057
      %v1563 = vpack.c.bf16 %v1061, %v1058
      %v1564 = vpack.c.bf16 %v1062, %v1059
      %v1565 = vpack.c.bf16 %v1066, %v1063
      %v1566 = vpack.c.bf16 %v1067, %v1064
      %v1567 = vpack.c.bf16 %v1068, %v1065
      %v1568 = vpack.c.bf16 %v1072, %v1069
      %v1569 = vpack.c.bf16 %v1073, %v1070
      %v1570 = vpack.c.bf16 %v1074, %v1071
      %v1571 = vpack.c.bf16 %v1078, %v1075
      %v1572 = vpack.c.bf16 %v1079, %v1076
      %v1573 = vpack.c.bf16 %v1080, %v1077
      %v1574 = vpack.c.bf16 %v1084, %v1081
      %v1575 = vpack.c.bf16 %v1085, %v1082
      %v1576 = vpack.c.bf16 %v1086, %v1083
      %v1577 = vpack.c.bf16 %v1090, %v1087
      %v1578 = vpack.c.bf16 %v1091, %v1088
      %v1579 = vpack.c.bf16 %v1092, %v1089
      %v1580 = vpack.c.bf16 %v1096, %v1093
      %v1581 = vpack.c.bf16 %v1097, %v1094
      %v1582 = vpack.c.bf16 %v1098, %v1095
      %v1583 = vpack.c.bf16 %v1102, %v1099
      %v1584 = vpack.c.bf16 %v1103, %v1100
      %v1585 = vpack.c.bf16 %v1104, %v1101
      %v1586 = vpack.c.bf16 %v1108, %v1105
      %v1587 = vpack.c.bf16 %v1109, %v1106
      %v1588 = vpack.c.bf16 %v1110, %v1107
      %v1589 = vpack.c.bf16 %v1114, %v1111
      %v1590 = vpack.c.bf16 %v1115, %v1112
      %v1591 = vpack.c.bf16 %v1116, %v1113
      %v1592 = vpack.c.bf16 %v1120, %v1117
      %v1593 = vpack.c.bf16 %v1121, %v1118
      %v1594 = vpack.c.bf16 %v1122, %v1119
      %v1595 = vpack.c.bf16 %v1126, %v1123
      %v1596 = vpack.c.bf16 %v1127, %v1124
      %v1597 = vpack.c.bf16 %v1128, %v1125
      %v1598 = vpack.c.bf16 %v1132, %v1129
      %v1599 = vpack.c.bf16 %v1133, %v1130
      %v1600 = vpack.c.bf16 %v1134, %v1131
      %v1601 = vpack.c.bf16 %v1138, %v1135
      %v1602 = vpack.c.bf16 %v1139, %v1136
      %v1603 = vpack.c.bf16 %v1140, %v1137
      %v1604 = vld [vmem:[%s1] sm:$0xff]
      %v1605 = vld [vmem:[%s1 + $0x8] sm:$0xf]
      %v1606 = vld [vmem:[%s1 + $0xc] sm:$0xff]
      %v1607 = vld [vmem:[%s1 + $0x14] sm:$0xf]
      %v1608 = vld [vmem:[%s1 + $0x18] sm:$0xff]
      %v1609 = vld [vmem:[%s1 + $0x20] sm:$0xf]
      %v1610 = vld [vmem:[%s1 + $0x24] sm:$0xff]
      %v1611 = vld [vmem:[%s1 + $0x2c] sm:$0xf]
      %v1612 = vld [vmem:[%s1 + $0x30] sm:$0xff]
      %v1613 = vld [vmem:[%s1 + $0x38] sm:$0xf]
      %v1614 = vld [vmem:[%s1 + $0x3c] sm:$0xff]
      %v1615 = vld [vmem:[%s1 + $0x44] sm:$0xf]
      %v1616 = vld [vmem:[%s1 + $0x48] sm:$0xff]
      %v1617 = vld [vmem:[%s1 + $0x50] sm:$0xf]
      %v1618 = vld [vmem:[%s1 + $0x54] sm:$0xff]
      %v1619 = vld [vmem:[%s1 + $0x5c] sm:$0xf]
      %v1620 = vld [vmem:[%s1 + $0x60] sm:$0xff]
      %v1621 = vld [vmem:[%s1 + $0x68] sm:$0xf]
      %v1622 = vld [vmem:[%s1 + $0x6c] sm:$0xff]
      %v1623 = vld [vmem:[%s1 + $0x74] sm:$0xf]
      %v1624 = vld [vmem:[%s1 + $0x78] sm:$0xff]
      %v1625 = vld [vmem:[%s1 + $0x80] sm:$0xf]
      %v1626 = vld [vmem:[%s1 + $0x84] sm:$0xff]
      %v1627 = vld [vmem:[%s1 + $0x8c] sm:$0xf]
      %v1628 = vld [vmem:[%s1 + $0x90] sm:$0xff]
      %v1629 = vld [vmem:[%s1 + $0x98] sm:$0xf]
      %v1630 = vld [vmem:[%s1 + $0x9c] sm:$0xff]
      %v1631 = vld [vmem:[%s1 + $0xa4] sm:$0xf]
      %v1632 = vld [vmem:[%s1 + $0xa8] sm:$0xff]
      %v1633 = vld [vmem:[%s1 + $0xb0] sm:$0xf]
      %v1634 = vld [vmem:[%s1 + $0xb4] sm:$0xff]
      %v1635 = vld [vmem:[%s1 + $0xbc] sm:$0xf]
      %v1636 = vld [vmem:[%s1 + $0xc0] sm:$0xff]
      %v1637 = vld [vmem:[%s1 + $0xc8] sm:$0xf]
      %v1638 = vld [vmem:[%s1 + $0xcc] sm:$0xff]
      %v1639 = vld [vmem:[%s1 + $0xd4] sm:$0xf]
      %v1640 = vld [vmem:[%s1 + $0xd8] sm:$0xff]
      %v1641 = vld [vmem:[%s1 + $0xe0] sm:$0xf]
      %v1642 = vld [vmem:[%s1 + $0xe4] sm:$0xff]
      %v1643 = vld [vmem:[%s1 + $0xec] sm:$0xf]
      %v1644 = vld [vmem:[%s1 + $0xf0] sm:$0xff]
      %v1645 = vld [vmem:[%s1 + $0xf8] sm:$0xf]
      %v1646 = vld [vmem:[%s1 + $0xfc] sm:$0xff]
      %v1647 = vld [vmem:[%s1 + $0x104] sm:$0xf]
      %v1648 = vld [vmem:[%s1 + $0x108] sm:$0xff]
      %v1649 = vld [vmem:[%s1 + $0x110] sm:$0xf]
      %v1650 = vld [vmem:[%s1 + $0x114] sm:$0xff]
      %v1651 = vld [vmem:[%s1 + $0x11c] sm:$0xf]
      %v1652 = vld [vmem:[%s1 + $0x120] sm:$0xff]
      %v1653 = vld [vmem:[%s1 + $0x128] sm:$0xf]
      %v1654 = vld [vmem:[%s1 + $0x12c] sm:$0xff]
      %v1655 = vld [vmem:[%s1 + $0x134] sm:$0xf]
      %v1656 = vld [vmem:[%s1 + $0x138] sm:$0xff]
      %v1657 = vld [vmem:[%s1 + $0x140] sm:$0xf]
      %v1658 = vld [vmem:[%s1 + $0x144] sm:$0xff]
      %v1659 = vld [vmem:[%s1 + $0x14c] sm:$0xf]
      %v1660 = vld [vmem:[%s1 + $0x150] sm:$0xff]
      %v1661 = vld [vmem:[%s1 + $0x158] sm:$0xf]
      %v1662 = vld [vmem:[%s1 + $0x15c] sm:$0xff]
      %v1663 = vld [vmem:[%s1 + $0x164] sm:$0xf]
      %v1664 = vld [vmem:[%s1 + $0x168] sm:$0xff]
      %v1665 = vld [vmem:[%s1 + $0x170] sm:$0xf]
      %v1666 = vld [vmem:[%s1 + $0x174] sm:$0xff]
      %v1667 = vld [vmem:[%s1 + $0x17c] sm:$0xf]
      %v1668 = vld [vmem:[%s1 + $0x180] sm:$0xff]
      %v1669 = vld [vmem:[%s1 + $0x188] sm:$0xf]
      %v1670 = vld [vmem:[%s1 + $0x18c] sm:$0xff]
      %v1671 = vld [vmem:[%s1 + $0x194] sm:$0xf]
      %v1672 = vld [vmem:[%s1 + $0x198] sm:$0xff]
      %v1673 = vld [vmem:[%s1 + $0x1a0] sm:$0xf]
      %v1674 = vld [vmem:[%s1 + $0x1a4] sm:$0xff]
      %v1675 = vld [vmem:[%s1 + $0x1ac] sm:$0xf]
      %v1676 = vld [vmem:[%s1 + $0x1b0] sm:$0xff]
      %v1677 = vld [vmem:[%s1 + $0x1b8] sm:$0xf]
      %v1678 = vld [vmem:[%s1 + $0x1bc] sm:$0xff]
      %v1679 = vld [vmem:[%s1 + $0x1c4] sm:$0xf]
      %v1680 = vld [vmem:[%s1 + $0x1c8] sm:$0xff]
      %v1681 = vld [vmem:[%s1 + $0x1d0] sm:$0xf]
      %v1682 = vld [vmem:[%s1 + $0x1d4] sm:$0xff]
      %v1683 = vld [vmem:[%s1 + $0x1dc] sm:$0xf]
      %v1684 = vld [vmem:[%s1 + $0x1e0] sm:$0xff]
      %v1685 = vld [vmem:[%s1 + $0x1e8] sm:$0xf]
      %v1686 = vld [vmem:[%s1 + $0x1ec] sm:$0xff]
      %v1687 = vld [vmem:[%s1 + $0x1f4] sm:$0xf]
      %v1688 = vpack.c.bf16 %v637, %v634
      %v1689 = vpack.c.bf16 %v638, %v635
      %v1690 = vpack.c.bf16 %v639, %v636
      %v1691 = vpack.c.bf16 %v643, %v640
      %v1692 = vpack.c.bf16 %v644, %v641
      %v1693 = vpack.c.bf16 %v645, %v642
      %v1694 = vpack.c.bf16 %v649, %v646
      %v1695 = vpack.c.bf16 %v650, %v647
      %v1696 = vpack.c.bf16 %v651, %v648
      %v1697 = vpack.c.bf16 %v655, %v652
      %v1698 = vpack.c.bf16 %v656, %v653
      %v1699 = vpack.c.bf16 %v657, %v654
      %v1700 = vpack.c.bf16 %v661, %v658
      %v1701 = vpack.c.bf16 %v662, %v659
      %v1702 = vpack.c.bf16 %v663, %v660
      %v1703 = vpack.c.bf16 %v667, %v664
      %v1704 = vpack.c.bf16 %v668, %v665
      %v1705 = vpack.c.bf16 %v669, %v666
      %v1706 = vpack.c.bf16 %v673, %v670
      %v1707 = vpack.c.bf16 %v674, %v671
      %v1708 = vpack.c.bf16 %v675, %v672
      %v1709 = vpack.c.bf16 %v679, %v676
      %v1710 = vpack.c.bf16 %v680, %v677
      %v1711 = vpack.c.bf16 %v681, %v678
      %v1712 = vpack.c.bf16 %v685, %v682
      %v1713 = vpack.c.bf16 %v686, %v683
      %v1714 = vpack.c.bf16 %v687, %v684
      %v1715 = vpack.c.bf16 %v691, %v688
      %v1716 = vpack.c.bf16 %v692, %v689
      %v1717 = vpack.c.bf16 %v693, %v690
      %v1718 = vpack.c.bf16 %v697, %v694
      %v1719 = vpack.c.bf16 %v698, %v695
      %v1720 = vpack.c.bf16 %v699, %v696
      %v1721 = vpack.c.bf16 %v703, %v700
      %v1722 = vpack.c.bf16 %v704, %v701
      %v1723 = vpack.c.bf16 %v705, %v702
      %v1724 = vpack.c.bf16 %v709, %v706
      %v1725 = vpack.c.bf16 %v710, %v707
      %v1726 = vpack.c.bf16 %v711, %v708
      %v1727 = vpack.c.bf16 %v715, %v712
      %v1728 = vpack.c.bf16 %v716, %v713
      %v1729 = vpack.c.bf16 %v717, %v714
      %s1730 = scalar_lea.vmem %s1, 504
      %v1731 = vld [vmem:[%s1730] sm:$0xff]
      %v1732 = vld [vmem:[%s1730 + $0x8] sm:$0xf]
      %v1733 = vld [vmem:[%s1730 + $0xc] sm:$0xff]
      %v1734 = vld [vmem:[%s1730 + $0x14] sm:$0xf]
      %v1735 = vld [vmem:[%s1730 + $0x18] sm:$0xff]
      %v1736 = vld [vmem:[%s1730 + $0x20] sm:$0xf]
      %v1737 = vld [vmem:[%s1730 + $0x24] sm:$0xff]
      %v1738 = vld [vmem:[%s1730 + $0x2c] sm:$0xf]
      %v1739 = vld [vmem:[%s1730 + $0x30] sm:$0xff]
      %v1740 = vld [vmem:[%s1730 + $0x38] sm:$0xf]
      %v1741 = vld [vmem:[%s1730 + $0x3c] sm:$0xff]
      %v1742 = vld [vmem:[%s1730 + $0x44] sm:$0xf]
      %v1743 = vld [vmem:[%s1730 + $0x48] sm:$0xff]
      %v1744 = vld [vmem:[%s1730 + $0x50] sm:$0xf]
      %v1745 = vld [vmem:[%s1730 + $0x54] sm:$0xff]
      %v1746 = vld [vmem:[%s1730 + $0x5c] sm:$0xf]
      %v1747 = vld [vmem:[%s1730 + $0x60] sm:$0xff]
      %v1748 = vld [vmem:[%s1730 + $0x68] sm:$0xf]
      %v1749 = vld [vmem:[%s1730 + $0x6c] sm:$0xff]
      %v1750 = vld [vmem:[%s1730 + $0x74] sm:$0xf]
      %v1751 = vld [vmem:[%s1730 + $0x78] sm:$0xff]
      %v1752 = vld [vmem:[%s1730 + $0x80] sm:$0xf]
      %v1753 = vld [vmem:[%s1730 + $0x84] sm:$0xff]
      %v1754 = vld [vmem:[%s1730 + $0x8c] sm:$0xf]
      %v1755 = vld [vmem:[%s1730 + $0x90] sm:$0xff]
      %v1756 = vld [vmem:[%s1730 + $0x98] sm:$0xf]
      %v1757 = vld [vmem:[%s1730 + $0x9c] sm:$0xff]
      %v1758 = vld [vmem:[%s1730 + $0xa4] sm:$0xf]
      %v1759 = vld [vmem:[%s1730 + $0xa8] sm:$0xff]
      %v1760 = vld [vmem:[%s1730 + $0xb0] sm:$0xf]
      %v1761 = vld [vmem:[%s1730 + $0xb4] sm:$0xff]
      %v1762 = vld [vmem:[%s1730 + $0xbc] sm:$0xf]
      %v1763 = vld [vmem:[%s1730 + $0xc0] sm:$0xff]
      %v1764 = vld [vmem:[%s1730 + $0xc8] sm:$0xf]
      %v1765 = vld [vmem:[%s1730 + $0xcc] sm:$0xff]
      %v1766 = vld [vmem:[%s1730 + $0xd4] sm:$0xf]
      %v1767 = vld [vmem:[%s1730 + $0xd8] sm:$0xff]
      %v1768 = vld [vmem:[%s1730 + $0xe0] sm:$0xf]
      %v1769 = vld [vmem:[%s1730 + $0xe4] sm:$0xff]
      %v1770 = vld [vmem:[%s1730 + $0xec] sm:$0xf]
      %v1771 = vld [vmem:[%s1730 + $0xf0] sm:$0xff]
      %v1772 = vld [vmem:[%s1730 + $0xf8] sm:$0xf]
      %v1773 = vld [vmem:[%s1730 + $0xfc] sm:$0xff]
      %v1774 = vld [vmem:[%s1730 + $0x104] sm:$0xf]
      %v1775 = vld [vmem:[%s1730 + $0x108] sm:$0xff]
      %v1776 = vld [vmem:[%s1730 + $0x110] sm:$0xf]
      %v1777 = vld [vmem:[%s1730 + $0x114] sm:$0xff]
      %v1778 = vld [vmem:[%s1730 + $0x11c] sm:$0xf]
      %v1779 = vld [vmem:[%s1730 + $0x120] sm:$0xff]
      %v1780 = vld [vmem:[%s1730 + $0x128] sm:$0xf]
      %v1781 = vld [vmem:[%s1730 + $0x12c] sm:$0xff]
      %v1782 = vld [vmem:[%s1730 + $0x134] sm:$0xf]
      %v1783 = vld [vmem:[%s1730 + $0x138] sm:$0xff]
      %v1784 = vld [vmem:[%s1730 + $0x140] sm:$0xf]
      %v1785 = vld [vmem:[%s1730 + $0x144] sm:$0xff]
      %v1786 = vld [vmem:[%s1730 + $0x14c] sm:$0xf]
      %v1787 = vld [vmem:[%s1730 + $0x150] sm:$0xff]
      %v1788 = vld [vmem:[%s1730 + $0x158] sm:$0xf]
      %v1789 = vld [vmem:[%s1730 + $0x15c] sm:$0xff]
      %v1790 = vld [vmem:[%s1730 + $0x164] sm:$0xf]
      %v1791 = vld [vmem:[%s1730 + $0x168] sm:$0xff]
      %v1792 = vld [vmem:[%s1730 + $0x170] sm:$0xf]
      %v1793 = vld [vmem:[%s1730 + $0x174] sm:$0xff]
      %v1794 = vld [vmem:[%s1730 + $0x17c] sm:$0xf]
      %v1795 = vld [vmem:[%s1730 + $0x180] sm:$0xff]
      %v1796 = vld [vmem:[%s1730 + $0x188] sm:$0xf]
      %v1797 = vld [vmem:[%s1730 + $0x18c] sm:$0xff]
      %v1798 = vld [vmem:[%s1730 + $0x194] sm:$0xf]
      %v1799 = vld [vmem:[%s1730 + $0x198] sm:$0xff]
      %v1800 = vld [vmem:[%s1730 + $0x1a0] sm:$0xf]
      %v1801 = vld [vmem:[%s1730 + $0x1a4] sm:$0xff]
      %v1802 = vld [vmem:[%s1730 + $0x1ac] sm:$0xf]
      %v1803 = vld [vmem:[%s1730 + $0x1b0] sm:$0xff]
      %v1804 = vld [vmem:[%s1730 + $0x1b8] sm:$0xf]
      %v1805 = vld [vmem:[%s1730 + $0x1bc] sm:$0xff]
      %v1806 = vld [vmem:[%s1730 + $0x1c4] sm:$0xf]
      %v1807 = vld [vmem:[%s1730 + $0x1c8] sm:$0xff]
      %v1808 = vld [vmem:[%s1730 + $0x1d0] sm:$0xf]
      %v1809 = vld [vmem:[%s1730 + $0x1d4] sm:$0xff]
      %v1810 = vld [vmem:[%s1730 + $0x1dc] sm:$0xf]
      %v1811 = vld [vmem:[%s1730 + $0x1e0] sm:$0xff]
      %v1812 = vld [vmem:[%s1730 + $0x1e8] sm:$0xf]
      %v1813 = vld [vmem:[%s1730 + $0x1ec] sm:$0xff]
      %v1814 = vld [vmem:[%s1730 + $0x1f4] sm:$0xf]
      %v1899 = vunpack.c.l.b16 %v1731
      %v1900 = vunpack.c.h.b16 %v1731
      %v1901 = vunpack.c.l.b16 %v1732
      %v1902 = vunpack.c.l.b16 %v1733
      %v1903 = vunpack.c.h.b16 %v1733
      %v1904 = vunpack.c.l.b16 %v1734
      %v1905 = vunpack.c.l.b16 %v1735
      %v1906 = vunpack.c.h.b16 %v1735
      %v1907 = vunpack.c.l.b16 %v1736
      %v1908 = vunpack.c.l.b16 %v1737
      %v1909 = vunpack.c.h.b16 %v1737
      %v1910 = vunpack.c.l.b16 %v1738
      %v1911 = vunpack.c.l.b16 %v1739
      %v1912 = vunpack.c.h.b16 %v1739
      %v1913 = vunpack.c.l.b16 %v1740
      %v1914 = vunpack.c.l.b16 %v1741
      %v1915 = vunpack.c.h.b16 %v1741
      %v1916 = vunpack.c.l.b16 %v1742
      %v1917 = vunpack.c.l.b16 %v1743
      %v1918 = vunpack.c.h.b16 %v1743
      %v1919 = vunpack.c.l.b16 %v1744
      %v1920 = vunpack.c.l.b16 %v1745
      %v1921 = vunpack.c.h.b16 %v1745
      %v1922 = vunpack.c.l.b16 %v1746
      %v1923 = vunpack.c.l.b16 %v1747
      %v1924 = vunpack.c.h.b16 %v1747
      %v1925 = vunpack.c.l.b16 %v1748
      %v1926 = vunpack.c.l.b16 %v1749
      %v1927 = vunpack.c.h.b16 %v1749
      %v1928 = vunpack.c.l.b16 %v1750
      %v1929 = vunpack.c.l.b16 %v1751
      %v1930 = vunpack.c.h.b16 %v1751
      %v1931 = vunpack.c.l.b16 %v1752
      %v1932 = vunpack.c.l.b16 %v1753
      %v1933 = vunpack.c.h.b16 %v1753
      %v1934 = vunpack.c.l.b16 %v1754
      %v1935 = vunpack.c.l.b16 %v1755
      %v1936 = vunpack.c.h.b16 %v1755
      %v1937 = vunpack.c.l.b16 %v1756
      %v1938 = vunpack.c.l.b16 %v1757
      %v1939 = vunpack.c.h.b16 %v1757
      %v1940 = vunpack.c.l.b16 %v1758
      %v1941 = vunpack.c.l.b16 %v1759
      %v1942 = vunpack.c.h.b16 %v1759
      %v1943 = vunpack.c.l.b16 %v1760
      %v1944 = vunpack.c.l.b16 %v1761
      %v1945 = vunpack.c.h.b16 %v1761
      %v1946 = vunpack.c.l.b16 %v1762
      %v1947 = vunpack.c.l.b16 %v1763
      %v1948 = vunpack.c.h.b16 %v1763
      %v1949 = vunpack.c.l.b16 %v1764
      %v1950 = vunpack.c.l.b16 %v1765
      %v1951 = vunpack.c.h.b16 %v1765
      %v1952 = vunpack.c.l.b16 %v1766
      %v1953 = vunpack.c.l.b16 %v1767
      %v1954 = vunpack.c.h.b16 %v1767
      %v1955 = vunpack.c.l.b16 %v1768
      %v1956 = vunpack.c.l.b16 %v1769
      %v1957 = vunpack.c.h.b16 %v1769
      %v1958 = vunpack.c.l.b16 %v1770
      %v1959 = vunpack.c.l.b16 %v1771
      %v1960 = vunpack.c.h.b16 %v1771
      %v1961 = vunpack.c.l.b16 %v1772
      %v1962 = vunpack.c.l.b16 %v1773
      %v1963 = vunpack.c.h.b16 %v1773
      %v1964 = vunpack.c.l.b16 %v1774
      %v1965 = vunpack.c.l.b16 %v1775
      %v1966 = vunpack.c.h.b16 %v1775
      %v1967 = vunpack.c.l.b16 %v1776
      %v1968 = vunpack.c.l.b16 %v1777
      %v1969 = vunpack.c.h.b16 %v1777
      %v1970 = vunpack.c.l.b16 %v1778
      %v1971 = vunpack.c.l.b16 %v1779
      %v1972 = vunpack.c.h.b16 %v1779
      %v1973 = vunpack.c.l.b16 %v1780
      %v1974 = vunpack.c.l.b16 %v1781
      %v1975 = vunpack.c.h.b16 %v1781
      %v1976 = vunpack.c.l.b16 %v1782
      %v1977 = vunpack.c.l.b16 %v1783
      %v1978 = vunpack.c.h.b16 %v1783
      %v1979 = vunpack.c.l.b16 %v1784
      %v1980 = vunpack.c.l.b16 %v1785
      %v1981 = vunpack.c.h.b16 %v1785
      %v1982 = vunpack.c.l.b16 %v1786
      %v1983 = vunpack.c.l.b16 %v1787
      %v1984 = vunpack.c.h.b16 %v1787
      %v1985 = vunpack.c.l.b16 %v1788
      %v1986 = vunpack.c.l.b16 %v1789
      %v1987 = vunpack.c.h.b16 %v1789
      %v1988 = vunpack.c.l.b16 %v1790
      %v1989 = vunpack.c.l.b16 %v1791
      %v1990 = vunpack.c.h.b16 %v1791
      %v1991 = vunpack.c.l.b16 %v1792
      %v1992 = vunpack.c.l.b16 %v1793
      %v1993 = vunpack.c.h.b16 %v1793
      %v1994 = vunpack.c.l.b16 %v1794
      %v1995 = vunpack.c.l.b16 %v1795
      %v1996 = vunpack.c.h.b16 %v1795
      %v1997 = vunpack.c.l.b16 %v1796
      %v1998 = vunpack.c.l.b16 %v1797
      %v1999 = vunpack.c.h.b16 %v1797
      %v2000 = vunpack.c.l.b16 %v1798
      %v2001 = vunpack.c.l.b16 %v1799
      %v2002 = vunpack.c.h.b16 %v1799
      %v2003 = vunpack.c.l.b16 %v1800
      %v2004 = vunpack.c.l.b16 %v1801
      %v2005 = vunpack.c.h.b16 %v1801
      %v2006 = vunpack.c.l.b16 %v1802
      %v2007 = vunpack.c.l.b16 %v1803
      %v2008 = vunpack.c.h.b16 %v1803
      %v2009 = vunpack.c.l.b16 %v1804
      %v2010 = vunpack.c.l.b16 %v1805
      %v2011 = vunpack.c.h.b16 %v1805
      %v2012 = vunpack.c.l.b16 %v1806
      %v2013 = vunpack.c.l.b16 %v1807
      %v2014 = vunpack.c.h.b16 %v1807
      %v2015 = vunpack.c.l.b16 %v1808
      %v2016 = vunpack.c.l.b16 %v1809
      %v2017 = vunpack.c.h.b16 %v1809
      %v2018 = vunpack.c.l.b16 %v1810
      %v2019 = vunpack.c.l.b16 %v1811
      %v2020 = vunpack.c.h.b16 %v1811
      %v2021 = vunpack.c.l.b16 %v1812
      %v2022 = vunpack.c.l.b16 %v1813
      %v2023 = vunpack.c.h.b16 %v1813
      %v2024 = vunpack.c.l.b16 %v1814
      %v2025 = vpack.c.b16 %v1902, %v1899
      %v2026 = vpack.c.b16 %v1903, %v1900
      %v2027 = vpack.c.b16 %v1904, %v1901
      %v2028 = vpack.c.b16 %v1908, %v1905
      %v2029 = vpack.c.b16 %v1909, %v1906
      %v2030 = vpack.c.b16 %v1910, %v1907
      %v2031 = vpack.c.b16 %v1914, %v1911
      %v2032 = vpack.c.b16 %v1915, %v1912
      %v2033 = vpack.c.b16 %v1916, %v1913
      %v2034 = vpack.c.b16 %v1920, %v1917
      %v2035 = vpack.c.b16 %v1921, %v1918
      %v2036 = vpack.c.b16 %v1922, %v1919
      %v2037 = vpack.c.b16 %v1926, %v1923
      %v2038 = vpack.c.b16 %v1927, %v1924
      %v2039 = vpack.c.b16 %v1928, %v1925
      %v2040 = vpack.c.b16 %v1932, %v1929
      %v2041 = vpack.c.b16 %v1933, %v1930
      %v2042 = vpack.c.b16 %v1934, %v1931
      %v2043 = vpack.c.b16 %v1938, %v1935
      %v2044 = vpack.c.b16 %v1939, %v1936
      %v2045 = vpack.c.b16 %v1940, %v1937
      %v2046 = vpack.c.b16 %v1944, %v1941
      %v2047 = vpack.c.b16 %v1945, %v1942
      %v2048 = vpack.c.b16 %v1946, %v1943
      %v2049 = vpack.c.b16 %v1950, %v1947
      %v2050 = vpack.c.b16 %v1951, %v1948
      %v2051 = vpack.c.b16 %v1952, %v1949
      %v2052 = vpack.c.b16 %v1956, %v1953
      %v2053 = vpack.c.b16 %v1957, %v1954
      %v2054 = vpack.c.b16 %v1958, %v1955
      %v2055 = vpack.c.b16 %v1962, %v1959
      %v2056 = vpack.c.b16 %v1963, %v1960
      %v2057 = vpack.c.b16 %v1964, %v1961
      %v2058 = vpack.c.b16 %v1968, %v1965
      %v2059 = vpack.c.b16 %v1969, %v1966
      %v2060 = vpack.c.b16 %v1970, %v1967
      %v2061 = vpack.c.b16 %v1974, %v1971
      %v2062 = vpack.c.b16 %v1975, %v1972
      %v2063 = vpack.c.b16 %v1976, %v1973
      %v2064 = vpack.c.b16 %v1980, %v1977
      %v2065 = vpack.c.b16 %v1981, %v1978
      %v2066 = vpack.c.b16 %v1982, %v1979
      %v2067 = vpack.c.b16 %v1986, %v1983
      %v2068 = vpack.c.b16 %v1987, %v1984
      %v2069 = vpack.c.b16 %v1988, %v1985
      %v2070 = vpack.c.b16 %v1992, %v1989
      %v2071 = vpack.c.b16 %v1993, %v1990
      %v2072 = vpack.c.b16 %v1994, %v1991
      %v2073 = vpack.c.b16 %v1998, %v1995
      %v2074 = vpack.c.b16 %v1999, %v1996
      %v2075 = vpack.c.b16 %v2000, %v1997
      %v2076 = vpack.c.b16 %v2004, %v2001
      %v2077 = vpack.c.b16 %v2005, %v2002
      %v2078 = vpack.c.b16 %v2006, %v2003
      %v2079 = vpack.c.b16 %v2010, %v2007
      %v2080 = vpack.c.b16 %v2011, %v2008
      %v2081 = vpack.c.b16 %v2012, %v2009
      %v2082 = vpack.c.b16 %v2016, %v2013
      %v2083 = vpack.c.b16 %v2017, %v2014
      %v2084 = vpack.c.b16 %v2018, %v2015
      %v2085 = vpack.c.b16 %v2022, %v2019
      %v2086 = vpack.c.b16 %v2023, %v2020
      %v2087 = vpack.c.b16 %v2024, %v2021
      %vm2151 = vcmask 654336
      %v2153 = vsel %vm2151, %v1690, 0
      %v2156 = vsel %vm2151, %v1693, 0
      %v2159 = vsel %vm2151, %v1696, 0
      %v2162 = vsel %vm2151, %v1699, 0
      %v2165 = vsel %vm2151, %v1702, 0
      %v2168 = vsel %vm2151, %v1705, 0
      %v2171 = vsel %vm2151, %v1708, 0
      %v2174 = vsel %vm2151, %v1711, 0
      %v2177 = vsel %vm2151, %v1714, 0
      %v2180 = vsel %vm2151, %v1717, 0
      %v2183 = vsel %vm2151, %v1720, 0
      %v2186 = vsel %vm2151, %v1723, 0
      %v2189 = vsel %vm2151, %v1726, 0
      %v2192 = vsel %vm2151, %v1729, 0
      %2194 = vmatprep.subr.bf16.mxu0 %v2026
      %2195 = vmatpush1.bf16.msra.mxu0 %v2025
      %2196 = vmatprep.subr.bf16.mxu0 %v2029
      %2197 = vmatpush1.bf16.msra.mxu0 %v2028
      %2198 = vmatprep.subr.bf16.mxu0 %v2032
      %2199 = vmatpush1.bf16.msra.mxu0 %v2031
      %2200 = vmatprep.subr.bf16.mxu0 %v2035
      %2201 = vmatpush1.bf16.msra.mxu0 %v2034
      %2202 = vmatprep.subr.bf16.mxu0 %v2038
      %2203 = vmatpush1.bf16.msra.mxu0 %v2037
      %2204 = vmatprep.subr.bf16.mxu0 %v2041
      %2205 = vmatpush1.bf16.msra.mxu0 %v2040
      %2206 = vmatprep.subr.bf16.mxu0 %v2044
      %2207 = vmatpush1.bf16.msra.mxu0 %v2043
      %2208 = vmatprep.subr.bf16.mxu0 %v2047
      %2209 = vmatpush1.bf16.msra.mxu0 %v2046
      %2210 = vmatprep.subr.bf16.mxu0 %v2050
      %2211 = vmatpush1.bf16.msra.mxu0 %v2049
      %2212 = vmatprep.subr.bf16.mxu0 %v2053
      %2213 = vmatpush1.bf16.msra.mxu0 %v2052
      %2214 = vmatprep.subr.bf16.mxu0 %v2056
      %2215 = vmatpush1.bf16.msra.mxu0 %v2055
      %2216 = vmatprep.subr.bf16.mxu0 %v2059
      %2217 = vmatpush1.bf16.msra.mxu0 %v2058
      %2218 = vmatprep.subr.bf16.mxu0 %v2062
      %2219 = vmatpush1.bf16.msra.mxu0 %v2061
      %2220 = vmatprep.subr.bf16.mxu0 %v2065
      %2221 = vmatpush1.bf16.msra.mxu0 %v2064
      %2222 = vmatprep.subr.bf16.mxu0 %v2068
      %2223 = vmatpush1.bf16.msra.mxu0 %v2067
      %2224 = vmatprep.subr.bf16.mxu0 %v2071
      %2225 = vmatpush1.bf16.msra.mxu0 %v2070
      %2226 = vmatprep.mubr.bf16.mxu0 %v1689
      %2227 = vmatmul.mubr.bf16.gmra.mrb[0].mxu0 %v1688
      %v2228 = vpop.f32.mrb[0].mxu0
      %v2229 = vadd.f32 0.0, %v2228
      %v2230 = vpop.f32.mrb[0].mxu0
      %v2231 = vadd.f32 0.0, %v2230
      %v2232 = vpop.f32.mrb[0].mxu0
      %v2233 = vadd.f32 0.0, %v2232
      %v2234 = vpop.f32.mrb[0].mxu0
      %v2235 = vadd.f32 0.0, %v2234
      %2236 = vmatprep.mubr.bf16.mxu0 %v1692
      %2237 = vmatmul.mubr.bf16.gmra.mrb[0].mxu0 %v1691
      %v2238 = vpop.f32.mrb[0].mxu0
      %v2239 = vadd.f32 0.0, %v2238
      %v2240 = vpop.f32.mrb[0].mxu0
      %v2241 = vadd.f32 0.0, %v2240
      %v2242 = vpop.f32.mrb[0].mxu0
      %v2243 = vadd.f32 0.0, %v2242
      %v2244 = vpop.f32.mrb[0].mxu0
      %v2245 = vadd.f32 0.0, %v2244
      %2246 = vmatprep.mubr.bf16.mxu0 %v1695
      %2247 = vmatmul.mubr.bf16.gmra.mrb[0].mxu0 %v1694
      %v2248 = vpop.f32.mrb[0].mxu0
      %v2249 = vadd.f32 0.0, %v2248
      %v2250 = vpop.f32.mrb[0].mxu0
      %v2251 = vadd.f32 0.0, %v2250
      %v2252 = vpop.f32.mrb[0].mxu0
      %v2253 = vadd.f32 0.0, %v2252
      %v2254 = vpop.f32.mrb[0].mxu0
      %v2255 = vadd.f32 0.0, %v2254
      %2256 = vmatprep.mubr.bf16.mxu0 %v1698
      %2257 = vmatmul.mubr.bf16.gmra.mrb[0].mxu0 %v1697
      %v2258 = vpop.f32.mrb[0].mxu0
      %v2259 = vadd.f32 0.0, %v2258
      %v2260 = vpop.f32.mrb[0].mxu0
      %v2261 = vadd.f32 0.0, %v2260
      %v2262 = vpop.f32.mrb[0].mxu0
      %v2263 = vadd.f32 0.0, %v2262
      %v2264 = vpop.f32.mrb[0].mxu0
      %v2265 = vadd.f32 0.0, %v2264
      %2266 = vmatprep.mubr.bf16.mxu0 %v1701
      %2267 = vmatmul.mubr.bf16.gmra.mrb[0].mxu0 %v1700
      %v2268 = vpop.f32.mrb[0].mxu0
      %v2269 = vadd.f32 0.0, %v2268
      %v2270 = vpop.f32.mrb[0].mxu0
      %v2271 = vadd.f32 0.0, %v2270
      %v2272 = vpop.f32.mrb[0].mxu0
      %v2273 = vadd.f32 0.0, %v2272
      %v2274 = vpop.f32.mrb[0].mxu0
      %v2275 = vadd.f32 0.0, %v2274
      %2276 = vmatprep.mubr.bf16.mxu0 %v1704
      %2277 = vmatmul.mubr.bf16.gmra.mrb[0].mxu0 %v1703
      %v2278 = vpop.f32.mrb[0].mxu0
      %v2279 = vadd.f32 0.0, %v2278
      %v2280 = vpop.f32.mrb[0].mxu0
      %v2281 = vadd.f32 0.0, %v2280
      %v2282 = vpop.f32.mrb[0].mxu0
      %v2283 = vadd.f32 0.0, %v2282
      %v2284 = vpop.f32.mrb[0].mxu0
      %v2285 = vadd.f32 0.0, %v2284
      %2286 = vmatprep.mubr.bf16.mxu0 %v1707
      %2287 = vmatmul.mubr.bf16.gmra.mrb[0].mxu0 %v1706
      %v2288 = vpop.f32.mrb[0].mxu0
      %v2289 = vadd.f32 0.0, %v2288
      %v2290 = vpop.f32.mrb[0].mxu0
      %v2291 = vadd.f32 0.0, %v2290
      %v2292 = vpop.f32.mrb[0].mxu0
      %v2293 = vadd.f32 0.0, %v2292
      %v2294 = vpop.f32.mrb[0].mxu0
      %v2295 = vadd.f32 0.0, %v2294
      %2296 = vmatprep.mubr.bf16.mxu0 %v1710
      %2297 = vmatmul.mubr.bf16.gmra.mrb[0].mxu0 %v1709
      %v2298 = vpop.f32.mrb[0].mxu0
      %v2299 = vadd.f32 0.0, %v2298
      %v2300 = vpop.f32.mrb[0].mxu0
      %v2301 = vadd.f32 0.0, %v2300
      %v2302 = vpop.f32.mrb[0].mxu0
      %v2303 = vadd.f32 0.0, %v2302
      %v2304 = vpop.f32.mrb[0].mxu0
      %v2305 = vadd.f32 0.0, %v2304
      %2306 = vmatprep.mubr.bf16.mxu0 %v1713
      %2307 = vmatmul.mubr.bf16.gmra.mrb[0].mxu0 %v1712
      %v2308 = vpop.f32.mrb[0].mxu0
      %v2309 = vadd.f32 0.0, %v2308
      %v2310 = vpop.f32.mrb[0].mxu0
      %v2311 = vadd.f32 0.0, %v2310
      %v2312 = vpop.f32.mrb[0].mxu0
      %v2313 = vadd.f32 0.0, %v2312
      %v2314 = vpop.f32.mrb[0].mxu0
      %v2315 = vadd.f32 0.0, %v2314
      %2316 = vmatprep.mubr.bf16.mxu0 %v1716
      %2317 = vmatmul.mubr.bf16.gmra.mrb[0].mxu0 %v1715
      %v2318 = vpop.f32.mrb[0].mxu0
      %v2319 = vadd.f32 0.0, %v2318
      %v2320 = vpop.f32.mrb[0].mxu0
      %v2321 = vadd.f32 0.0, %v2320
      %v2322 = vpop.f32.mrb[0].mxu0
      %v2323 = vadd.f32 0.0, %v2322
      %v2324 = vpop.f32.mrb[0].mxu0
      %v2325 = vadd.f32 0.0, %v2324
      %2326 = vmatprep.mubr.bf16.mxu0 %v1719
      %2327 = vmatmul.mubr.bf16.gmra.mrb[0].mxu0 %v1718
      %v2328 = vpop.f32.mrb[0].mxu0
      %v2329 = vadd.f32 0.0, %v2328
      %v2330 = vpop.f32.mrb[0].mxu0
      %v2331 = vadd.f32 0.0, %v2330
      %v2332 = vpop.f32.mrb[0].mxu0
      %v2333 = vadd.f32 0.0, %v2332
      %v2334 = vpop.f32.mrb[0].mxu0
      %v2335 = vadd.f32 0.0, %v2334
      %2336 = vmatprep.mubr.bf16.mxu0 %v1722
      %2337 = vmatmul.mubr.bf16.gmra.mrb[0].mxu0 %v1721
      %v2338 = vpop.f32.mrb[0].mxu0
      %v2339 = vadd.f32 0.0, %v2338
      %v2340 = vpop.f32.mrb[0].mxu0
      %v2341 = vadd.f32 0.0, %v2340
      %v2342 = vpop.f32.mrb[0].mxu0
      %v2343 = vadd.f32 0.0, %v2342
      %v2344 = vpop.f32.mrb[0].mxu0
      %v2345 = vadd.f32 0.0, %v2344
      %2346 = vmatprep.mubr.bf16.mxu0 %v1725
      %2347 = vmatmul.mubr.bf16.gmra.mrb[0].mxu0 %v1724
      %v2348 = vpop.f32.mrb[0].mxu0
      %v2349 = vadd.f32 0.0, %v2348
      %v2350 = vpop.f32.mrb[0].mxu0
      %v2351 = vadd.f32 0.0, %v2350
      %v2352 = vpop.f32.mrb[0].mxu0
      %v2353 = vadd.f32 0.0, %v2352
      %v2354 = vpop.f32.mrb[0].mxu0
      %v2355 = vadd.f32 0.0, %v2354
      %2356 = vmatprep.mubr.bf16.mxu0 %v1728
      %2357 = vmatmul.mubr.bf16.gmra.mrb[0].mxu0 %v1727
      %v2358 = vpop.f32.mrb[0].mxu0
      %v2359 = vadd.f32 0.0, %v2358
      %v2360 = vpop.f32.mrb[0].mxu0
      %v2361 = vadd.f32 0.0, %v2360
      %v2362 = vpop.f32.mrb[0].mxu0
      %v2363 = vadd.f32 0.0, %v2362
      %v2364 = vpop.f32.mrb[0].mxu0
      %v2365 = vadd.f32 0.0, %v2364
      %2366 = vdwg.mxu0
      %2367 = vmatprep.subr.bf16.mxu0 %v2074
      %2368 = vmatpush1.bf16.msra.mxu0 %v2073
      %2369 = vmatprep.subr.bf16.mxu0 %v2077
      %2370 = vmatpush1.bf16.msra.mxu0 %v2076
      %2371 = vmatprep.subr.bf16.mxu0 %v2080
      %2372 = vmatpush1.bf16.msra.mxu0 %v2079
      %2373 = vmatprep.subr.bf16.mxu0 %v2083
      %2374 = vmatpush1.bf16.msra.mxu0 %v2082
      %2375 = vmatprep.subr.bf16.mxu0 %v2086
      %2376 = vmatpush1.bf16.msra.mxu0 %v2085
      %2377 = vmatprep.subr.bf16.mxu0 0
      %2378 = vmatpush1.bf16.msra.mxu0 0
      %2379 = vmatprep.subr.bf16.mxu0 0
      %2380 = vmatpush1.bf16.msra.mxu0 0
      %2381 = vmatprep.subr.bf16.mxu0 0
      %2382 = vmatpush1.bf16.msra.mxu0 0
      %2383 = vmatprep.subr.bf16.mxu0 0
      %2384 = vmatpush1.bf16.msra.mxu0 0
      %2385 = vmatprep.subr.bf16.mxu0 0
      %2386 = vmatpush1.bf16.msra.mxu0 0
      %2387 = vmatprep.subr.bf16.mxu0 0
      %2388 = vmatpush1.bf16.msra.mxu0 0
      %2389 = vmatprep.subr.bf16.mxu0 0
      %2390 = vmatpush1.bf16.msra.mxu0 0
      %2391 = vmatprep.subr.bf16.mxu0 0
      %2392 = vmatpush1.bf16.msra.mxu0 0
      %2393 = vmatprep.subr.bf16.mxu0 0
      %2394 = vmatpush1.bf16.msra.mxu0 0
      %2395 = vmatprep.subr.bf16.mxu0 0
      %2396 = vmatpush1.bf16.msra.mxu0 0
      %2397 = vmatprep.subr.bf16.mxu0 0
      %2398 = vmatpush1.bf16.msra.mxu0 0
      %2399 = vmatprep.mubr.bf16.mxu0 0
      %2400 = vmatmul.mubr.bf16.gmra.mrb[0].mxu0 %v2153
      %v2401 = vpop.f32.mrb[0].mxu0
      %v2402 = vadd.f32 %v2229, %v2401
      %v2403 = vpop.f32.mrb[0].mxu0
      %v2404 = vadd.f32 %v2231, %v2403
      %v2405 = vpop.f32.mrb[0].mxu0
      %v2406 = vadd.f32 %v2233, %v2405
      %v2407 = vpop.f32.mrb[0].mxu0
      %v2408 = vadd.f32 %v2235, %v2407
      %2409 = vmatprep.mubr.bf16.mxu0 0
      %2410 = vmatmul.mubr.bf16.gmra.mrb[0].mxu0 %v2156
      %v2411 = vpop.f32.mrb[0].mxu0
      %v2412 = vadd.f32 %v2239, %v2411
      %v2413 = vpop.f32.mrb[0].mxu0
      %v2414 = vadd.f32 %v2241, %v2413
      %v2415 = vpop.f32.mrb[0].mxu0
      %v2416 = vadd.f32 %v2243, %v2415
      %v2417 = vpop.f32.mrb[0].mxu0
      %v2418 = vadd.f32 %v2245, %v2417
      %2419 = vmatprep.mubr.bf16.mxu0 0
      %2420 = vmatmul.mubr.bf16.gmra.mrb[0].mxu0 %v2159
      %v2421 = vpop.f32.mrb[0].mxu0
      %v2422 = vadd.f32 %v2249, %v2421
      %v2423 = vpop.f32.mrb[0].mxu0
      %v2424 = vadd.f32 %v2251, %v2423
      %v2425 = vpop.f32.mrb[0].mxu0
      %v2426 = vadd.f32 %v2253, %v2425
      %v2427 = vpop.f32.mrb[0].mxu0
      %v2428 = vadd.f32 %v2255, %v2427
      %2429 = vmatprep.mubr.bf16.mxu0 0
      %2430 = vmatmul.mubr.bf16.gmra.mrb[0].mxu0 %v2162
      %v2431 = vpop.f32.mrb[0].mxu0
      %v2432 = vadd.f32 %v2259, %v2431
      %v2433 = vpop.f32.mrb[0].mxu0
      %v2434 = vadd.f32 %v2261, %v2433
      %v2435 = vpop.f32.mrb[0].mxu0
      %v2436 = vadd.f32 %v2263, %v2435
      %v2437 = vpop.f32.mrb[0].mxu0
      %v2438 = vadd.f32 %v2265, %v2437
      %2439 = vmatprep.mubr.bf16.mxu0 0
      %2440 = vmatmul.mubr.bf16.gmra.mrb[0].mxu0 %v2165
      %v2441 = vpop.f32.mrb[0].mxu0
      %v2442 = vadd.f32 %v2269, %v2441
      %v2443 = vpop.f32.mrb[0].mxu0
      %v2444 = vadd.f32 %v2271, %v2443
      %v2445 = vpop.f32.mrb[0].mxu0
      %v2446 = vadd.f32 %v2273, %v2445
      %v2447 = vpop.f32.mrb[0].mxu0
      %v2448 = vadd.f32 %v2275, %v2447
      %2449 = vmatprep.mubr.bf16.mxu0 0
      %2450 = vmatmul.mubr.bf16.gmra.mrb[0].mxu0 %v2168
      %v2451 = vpop.f32.mrb[0].mxu0
      %v2452 = vadd.f32 %v2279, %v2451
      %v2453 = vpop.f32.mrb[0].mxu0
      %v2454 = vadd.f32 %v2281, %v2453
      %v2455 = vpop.f32.mrb[0].mxu0
      %v2456 = vadd.f32 %v2283, %v2455
      %v2457 = vpop.f32.mrb[0].mxu0
      %v2458 = vadd.f32 %v2285, %v2457
      %2459 = vmatprep.mubr.bf16.mxu0 0
      %2460 = vmatmul.mubr.bf16.gmra.mrb[0].mxu0 %v2171
      %v2461 = vpop.f32.mrb[0].mxu0
      %v2462 = vadd.f32 %v2289, %v2461
      %v2463 = vpop.f32.mrb[0].mxu0
      %v2464 = vadd.f32 %v2291, %v2463
      %v2465 = vpop.f32.mrb[0].mxu0
      %v2466 = vadd.f32 %v2293, %v2465
      %v2467 = vpop.f32.mrb[0].mxu0
      %v2468 = vadd.f32 %v2295, %v2467
      %2469 = vmatprep.mubr.bf16.mxu0 0
      %2470 = vmatmul.mubr.bf16.gmra.mrb[0].mxu0 %v2174
      %v2471 = vpop.f32.mrb[0].mxu0
      %v2472 = vadd.f32 %v2299, %v2471
      %v2473 = vpop.f32.mrb[0].mxu0
      %v2474 = vadd.f32 %v2301, %v2473
      %v2475 = vpop.f32.mrb[0].mxu0
      %v2476 = vadd.f32 %v2303, %v2475
      %v2477 = vpop.f32.mrb[0].mxu0
      %v2478 = vadd.f32 %v2305, %v2477
      %2479 = vmatprep.mubr.bf16.mxu0 0
      %2480 = vmatmul.mubr.bf16.gmra.mrb[0].mxu0 %v2177
      %v2481 = vpop.f32.mrb[0].mxu0
      %v2482 = vadd.f32 %v2309, %v2481
      %v2483 = vpop.f32.mrb[0].mxu0
      %v2484 = vadd.f32 %v2311, %v2483
      %v2485 = vpop.f32.mrb[0].mxu0
      %v2486 = vadd.f32 %v2313, %v2485
      %v2487 = vpop.f32.mrb[0].mxu0
      %v2488 = vadd.f32 %v2315, %v2487
      %2489 = vmatprep.mubr.bf16.mxu0 0
      %2490 = vmatmul.mubr.bf16.gmra.mrb[0].mxu0 %v2180
      %v2491 = vpop.f32.mrb[0].mxu0
      %v2492 = vadd.f32 %v2319, %v2491
      %v2493 = vpop.f32.mrb[0].mxu0
      %v2494 = vadd.f32 %v2321, %v2493
      %v2495 = vpop.f32.mrb[0].mxu0
      %v2496 = vadd.f32 %v2323, %v2495
      %v2497 = vpop.f32.mrb[0].mxu0
      %v2498 = vadd.f32 %v2325, %v2497
      %2499 = vmatprep.mubr.bf16.mxu0 0
      %2500 = vmatmul.mubr.bf16.gmra.mrb[0].mxu0 %v2183
      %v2501 = vpop.f32.mrb[0].mxu0
      %v2502 = vadd.f32 %v2329, %v2501
      %v2503 = vpop.f32.mrb[0].mxu0
      %v2504 = vadd.f32 %v2331, %v2503
      %v2505 = vpop.f32.mrb[0].mxu0
      %v2506 = vadd.f32 %v2333, %v2505
      %v2507 = vpop.f32.mrb[0].mxu0
      %v2508 = vadd.f32 %v2335, %v2507
      %2509 = vmatprep.mubr.bf16.mxu0 0
      %2510 = vmatmul.mubr.bf16.gmra.mrb[0].mxu0 %v2186
      %v2511 = vpop.f32.mrb[0].mxu0
      %v2512 = vadd.f32 %v2339, %v2511
      %v2513 = vpop.f32.mrb[0].mxu0
      %v2514 = vadd.f32 %v2341, %v2513
      %v2515 = vpop.f32.mrb[0].mxu0
      %v2516 = vadd.f32 %v2343, %v2515
      %v2517 = vpop.f32.mrb[0].mxu0
      %v2518 = vadd.f32 %v2345, %v2517
      %2519 = vmatprep.mubr.bf16.mxu0 0
      %2520 = vmatmul.mubr.bf16.gmra.mrb[0].mxu0 %v2189
      %v2521 = vpop.f32.mrb[0].mxu0
      %v2522 = vadd.f32 %v2349, %v2521
      %v2523 = vpop.f32.mrb[0].mxu0
      %v2524 = vadd.f32 %v2351, %v2523
      %v2525 = vpop.f32.mrb[0].mxu0
      %v2526 = vadd.f32 %v2353, %v2525
      %v2527 = vpop.f32.mrb[0].mxu0
      %v2528 = vadd.f32 %v2355, %v2527
      %2529 = vmatprep.mubr.bf16.mxu0 0
      %2530 = vmatmul.mubr.bf16.gmra.mrb[0].mxu0 %v2192
      %v2531 = vpop.f32.mrb[0].mxu0
      %v2532 = vadd.f32 %v2359, %v2531
      %v2533 = vpop.f32.mrb[0].mxu0
      %v2534 = vadd.f32 %v2361, %v2533
      %v2535 = vpop.f32.mrb[0].mxu0
      %v2536 = vadd.f32 %v2363, %v2535
      %v2537 = vpop.f32.mrb[0].mxu0
      %v2538 = vadd.f32 %v2365, %v2537
      %2539 = vdwg.mxu0
      %2540 = vmatprep.subr.bf16.mxu0 0
      %2541 = vmatpush1.bf16.msra.mxu0 %v2027
      %2542 = vmatprep.subr.bf16.mxu0 0
      %2543 = vmatpush1.bf16.msra.mxu0 %v2030
      %2544 = vmatprep.subr.bf16.mxu0 0
      %2545 = vmatpush1.bf16.msra.mxu0 %v2033
      %2546 = vmatprep.subr.bf16.mxu0 0
      %2547 = vmatpush1.bf16.msra.mxu0 %v2036
      %2548 = vmatprep.subr.bf16.mxu0 0
      %2549 = vmatpush1.bf16.msra.mxu0 %v2039
      %2550 = vmatprep.subr.bf16.mxu0 0
      %2551 = vmatpush1.bf16.msra.mxu0 %v2042
      %2552 = vmatprep.subr.bf16.mxu0 0
      %2553 = vmatpush1.bf16.msra.mxu0 %v2045
      %2554 = vmatprep.subr.bf16.mxu0 0
      %2555 = vmatpush1.bf16.msra.mxu0 %v2048
      %2556 = vmatprep.subr.bf16.mxu0 0
      %2557 = vmatpush1.bf16.msra.mxu0 %v2051
      %2558 = vmatprep.subr.bf16.mxu0 0
      %2559 = vmatpush1.bf16.msra.mxu0 %v2054
      %2560 = vmatprep.subr.bf16.mxu0 0
      %2561 = vmatpush1.bf16.msra.mxu0 %v2057
      %2562 = vmatprep.subr.bf16.mxu0 0
      %2563 = vmatpush1.bf16.msra.mxu0 %v2060
      %2564 = vmatprep.subr.bf16.mxu0 0
      %2565 = vmatpush1.bf16.msra.mxu0 %v2063
      %2566 = vmatprep.subr.bf16.mxu0 0
      %2567 = vmatpush1.bf16.msra.mxu0 %v2066
      %2568 = vmatprep.subr.bf16.mxu0 0
      %2569 = vmatpush1.bf16.msra.mxu0 %v2069
      %2570 = vmatprep.subr.bf16.mxu0 0
      %2571 = vmatpush1.bf16.msra.mxu0 %v2072
      %2572 = vmatprep.mubr.bf16.mxu0 %v1689
      %2573 = vmatmul.mubr.bf16.gmra.mrb[0].mxu0 %v1688
      %v2574 = vpop.f32.mrb[0].mxu0
      %v2575 = vadd.f32 0.0, %v2574
      %v2576 = vpop.f32.mrb[0].mxu0
      %v2577 = vpop.f32.mrb[0].mxu0
      %v2578 = vadd.f32 0.0, %v2577
      %v2579 = vpop.f32.mrb[0].mxu0
      %2580 = vmatprep.mubr.bf16.mxu0 %v1692
      %2581 = vmatmul.mubr.bf16.gmra.mrb[0].mxu0 %v1691
      %v2582 = vpop.f32.mrb[0].mxu0
      %v2583 = vadd.f32 0.0, %v2582
      %v2584 = vpop.f32.mrb[0].mxu0
      %v2585 = vpop.f32.mrb[0].mxu0
      %v2586 = vadd.f32 0.0, %v2585
      %v2587 = vpop.f32.mrb[0].mxu0
      %2588 = vmatprep.mubr.bf16.mxu0 %v1695
      %2589 = vmatmul.mubr.bf16.gmra.mrb[0].mxu0 %v1694
      %v2590 = vpop.f32.mrb[0].mxu0
      %v2591 = vadd.f32 0.0, %v2590
      %v2592 = vpop.f32.mrb[0].mxu0
      %v2593 = vpop.f32.mrb[0].mxu0
      %v2594 = vadd.f32 0.0, %v2593
      %v2595 = vpop.f32.mrb[0].mxu0
      %2596 = vmatprep.mubr.bf16.mxu0 %v1698
      %2597 = vmatmul.mubr.bf16.gmra.mrb[0].mxu0 %v1697
      %v2598 = vpop.f32.mrb[0].mxu0
      %v2599 = vadd.f32 0.0, %v2598
      %v2600 = vpop.f32.mrb[0].mxu0
      %v2601 = vpop.f32.mrb[0].mxu0
      %v2602 = vadd.f32 0.0, %v2601
      %v2603 = vpop.f32.mrb[0].mxu0
      %2604 = vmatprep.mubr.bf16.mxu0 %v1701
      %2605 = vmatmul.mubr.bf16.gmra.mrb[0].mxu0 %v1700
      %v2606 = vpop.f32.mrb[0].mxu0
      %v2607 = vadd.f32 0.0, %v2606
      %v2608 = vpop.f32.mrb[0].mxu0
      %v2609 = vpop.f32.mrb[0].mxu0
      %v2610 = vadd.f32 0.0, %v2609
      %v2611 = vpop.f32.mrb[0].mxu0
      %2612 = vmatprep.mubr.bf16.mxu0 %v1704
      %2613 = vmatmul.mubr.bf16.gmra.mrb[0].mxu0 %v1703
      %v2614 = vpop.f32.mrb[0].mxu0
      %v2615 = vadd.f32 0.0, %v2614
      %v2616 = vpop.f32.mrb[0].mxu0
      %v2617 = vpop.f32.mrb[0].mxu0
      %v2618 = vadd.f32 0.0, %v2617
      %v2619 = vpop.f32.mrb[0].mxu0
      %2620 = vmatprep.mubr.bf16.mxu0 %v1707
      %2621 = vmatmul.mubr.bf16.gmra.mrb[0].mxu0 %v1706
      %v2622 = vpop.f32.mrb[0].mxu0
      %v2623 = vadd.f32 0.0, %v2622
      %v2624 = vpop.f32.mrb[0].mxu0
      %v2625 = vpop.f32.mrb[0].mxu0
      %v2626 = vadd.f32 0.0, %v2625
      %v2627 = vpop.f32.mrb[0].mxu0
      %2628 = vmatprep.mubr.bf16.mxu0 %v1710
      %2629 = vmatmul.mubr.bf16.gmra.mrb[0].mxu0 %v1709
      %v2630 = vpop.f32.mrb[0].mxu0
      %v2631 = vadd.f32 0.0, %v2630
      %v2632 = vpop.f32.mrb[0].mxu0
      %v2633 = vpop.f32.mrb[0].mxu0
      %v2634 = vadd.f32 0.0, %v2633
      %v2635 = vpop.f32.mrb[0].mxu0
      %2636 = vmatprep.mubr.bf16.mxu0 %v1713
      %2637 = vmatmul.mubr.bf16.gmra.mrb[0].mxu0 %v1712
      %v2638 = vpop.f32.mrb[0].mxu0
      %v2639 = vadd.f32 0.0, %v2638
      %v2640 = vpop.f32.mrb[0].mxu0
      %v2641 = vpop.f32.mrb[0].mxu0
      %v2642 = vadd.f32 0.0, %v2641
      %v2643 = vpop.f32.mrb[0].mxu0
      %2644 = vmatprep.mubr.bf16.mxu0 %v1716
      %2645 = vmatmul.mubr.bf16.gmra.mrb[0].mxu0 %v1715
      %v2646 = vpop.f32.mrb[0].mxu0
      %v2647 = vadd.f32 0.0, %v2646
      %v2648 = vpop.f32.mrb[0].mxu0
      %v2649 = vpop.f32.mrb[0].mxu0
      %v2650 = vadd.f32 0.0, %v2649
      %v2651 = vpop.f32.mrb[0].mxu0
      %2652 = vmatprep.mubr.bf16.mxu0 %v1719
      %2653 = vmatmul.mubr.bf16.gmra.mrb[0].mxu0 %v1718
      %v2654 = vpop.f32.mrb[0].mxu0
      %v2655 = vadd.f32 0.0, %v2654
      %v2656 = vpop.f32.mrb[0].mxu0
      %v2657 = vpop.f32.mrb[0].mxu0
      %v2658 = vadd.f32 0.0, %v2657
      %v2659 = vpop.f32.mrb[0].mxu0
      %2660 = vmatprep.mubr.bf16.mxu0 %v1722
      %2661 = vmatmul.mubr.bf16.gmra.mrb[0].mxu0 %v1721
      %v2662 = vpop.f32.mrb[0].mxu0
      %v2663 = vadd.f32 0.0, %v2662
      %v2664 = vpop.f32.mrb[0].mxu0
      %v2665 = vpop.f32.mrb[0].mxu0
      %v2666 = vadd.f32 0.0, %v2665
      %v2667 = vpop.f32.mrb[0].mxu0
      %2668 = vmatprep.mubr.bf16.mxu0 %v1725
      %2669 = vmatmul.mubr.bf16.gmra.mrb[0].mxu0 %v1724
      %v2670 = vpop.f32.mrb[0].mxu0
      %v2671 = vadd.f32 0.0, %v2670
      %v2672 = vpop.f32.mrb[0].mxu0
      %v2673 = vpop.f32.mrb[0].mxu0
      %v2674 = vadd.f32 0.0, %v2673
      %v2675 = vpop.f32.mrb[0].mxu0
      %2676 = vmatprep.mubr.bf16.mxu0 %v1728
      %2677 = vmatmul.mubr.bf16.gmra.mrb[0].mxu0 %v1727
      %v2678 = vpop.f32.mrb[0].mxu0
      %v2679 = vadd.f32 0.0, %v2678
      %v2680 = vpop.f32.mrb[0].mxu0
      %v2681 = vpop.f32.mrb[0].mxu0
      %v2682 = vadd.f32 0.0, %v2681
      %v2683 = vpop.f32.mrb[0].mxu0
      %2684 = vdwg.mxu0
      %2685 = vmatprep.subr.bf16.mxu0 0
      %2686 = vmatpush1.bf16.msra.mxu0 %v2075
      %2687 = vmatprep.subr.bf16.mxu0 0
      %2688 = vmatpush1.bf16.msra.mxu0 %v2078
      %2689 = vmatprep.subr.bf16.mxu0 0
      %2690 = vmatpush1.bf16.msra.mxu0 %v2081
      %2691 = vmatprep.subr.bf16.mxu0 0
      %2692 = vmatpush1.bf16.msra.mxu0 %v2084
      %2693 = vmatprep.subr.bf16.mxu0 0
      %2694 = vmatpush1.bf16.msra.mxu0 %v2087
      %2695 = vmatprep.subr.bf16.mxu0 0
      %2696 = vmatpush1.bf16.msra.mxu0 0
      %2697 = vmatprep.subr.bf16.mxu0 0
      %2698 = vmatpush1.bf16.msra.mxu0 0
      %2699 = vmatprep.subr.bf16.mxu0 0
      %2700 = vmatpush1.bf16.msra.mxu0 0
      %2701 = vmatprep.subr.bf16.mxu0 0
      %2702 = vmatpush1.bf16.msra.mxu0 0
      %2703 = vmatprep.subr.bf16.mxu0 0
      %2704 = vmatpush1.bf16.msra.mxu0 0
      %2705 = vmatprep.subr.bf16.mxu0 0
      %2706 = vmatpush1.bf16.msra.mxu0 0
      %2707 = vmatprep.subr.bf16.mxu0 0
      %2708 = vmatpush1.bf16.msra.mxu0 0
      %2709 = vmatprep.subr.bf16.mxu0 0
      %2710 = vmatpush1.bf16.msra.mxu0 0
      %2711 = vmatprep.subr.bf16.mxu0 0
      %2712 = vmatpush1.bf16.msra.mxu0 0
      %2713 = vmatprep.subr.bf16.mxu0 0
      %2714 = vmatpush1.bf16.msra.mxu0 0
      %2715 = vmatprep.subr.bf16.mxu0 0
      %2716 = vmatpush1.bf16.msra.mxu0 0
      %2717 = vmatprep.mubr.bf16.mxu0 0
      %2718 = vmatmul.mubr.bf16.gmra.mrb[0].mxu0 %v2153
      %v2719 = vpop.f32.mrb[0].mxu0
      %v2720 = vadd.f32 %v2575, %v2719
      %v2721 = vpop.f32.mrb[0].mxu0
      %v2722 = vpop.f32.mrb[0].mxu0
      %v2723 = vadd.f32 %v2578, %v2722
      %v2724 = vpop.f32.mrb[0].mxu0
      %2725 = vmatprep.mubr.bf16.mxu0 0
      %2726 = vmatmul.mubr.bf16.gmra.mrb[0].mxu0 %v2156
      %v2727 = vpop.f32.mrb[0].mxu0
      %v2728 = vadd.f32 %v2583, %v2727
      %v2729 = vpop.f32.mrb[0].mxu0
      %v2730 = vpop.f32.mrb[0].mxu0
      %v2731 = vadd.f32 %v2586, %v2730
      %v2732 = vpop.f32.mrb[0].mxu0
      %2733 = vmatprep.mubr.bf16.mxu0 0
      %2734 = vmatmul.mubr.bf16.gmra.mrb[0].mxu0 %v2159
      %v2735 = vpop.f32.mrb[0].mxu0
      %v2736 = vadd.f32 %v2591, %v2735
      %v2737 = vpop.f32.mrb[0].mxu0
      %v2738 = vpop.f32.mrb[0].mxu0
      %v2739 = vadd.f32 %v2594, %v2738
      %v2740 = vpop.f32.mrb[0].mxu0
      %2741 = vmatprep.mubr.bf16.mxu0 0
      %2742 = vmatmul.mubr.bf16.gmra.mrb[0].mxu0 %v2162
      %v2743 = vpop.f32.mrb[0].mxu0
      %v2744 = vadd.f32 %v2599, %v2743
      %v2745 = vpop.f32.mrb[0].mxu0
      %v2746 = vpop.f32.mrb[0].mxu0
      %v2747 = vadd.f32 %v2602, %v2746
      %v2748 = vpop.f32.mrb[0].mxu0
      %2749 = vmatprep.mubr.bf16.mxu0 0
      %2750 = vmatmul.mubr.bf16.gmra.mrb[0].mxu0 %v2165
      %v2751 = vpop.f32.mrb[0].mxu0
      %v2752 = vadd.f32 %v2607, %v2751
      %v2753 = vpop.f32.mrb[0].mxu0
      %v2754 = vpop.f32.mrb[0].mxu0
      %v2755 = vadd.f32 %v2610, %v2754
      %v2756 = vpop.f32.mrb[0].mxu0
      %2757 = vmatprep.mubr.bf16.mxu0 0
      %2758 = vmatmul.mubr.bf16.gmra.mrb[0].mxu0 %v2168
      %v2759 = vpop.f32.mrb[0].mxu0
      %v2760 = vadd.f32 %v2615, %v2759
      %v2761 = vpop.f32.mrb[0].mxu0
      %v2762 = vpop.f32.mrb[0].mxu0
      %v2763 = vadd.f32 %v2618, %v2762
      %v2764 = vpop.f32.mrb[0].mxu0
      %2765 = vmatprep.mubr.bf16.mxu0 0
      %2766 = vmatmul.mubr.bf16.gmra.mrb[0].mxu0 %v2171
      %v2767 = vpop.f32.mrb[0].mxu0
      %v2768 = vadd.f32 %v2623, %v2767
      %v2769 = vpop.f32.mrb[0].mxu0
      %v2770 = vpop.f32.mrb[0].mxu0
      %v2771 = vadd.f32 %v2626, %v2770
      %v2772 = vpop.f32.mrb[0].mxu0
      %2773 = vmatprep.mubr.bf16.mxu0 0
      %2774 = vmatmul.mubr.bf16.gmra.mrb[0].mxu0 %v2174
      %v2775 = vpop.f32.mrb[0].mxu0
      %v2776 = vadd.f32 %v2631, %v2775
      %v2777 = vpop.f32.mrb[0].mxu0
      %v2778 = vpop.f32.mrb[0].mxu0
      %v2779 = vadd.f32 %v2634, %v2778
      %v2780 = vpop.f32.mrb[0].mxu0
      %2781 = vmatprep.mubr.bf16.mxu0 0
      %2782 = vmatmul.mubr.bf16.gmra.mrb[0].mxu0 %v2177
      %v2783 = vpop.f32.mrb[0].mxu0
      %v2784 = vadd.f32 %v2639, %v2783
      %v2785 = vpop.f32.mrb[0].mxu0
      %v2786 = vpop.f32.mrb[0].mxu0
      %v2787 = vadd.f32 %v2642, %v2786
      %v2788 = vpop.f32.mrb[0].mxu0
      %2789 = vmatprep.mubr.bf16.mxu0 0
      %2790 = vmatmul.mubr.bf16.gmra.mrb[0].mxu0 %v2180
      %v2791 = vpop.f32.mrb[0].mxu0
      %v2792 = vadd.f32 %v2647, %v2791
      %v2793 = vpop.f32.mrb[0].mxu0
      %v2794 = vpop.f32.mrb[0].mxu0
      %v2795 = vadd.f32 %v2650, %v2794
      %v2796 = vpop.f32.mrb[0].mxu0
      %2797 = vmatprep.mubr.bf16.mxu0 0
      %2798 = vmatmul.mubr.bf16.gmra.mrb[0].mxu0 %v2183
      %v2799 = vpop.f32.mrb[0].mxu0
      %v2800 = vadd.f32 %v2655, %v2799
      %v2801 = vpop.f32.mrb[0].mxu0
      %v2802 = vpop.f32.mrb[0].mxu0
      %v2803 = vadd.f32 %v2658, %v2802
      %v2804 = vpop.f32.mrb[0].mxu0
      %2805 = vmatprep.mubr.bf16.mxu0 0
      %2806 = vmatmul.mubr.bf16.gmra.mrb[0].mxu0 %v2186
      %v2807 = vpop.f32.mrb[0].mxu0
      %v2808 = vadd.f32 %v2663, %v2807
      %v2809 = vpop.f32.mrb[0].mxu0
      %v2810 = vpop.f32.mrb[0].mxu0
      %v2811 = vadd.f32 %v2666, %v2810
      %v2812 = vpop.f32.mrb[0].mxu0
      %2813 = vmatprep.mubr.bf16.mxu0 0
      %2814 = vmatmul.mubr.bf16.gmra.mrb[0].mxu0 %v2189
      %v2815 = vpop.f32.mrb[0].mxu0
      %v2816 = vadd.f32 %v2671, %v2815
      %v2817 = vpop.f32.mrb[0].mxu0
      %v2818 = vpop.f32.mrb[0].mxu0
      %v2819 = vadd.f32 %v2674, %v2818
      %v2820 = vpop.f32.mrb[0].mxu0
      %2821 = vmatprep.mubr.bf16.mxu0 0
      %2822 = vmatmul.mubr.bf16.gmra.mrb[0].mxu0 %v2192
      %v2823 = vpop.f32.mrb[0].mxu0
      %v2824 = vadd.f32 %v2679, %v2823
      %v2825 = vpop.f32.mrb[0].mxu0
      %v2826 = vpop.f32.mrb[0].mxu0
      %v2827 = vadd.f32 %v2682, %v2826
      %v2828 = vpop.f32.mrb[0].mxu0
      %2829 = vdwg.mxu0
      %v2914 = vunpack.c.l.b16 %v1604
      %v2915 = vunpack.c.h.b16 %v1604
      %v2916 = vunpack.c.l.b16 %v1605
      %v2917 = vunpack.c.l.b16 %v1606
      %v2918 = vunpack.c.h.b16 %v1606
      %v2919 = vunpack.c.l.b16 %v1607
      %v2920 = vunpack.c.l.b16 %v1608
      %v2921 = vunpack.c.h.b16 %v1608
      %v2922 = vunpack.c.l.b16 %v1609
      %v2923 = vunpack.c.l.b16 %v1610
      %v2924 = vunpack.c.h.b16 %v1610
      %v2925 = vunpack.c.l.b16 %v1611
      %v2926 = vunpack.c.l.b16 %v1612
      %v2927 = vunpack.c.h.b16 %v1612
      %v2928 = vunpack.c.l.b16 %v1613
      %v2929 = vunpack.c.l.b16 %v1614
      %v2930 = vunpack.c.h.b16 %v1614
      %v2931 = vunpack.c.l.b16 %v1615
      %v2932 = vunpack.c.l.b16 %v1616
      %v2933 = vunpack.c.h.b16 %v1616
      %v2934 = vunpack.c.l.b16 %v1617
      %v2935 = vunpack.c.l.b16 %v1618
      %v2936 = vunpack.c.h.b16 %v1618
      %v2937 = vunpack.c.l.b16 %v1619
      %v2938 = vunpack.c.l.b16 %v1620
      %v2939 = vunpack.c.h.b16 %v1620
      %v2940 = vunpack.c.l.b16 %v1621
      %v2941 = vunpack.c.l.b16 %v1622
      %v2942 = vunpack.c.h.b16 %v1622
      %v2943 = vunpack.c.l.b16 %v1623
      %v2944 = vunpack.c.l.b16 %v1624
      %v2945 = vunpack.c.h.b16 %v1624
      %v2946 = vunpack.c.l.b16 %v1625
      %v2947 = vunpack.c.l.b16 %v1626
      %v2948 = vunpack.c.h.b16 %v1626
      %v2949 = vunpack.c.l.b16 %v1627
      %v2950 = vunpack.c.l.b16 %v1628
      %v2951 = vunpack.c.h.b16 %v1628
      %v2952 = vunpack.c.l.b16 %v1629
      %v2953 = vunpack.c.l.b16 %v1630
      %v2954 = vunpack.c.h.b16 %v1630
      %v2955 = vunpack.c.l.b16 %v1631
      %v2956 = vunpack.c.l.b16 %v1632
      %v2957 = vunpack.c.h.b16 %v1632
      %v2958 = vunpack.c.l.b16 %v1633
      %v2959 = vunpack.c.l.b16 %v1634
      %v2960 = vunpack.c.h.b16 %v1634
      %v2961 = vunpack.c.l.b16 %v1635
      %v2962 = vunpack.c.l.b16 %v1636
      %v2963 = vunpack.c.h.b16 %v1636
      %v2964 = vunpack.c.l.b16 %v1637
      %v2965 = vunpack.c.l.b16 %v1638
      %v2966 = vunpack.c.h.b16 %v1638
      %v2967 = vunpack.c.l.b16 %v1639
      %v2968 = vunpack.c.l.b16 %v1640
      %v2969 = vunpack.c.h.b16 %v1640
      %v2970 = vunpack.c.l.b16 %v1641
      %v2971 = vunpack.c.l.b16 %v1642
      %v2972 = vunpack.c.h.b16 %v1642
      %v2973 = vunpack.c.l.b16 %v1643
      %v2974 = vunpack.c.l.b16 %v1644
      %v2975 = vunpack.c.h.b16 %v1644
      %v2976 = vunpack.c.l.b16 %v1645
      %v2977 = vunpack.c.l.b16 %v1646
      %v2978 = vunpack.c.h.b16 %v1646
      %v2979 = vunpack.c.l.b16 %v1647
      %v2980 = vunpack.c.l.b16 %v1648
      %v2981 = vunpack.c.h.b16 %v1648
      %v2982 = vunpack.c.l.b16 %v1649
      %v2983 = vunpack.c.l.b16 %v1650
      %v2984 = vunpack.c.h.b16 %v1650
      %v2985 = vunpack.c.l.b16 %v1651
      %v2986 = vunpack.c.l.b16 %v1652
      %v2987 = vunpack.c.h.b16 %v1652
      %v2988 = vunpack.c.l.b16 %v1653
      %v2989 = vunpack.c.l.b16 %v1654
      %v2990 = vunpack.c.h.b16 %v1654
      %v2991 = vunpack.c.l.b16 %v1655
      %v2992 = vunpack.c.l.b16 %v1656
      %v2993 = vunpack.c.h.b16 %v1656
      %v2994 = vunpack.c.l.b16 %v1657
      %v2995 = vunpack.c.l.b16 %v1658
      %v2996 = vunpack.c.h.b16 %v1658
      %v2997 = vunpack.c.l.b16 %v1659
      %v2998 = vunpack.c.l.b16 %v1660
      %v2999 = vunpack.c.h.b16 %v1660
      %v3000 = vunpack.c.l.b16 %v1661
      %v3001 = vunpack.c.l.b16 %v1662
      %v3002 = vunpack.c.h.b16 %v1662
      %v3003 = vunpack.c.l.b16 %v1663
      %v3004 = vunpack.c.l.b16 %v1664
      %v3005 = vunpack.c.h.b16 %v1664
      %v3006 = vunpack.c.l.b16 %v1665
      %v3007 = vunpack.c.l.b16 %v1666
      %v3008 = vunpack.c.h.b16 %v1666
      %v3009 = vunpack.c.l.b16 %v1667
      %v3010 = vunpack.c.l.b16 %v1668
      %v3011 = vunpack.c.h.b16 %v1668
      %v3012 = vunpack.c.l.b16 %v1669
      %v3013 = vunpack.c.l.b16 %v1670
      %v3014 = vunpack.c.h.b16 %v1670
      %v3015 = vunpack.c.l.b16 %v1671
      %v3016 = vunpack.c.l.b16 %v1672
      %v3017 = vunpack.c.h.b16 %v1672
      %v3018 = vunpack.c.l.b16 %v1673
      %v3019 = vunpack.c.l.b16 %v1674
      %v3020 = vunpack.c.h.b16 %v1674
      %v3021 = vunpack.c.l.b16 %v1675
      %v3022 = vunpack.c.l.b16 %v1676
      %v3023 = vunpack.c.h.b16 %v1676
      %v3024 = vunpack.c.l.b16 %v1677
      %v3025 = vunpack.c.l.b16 %v1678
      %v3026 = vunpack.c.h.b16 %v1678
      %v3027 = vunpack.c.l.b16 %v1679
      %v3028 = vunpack.c.l.b16 %v1680
      %v3029 = vunpack.c.h.b16 %v1680
      %v3030 = vunpack.c.l.b16 %v1681
      %v3031 = vunpack.c.l.b16 %v1682
      %v3032 = vunpack.c.h.b16 %v1682
      %v3033 = vunpack.c.l.b16 %v1683
      %v3034 = vunpack.c.l.b16 %v1684
      %v3035 = vunpack.c.h.b16 %v1684
      %v3036 = vunpack.c.l.b16 %v1685
      %v3037 = vunpack.c.l.b16 %v1686
      %v3038 = vunpack.c.h.b16 %v1686
      %v3039 = vunpack.c.l.b16 %v1687
      %v3040 = vpack.c.b16 %v2917, %v2914
      %v3041 = vpack.c.b16 %v2918, %v2915
      %v3042 = vpack.c.b16 %v2919, %v2916
      %v3043 = vpack.c.b16 %v2923, %v2920
      %v3044 = vpack.c.b16 %v2924, %v2921
      %v3045 = vpack.c.b16 %v2925, %v2922
      %v3046 = vpack.c.b16 %v2929, %v2926
      %v3047 = vpack.c.b16 %v2930, %v2927
      %v3048 = vpack.c.b16 %v2931, %v2928
      %v3049 = vpack.c.b16 %v2935, %v2932
      %v3050 = vpack.c.b16 %v2936, %v2933
      %v3051 = vpack.c.b16 %v2937, %v2934
      %v3052 = vpack.c.b16 %v2941, %v2938
      %v3053 = vpack.c.b16 %v2942, %v2939
      %v3054 = vpack.c.b16 %v2943, %v2940
      %v3055 = vpack.c.b16 %v2947, %v2944
      %v3056 = vpack.c.b16 %v2948, %v2945
      %v3057 = vpack.c.b16 %v2949, %v2946
      %v3058 = vpack.c.b16 %v2953, %v2950
      %v3059 = vpack.c.b16 %v2954, %v2951
      %v3060 = vpack.c.b16 %v2955, %v2952
      %v3061 = vpack.c.b16 %v2959, %v2956
      %v3062 = vpack.c.b16 %v2960, %v2957
      %v3063 = vpack.c.b16 %v2961, %v2958
      %v3064 = vpack.c.b16 %v2965, %v2962
      %v3065 = vpack.c.b16 %v2966, %v2963
      %v3066 = vpack.c.b16 %v2967, %v2964
      %v3067 = vpack.c.b16 %v2971, %v2968
      %v3068 = vpack.c.b16 %v2972, %v2969
      %v3069 = vpack.c.b16 %v2973, %v2970
      %v3070 = vpack.c.b16 %v2977, %v2974
      %v3071 = vpack.c.b16 %v2978, %v2975
      %v3072 = vpack.c.b16 %v2979, %v2976
      %v3073 = vpack.c.b16 %v2983, %v2980
      %v3074 = vpack.c.b16 %v2984, %v2981
      %v3075 = vpack.c.b16 %v2985, %v2982
      %v3076 = vpack.c.b16 %v2989, %v2986
      %v3077 = vpack.c.b16 %v2990, %v2987
      %v3078 = vpack.c.b16 %v2991, %v2988
      %v3079 = vpack.c.b16 %v2995, %v2992
      %v3080 = vpack.c.b16 %v2996, %v2993
      %v3081 = vpack.c.b16 %v2997, %v2994
      %v3082 = vpack.c.b16 %v3001, %v2998
      %v3083 = vpack.c.b16 %v3002, %v2999
      %v3084 = vpack.c.b16 %v3003, %v3000
      %v3085 = vpack.c.b16 %v3007, %v3004
      %v3086 = vpack.c.b16 %v3008, %v3005
      %v3087 = vpack.c.b16 %v3009, %v3006
      %v3088 = vpack.c.b16 %v3013, %v3010
      %v3089 = vpack.c.b16 %v3014, %v3011
      %v3090 = vpack.c.b16 %v3015, %v3012
      %v3091 = vpack.c.b16 %v3019, %v3016
      %v3092 = vpack.c.b16 %v3020, %v3017
      %v3093 = vpack.c.b16 %v3021, %v3018
      %v3094 = vpack.c.b16 %v3025, %v3022
      %v3095 = vpack.c.b16 %v3026, %v3023
      %v3096 = vpack.c.b16 %v3027, %v3024
      %v3097 = vpack.c.b16 %v3031, %v3028
      %v3098 = vpack.c.b16 %v3032, %v3029
      %v3099 = vpack.c.b16 %v3033, %v3030
      %v3100 = vpack.c.b16 %v3037, %v3034
      %v3101 = vpack.c.b16 %v3038, %v3035
      %v3102 = vpack.c.b16 %v3039, %v3036
      %v3167 = vsel %vm2151, %v1564, 0
      %v3170 = vsel %vm2151, %v1567, 0
      %v3173 = vsel %vm2151, %v1570, 0
      %v3176 = vsel %vm2151, %v1573, 0
      %v3179 = vsel %vm2151, %v1576, 0
      %v3182 = vsel %vm2151, %v1579, 0
      %v3185 = vsel %vm2151, %v1582, 0
      %v3188 = vsel %vm2151, %v1585, 0
      %v3191 = vsel %vm2151, %v1588, 0
      %v3194 = vsel %vm2151, %v1591, 0
      %v3197 = vsel %vm2151, %v1594, 0
      %v3200 = vsel %vm2151, %v1597, 0
      %v3203 = vsel %vm2151, %v1600, 0
      %v3206 = vsel %vm2151, %v1603, 0
      %3208 = vmatprep.subr.bf16.mxu0 %v3041
      %3209 = vmatpush1.bf16.msra.mxu0 %v3040
      %3210 = vmatprep.subr.bf16.mxu0 %v3044
      %3211 = vmatpush1.bf16.msra.mxu0 %v3043
      %3212 = vmatprep.subr.bf16.mxu0 %v3047
      %3213 = vmatpush1.bf16.msra.mxu0 %v3046
      %3214 = vmatprep.subr.bf16.mxu0 %v3050
      %3215 = vmatpush1.bf16.msra.mxu0 %v3049
      %3216 = vmatprep.subr.bf16.mxu0 %v3053
      %3217 = vmatpush1.bf16.msra.mxu0 %v3052
      %3218 = vmatprep.subr.bf16.mxu0 %v3056
      %3219 = vmatpush1.bf16.msra.mxu0 %v3055
      %3220 = vmatprep.subr.bf16.mxu0 %v3059
      %3221 = vmatpush1.bf16.msra.mxu0 %v3058
      %3222 = vmatprep.subr.bf16.mxu0 %v3062
      %3223 = vmatpush1.bf16.msra.mxu0 %v3061
      %3224 = vmatprep.subr.bf16.mxu0 %v3065
      %3225 = vmatpush1.bf16.msra.mxu0 %v3064
      %3226 = vmatprep.subr.bf16.mxu0 %v3068
      %3227 = vmatpush1.bf16.msra.mxu0 %v3067
      %3228 = vmatprep.subr.bf16.mxu0 %v3071
      %3229 = vmatpush1.bf16.msra.mxu0 %v3070
      %3230 = vmatprep.subr.bf16.mxu0 %v3074
      %3231 = vmatpush1.bf16.msra.mxu0 %v3073
      %3232 = vmatprep.subr.bf16.mxu0 %v3077
      %3233 = vmatpush1.bf16.msra.mxu0 %v3076
      %3234 = vmatprep.subr.bf16.mxu0 %v3080
      %3235 = vmatpush1.bf16.msra.mxu0 %v3079
      %3236 = vmatprep.subr.bf16.mxu0 %v3083
      %3237 = vmatpush1.bf16.msra.mxu0 %v3082
      %3238 = vmatprep.subr.bf16.mxu0 %v3086
      %3239 = vmatpush1.bf16.msra.mxu0 %v3085
      %3240 = vmatprep.mubr.bf16.mxu0 %v1563
      %3241 = vmatmul.mubr.bf16.gmra.mrb[0].mxu0 %v1562
      %v3242 = vpop.f32.mrb[0].mxu0
      %v3243 = vadd.f32 %v2402, %v3242
      %v3244 = vpop.f32.mrb[0].mxu0
      %v3245 = vadd.f32 %v2404, %v3244
      %v3246 = vpop.f32.mrb[0].mxu0
      %v3247 = vadd.f32 %v2406, %v3246
      %v3248 = vpop.f32.mrb[0].mxu0
      %v3249 = vadd.f32 %v2408, %v3248
      %3250 = vmatprep.mubr.bf16.mxu0 %v1566
      %3251 = vmatmul.mubr.bf16.gmra.mrb[0].mxu0 %v1565
      %v3252 = vpop.f32.mrb[0].mxu0
      %v3253 = vadd.f32 %v2412, %v3252
      %v3254 = vpop.f32.mrb[0].mxu0
      %v3255 = vadd.f32 %v2414, %v3254
      %v3256 = vpop.f32.mrb[0].mxu0
      %v3257 = vadd.f32 %v2416, %v3256
      %v3258 = vpop.f32.mrb[0].mxu0
      %v3259 = vadd.f32 %v2418, %v3258
      %3260 = vmatprep.mubr.bf16.mxu0 %v1569
      %3261 = vmatmul.mubr.bf16.gmra.mrb[0].mxu0 %v1568
      %v3262 = vpop.f32.mrb[0].mxu0
      %v3263 = vadd.f32 %v2422, %v3262
      %v3264 = vpop.f32.mrb[0].mxu0
      %v3265 = vadd.f32 %v2424, %v3264
      %v3266 = vpop.f32.mrb[0].mxu0
      %v3267 = vadd.f32 %v2426, %v3266
      %v3268 = vpop.f32.mrb[0].mxu0
      %v3269 = vadd.f32 %v2428, %v3268
      %3270 = vmatprep.mubr.bf16.mxu0 %v1572
      %3271 = vmatmul.mubr.bf16.gmra.mrb[0].mxu0 %v1571
      %v3272 = vpop.f32.mrb[0].mxu0
      %v3273 = vadd.f32 %v2432, %v3272
      %v3274 = vpop.f32.mrb[0].mxu0
      %v3275 = vadd.f32 %v2434, %v3274
      %v3276 = vpop.f32.mrb[0].mxu0
      %v3277 = vadd.f32 %v2436, %v3276
      %v3278 = vpop.f32.mrb[0].mxu0
      %v3279 = vadd.f32 %v2438, %v3278
      %3280 = vmatprep.mubr.bf16.mxu0 %v1575
      %3281 = vmatmul.mubr.bf16.gmra.mrb[0].mxu0 %v1574
      %v3282 = vpop.f32.mrb[0].mxu0
      %v3283 = vadd.f32 %v2442, %v3282
      %v3284 = vpop.f32.mrb[0].mxu0
      %v3285 = vadd.f32 %v2444, %v3284
      %v3286 = vpop.f32.mrb[0].mxu0
      %v3287 = vadd.f32 %v2446, %v3286
      %v3288 = vpop.f32.mrb[0].mxu0
      %v3289 = vadd.f32 %v2448, %v3288
      %3290 = vmatprep.mubr.bf16.mxu0 %v1578
      %3291 = vmatmul.mubr.bf16.gmra.mrb[0].mxu0 %v1577
      %v3292 = vpop.f32.mrb[0].mxu0
      %v3293 = vadd.f32 %v2452, %v3292
      %v3294 = vpop.f32.mrb[0].mxu0
      %v3295 = vadd.f32 %v2454, %v3294
      %v3296 = vpop.f32.mrb[0].mxu0
      %v3297 = vadd.f32 %v2456, %v3296
      %v3298 = vpop.f32.mrb[0].mxu0
      %v3299 = vadd.f32 %v2458, %v3298
      %3300 = vmatprep.mubr.bf16.mxu0 %v1581
      %3301 = vmatmul.mubr.bf16.gmra.mrb[0].mxu0 %v1580
      %v3302 = vpop.f32.mrb[0].mxu0
      %v3303 = vadd.f32 %v2462, %v3302
      %v3304 = vpop.f32.mrb[0].mxu0
      %v3305 = vadd.f32 %v2464, %v3304
      %v3306 = vpop.f32.mrb[0].mxu0
      %v3307 = vadd.f32 %v2466, %v3306
      %v3308 = vpop.f32.mrb[0].mxu0
      %v3309 = vadd.f32 %v2468, %v3308
      %3310 = vmatprep.mubr.bf16.mxu0 %v1584
      %3311 = vmatmul.mubr.bf16.gmra.mrb[0].mxu0 %v1583
      %v3312 = vpop.f32.mrb[0].mxu0
      %v3313 = vadd.f32 %v2472, %v3312
      %v3314 = vpop.f32.mrb[0].mxu0
      %v3315 = vadd.f32 %v2474, %v3314
      %v3316 = vpop.f32.mrb[0].mxu0
      %v3317 = vadd.f32 %v2476, %v3316
      %v3318 = vpop.f32.mrb[0].mxu0
      %v3319 = vadd.f32 %v2478, %v3318
      %3320 = vmatprep.mubr.bf16.mxu0 %v1587
      %3321 = vmatmul.mubr.bf16.gmra.mrb[0].mxu0 %v1586
      %v3322 = vpop.f32.mrb[0].mxu0
      %v3323 = vadd.f32 %v2482, %v3322
      %v3324 = vpop.f32.mrb[0].mxu0
      %v3325 = vadd.f32 %v2484, %v3324
      %v3326 = vpop.f32.mrb[0].mxu0
      %v3327 = vadd.f32 %v2486, %v3326
      %v3328 = vpop.f32.mrb[0].mxu0
      %v3329 = vadd.f32 %v2488, %v3328
      %3330 = vmatprep.mubr.bf16.mxu0 %v1590
      %3331 = vmatmul.mubr.bf16.gmra.mrb[0].mxu0 %v1589
      %v3332 = vpop.f32.mrb[0].mxu0
      %v3333 = vadd.f32 %v2492, %v3332
      %v3334 = vpop.f32.mrb[0].mxu0
      %v3335 = vadd.f32 %v2494, %v3334
      %v3336 = vpop.f32.mrb[0].mxu0
      %v3337 = vadd.f32 %v2496, %v3336
      %v3338 = vpop.f32.mrb[0].mxu0
      %v3339 = vadd.f32 %v2498, %v3338
      %3340 = vmatprep.mubr.bf16.mxu0 %v1593
      %3341 = vmatmul.mubr.bf16.gmra.mrb[0].mxu0 %v1592
      %v3342 = vpop.f32.mrb[0].mxu0
      %v3343 = vadd.f32 %v2502, %v3342
      %v3344 = vpop.f32.mrb[0].mxu0
      %v3345 = vadd.f32 %v2504, %v3344
      %v3346 = vpop.f32.mrb[0].mxu0
      %v3347 = vadd.f32 %v2506, %v3346
      %v3348 = vpop.f32.mrb[0].mxu0
      %v3349 = vadd.f32 %v2508, %v3348
      %3350 = vmatprep.mubr.bf16.mxu0 %v1596
      %3351 = vmatmul.mubr.bf16.gmra.mrb[0].mxu0 %v1595
      %v3352 = vpop.f32.mrb[0].mxu0
      %v3353 = vadd.f32 %v2512, %v3352
      %v3354 = vpop.f32.mrb[0].mxu0
      %v3355 = vadd.f32 %v2514, %v3354
      %v3356 = vpop.f32.mrb[0].mxu0
      %v3357 = vadd.f32 %v2516, %v3356
      %v3358 = vpop.f32.mrb[0].mxu0
      %v3359 = vadd.f32 %v2518, %v3358
      %3360 = vmatprep.mubr.bf16.mxu0 %v1599
      %3361 = vmatmul.mubr.bf16.gmra.mrb[0].mxu0 %v1598
      %v3362 = vpop.f32.mrb[0].mxu0
      %v3363 = vadd.f32 %v2522, %v3362
      %v3364 = vpop.f32.mrb[0].mxu0
      %v3365 = vadd.f32 %v2524, %v3364
      %v3366 = vpop.f32.mrb[0].mxu0
      %v3367 = vadd.f32 %v2526, %v3366
      %v3368 = vpop.f32.mrb[0].mxu0
      %v3369 = vadd.f32 %v2528, %v3368
      %3370 = vmatprep.mubr.bf16.mxu0 %v1602
      %3371 = vmatmul.mubr.bf16.gmra.mrb[0].mxu0 %v1601
      %v3372 = vpop.f32.mrb[0].mxu0
      %v3373 = vadd.f32 %v2532, %v3372
      %v3374 = vpop.f32.mrb[0].mxu0
      %v3375 = vadd.f32 %v2534, %v3374
      %v3376 = vpop.f32.mrb[0].mxu0
      %v3377 = vadd.f32 %v2536, %v3376
      %v3378 = vpop.f32.mrb[0].mxu0
      %v3379 = vadd.f32 %v2538, %v3378
      %3380 = vdwg.mxu0
      %3381 = vmatprep.subr.bf16.mxu0 %v3089
      %3382 = vmatpush1.bf16.msra.mxu0 %v3088
      %3383 = vmatprep.subr.bf16.mxu0 %v3092
      %3384 = vmatpush1.bf16.msra.mxu0 %v3091
      %3385 = vmatprep.subr.bf16.mxu0 %v3095
      %3386 = vmatpush1.bf16.msra.mxu0 %v3094
      %3387 = vmatprep.subr.bf16.mxu0 %v3098
      %3388 = vmatpush1.bf16.msra.mxu0 %v3097
      %3389 = vmatprep.subr.bf16.mxu0 %v3101
      %3390 = vmatpush1.bf16.msra.mxu0 %v3100
      %3391 = vmatprep.subr.bf16.mxu0 0
      %3392 = vmatpush1.bf16.msra.mxu0 0
      %3393 = vmatprep.subr.bf16.mxu0 0
      %3394 = vmatpush1.bf16.msra.mxu0 0
      %3395 = vmatprep.subr.bf16.mxu0 0
      %3396 = vmatpush1.bf16.msra.mxu0 0
      %3397 = vmatprep.subr.bf16.mxu0 0
      %3398 = vmatpush1.bf16.msra.mxu0 0
      %3399 = vmatprep.subr.bf16.mxu0 0
      %3400 = vmatpush1.bf16.msra.mxu0 0
      %3401 = vmatprep.subr.bf16.mxu0 0
      %3402 = vmatpush1.bf16.msra.mxu0 0
      %3403 = vmatprep.subr.bf16.mxu0 0
      %3404 = vmatpush1.bf16.msra.mxu0 0
      %3405 = vmatprep.subr.bf16.mxu0 0
      %3406 = vmatpush1.bf16.msra.mxu0 0
      %3407 = vmatprep.subr.bf16.mxu0 0
      %3408 = vmatpush1.bf16.msra.mxu0 0
      %3409 = vmatprep.subr.bf16.mxu0 0
      %3410 = vmatpush1.bf16.msra.mxu0 0
      %3411 = vmatprep.subr.bf16.mxu0 0
      %3412 = vmatpush1.bf16.msra.mxu0 0
      %3413 = vmatprep.mubr.bf16.mxu0 0
      %3414 = vmatmul.mubr.bf16.gmra.mrb[0].mxu0 %v3167
      %v3415 = vpop.f32.mrb[0].mxu0
      %v3416 = vadd.f32 %v3243, %v3415
      %v3417 = vpop.f32.mrb[0].mxu0
      %v3418 = vadd.f32 %v3245, %v3417
      %v3419 = vpop.f32.mrb[0].mxu0
      %v3420 = vadd.f32 %v3247, %v3419
      %v3421 = vpop.f32.mrb[0].mxu0
      %v3422 = vadd.f32 %v3249, %v3421
      %3423 = vmatprep.mubr.bf16.mxu0 0
      %3424 = vmatmul.mubr.bf16.gmra.mrb[0].mxu0 %v3170
      %v3425 = vpop.f32.mrb[0].mxu0
      %v3426 = vadd.f32 %v3253, %v3425
      %v3427 = vpop.f32.mrb[0].mxu0
      %v3428 = vadd.f32 %v3255, %v3427
      %v3429 = vpop.f32.mrb[0].mxu0
      %v3430 = vadd.f32 %v3257, %v3429
      %v3431 = vpop.f32.mrb[0].mxu0
      %v3432 = vadd.f32 %v3259, %v3431
      %3433 = vmatprep.mubr.bf16.mxu0 0
      %3434 = vmatmul.mubr.bf16.gmra.mrb[0].mxu0 %v3173
      %v3435 = vpop.f32.mrb[0].mxu0
      %v3436 = vadd.f32 %v3263, %v3435
      %v3437 = vpop.f32.mrb[0].mxu0
      %v3438 = vadd.f32 %v3265, %v3437
      %v3439 = vpop.f32.mrb[0].mxu0
      %v3440 = vadd.f32 %v3267, %v3439
      %v3441 = vpop.f32.mrb[0].mxu0
      %v3442 = vadd.f32 %v3269, %v3441
      %3443 = vmatprep.mubr.bf16.mxu0 0
      %3444 = vmatmul.mubr.bf16.gmra.mrb[0].mxu0 %v3176
      %v3445 = vpop.f32.mrb[0].mxu0
      %v3446 = vadd.f32 %v3273, %v3445
      %v3447 = vpop.f32.mrb[0].mxu0
      %v3448 = vadd.f32 %v3275, %v3447
      %v3449 = vpop.f32.mrb[0].mxu0
      %v3450 = vadd.f32 %v3277, %v3449
      %v3451 = vpop.f32.mrb[0].mxu0
      %v3452 = vadd.f32 %v3279, %v3451
      %3453 = vmatprep.mubr.bf16.mxu0 0
      %3454 = vmatmul.mubr.bf16.gmra.mrb[0].mxu0 %v3179
      %v3455 = vpop.f32.mrb[0].mxu0
      %v3456 = vadd.f32 %v3283, %v3455
      %v3457 = vpop.f32.mrb[0].mxu0
      %v3458 = vadd.f32 %v3285, %v3457
      %v3459 = vpop.f32.mrb[0].mxu0
      %v3460 = vadd.f32 %v3287, %v3459
      %v3461 = vpop.f32.mrb[0].mxu0
      %v3462 = vadd.f32 %v3289, %v3461
      %3463 = vmatprep.mubr.bf16.mxu0 0
      %3464 = vmatmul.mubr.bf16.gmra.mrb[0].mxu0 %v3182
      %v3465 = vpop.f32.mrb[0].mxu0
      %v3466 = vadd.f32 %v3293, %v3465
      %v3467 = vpop.f32.mrb[0].mxu0
      %v3468 = vadd.f32 %v3295, %v3467
      %v3469 = vpop.f32.mrb[0].mxu0
      %v3470 = vadd.f32 %v3297, %v3469
      %v3471 = vpop.f32.mrb[0].mxu0
      %v3472 = vadd.f32 %v3299, %v3471
      %3473 = vmatprep.mubr.bf16.mxu0 0
      %3474 = vmatmul.mubr.bf16.gmra.mrb[0].mxu0 %v3185
      %v3475 = vpop.f32.mrb[0].mxu0
      %v3476 = vadd.f32 %v3303, %v3475
      %v3477 = vpop.f32.mrb[0].mxu0
      %v3478 = vadd.f32 %v3305, %v3477
      %v3479 = vpop.f32.mrb[0].mxu0
      %v3480 = vadd.f32 %v3307, %v3479
      %v3481 = vpop.f32.mrb[0].mxu0
      %v3482 = vadd.f32 %v3309, %v3481
      %3483 = vmatprep.mubr.bf16.mxu0 0
      %3484 = vmatmul.mubr.bf16.gmra.mrb[0].mxu0 %v3188
      %v3485 = vpop.f32.mrb[0].mxu0
      %v3486 = vadd.f32 %v3313, %v3485
      %v3487 = vpop.f32.mrb[0].mxu0
      %v3488 = vadd.f32 %v3315, %v3487
      %v3489 = vpop.f32.mrb[0].mxu0
      %v3490 = vadd.f32 %v3317, %v3489
      %v3491 = vpop.f32.mrb[0].mxu0
      %v3492 = vadd.f32 %v3319, %v3491
      %3493 = vmatprep.mubr.bf16.mxu0 0
      %3494 = vmatmul.mubr.bf16.gmra.mrb[0].mxu0 %v3191
      %v3495 = vpop.f32.mrb[0].mxu0
      %v3496 = vadd.f32 %v3323, %v3495
      %v3497 = vpop.f32.mrb[0].mxu0
      %v3498 = vadd.f32 %v3325, %v3497
      %v3499 = vpop.f32.mrb[0].mxu0
      %v3500 = vadd.f32 %v3327, %v3499
      %v3501 = vpop.f32.mrb[0].mxu0
      %v3502 = vadd.f32 %v3329, %v3501
      %3503 = vmatprep.mubr.bf16.mxu0 0
      %3504 = vmatmul.mubr.bf16.gmra.mrb[0].mxu0 %v3194
      %v3505 = vpop.f32.mrb[0].mxu0
      %v3506 = vadd.f32 %v3333, %v3505
      %v3507 = vpop.f32.mrb[0].mxu0
      %v3508 = vadd.f32 %v3335, %v3507
      %v3509 = vpop.f32.mrb[0].mxu0
      %v3510 = vadd.f32 %v3337, %v3509
      %v3511 = vpop.f32.mrb[0].mxu0
      %v3512 = vadd.f32 %v3339, %v3511
      %3513 = vmatprep.mubr.bf16.mxu0 0
      %3514 = vmatmul.mubr.bf16.gmra.mrb[0].mxu0 %v3197
      %v3515 = vpop.f32.mrb[0].mxu0
      %v3516 = vadd.f32 %v3343, %v3515
      %v3517 = vpop.f32.mrb[0].mxu0
      %v3518 = vadd.f32 %v3345, %v3517
      %v3519 = vpop.f32.mrb[0].mxu0
      %v3520 = vadd.f32 %v3347, %v3519
      %v3521 = vpop.f32.mrb[0].mxu0
      %v3522 = vadd.f32 %v3349, %v3521
      %3523 = vmatprep.mubr.bf16.mxu0 0
      %3524 = vmatmul.mubr.bf16.gmra.mrb[0].mxu0 %v3200
      %v3525 = vpop.f32.mrb[0].mxu0
      %v3526 = vadd.f32 %v3353, %v3525
      %v3527 = vpop.f32.mrb[0].mxu0
      %v3528 = vadd.f32 %v3355, %v3527
      %v3529 = vpop.f32.mrb[0].mxu0
      %v3530 = vadd.f32 %v3357, %v3529
      %v3531 = vpop.f32.mrb[0].mxu0
      %v3532 = vadd.f32 %v3359, %v3531
      %3533 = vmatprep.mubr.bf16.mxu0 0
      %3534 = vmatmul.mubr.bf16.gmra.mrb[0].mxu0 %v3203
      %v3535 = vpop.f32.mrb[0].mxu0
      %v3536 = vadd.f32 %v3363, %v3535
      %v3537 = vpop.f32.mrb[0].mxu0
      %v3538 = vadd.f32 %v3365, %v3537
      %v3539 = vpop.f32.mrb[0].mxu0
      %v3540 = vadd.f32 %v3367, %v3539
      %v3541 = vpop.f32.mrb[0].mxu0
      %v3542 = vadd.f32 %v3369, %v3541
      %3543 = vmatprep.mubr.bf16.mxu0 0
      %3544 = vmatmul.mubr.bf16.gmra.mrb[0].mxu0 %v3206
      %v3545 = vpop.f32.mrb[0].mxu0
      %v3546 = vadd.f32 %v3373, %v3545
      %v3547 = vpop.f32.mrb[0].mxu0
      %v3548 = vadd.f32 %v3375, %v3547
      %v3549 = vpop.f32.mrb[0].mxu0
      %v3550 = vadd.f32 %v3377, %v3549
      %v3551 = vpop.f32.mrb[0].mxu0
      %v3552 = vadd.f32 %v3379, %v3551
      %3553 = vdwg.mxu0
      %3554 = vmatprep.subr.bf16.mxu0 0
      %3555 = vmatpush1.bf16.msra.mxu0 %v3042
      %3556 = vmatprep.subr.bf16.mxu0 0
      %3557 = vmatpush1.bf16.msra.mxu0 %v3045
      %3558 = vmatprep.subr.bf16.mxu0 0
      %3559 = vmatpush1.bf16.msra.mxu0 %v3048
      %3560 = vmatprep.subr.bf16.mxu0 0
      %3561 = vmatpush1.bf16.msra.mxu0 %v3051
      %3562 = vmatprep.subr.bf16.mxu0 0
      %3563 = vmatpush1.bf16.msra.mxu0 %v3054
      %3564 = vmatprep.subr.bf16.mxu0 0
      %3565 = vmatpush1.bf16.msra.mxu0 %v3057
      %3566 = vmatprep.subr.bf16.mxu0 0
      %3567 = vmatpush1.bf16.msra.mxu0 %v3060
      %3568 = vmatprep.subr.bf16.mxu0 0
      %3569 = vmatpush1.bf16.msra.mxu0 %v3063
      %3570 = vmatprep.subr.bf16.mxu0 0
      %3571 = vmatpush1.bf16.msra.mxu0 %v3066
      %3572 = vmatprep.subr.bf16.mxu0 0
      %3573 = vmatpush1.bf16.msra.mxu0 %v3069
      %3574 = vmatprep.subr.bf16.mxu0 0
      %3575 = vmatpush1.bf16.msra.mxu0 %v3072
      %3576 = vmatprep.subr.bf16.mxu0 0
      %3577 = vmatpush1.bf16.msra.mxu0 %v3075
      %3578 = vmatprep.subr.bf16.mxu0 0
      %3579 = vmatpush1.bf16.msra.mxu0 %v3078
      %3580 = vmatprep.subr.bf16.mxu0 0
      %3581 = vmatpush1.bf16.msra.mxu0 %v3081
      %3582 = vmatprep.subr.bf16.mxu0 0
      %3583 = vmatpush1.bf16.msra.mxu0 %v3084
      %3584 = vmatprep.subr.bf16.mxu0 0
      %3585 = vmatpush1.bf16.msra.mxu0 %v3087
      %3586 = vmatprep.mubr.bf16.mxu0 %v1563
      %3587 = vmatmul.mubr.bf16.gmra.mrb[0].mxu0 %v1562
      %v3588 = vpop.f32.mrb[0].mxu0
      %v3589 = vadd.f32 %v2720, %v3588
      %v3590 = vpop.f32.mrb[0].mxu0
      %v3591 = vpop.f32.mrb[0].mxu0
      %v3592 = vadd.f32 %v2723, %v3591
      %v3593 = vpop.f32.mrb[0].mxu0
      %3594 = vmatprep.mubr.bf16.mxu0 %v1566
      %3595 = vmatmul.mubr.bf16.gmra.mrb[0].mxu0 %v1565
      %v3596 = vpop.f32.mrb[0].mxu0
      %v3597 = vadd.f32 %v2728, %v3596
      %v3598 = vpop.f32.mrb[0].mxu0
      %v3599 = vpop.f32.mrb[0].mxu0
      %v3600 = vadd.f32 %v2731, %v3599
      %v3601 = vpop.f32.mrb[0].mxu0
      %3602 = vmatprep.mubr.bf16.mxu0 %v1569
      %3603 = vmatmul.mubr.bf16.gmra.mrb[0].mxu0 %v1568
      %v3604 = vpop.f32.mrb[0].mxu0
      %v3605 = vadd.f32 %v2736, %v3604
      %v3606 = vpop.f32.mrb[0].mxu0
      %v3607 = vpop.f32.mrb[0].mxu0
      %v3608 = vadd.f32 %v2739, %v3607
      %v3609 = vpop.f32.mrb[0].mxu0
      %3610 = vmatprep.mubr.bf16.mxu0 %v1572
      %3611 = vmatmul.mubr.bf16.gmra.mrb[0].mxu0 %v1571
      %v3612 = vpop.f32.mrb[0].mxu0
      %v3613 = vadd.f32 %v2744, %v3612
      %v3614 = vpop.f32.mrb[0].mxu0
      %v3615 = vpop.f32.mrb[0].mxu0
      %v3616 = vadd.f32 %v2747, %v3615
      %v3617 = vpop.f32.mrb[0].mxu0
      %3618 = vmatprep.mubr.bf16.mxu0 %v1575
      %3619 = vmatmul.mubr.bf16.gmra.mrb[0].mxu0 %v1574
      %v3620 = vpop.f32.mrb[0].mxu0
      %v3621 = vadd.f32 %v2752, %v3620
      %v3622 = vpop.f32.mrb[0].mxu0
      %v3623 = vpop.f32.mrb[0].mxu0
      %v3624 = vadd.f32 %v2755, %v3623
      %v3625 = vpop.f32.mrb[0].mxu0
      %3626 = vmatprep.mubr.bf16.mxu0 %v1578
      %3627 = vmatmul.mubr.bf16.gmra.mrb[0].mxu0 %v1577
      %v3628 = vpop.f32.mrb[0].mxu0
      %v3629 = vadd.f32 %v2760, %v3628
      %v3630 = vpop.f32.mrb[0].mxu0
      %v3631 = vpop.f32.mrb[0].mxu0
      %v3632 = vadd.f32 %v2763, %v3631
      %v3633 = vpop.f32.mrb[0].mxu0
      %3634 = vmatprep.mubr.bf16.mxu0 %v1581
      %3635 = vmatmul.mubr.bf16.gmra.mrb[0].mxu0 %v1580
      %v3636 = vpop.f32.mrb[0].mxu0
      %v3637 = vadd.f32 %v2768, %v3636
      %v3638 = vpop.f32.mrb[0].mxu0
      %v3639 = vpop.f32.mrb[0].mxu0
      %v3640 = vadd.f32 %v2771, %v3639
      %v3641 = vpop.f32.mrb[0].mxu0
      %3642 = vmatprep.mubr.bf16.mxu0 %v1584
      %3643 = vmatmul.mubr.bf16.gmra.mrb[0].mxu0 %v1583
      %v3644 = vpop.f32.mrb[0].mxu0
      %v3645 = vadd.f32 %v2776, %v3644
      %v3646 = vpop.f32.mrb[0].mxu0
      %v3647 = vpop.f32.mrb[0].mxu0
      %v3648 = vadd.f32 %v2779, %v3647
      %v3649 = vpop.f32.mrb[0].mxu0
      %3650 = vmatprep.mubr.bf16.mxu0 %v1587
      %3651 = vmatmul.mubr.bf16.gmra.mrb[0].mxu0 %v1586
      %v3652 = vpop.f32.mrb[0].mxu0
      %v3653 = vadd.f32 %v2784, %v3652
      %v3654 = vpop.f32.mrb[0].mxu0
      %v3655 = vpop.f32.mrb[0].mxu0
      %v3656 = vadd.f32 %v2787, %v3655
      %v3657 = vpop.f32.mrb[0].mxu0
      %3658 = vmatprep.mubr.bf16.mxu0 %v1590
      %3659 = vmatmul.mubr.bf16.gmra.mrb[0].mxu0 %v1589
      %v3660 = vpop.f32.mrb[0].mxu0
      %v3661 = vadd.f32 %v2792, %v3660
      %v3662 = vpop.f32.mrb[0].mxu0
      %v3663 = vpop.f32.mrb[0].mxu0
      %v3664 = vadd.f32 %v2795, %v3663
      %v3665 = vpop.f32.mrb[0].mxu0
      %3666 = vmatprep.mubr.bf16.mxu0 %v1593
      %3667 = vmatmul.mubr.bf16.gmra.mrb[0].mxu0 %v1592
      %v3668 = vpop.f32.mrb[0].mxu0
      %v3669 = vadd.f32 %v2800, %v3668
      %v3670 = vpop.f32.mrb[0].mxu0
      %v3671 = vpop.f32.mrb[0].mxu0
      %v3672 = vadd.f32 %v2803, %v3671
      %v3673 = vpop.f32.mrb[0].mxu0
      %3674 = vmatprep.mubr.bf16.mxu0 %v1596
      %3675 = vmatmul.mubr.bf16.gmra.mrb[0].mxu0 %v1595
      %v3676 = vpop.f32.mrb[0].mxu0
      %v3677 = vadd.f32 %v2808, %v3676
      %v3678 = vpop.f32.mrb[0].mxu0
      %v3679 = vpop.f32.mrb[0].mxu0
      %v3680 = vadd.f32 %v2811, %v3679
      %v3681 = vpop.f32.mrb[0].mxu0
      %3682 = vmatprep.mubr.bf16.mxu0 %v1599
      %3683 = vmatmul.mubr.bf16.gmra.mrb[0].mxu0 %v1598
      %v3684 = vpop.f32.mrb[0].mxu0
      %v3685 = vadd.f32 %v2816, %v3684
      %v3686 = vpop.f32.mrb[0].mxu0
      %v3687 = vpop.f32.mrb[0].mxu0
      %v3688 = vadd.f32 %v2819, %v3687
      %v3689 = vpop.f32.mrb[0].mxu0
      %3690 = vmatprep.mubr.bf16.mxu0 %v1602
      %3691 = vmatmul.mubr.bf16.gmra.mrb[0].mxu0 %v1601
      %v3692 = vpop.f32.mrb[0].mxu0
      %v3693 = vadd.f32 %v2824, %v3692
      %v3694 = vpop.f32.mrb[0].mxu0
      %v3695 = vpop.f32.mrb[0].mxu0
      %v3696 = vadd.f32 %v2827, %v3695
      %v3697 = vpop.f32.mrb[0].mxu0
      %3698 = vdwg.mxu0
      %3699 = vmatprep.subr.bf16.mxu0 0
      %3700 = vmatpush1.bf16.msra.mxu0 %v3090
      %3701 = vmatprep.subr.bf16.mxu0 0
      %3702 = vmatpush1.bf16.msra.mxu0 %v3093
      %3703 = vmatprep.subr.bf16.mxu0 0
      %3704 = vmatpush1.bf16.msra.mxu0 %v3096
      %3705 = vmatprep.subr.bf16.mxu0 0
      %3706 = vmatpush1.bf16.msra.mxu0 %v3099
      %3707 = vmatprep.subr.bf16.mxu0 0
      %3708 = vmatpush1.bf16.msra.mxu0 %v3102
      %3709 = vmatprep.subr.bf16.mxu0 0
      %3710 = vmatpush1.bf16.msra.mxu0 0
      %3711 = vmatprep.subr.bf16.mxu0 0
      %3712 = vmatpush1.bf16.msra.mxu0 0
      %3713 = vmatprep.subr.bf16.mxu0 0
      %3714 = vmatpush1.bf16.msra.mxu0 0
      %3715 = vmatprep.subr.bf16.mxu0 0
      %3716 = vmatpush1.bf16.msra.mxu0 0
      %3717 = vmatprep.subr.bf16.mxu0 0
      %3718 = vmatpush1.bf16.msra.mxu0 0
      %3719 = vmatprep.subr.bf16.mxu0 0
      %3720 = vmatpush1.bf16.msra.mxu0 0
      %3721 = vmatprep.subr.bf16.mxu0 0
      %3722 = vmatpush1.bf16.msra.mxu0 0
      %3723 = vmatprep.subr.bf16.mxu0 0
      %3724 = vmatpush1.bf16.msra.mxu0 0
      %3725 = vmatprep.subr.bf16.mxu0 0
      %3726 = vmatpush1.bf16.msra.mxu0 0
      %3727 = vmatprep.subr.bf16.mxu0 0
      %3728 = vmatpush1.bf16.msra.mxu0 0
      %3729 = vmatprep.subr.bf16.mxu0 0
      %3730 = vmatpush1.bf16.msra.mxu0 0
      %3731 = vmatprep.mubr.bf16.mxu0 0
      %3732 = vmatmul.mubr.bf16.gmra.mrb[0].mxu0 %v3167
      %v3733 = vpop.f32.mrb[0].mxu0
      %v3734 = vadd.f32 %v3589, %v3733
      %v3735 = vpop.f32.mrb[0].mxu0
      %v3736 = vpop.f32.mrb[0].mxu0
      %v3737 = vadd.f32 %v3592, %v3736
      %v3738 = vpop.f32.mrb[0].mxu0
      %3739 = vmatprep.mubr.bf16.mxu0 0
      %3740 = vmatmul.mubr.bf16.gmra.mrb[0].mxu0 %v3170
      %v3741 = vpop.f32.mrb[0].mxu0
      %v3742 = vadd.f32 %v3597, %v3741
      %v3743 = vpop.f32.mrb[0].mxu0
      %v3744 = vpop.f32.mrb[0].mxu0
      %v3745 = vadd.f32 %v3600, %v3744
      %v3746 = vpop.f32.mrb[0].mxu0
      %3747 = vmatprep.mubr.bf16.mxu0 0
      %3748 = vmatmul.mubr.bf16.gmra.mrb[0].mxu0 %v3173
      %v3749 = vpop.f32.mrb[0].mxu0
      %v3750 = vadd.f32 %v3605, %v3749
      %v3751 = vpop.f32.mrb[0].mxu0
      %v3752 = vpop.f32.mrb[0].mxu0
      %v3753 = vadd.f32 %v3608, %v3752
      %v3754 = vpop.f32.mrb[0].mxu0
      %3755 = vmatprep.mubr.bf16.mxu0 0
      %3756 = vmatmul.mubr.bf16.gmra.mrb[0].mxu0 %v3176
      %v3757 = vpop.f32.mrb[0].mxu0
      %v3758 = vadd.f32 %v3613, %v3757
      %v3759 = vpop.f32.mrb[0].mxu0
      %v3760 = vpop.f32.mrb[0].mxu0
      %v3761 = vadd.f32 %v3616, %v3760
      %v3762 = vpop.f32.mrb[0].mxu0
      %3763 = vmatprep.mubr.bf16.mxu0 0
      %3764 = vmatmul.mubr.bf16.gmra.mrb[0].mxu0 %v3179
      %v3765 = vpop.f32.mrb[0].mxu0
      %v3766 = vadd.f32 %v3621, %v3765
      %v3767 = vpop.f32.mrb[0].mxu0
      %v3768 = vpop.f32.mrb[0].mxu0
      %v3769 = vadd.f32 %v3624, %v3768
      %v3770 = vpop.f32.mrb[0].mxu0
      %3771 = vmatprep.mubr.bf16.mxu0 0
      %3772 = vmatmul.mubr.bf16.gmra.mrb[0].mxu0 %v3182
      %v3773 = vpop.f32.mrb[0].mxu0
      %v3774 = vadd.f32 %v3629, %v3773
      %v3775 = vpop.f32.mrb[0].mxu0
      %v3776 = vpop.f32.mrb[0].mxu0
      %v3777 = vadd.f32 %v3632, %v3776
      %v3778 = vpop.f32.mrb[0].mxu0
      %3779 = vmatprep.mubr.bf16.mxu0 0
      %3780 = vmatmul.mubr.bf16.gmra.mrb[0].mxu0 %v3185
      %v3781 = vpop.f32.mrb[0].mxu0
      %v3782 = vadd.f32 %v3637, %v3781
      %v3783 = vpop.f32.mrb[0].mxu0
      %v3784 = vpop.f32.mrb[0].mxu0
      %v3785 = vadd.f32 %v3640, %v3784
      %v3786 = vpop.f32.mrb[0].mxu0
      %3787 = vmatprep.mubr.bf16.mxu0 0
      %3788 = vmatmul.mubr.bf16.gmra.mrb[0].mxu0 %v3188
      %v3789 = vpop.f32.mrb[0].mxu0
      %v3790 = vadd.f32 %v3645, %v3789
      %v3791 = vpop.f32.mrb[0].mxu0
      %v3792 = vpop.f32.mrb[0].mxu0
      %v3793 = vadd.f32 %v3648, %v3792
      %v3794 = vpop.f32.mrb[0].mxu0
      %3795 = vmatprep.mubr.bf16.mxu0 0
      %3796 = vmatmul.mubr.bf16.gmra.mrb[0].mxu0 %v3191
      %v3797 = vpop.f32.mrb[0].mxu0
      %v3798 = vadd.f32 %v3653, %v3797
      %v3799 = vpop.f32.mrb[0].mxu0
      %v3800 = vpop.f32.mrb[0].mxu0
      %v3801 = vadd.f32 %v3656, %v3800
      %v3802 = vpop.f32.mrb[0].mxu0
      %3803 = vmatprep.mubr.bf16.mxu0 0
      %3804 = vmatmul.mubr.bf16.gmra.mrb[0].mxu0 %v3194
      %v3805 = vpop.f32.mrb[0].mxu0
      %v3806 = vadd.f32 %v3661, %v3805
      %v3807 = vpop.f32.mrb[0].mxu0
      %v3808 = vpop.f32.mrb[0].mxu0
      %v3809 = vadd.f32 %v3664, %v3808
      %v3810 = vpop.f32.mrb[0].mxu0
      %3811 = vmatprep.mubr.bf16.mxu0 0
      %3812 = vmatmul.mubr.bf16.gmra.mrb[0].mxu0 %v3197
      %v3813 = vpop.f32.mrb[0].mxu0
      %v3814 = vadd.f32 %v3669, %v3813
      %v3815 = vpop.f32.mrb[0].mxu0
      %v3816 = vpop.f32.mrb[0].mxu0
      %v3817 = vadd.f32 %v3672, %v3816
      %v3818 = vpop.f32.mrb[0].mxu0
      %3819 = vmatprep.mubr.bf16.mxu0 0
      %3820 = vmatmul.mubr.bf16.gmra.mrb[0].mxu0 %v3200
      %v3821 = vpop.f32.mrb[0].mxu0
      %v3822 = vadd.f32 %v3677, %v3821
      %v3823 = vpop.f32.mrb[0].mxu0
      %v3824 = vpop.f32.mrb[0].mxu0
      %v3825 = vadd.f32 %v3680, %v3824
      %v3826 = vpop.f32.mrb[0].mxu0
      %3827 = vmatprep.mubr.bf16.mxu0 0
      %3828 = vmatmul.mubr.bf16.gmra.mrb[0].mxu0 %v3203
      %v3829 = vpop.f32.mrb[0].mxu0
      %v3830 = vadd.f32 %v3685, %v3829
      %v3831 = vpop.f32.mrb[0].mxu0
      %v3832 = vpop.f32.mrb[0].mxu0
      %v3833 = vadd.f32 %v3688, %v3832
      %v3834 = vpop.f32.mrb[0].mxu0
      %3835 = vmatprep.mubr.bf16.mxu0 0
      %3836 = vmatmul.mubr.bf16.gmra.mrb[0].mxu0 %v3206
      %v3837 = vpop.f32.mrb[0].mxu0
      %v3838 = vadd.f32 %v3693, %v3837
      %v3839 = vpop.f32.mrb[0].mxu0
      %v3840 = vpop.f32.mrb[0].mxu0
      %v3841 = vadd.f32 %v3696, %v3840
      %v3842 = vpop.f32.mrb[0].mxu0
      %3843 = vdwg.mxu0
      %v3844 = vpack.c.bf16 %v1481, %v1478
      %v3845 = vpack.c.bf16 %v1482, %v1479
      %v3846 = vpack.c.bf16 %v1483, %v1480
      %v3847 = vpack.c.bf16 %v1487, %v1484
      %v3848 = vpack.c.bf16 %v1488, %v1485
      %v3849 = vpack.c.bf16 %v1489, %v1486
      %v3850 = vpack.c.bf16 %v1493, %v1490
      %v3851 = vpack.c.bf16 %v1494, %v1491
      %v3852 = vpack.c.bf16 %v1495, %v1492
      %v3853 = vpack.c.bf16 %v1499, %v1496
      %v3854 = vpack.c.bf16 %v1500, %v1497
      %v3855 = vpack.c.bf16 %v1501, %v1498
      %v3856 = vpack.c.bf16 %v1505, %v1502
      %v3857 = vpack.c.bf16 %v1506, %v1503
      %v3858 = vpack.c.bf16 %v1507, %v1504
      %v3859 = vpack.c.bf16 %v1511, %v1508
      %v3860 = vpack.c.bf16 %v1512, %v1509
      %v3861 = vpack.c.bf16 %v1513, %v1510
      %v3862 = vpack.c.bf16 %v1517, %v1514
      %v3863 = vpack.c.bf16 %v1518, %v1515
      %v3864 = vpack.c.bf16 %v1519, %v1516
      %v3865 = vpack.c.bf16 %v1523, %v1520
      %v3866 = vpack.c.bf16 %v1524, %v1521
      %v3867 = vpack.c.bf16 %v1525, %v1522
      %v3868 = vpack.c.bf16 %v1529, %v1526
      %v3869 = vpack.c.bf16 %v1530, %v1527
      %v3870 = vpack.c.bf16 %v1531, %v1528
      %v3871 = vpack.c.bf16 %v1535, %v1532
      %v3872 = vpack.c.bf16 %v1536, %v1533
      %v3873 = vpack.c.bf16 %v1537, %v1534
      %v3874 = vpack.c.bf16 %v1541, %v1538
      %v3875 = vpack.c.bf16 %v1542, %v1539
      %v3876 = vpack.c.bf16 %v1543, %v1540
      %v3877 = vpack.c.bf16 %v1547, %v1544
      %v3878 = vpack.c.bf16 %v1548, %v1545
      %v3879 = vpack.c.bf16 %v1549, %v1546
      %v3880 = vpack.c.bf16 %v1553, %v1550
      %v3881 = vpack.c.bf16 %v1554, %v1551
      %v3882 = vpack.c.bf16 %v1555, %v1552
      %v3883 = vpack.c.bf16 %v1559, %v1556
      %v3884 = vpack.c.bf16 %v1560, %v1557
      %v3885 = vpack.c.bf16 %v1561, %v1558
      %s3886 = scalar_lea.vmem %s1, 1008
      %v3887 = vld [vmem:[%s3886] sm:$0xff]
      %v3888 = vld [vmem:[%s3886 + $0x8] sm:$0xf]
      %v3889 = vld [vmem:[%s3886 + $0xc] sm:$0xff]
      %v3890 = vld [vmem:[%s3886 + $0x14] sm:$0xf]
      %v3891 = vld [vmem:[%s3886 + $0x18] sm:$0xff]
      %v3892 = vld [vmem:[%s3886 + $0x20] sm:$0xf]
      %v3893 = vld [vmem:[%s3886 + $0x24] sm:$0xff]
      %v3894 = vld [vmem:[%s3886 + $0x2c] sm:$0xf]
      %v3895 = vld [vmem:[%s3886 + $0x30] sm:$0xff]
      %v3896 = vld [vmem:[%s3886 + $0x38] sm:$0xf]
      %v3897 = vld [vmem:[%s3886 + $0x3c] sm:$0xff]
      %v3898 = vld [vmem:[%s3886 + $0x44] sm:$0xf]
      %v3899 = vld [vmem:[%s3886 + $0x48] sm:$0xff]
      %v3900 = vld [vmem:[%s3886 + $0x50] sm:$0xf]
      %v3901 = vld [vmem:[%s3886 + $0x54] sm:$0xff]
      %v3902 = vld [vmem:[%s3886 + $0x5c] sm:$0xf]
      %v3903 = vld [vmem:[%s3886 + $0x60] sm:$0xff]
      %v3904 = vld [vmem:[%s3886 + $0x68] sm:$0xf]
      %v3905 = vld [vmem:[%s3886 + $0x6c] sm:$0xff]
      %v3906 = vld [vmem:[%s3886 + $0x74] sm:$0xf]
      %v3907 = vld [vmem:[%s3886 + $0x78] sm:$0xff]
      %v3908 = vld [vmem:[%s3886 + $0x80] sm:$0xf]
      %v3909 = vld [vmem:[%s3886 + $0x84] sm:$0xff]
      %v3910 = vld [vmem:[%s3886 + $0x8c] sm:$0xf]
      %v3911 = vld [vmem:[%s3886 + $0x90] sm:$0xff]
      %v3912 = vld [vmem:[%s3886 + $0x98] sm:$0xf]
      %v3913 = vld [vmem:[%s3886 + $0x9c] sm:$0xff]
      %v3914 = vld [vmem:[%s3886 + $0xa4] sm:$0xf]
      %v3915 = vld [vmem:[%s3886 + $0xa8] sm:$0xff]
      %v3916 = vld [vmem:[%s3886 + $0xb0] sm:$0xf]
      %v3917 = vld [vmem:[%s3886 + $0xb4] sm:$0xff]
      %v3918 = vld [vmem:[%s3886 + $0xbc] sm:$0xf]
      %v3919 = vld [vmem:[%s3886 + $0xc0] sm:$0xff]
      %v3920 = vld [vmem:[%s3886 + $0xc8] sm:$0xf]
      %v3921 = vld [vmem:[%s3886 + $0xcc] sm:$0xff]
      %v3922 = vld [vmem:[%s3886 + $0xd4] sm:$0xf]
      %v3923 = vld [vmem:[%s3886 + $0xd8] sm:$0xff]
      %v3924 = vld [vmem:[%s3886 + $0xe0] sm:$0xf]
      %v3925 = vld [vmem:[%s3886 + $0xe4] sm:$0xff]
      %v3926 = vld [vmem:[%s3886 + $0xec] sm:$0xf]
      %v3927 = vld [vmem:[%s3886 + $0xf0] sm:$0xff]
      %v3928 = vld [vmem:[%s3886 + $0xf8] sm:$0xf]
      %v3929 = vld [vmem:[%s3886 + $0xfc] sm:$0xff]
      %v3930 = vld [vmem:[%s3886 + $0x104] sm:$0xf]
      %v3931 = vld [vmem:[%s3886 + $0x108] sm:$0xff]
      %v3932 = vld [vmem:[%s3886 + $0x110] sm:$0xf]
      %v3933 = vld [vmem:[%s3886 + $0x114] sm:$0xff]
      %v3934 = vld [vmem:[%s3886 + $0x11c] sm:$0xf]
      %v3935 = vld [vmem:[%s3886 + $0x120] sm:$0xff]
      %v3936 = vld [vmem:[%s3886 + $0x128] sm:$0xf]
      %v3937 = vld [vmem:[%s3886 + $0x12c] sm:$0xff]
      %v3938 = vld [vmem:[%s3886 + $0x134] sm:$0xf]
      %v3939 = vld [vmem:[%s3886 + $0x138] sm:$0xff]
      %v3940 = vld [vmem:[%s3886 + $0x140] sm:$0xf]
      %v3941 = vld [vmem:[%s3886 + $0x144] sm:$0xff]
      %v3942 = vld [vmem:[%s3886 + $0x14c] sm:$0xf]
      %v3943 = vld [vmem:[%s3886 + $0x150] sm:$0xff]
      %v3944 = vld [vmem:[%s3886 + $0x158] sm:$0xf]
      %v3945 = vld [vmem:[%s3886 + $0x15c] sm:$0xff]
      %v3946 = vld [vmem:[%s3886 + $0x164] sm:$0xf]
      %v3947 = vld [vmem:[%s3886 + $0x168] sm:$0xff]
      %v3948 = vld [vmem:[%s3886 + $0x170] sm:$0xf]
      %v3949 = vld [vmem:[%s3886 + $0x174] sm:$0xff]
      %v3950 = vld [vmem:[%s3886 + $0x17c] sm:$0xf]
      %v3951 = vld [vmem:[%s3886 + $0x180] sm:$0xff]
      %v3952 = vld [vmem:[%s3886 + $0x188] sm:$0xf]
      %v3953 = vld [vmem:[%s3886 + $0x18c] sm:$0xff]
      %v3954 = vld [vmem:[%s3886 + $0x194] sm:$0xf]
      %v3955 = vld [vmem:[%s3886 + $0x198] sm:$0xff]
      %v3956 = vld [vmem:[%s3886 + $0x1a0] sm:$0xf]
      %v3957 = vld [vmem:[%s3886 + $0x1a4] sm:$0xff]
      %v3958 = vld [vmem:[%s3886 + $0x1ac] sm:$0xf]
      %v3959 = vld [vmem:[%s3886 + $0x1b0] sm:$0xff]
      %v3960 = vld [vmem:[%s3886 + $0x1b8] sm:$0xf]
      %v3961 = vld [vmem:[%s3886 + $0x1bc] sm:$0xff]
      %v3962 = vld [vmem:[%s3886 + $0x1c4] sm:$0xf]
      %v3963 = vld [vmem:[%s3886 + $0x1c8] sm:$0xff]
      %v3964 = vld [vmem:[%s3886 + $0x1d0] sm:$0xf]
      %v3965 = vld [vmem:[%s3886 + $0x1d4] sm:$0xff]
      %v3966 = vld [vmem:[%s3886 + $0x1dc] sm:$0xf]
      %v3967 = vld [vmem:[%s3886 + $0x1e0] sm:$0xff]
      %v3968 = vld [vmem:[%s3886 + $0x1e8] sm:$0xf]
      %v3969 = vld [vmem:[%s3886 + $0x1ec] sm:$0xff]
      %v3970 = vld [vmem:[%s3886 + $0x1f4] sm:$0xf]
      %v4055 = vunpack.c.l.b16 %v3887
      %v4056 = vunpack.c.h.b16 %v3887
      %v4057 = vunpack.c.l.b16 %v3888
      %v4058 = vunpack.c.l.b16 %v3889
      %v4059 = vunpack.c.h.b16 %v3889
      %v4060 = vunpack.c.l.b16 %v3890
      %v4061 = vunpack.c.l.b16 %v3891
      %v4062 = vunpack.c.h.b16 %v3891
      %v4063 = vunpack.c.l.b16 %v3892
      %v4064 = vunpack.c.l.b16 %v3893
      %v4065 = vunpack.c.h.b16 %v3893
      %v4066 = vunpack.c.l.b16 %v3894
      %v4067 = vunpack.c.l.b16 %v3895
      %v4068 = vunpack.c.h.b16 %v3895
      %v4069 = vunpack.c.l.b16 %v3896
      %v4070 = vunpack.c.l.b16 %v3897
      %v4071 = vunpack.c.h.b16 %v3897
      %v4072 = vunpack.c.l.b16 %v3898
      %v4073 = vunpack.c.l.b16 %v3899
      %v4074 = vunpack.c.h.b16 %v3899
      %v4075 = vunpack.c.l.b16 %v3900
      %v4076 = vunpack.c.l.b16 %v3901
      %v4077 = vunpack.c.h.b16 %v3901
      %v4078 = vunpack.c.l.b16 %v3902
      %v4079 = vunpack.c.l.b16 %v3903
      %v4080 = vunpack.c.h.b16 %v3903
      %v4081 = vunpack.c.l.b16 %v3904
      %v4082 = vunpack.c.l.b16 %v3905
      %v4083 = vunpack.c.h.b16 %v3905
      %v4084 = vunpack.c.l.b16 %v3906
      %v4085 = vunpack.c.l.b16 %v3907
      %v4086 = vunpack.c.h.b16 %v3907
      %v4087 = vunpack.c.l.b16 %v3908
      %v4088 = vunpack.c.l.b16 %v3909
      %v4089 = vunpack.c.h.b16 %v3909
      %v4090 = vunpack.c.l.b16 %v3910
      %v4091 = vunpack.c.l.b16 %v3911
      %v4092 = vunpack.c.h.b16 %v3911
      %v4093 = vunpack.c.l.b16 %v3912
      %v4094 = vunpack.c.l.b16 %v3913
      %v4095 = vunpack.c.h.b16 %v3913
      %v4096 = vunpack.c.l.b16 %v3914
      %v4097 = vunpack.c.l.b16 %v3915
      %v4098 = vunpack.c.h.b16 %v3915
      %v4099 = vunpack.c.l.b16 %v3916
      %v4100 = vunpack.c.l.b16 %v3917
      %v4101 = vunpack.c.h.b16 %v3917
      %v4102 = vunpack.c.l.b16 %v3918
      %v4103 = vunpack.c.l.b16 %v3919
      %v4104 = vunpack.c.h.b16 %v3919
      %v4105 = vunpack.c.l.b16 %v3920
      %v4106 = vunpack.c.l.b16 %v3921
      %v4107 = vunpack.c.h.b16 %v3921
      %v4108 = vunpack.c.l.b16 %v3922
      %v4109 = vunpack.c.l.b16 %v3923
      %v4110 = vunpack.c.h.b16 %v3923
      %v4111 = vunpack.c.l.b16 %v3924
      %v4112 = vunpack.c.l.b16 %v3925
      %v4113 = vunpack.c.h.b16 %v3925
      %v4114 = vunpack.c.l.b16 %v3926
      %v4115 = vunpack.c.l.b16 %v3927
      %v4116 = vunpack.c.h.b16 %v3927
      %v4117 = vunpack.c.l.b16 %v3928
      %v4118 = vunpack.c.l.b16 %v3929
      %v4119 = vunpack.c.h.b16 %v3929
      %v4120 = vunpack.c.l.b16 %v3930
      %v4121 = vunpack.c.l.b16 %v3931
      %v4122 = vunpack.c.h.b16 %v3931
      %v4123 = vunpack.c.l.b16 %v3932
      %v4124 = vunpack.c.l.b16 %v3933
      %v4125 = vunpack.c.h.b16 %v3933
      %v4126 = vunpack.c.l.b16 %v3934
      %v4127 = vunpack.c.l.b16 %v3935
      %v4128 = vunpack.c.h.b16 %v3935
      %v4129 = vunpack.c.l.b16 %v3936
      %v4130 = vunpack.c.l.b16 %v3937
      %v4131 = vunpack.c.h.b16 %v3937
      %v4132 = vunpack.c.l.b16 %v3938
      %v4133 = vunpack.c.l.b16 %v3939
      %v4134 = vunpack.c.h.b16 %v3939
      %v4135 = vunpack.c.l.b16 %v3940
      %v4136 = vunpack.c.l.b16 %v3941
      %v4137 = vunpack.c.h.b16 %v3941
      %v4138 = vunpack.c.l.b16 %v3942
      %v4139 = vunpack.c.l.b16 %v3943
      %v4140 = vunpack.c.h.b16 %v3943
      %v4141 = vunpack.c.l.b16 %v3944
      %v4142 = vunpack.c.l.b16 %v3945
      %v4143 = vunpack.c.h.b16 %v3945
      %v4144 = vunpack.c.l.b16 %v3946
      %v4145 = vunpack.c.l.b16 %v3947
      %v4146 = vunpack.c.h.b16 %v3947
      %v4147 = vunpack.c.l.b16 %v3948
      %v4148 = vunpack.c.l.b16 %v3949
      %v4149 = vunpack.c.h.b16 %v3949
      %v4150 = vunpack.c.l.b16 %v3950
      %v4151 = vunpack.c.l.b16 %v3951
      %v4152 = vunpack.c.h.b16 %v3951
      %v4153 = vunpack.c.l.b16 %v3952
      %v4154 = vunpack.c.l.b16 %v3953
      %v4155 = vunpack.c.h.b16 %v3953
      %v4156 = vunpack.c.l.b16 %v3954
      %v4157 = vunpack.c.l.b16 %v3955
      %v4158 = vunpack.c.h.b16 %v3955
      %v4159 = vunpack.c.l.b16 %v3956
      %v4160 = vunpack.c.l.b16 %v3957
      %v4161 = vunpack.c.h.b16 %v3957
      %v4162 = vunpack.c.l.b16 %v3958
      %v4163 = vunpack.c.l.b16 %v3959
      %v4164 = vunpack.c.h.b16 %v3959
      %v4165 = vunpack.c.l.b16 %v3960
      %v4166 = vunpack.c.l.b16 %v3961
      %v4167 = vunpack.c.h.b16 %v3961
      %v4168 = vunpack.c.l.b16 %v3962
      %v4169 = vunpack.c.l.b16 %v3963
      %v4170 = vunpack.c.h.b16 %v3963
      %v4171 = vunpack.c.l.b16 %v3964
      %v4172 = vunpack.c.l.b16 %v3965
      %v4173 = vunpack.c.h.b16 %v3965
      %v4174 = vunpack.c.l.b16 %v3966
      %v4175 = vunpack.c.l.b16 %v3967
      %v4176 = vunpack.c.h.b16 %v3967
      %v4177 = vunpack.c.l.b16 %v3968
      %v4178 = vunpack.c.l.b16 %v3969
      %v4179 = vunpack.c.h.b16 %v3969
      %v4180 = vunpack.c.l.b16 %v3970
      %v4181 = vpack.c.b16 %v4058, %v4055
      %v4182 = vpack.c.b16 %v4059, %v4056
      %v4183 = vpack.c.b16 %v4060, %v4057
      %v4184 = vpack.c.b16 %v4064, %v4061
      %v4185 = vpack.c.b16 %v4065, %v4062
      %v4186 = vpack.c.b16 %v4066, %v4063
      %v4187 = vpack.c.b16 %v4070, %v4067
      %v4188 = vpack.c.b16 %v4071, %v4068
      %v4189 = vpack.c.b16 %v4072, %v4069
      %v4190 = vpack.c.b16 %v4076, %v4073
      %v4191 = vpack.c.b16 %v4077, %v4074
      %v4192 = vpack.c.b16 %v4078, %v4075
      %v4193 = vpack.c.b16 %v4082, %v4079
      %v4194 = vpack.c.b16 %v4083, %v4080
      %v4195 = vpack.c.b16 %v4084, %v4081
      %v4196 = vpack.c.b16 %v4088, %v4085
      %v4197 = vpack.c.b16 %v4089, %v4086
      %v4198 = vpack.c.b16 %v4090, %v4087
      %v4199 = vpack.c.b16 %v4094, %v4091
      %v4200 = vpack.c.b16 %v4095, %v4092
      %v4201 = vpack.c.b16 %v4096, %v4093
      %v4202 = vpack.c.b16 %v4100, %v4097
      %v4203 = vpack.c.b16 %v4101, %v4098
      %v4204 = vpack.c.b16 %v4102, %v4099
      %v4205 = vpack.c.b16 %v4106, %v4103
      %v4206 = vpack.c.b16 %v4107, %v4104
      %v4207 = vpack.c.b16 %v4108, %v4105
      %v4208 = vpack.c.b16 %v4112, %v4109
      %v4209 = vpack.c.b16 %v4113, %v4110
      %v4210 = vpack.c.b16 %v4114, %v4111
      %v4211 = vpack.c.b16 %v4118, %v4115
      %v4212 = vpack.c.b16 %v4119, %v4116
      %v4213 = vpack.c.b16 %v4120, %v4117
      %v4214 = vpack.c.b16 %v4124, %v4121
      %v4215 = vpack.c.b16 %v4125, %v4122
      %v4216 = vpack.c.b16 %v4126, %v4123
      %v4217 = vpack.c.b16 %v4130, %v4127
      %v4218 = vpack.c.b16 %v4131, %v4128
      %v4219 = vpack.c.b16 %v4132, %v4129
      %v4220 = vpack.c.b16 %v4136, %v4133
      %v4221 = vpack.c.b16 %v4137, %v4134
      %v4222 = vpack.c.b16 %v4138, %v4135
      %v4223 = vpack.c.b16 %v4142, %v4139
      %v4224 = vpack.c.b16 %v4143, %v4140
      %v4225 = vpack.c.b16 %v4144, %v4141
      %v4226 = vpack.c.b16 %v4148, %v4145
      %v4227 = vpack.c.b16 %v4149, %v4146
      %v4228 = vpack.c.b16 %v4150, %v4147
      %v4229 = vpack.c.b16 %v4154, %v4151
      %v4230 = vpack.c.b16 %v4155, %v4152
      %v4231 = vpack.c.b16 %v4156, %v4153
      %v4232 = vpack.c.b16 %v4160, %v4157
      %v4233 = vpack.c.b16 %v4161, %v4158
      %v4234 = vpack.c.b16 %v4162, %v4159
      %v4235 = vpack.c.b16 %v4166, %v4163
      %v4236 = vpack.c.b16 %v4167, %v4164
      %v4237 = vpack.c.b16 %v4168, %v4165
      %v4238 = vpack.c.b16 %v4172, %v4169
      %v4239 = vpack.c.b16 %v4173, %v4170
      %v4240 = vpack.c.b16 %v4174, %v4171
      %v4241 = vpack.c.b16 %v4178, %v4175
      %v4242 = vpack.c.b16 %v4179, %v4176
      %v4243 = vpack.c.b16 %v4180, %v4177
      %v4308 = vsel %vm2151, %v3846, 0
      %v4311 = vsel %vm2151, %v3849, 0
      %v4314 = vsel %vm2151, %v3852, 0
      %v4317 = vsel %vm2151, %v3855, 0
      %v4320 = vsel %vm2151, %v3858, 0
      %v4323 = vsel %vm2151, %v3861, 0
      %v4326 = vsel %vm2151, %v3864, 0
      %v4329 = vsel %vm2151, %v3867, 0
      %v4332 = vsel %vm2151, %v3870, 0
      %v4335 = vsel %vm2151, %v3873, 0
      %v4338 = vsel %vm2151, %v3876, 0
      %v4341 = vsel %vm2151, %v3879, 0
      %v4344 = vsel %vm2151, %v3882, 0
      %v4347 = vsel %vm2151, %v3885, 0
      %4349 = vmatprep.subr.bf16.mxu0 %v4182
      %4350 = vmatpush1.bf16.msra.mxu0 %v4181
      %4351 = vmatprep.subr.bf16.mxu0 %v4185
      %4352 = vmatpush1.bf16.msra.mxu0 %v4184
      %4353 = vmatprep.subr.bf16.mxu0 %v4188
      %4354 = vmatpush1.bf16.msra.mxu0 %v4187
      %4355 = vmatprep.subr.bf16.mxu0 %v4191
      %4356 = vmatpush1.bf16.msra.mxu0 %v4190
      %4357 = vmatprep.subr.bf16.mxu0 %v4194
      %4358 = vmatpush1.bf16.msra.mxu0 %v4193
      %4359 = vmatprep.subr.bf16.mxu0 %v4197
      %4360 = vmatpush1.bf16.msra.mxu0 %v4196
      %4361 = vmatprep.subr.bf16.mxu0 %v4200
      %4362 = vmatpush1.bf16.msra.mxu0 %v4199
      %4363 = vmatprep.subr.bf16.mxu0 %v4203
      %4364 = vmatpush1.bf16.msra.mxu0 %v4202
      %4365 = vmatprep.subr.bf16.mxu0 %v4206
      %4366 = vmatpush1.bf16.msra.mxu0 %v4205
      %4367 = vmatprep.subr.bf16.mxu0 %v4209
      %4368 = vmatpush1.bf16.msra.mxu0 %v4208
      %4369 = vmatprep.subr.bf16.mxu0 %v4212
      %4370 = vmatpush1.bf16.msra.mxu0 %v4211
      %4371 = vmatprep.subr.bf16.mxu0 %v4215
      %4372 = vmatpush1.bf16.msra.mxu0 %v4214
      %4373 = vmatprep.subr.bf16.mxu0 %v4218
      %4374 = vmatpush1.bf16.msra.mxu0 %v4217
      %4375 = vmatprep.subr.bf16.mxu0 %v4221
      %4376 = vmatpush1.bf16.msra.mxu0 %v4220
      %4377 = vmatprep.subr.bf16.mxu0 %v4224
      %4378 = vmatpush1.bf16.msra.mxu0 %v4223
      %4379 = vmatprep.subr.bf16.mxu0 %v4227
      %4380 = vmatpush1.bf16.msra.mxu0 %v4226
      %4381 = vmatprep.mubr.bf16.mxu0 %v3845
      %4382 = vmatmul.mubr.bf16.gmra.mrb[0].mxu0 %v3844
      %v4383 = vpop.f32.mrb[0].mxu0
      %v4384 = vadd.f32 0.0, %v4383
      %v4385 = vpop.f32.mrb[0].mxu0
      %v4386 = vadd.f32 0.0, %v4385
      %v4387 = vpop.f32.mrb[0].mxu0
      %v4388 = vadd.f32 0.0, %v4387
      %v4389 = vpop.f32.mrb[0].mxu0
      %v4390 = vadd.f32 0.0, %v4389
      %4391 = vmatprep.mubr.bf16.mxu0 %v3848
      %4392 = vmatmul.mubr.bf16.gmra.mrb[0].mxu0 %v3847
      %v4393 = vpop.f32.mrb[0].mxu0
      %v4394 = vadd.f32 0.0, %v4393
      %v4395 = vpop.f32.mrb[0].mxu0
      %v4396 = vadd.f32 0.0, %v4395
      %v4397 = vpop.f32.mrb[0].mxu0
      %v4398 = vadd.f32 0.0, %v4397
      %v4399 = vpop.f32.mrb[0].mxu0
      %v4400 = vadd.f32 0.0, %v4399
      %4401 = vmatprep.mubr.bf16.mxu0 %v3851
      %4402 = vmatmul.mubr.bf16.gmra.mrb[0].mxu0 %v3850
      %v4403 = vpop.f32.mrb[0].mxu0
      %v4404 = vadd.f32 0.0, %v4403
      %v4405 = vpop.f32.mrb[0].mxu0
      %v4406 = vadd.f32 0.0, %v4405
      %v4407 = vpop.f32.mrb[0].mxu0
      %v4408 = vadd.f32 0.0, %v4407
      %v4409 = vpop.f32.mrb[0].mxu0
      %v4410 = vadd.f32 0.0, %v4409
      %4411 = vmatprep.mubr.bf16.mxu0 %v3854
      %4412 = vmatmul.mubr.bf16.gmra.mrb[0].mxu0 %v3853
      %v4413 = vpop.f32.mrb[0].mxu0
      %v4414 = vadd.f32 0.0, %v4413
      %v4415 = vpop.f32.mrb[0].mxu0
      %v4416 = vadd.f32 0.0, %v4415
      %v4417 = vpop.f32.mrb[0].mxu0
      %v4418 = vadd.f32 0.0, %v4417
      %v4419 = vpop.f32.mrb[0].mxu0
      %v4420 = vadd.f32 0.0, %v4419
      %4421 = vmatprep.mubr.bf16.mxu0 %v3857
      %4422 = vmatmul.mubr.bf16.gmra.mrb[0].mxu0 %v3856
      %v4423 = vpop.f32.mrb[0].mxu0
      %v4424 = vadd.f32 0.0, %v4423
      %v4425 = vpop.f32.mrb[0].mxu0
      %v4426 = vadd.f32 0.0, %v4425
      %v4427 = vpop.f32.mrb[0].mxu0
      %v4428 = vadd.f32 0.0, %v4427
      %v4429 = vpop.f32.mrb[0].mxu0
      %v4430 = vadd.f32 0.0, %v4429
      %4431 = vmatprep.mubr.bf16.mxu0 %v3860
      %4432 = vmatmul.mubr.bf16.gmra.mrb[0].mxu0 %v3859
      %v4433 = vpop.f32.mrb[0].mxu0
      %v4434 = vadd.f32 0.0, %v4433
      %v4435 = vpop.f32.mrb[0].mxu0
      %v4436 = vadd.f32 0.0, %v4435
      %v4437 = vpop.f32.mrb[0].mxu0
      %v4438 = vadd.f32 0.0, %v4437
      %v4439 = vpop.f32.mrb[0].mxu0
      %v4440 = vadd.f32 0.0, %v4439
      %4441 = vmatprep.mubr.bf16.mxu0 %v3863
      %4442 = vmatmul.mubr.bf16.gmra.mrb[0].mxu0 %v3862
      %v4443 = vpop.f32.mrb[0].mxu0
      %v4444 = vadd.f32 0.0, %v4443
      %v4445 = vpop.f32.mrb[0].mxu0
      %v4446 = vadd.f32 0.0, %v4445
      %v4447 = vpop.f32.mrb[0].mxu0
      %v4448 = vadd.f32 0.0, %v4447
      %v4449 = vpop.f32.mrb[0].mxu0
      %v4450 = vadd.f32 0.0, %v4449
      %4451 = vmatprep.mubr.bf16.mxu0 %v3866
      %4452 = vmatmul.mubr.bf16.gmra.mrb[0].mxu0 %v3865
      %v4453 = vpop.f32.mrb[0].mxu0
      %v4454 = vadd.f32 0.0, %v4453
      %v4455 = vpop.f32.mrb[0].mxu0
      %v4456 = vadd.f32 0.0, %v4455
      %v4457 = vpop.f32.mrb[0].mxu0
      %v4458 = vadd.f32 0.0, %v4457
      %v4459 = vpop.f32.mrb[0].mxu0
      %v4460 = vadd.f32 0.0, %v4459
      %4461 = vmatprep.mubr.bf16.mxu0 %v3869
      %4462 = vmatmul.mubr.bf16.gmra.mrb[0].mxu0 %v3868
      %v4463 = vpop.f32.mrb[0].mxu0
      %v4464 = vadd.f32 0.0, %v4463
      %v4465 = vpop.f32.mrb[0].mxu0
      %v4466 = vadd.f32 0.0, %v4465
      %v4467 = vpop.f32.mrb[0].mxu0
      %v4468 = vadd.f32 0.0, %v4467
      %v4469 = vpop.f32.mrb[0].mxu0
      %v4470 = vadd.f32 0.0, %v4469
      %4471 = vmatprep.mubr.bf16.mxu0 %v3872
      %4472 = vmatmul.mubr.bf16.gmra.mrb[0].mxu0 %v3871
      %v4473 = vpop.f32.mrb[0].mxu0
      %v4474 = vadd.f32 0.0, %v4473
      %v4475 = vpop.f32.mrb[0].mxu0
      %v4476 = vadd.f32 0.0, %v4475
      %v4477 = vpop.f32.mrb[0].mxu0
      %v4478 = vadd.f32 0.0, %v4477
      %v4479 = vpop.f32.mrb[0].mxu0
      %v4480 = vadd.f32 0.0, %v4479
      %4481 = vmatprep.mubr.bf16.mxu0 %v3875
      %4482 = vmatmul.mubr.bf16.gmra.mrb[0].mxu0 %v3874
      %v4483 = vpop.f32.mrb[0].mxu0
      %v4484 = vadd.f32 0.0, %v4483
      %v4485 = vpop.f32.mrb[0].mxu0
      %v4486 = vadd.f32 0.0, %v4485
      %v4487 = vpop.f32.mrb[0].mxu0
      %v4488 = vadd.f32 0.0, %v4487
      %v4489 = vpop.f32.mrb[0].mxu0
      %v4490 = vadd.f32 0.0, %v4489
      %4491 = vmatprep.mubr.bf16.mxu0 %v3878
      %4492 = vmatmul.mubr.bf16.gmra.mrb[0].mxu0 %v3877
      %v4493 = vpop.f32.mrb[0].mxu0
      %v4494 = vadd.f32 0.0, %v4493
      %v4495 = vpop.f32.mrb[0].mxu0
      %v4496 = vadd.f32 0.0, %v4495
      %v4497 = vpop.f32.mrb[0].mxu0
      %v4498 = vadd.f32 0.0, %v4497
      %v4499 = vpop.f32.mrb[0].mxu0
      %v4500 = vadd.f32 0.0, %v4499
      %4501 = vmatprep.mubr.bf16.mxu0 %v3881
      %4502 = vmatmul.mubr.bf16.gmra.mrb[0].mxu0 %v3880
      %v4503 = vpop.f32.mrb[0].mxu0
      %v4504 = vadd.f32 0.0, %v4503
      %v4505 = vpop.f32.mrb[0].mxu0
      %v4506 = vadd.f32 0.0, %v4505
      %v4507 = vpop.f32.mrb[0].mxu0
      %v4508 = vadd.f32 0.0, %v4507
      %v4509 = vpop.f32.mrb[0].mxu0
      %v4510 = vadd.f32 0.0, %v4509
      %4511 = vmatprep.mubr.bf16.mxu0 %v3884
      %4512 = vmatmul.mubr.bf16.gmra.mrb[0].mxu0 %v3883
      %v4513 = vpop.f32.mrb[0].mxu0
      %v4514 = vadd.f32 0.0, %v4513
      %v4515 = vpop.f32.mrb[0].mxu0
      %v4516 = vadd.f32 0.0, %v4515
      %v4517 = vpop.f32.mrb[0].mxu0
      %v4518 = vadd.f32 0.0, %v4517
      %v4519 = vpop.f32.mrb[0].mxu0
      %v4520 = vadd.f32 0.0, %v4519
      %4521 = vdwg.mxu0
      %4522 = vmatprep.subr.bf16.mxu0 %v4230
      %4523 = vmatpush1.bf16.msra.mxu0 %v4229
      %4524 = vmatprep.subr.bf16.mxu0 %v4233
      %4525 = vmatpush1.bf16.msra.mxu0 %v4232
      %4526 = vmatprep.subr.bf16.mxu0 %v4236
      %4527 = vmatpush1.bf16.msra.mxu0 %v4235
      %4528 = vmatprep.subr.bf16.mxu0 %v4239
      %4529 = vmatpush1.bf16.msra.mxu0 %v4238
      %4530 = vmatprep.subr.bf16.mxu0 %v4242
      %4531 = vmatpush1.bf16.msra.mxu0 %v4241
      %4532 = vmatprep.subr.bf16.mxu0 0
      %4533 = vmatpush1.bf16.msra.mxu0 0
      %4534 = vmatprep.subr.bf16.mxu0 0
      %4535 = vmatpush1.bf16.msra.mxu0 0
      %4536 = vmatprep.subr.bf16.mxu0 0
      %4537 = vmatpush1.bf16.msra.mxu0 0
      %4538 = vmatprep.subr.bf16.mxu0 0
      %4539 = vmatpush1.bf16.msra.mxu0 0
      %4540 = vmatprep.subr.bf16.mxu0 0
      %4541 = vmatpush1.bf16.msra.mxu0 0
      %4542 = vmatprep.subr.bf16.mxu0 0
      %4543 = vmatpush1.bf16.msra.mxu0 0
      %4544 = vmatprep.subr.bf16.mxu0 0
      %4545 = vmatpush1.bf16.msra.mxu0 0
      %4546 = vmatprep.subr.bf16.mxu0 0
      %4547 = vmatpush1.bf16.msra.mxu0 0
      %4548 = vmatprep.subr.bf16.mxu0 0
      %4549 = vmatpush1.bf16.msra.mxu0 0
      %4550 = vmatprep.subr.bf16.mxu0 0
      %4551 = vmatpush1.bf16.msra.mxu0 0
      %4552 = vmatprep.subr.bf16.mxu0 0
      %4553 = vmatpush1.bf16.msra.mxu0 0
      %4554 = vmatprep.mubr.bf16.mxu0 0
      %4555 = vmatmul.mubr.bf16.gmra.mrb[0].mxu0 %v4308
      %v4556 = vpop.f32.mrb[0].mxu0
      %v4557 = vadd.f32 %v4384, %v4556
      %v4558 = vpop.f32.mrb[0].mxu0
      %v4559 = vadd.f32 %v4386, %v4558
      %v4560 = vpop.f32.mrb[0].mxu0
      %v4561 = vadd.f32 %v4388, %v4560
      %v4562 = vpop.f32.mrb[0].mxu0
      %v4563 = vadd.f32 %v4390, %v4562
      %4564 = vmatprep.mubr.bf16.mxu0 0
      %4565 = vmatmul.mubr.bf16.gmra.mrb[0].mxu0 %v4311
      %v4566 = vpop.f32.mrb[0].mxu0
      %v4567 = vadd.f32 %v4394, %v4566
      %v4568 = vpop.f32.mrb[0].mxu0
      %v4569 = vadd.f32 %v4396, %v4568
      %v4570 = vpop.f32.mrb[0].mxu0
      %v4571 = vadd.f32 %v4398, %v4570
      %v4572 = vpop.f32.mrb[0].mxu0
      %v4573 = vadd.f32 %v4400, %v4572
      %4574 = vmatprep.mubr.bf16.mxu0 0
      %4575 = vmatmul.mubr.bf16.gmra.mrb[0].mxu0 %v4314
      %v4576 = vpop.f32.mrb[0].mxu0
      %v4577 = vadd.f32 %v4404, %v4576
      %v4578 = vpop.f32.mrb[0].mxu0
      %v4579 = vadd.f32 %v4406, %v4578
      %v4580 = vpop.f32.mrb[0].mxu0
      %v4581 = vadd.f32 %v4408, %v4580
      %v4582 = vpop.f32.mrb[0].mxu0
      %v4583 = vadd.f32 %v4410, %v4582
      %4584 = vmatprep.mubr.bf16.mxu0 0
      %4585 = vmatmul.mubr.bf16.gmra.mrb[0].mxu0 %v4317
      %v4586 = vpop.f32.mrb[0].mxu0
      %v4587 = vadd.f32 %v4414, %v4586
      %v4588 = vpop.f32.mrb[0].mxu0
      %v4589 = vadd.f32 %v4416, %v4588
      %v4590 = vpop.f32.mrb[0].mxu0
      %v4591 = vadd.f32 %v4418, %v4590
      %v4592 = vpop.f32.mrb[0].mxu0
      %v4593 = vadd.f32 %v4420, %v4592
      %4594 = vmatprep.mubr.bf16.mxu0 0
      %4595 = vmatmul.mubr.bf16.gmra.mrb[0].mxu0 %v4320
      %v4596 = vpop.f32.mrb[0].mxu0
      %v4597 = vadd.f32 %v4424, %v4596
      %v4598 = vpop.f32.mrb[0].mxu0
      %v4599 = vadd.f32 %v4426, %v4598
      %v4600 = vpop.f32.mrb[0].mxu0
      %v4601 = vadd.f32 %v4428, %v4600
      %v4602 = vpop.f32.mrb[0].mxu0
      %v4603 = vadd.f32 %v4430, %v4602
      %4604 = vmatprep.mubr.bf16.mxu0 0
      %4605 = vmatmul.mubr.bf16.gmra.mrb[0].mxu0 %v4323
      %v4606 = vpop.f32.mrb[0].mxu0
      %v4607 = vadd.f32 %v4434, %v4606
      %v4608 = vpop.f32.mrb[0].mxu0
      %v4609 = vadd.f32 %v4436, %v4608
      %v4610 = vpop.f32.mrb[0].mxu0
      %v4611 = vadd.f32 %v4438, %v4610
      %v4612 = vpop.f32.mrb[0].mxu0
      %v4613 = vadd.f32 %v4440, %v4612
      %4614 = vmatprep.mubr.bf16.mxu0 0
      %4615 = vmatmul.mubr.bf16.gmra.mrb[0].mxu0 %v4326
      %v4616 = vpop.f32.mrb[0].mxu0
      %v4617 = vadd.f32 %v4444, %v4616
      %v4618 = vpop.f32.mrb[0].mxu0
      %v4619 = vadd.f32 %v4446, %v4618
      %v4620 = vpop.f32.mrb[0].mxu0
      %v4621 = vadd.f32 %v4448, %v4620
      %v4622 = vpop.f32.mrb[0].mxu0
      %v4623 = vadd.f32 %v4450, %v4622
      %4624 = vmatprep.mubr.bf16.mxu0 0
      %4625 = vmatmul.mubr.bf16.gmra.mrb[0].mxu0 %v4329
      %v4626 = vpop.f32.mrb[0].mxu0
      %v4627 = vadd.f32 %v4454, %v4626
      %v4628 = vpop.f32.mrb[0].mxu0
      %v4629 = vadd.f32 %v4456, %v4628
      %v4630 = vpop.f32.mrb[0].mxu0
      %v4631 = vadd.f32 %v4458, %v4630
      %v4632 = vpop.f32.mrb[0].mxu0
      %v4633 = vadd.f32 %v4460, %v4632
      %4634 = vmatprep.mubr.bf16.mxu0 0
      %4635 = vmatmul.mubr.bf16.gmra.mrb[0].mxu0 %v4332
      %v4636 = vpop.f32.mrb[0].mxu0
      %v4637 = vadd.f32 %v4464, %v4636
      %v4638 = vpop.f32.mrb[0].mxu0
      %v4639 = vadd.f32 %v4466, %v4638
      %v4640 = vpop.f32.mrb[0].mxu0
      %v4641 = vadd.f32 %v4468, %v4640
      %v4642 = vpop.f32.mrb[0].mxu0
      %v4643 = vadd.f32 %v4470, %v4642
      %4644 = vmatprep.mubr.bf16.mxu0 0
      %4645 = vmatmul.mubr.bf16.gmra.mrb[0].mxu0 %v4335
      %v4646 = vpop.f32.mrb[0].mxu0
      %v4647 = vadd.f32 %v4474, %v4646
      %v4648 = vpop.f32.mrb[0].mxu0
      %v4649 = vadd.f32 %v4476, %v4648
      %v4650 = vpop.f32.mrb[0].mxu0
      %v4651 = vadd.f32 %v4478, %v4650
      %v4652 = vpop.f32.mrb[0].mxu0
      %v4653 = vadd.f32 %v4480, %v4652
      %4654 = vmatprep.mubr.bf16.mxu0 0
      %4655 = vmatmul.mubr.bf16.gmra.mrb[0].mxu0 %v4338
      %v4656 = vpop.f32.mrb[0].mxu0
      %v4657 = vadd.f32 %v4484, %v4656
      %v4658 = vpop.f32.mrb[0].mxu0
      %v4659 = vadd.f32 %v4486, %v4658
      %v4660 = vpop.f32.mrb[0].mxu0
      %v4661 = vadd.f32 %v4488, %v4660
      %v4662 = vpop.f32.mrb[0].mxu0
      %v4663 = vadd.f32 %v4490, %v4662
      %4664 = vmatprep.mubr.bf16.mxu0 0
      %4665 = vmatmul.mubr.bf16.gmra.mrb[0].mxu0 %v4341
      %v4666 = vpop.f32.mrb[0].mxu0
      %v4667 = vadd.f32 %v4494, %v4666
      %v4668 = vpop.f32.mrb[0].mxu0
      %v4669 = vadd.f32 %v4496, %v4668
      %v4670 = vpop.f32.mrb[0].mxu0
      %v4671 = vadd.f32 %v4498, %v4670
      %v4672 = vpop.f32.mrb[0].mxu0
      %v4673 = vadd.f32 %v4500, %v4672
      %4674 = vmatprep.mubr.bf16.mxu0 0
      %4675 = vmatmul.mubr.bf16.gmra.mrb[0].mxu0 %v4344
      %v4676 = vpop.f32.mrb[0].mxu0
      %v4677 = vadd.f32 %v4504, %v4676
      %v4678 = vpop.f32.mrb[0].mxu0
      %v4679 = vadd.f32 %v4506, %v4678
      %v4680 = vpop.f32.mrb[0].mxu0
      %v4681 = vadd.f32 %v4508, %v4680
      %v4682 = vpop.f32.mrb[0].mxu0
      %v4683 = vadd.f32 %v4510, %v4682
      %4684 = vmatprep.mubr.bf16.mxu0 0
      %4685 = vmatmul.mubr.bf16.gmra.mrb[0].mxu0 %v4347
      %v4686 = vpop.f32.mrb[0].mxu0
      %v4687 = vadd.f32 %v4514, %v4686
      %v4688 = vpop.f32.mrb[0].mxu0
      %v4689 = vadd.f32 %v4516, %v4688
      %v4690 = vpop.f32.mrb[0].mxu0
      %v4691 = vadd.f32 %v4518, %v4690
      %v4692 = vpop.f32.mrb[0].mxu0
      %v4693 = vadd.f32 %v4520, %v4692
      %4694 = vdwg.mxu0
      %4695 = vmatprep.subr.bf16.mxu0 0
      %4696 = vmatpush1.bf16.msra.mxu0 %v4183
      %4697 = vmatprep.subr.bf16.mxu0 0
      %4698 = vmatpush1.bf16.msra.mxu0 %v4186
      %4699 = vmatprep.subr.bf16.mxu0 0
      %4700 = vmatpush1.bf16.msra.mxu0 %v4189
      %4701 = vmatprep.subr.bf16.mxu0 0
      %4702 = vmatpush1.bf16.msra.mxu0 %v4192
      %4703 = vmatprep.subr.bf16.mxu0 0
      %4704 = vmatpush1.bf16.msra.mxu0 %v4195
      %4705 = vmatprep.subr.bf16.mxu0 0
      %4706 = vmatpush1.bf16.msra.mxu0 %v4198
      %4707 = vmatprep.subr.bf16.mxu0 0
      %4708 = vmatpush1.bf16.msra.mxu0 %v4201
      %4709 = vmatprep.subr.bf16.mxu0 0
      %4710 = vmatpush1.bf16.msra.mxu0 %v4204
      %4711 = vmatprep.subr.bf16.mxu0 0
      %4712 = vmatpush1.bf16.msra.mxu0 %v4207
      %4713 = vmatprep.subr.bf16.mxu0 0
      %4714 = vmatpush1.bf16.msra.mxu0 %v4210
      %4715 = vmatprep.subr.bf16.mxu0 0
      %4716 = vmatpush1.bf16.msra.mxu0 %v4213
      %4717 = vmatprep.subr.bf16.mxu0 0
      %4718 = vmatpush1.bf16.msra.mxu0 %v4216
      %4719 = vmatprep.subr.bf16.mxu0 0
      %4720 = vmatpush1.bf16.msra.mxu0 %v4219
      %4721 = vmatprep.subr.bf16.mxu0 0
      %4722 = vmatpush1.bf16.msra.mxu0 %v4222
      %4723 = vmatprep.subr.bf16.mxu0 0
      %4724 = vmatpush1.bf16.msra.mxu0 %v4225
      %4725 = vmatprep.subr.bf16.mxu0 0
      %4726 = vmatpush1.bf16.msra.mxu0 %v4228
      %4727 = vmatprep.mubr.bf16.mxu0 %v3845
      %4728 = vmatmul.mubr.bf16.gmra.mrb[0].mxu0 %v3844
      %v4729 = vpop.f32.mrb[0].mxu0
      %v4730 = vadd.f32 0.0, %v4729
      %v4731 = vpop.f32.mrb[0].mxu0
      %v4732 = vpop.f32.mrb[0].mxu0
      %v4733 = vadd.f32 0.0, %v4732
      %v4734 = vpop.f32.mrb[0].mxu0
      %4735 = vmatprep.mubr.bf16.mxu0 %v3848
      %4736 = vmatmul.mubr.bf16.gmra.mrb[0].mxu0 %v3847
      %v4737 = vpop.f32.mrb[0].mxu0
      %v4738 = vadd.f32 0.0, %v4737
      %v4739 = vpop.f32.mrb[0].mxu0
      %v4740 = vpop.f32.mrb[0].mxu0
      %v4741 = vadd.f32 0.0, %v4740
      %v4742 = vpop.f32.mrb[0].mxu0
      %4743 = vmatprep.mubr.bf16.mxu0 %v3851
      %4744 = vmatmul.mubr.bf16.gmra.mrb[0].mxu0 %v3850
      %v4745 = vpop.f32.mrb[0].mxu0
      %v4746 = vadd.f32 0.0, %v4745
      %v4747 = vpop.f32.mrb[0].mxu0
      %v4748 = vpop.f32.mrb[0].mxu0
      %v4749 = vadd.f32 0.0, %v4748
      %v4750 = vpop.f32.mrb[0].mxu0
      %4751 = vmatprep.mubr.bf16.mxu0 %v3854
      %4752 = vmatmul.mubr.bf16.gmra.mrb[0].mxu0 %v3853
      %v4753 = vpop.f32.mrb[0].mxu0
      %v4754 = vadd.f32 0.0, %v4753
      %v4755 = vpop.f32.mrb[0].mxu0
      %v4756 = vpop.f32.mrb[0].mxu0
      %v4757 = vadd.f32 0.0, %v4756
      %v4758 = vpop.f32.mrb[0].mxu0
      %4759 = vmatprep.mubr.bf16.mxu0 %v3857
      %4760 = vmatmul.mubr.bf16.gmra.mrb[0].mxu0 %v3856
      %v4761 = vpop.f32.mrb[0].mxu0
      %v4762 = vadd.f32 0.0, %v4761
      %v4763 = vpop.f32.mrb[0].mxu0
      %v4764 = vpop.f32.mrb[0].mxu0
      %v4765 = vadd.f32 0.0, %v4764
      %v4766 = vpop.f32.mrb[0].mxu0
      %4767 = vmatprep.mubr.bf16.mxu0 %v3860
      %4768 = vmatmul.mubr.bf16.gmra.mrb[0].mxu0 %v3859
      %v4769 = vpop.f32.mrb[0].mxu0
      %v4770 = vadd.f32 0.0, %v4769
      %v4771 = vpop.f32.mrb[0].mxu0
      %v4772 = vpop.f32.mrb[0].mxu0
      %v4773 = vadd.f32 0.0, %v4772
      %v4774 = vpop.f32.mrb[0].mxu0
      %4775 = vmatprep.mubr.bf16.mxu0 %v3863
      %4776 = vmatmul.mubr.bf16.gmra.mrb[0].mxu0 %v3862
      %v4777 = vpop.f32.mrb[0].mxu0
      %v4778 = vadd.f32 0.0, %v4777
      %v4779 = vpop.f32.mrb[0].mxu0
      %v4780 = vpop.f32.mrb[0].mxu0
      %v4781 = vadd.f32 0.0, %v4780
      %v4782 = vpop.f32.mrb[0].mxu0
      %4783 = vmatprep.mubr.bf16.mxu0 %v3866
      %4784 = vmatmul.mubr.bf16.gmra.mrb[0].mxu0 %v3865
      %v4785 = vpop.f32.mrb[0].mxu0
      %v4786 = vadd.f32 0.0, %v4785
      %v4787 = vpop.f32.mrb[0].mxu0
      %v4788 = vpop.f32.mrb[0].mxu0
      %v4789 = vadd.f32 0.0, %v4788
      %v4790 = vpop.f32.mrb[0].mxu0
      %4791 = vmatprep.mubr.bf16.mxu0 %v3869
      %4792 = vmatmul.mubr.bf16.gmra.mrb[0].mxu0 %v3868
      %v4793 = vpop.f32.mrb[0].mxu0
      %v4794 = vadd.f32 0.0, %v4793
      %v4795 = vpop.f32.mrb[0].mxu0
      %v4796 = vpop.f32.mrb[0].mxu0
      %v4797 = vadd.f32 0.0, %v4796
      %v4798 = vpop.f32.mrb[0].mxu0
      %4799 = vmatprep.mubr.bf16.mxu0 %v3872
      %4800 = vmatmul.mubr.bf16.gmra.mrb[0].mxu0 %v3871
      %v4801 = vpop.f32.mrb[0].mxu0
      %v4802 = vadd.f32 0.0, %v4801
      %v4803 = vpop.f32.mrb[0].mxu0
      %v4804 = vpop.f32.mrb[0].mxu0
      %v4805 = vadd.f32 0.0, %v4804
      %v4806 = vpop.f32.mrb[0].mxu0
      %4807 = vmatprep.mubr.bf16.mxu0 %v3875
      %4808 = vmatmul.mubr.bf16.gmra.mrb[0].mxu0 %v3874
      %v4809 = vpop.f32.mrb[0].mxu0
      %v4810 = vadd.f32 0.0, %v4809
      %v4811 = vpop.f32.mrb[0].mxu0
      %v4812 = vpop.f32.mrb[0].mxu0
      %v4813 = vadd.f32 0.0, %v4812
      %v4814 = vpop.f32.mrb[0].mxu0
      %4815 = vmatprep.mubr.bf16.mxu0 %v3878
      %4816 = vmatmul.mubr.bf16.gmra.mrb[0].mxu0 %v3877
      %v4817 = vpop.f32.mrb[0].mxu0
      %v4818 = vadd.f32 0.0, %v4817
      %v4819 = vpop.f32.mrb[0].mxu0
      %v4820 = vpop.f32.mrb[0].mxu0
      %v4821 = vadd.f32 0.0, %v4820
      %v4822 = vpop.f32.mrb[0].mxu0
      %4823 = vmatprep.mubr.bf16.mxu0 %v3881
      %4824 = vmatmul.mubr.bf16.gmra.mrb[0].mxu0 %v3880
      %v4825 = vpop.f32.mrb[0].mxu0
      %v4826 = vadd.f32 0.0, %v4825
      %v4827 = vpop.f32.mrb[0].mxu0
      %v4828 = vpop.f32.mrb[0].mxu0
      %v4829 = vadd.f32 0.0, %v4828
      %v4830 = vpop.f32.mrb[0].mxu0
      %4831 = vmatprep.mubr.bf16.mxu0 %v3884
      %4832 = vmatmul.mubr.bf16.gmra.mrb[0].mxu0 %v3883
      %v4833 = vpop.f32.mrb[0].mxu0
      %v4834 = vadd.f32 0.0, %v4833
      %v4835 = vpop.f32.mrb[0].mxu0
      %v4836 = vpop.f32.mrb[0].mxu0
      %v4837 = vadd.f32 0.0, %v4836
      %v4838 = vpop.f32.mrb[0].mxu0
      %4839 = vdwg.mxu0
      %4840 = vmatprep.subr.bf16.mxu0 0
      %4841 = vmatpush1.bf16.msra.mxu0 %v4231
      %4842 = vmatprep.subr.bf16.mxu0 0
      %4843 = vmatpush1.bf16.msra.mxu0 %v4234
      %4844 = vmatprep.subr.bf16.mxu0 0
      %4845 = vmatpush1.bf16.msra.mxu0 %v4237
      %4846 = vmatprep.subr.bf16.mxu0 0
      %4847 = vmatpush1.bf16.msra.mxu0 %v4240
      %4848 = vmatprep.subr.bf16.mxu0 0
      %4849 = vmatpush1.bf16.msra.mxu0 %v4243
      %4850 = vmatprep.subr.bf16.mxu0 0
      %4851 = vmatpush1.bf16.msra.mxu0 0
      %4852 = vmatprep.subr.bf16.mxu0 0
      %4853 = vmatpush1.bf16.msra.mxu0 0
      %4854 = vmatprep.subr.bf16.mxu0 0
      %4855 = vmatpush1.bf16.msra.mxu0 0
      %4856 = vmatprep.subr.bf16.mxu0 0
      %4857 = vmatpush1.bf16.msra.mxu0 0
      %4858 = vmatprep.subr.bf16.mxu0 0
      %4859 = vmatpush1.bf16.msra.mxu0 0
      %4860 = vmatprep.subr.bf16.mxu0 0
      %4861 = vmatpush1.bf16.msra.mxu0 0
      %4862 = vmatprep.subr.bf16.mxu0 0
      %4863 = vmatpush1.bf16.msra.mxu0 0
      %4864 = vmatprep.subr.bf16.mxu0 0
      %4865 = vmatpush1.bf16.msra.mxu0 0
      %4866 = vmatprep.subr.bf16.mxu0 0
      %4867 = vmatpush1.bf16.msra.mxu0 0
      %4868 = vmatprep.subr.bf16.mxu0 0
      %4869 = vmatpush1.bf16.msra.mxu0 0
      %4870 = vmatprep.subr.bf16.mxu0 0
      %4871 = vmatpush1.bf16.msra.mxu0 0
      %4872 = vmatprep.mubr.bf16.mxu0 0
      %4873 = vmatmul.mubr.bf16.gmra.mrb[0].mxu0 %v4308
      %v4874 = vpop.f32.mrb[0].mxu0
      %v4875 = vadd.f32 %v4730, %v4874
      %v4876 = vpop.f32.mrb[0].mxu0
      %v4877 = vpop.f32.mrb[0].mxu0
      %v4878 = vadd.f32 %v4733, %v4877
      %v4879 = vpop.f32.mrb[0].mxu0
      %4880 = vmatprep.mubr.bf16.mxu0 0
      %4881 = vmatmul.mubr.bf16.gmra.mrb[0].mxu0 %v4311
      %v4882 = vpop.f32.mrb[0].mxu0
      %v4883 = vadd.f32 %v4738, %v4882
      %v4884 = vpop.f32.mrb[0].mxu0
      %v4885 = vpop.f32.mrb[0].mxu0
      %v4886 = vadd.f32 %v4741, %v4885
      %v4887 = vpop.f32.mrb[0].mxu0
      %4888 = vmatprep.mubr.bf16.mxu0 0
      %4889 = vmatmul.mubr.bf16.gmra.mrb[0].mxu0 %v4314
      %v4890 = vpop.f32.mrb[0].mxu0
      %v4891 = vadd.f32 %v4746, %v4890
      %v4892 = vpop.f32.mrb[0].mxu0
      %v4893 = vpop.f32.mrb[0].mxu0
      %v4894 = vadd.f32 %v4749, %v4893
      %v4895 = vpop.f32.mrb[0].mxu0
      %4896 = vmatprep.mubr.bf16.mxu0 0
      %4897 = vmatmul.mubr.bf16.gmra.mrb[0].mxu0 %v4317
      %v4898 = vpop.f32.mrb[0].mxu0
      %v4899 = vadd.f32 %v4754, %v4898
      %v4900 = vpop.f32.mrb[0].mxu0
      %v4901 = vpop.f32.mrb[0].mxu0
      %v4902 = vadd.f32 %v4757, %v4901
      %v4903 = vpop.f32.mrb[0].mxu0
      %4904 = vmatprep.mubr.bf16.mxu0 0
      %4905 = vmatmul.mubr.bf16.gmra.mrb[0].mxu0 %v4320
      %v4906 = vpop.f32.mrb[0].mxu0
      %v4907 = vadd.f32 %v4762, %v4906
      %v4908 = vpop.f32.mrb[0].mxu0
      %v4909 = vpop.f32.mrb[0].mxu0
      %v4910 = vadd.f32 %v4765, %v4909
      %v4911 = vpop.f32.mrb[0].mxu0
      %4912 = vmatprep.mubr.bf16.mxu0 0
      %4913 = vmatmul.mubr.bf16.gmra.mrb[0].mxu0 %v4323
      %v4914 = vpop.f32.mrb[0].mxu0
      %v4915 = vadd.f32 %v4770, %v4914
      %v4916 = vpop.f32.mrb[0].mxu0
      %v4917 = vpop.f32.mrb[0].mxu0
      %v4918 = vadd.f32 %v4773, %v4917
      %v4919 = vpop.f32.mrb[0].mxu0
      %4920 = vmatprep.mubr.bf16.mxu0 0
      %4921 = vmatmul.mubr.bf16.gmra.mrb[0].mxu0 %v4326
      %v4922 = vpop.f32.mrb[0].mxu0
      %v4923 = vadd.f32 %v4778, %v4922
      %v4924 = vpop.f32.mrb[0].mxu0
      %v4925 = vpop.f32.mrb[0].mxu0
      %v4926 = vadd.f32 %v4781, %v4925
      %v4927 = vpop.f32.mrb[0].mxu0
      %4928 = vmatprep.mubr.bf16.mxu0 0
      %4929 = vmatmul.mubr.bf16.gmra.mrb[0].mxu0 %v4329
      %v4930 = vpop.f32.mrb[0].mxu0
      %v4931 = vadd.f32 %v4786, %v4930
      %v4932 = vpop.f32.mrb[0].mxu0
      %v4933 = vpop.f32.mrb[0].mxu0
      %v4934 = vadd.f32 %v4789, %v4933
      %v4935 = vpop.f32.mrb[0].mxu0
      %4936 = vmatprep.mubr.bf16.mxu0 0
      %4937 = vmatmul.mubr.bf16.gmra.mrb[0].mxu0 %v4332
      %v4938 = vpop.f32.mrb[0].mxu0
      %v4939 = vadd.f32 %v4794, %v4938
      %v4940 = vpop.f32.mrb[0].mxu0
      %v4941 = vpop.f32.mrb[0].mxu0
      %v4942 = vadd.f32 %v4797, %v4941
      %v4943 = vpop.f32.mrb[0].mxu0
      %4944 = vmatprep.mubr.bf16.mxu0 0
      %4945 = vmatmul.mubr.bf16.gmra.mrb[0].mxu0 %v4335
      %v4946 = vpop.f32.mrb[0].mxu0
      %v4947 = vadd.f32 %v4802, %v4946
      %v4948 = vpop.f32.mrb[0].mxu0
      %v4949 = vpop.f32.mrb[0].mxu0
      %v4950 = vadd.f32 %v4805, %v4949
      %v4951 = vpop.f32.mrb[0].mxu0
      %4952 = vmatprep.mubr.bf16.mxu0 0
      %4953 = vmatmul.mubr.bf16.gmra.mrb[0].mxu0 %v4338
      %v4954 = vpop.f32.mrb[0].mxu0
      %v4955 = vadd.f32 %v4810, %v4954
      %v4956 = vpop.f32.mrb[0].mxu0
      %v4957 = vpop.f32.mrb[0].mxu0
      %v4958 = vadd.f32 %v4813, %v4957
      %v4959 = vpop.f32.mrb[0].mxu0
      %4960 = vmatprep.mubr.bf16.mxu0 0
      %4961 = vmatmul.mubr.bf16.gmra.mrb[0].mxu0 %v4341
      %v4962 = vpop.f32.mrb[0].mxu0
      %v4963 = vadd.f32 %v4818, %v4962
      %v4964 = vpop.f32.mrb[0].mxu0
      %v4965 = vpop.f32.mrb[0].mxu0
      %v4966 = vadd.f32 %v4821, %v4965
      %v4967 = vpop.f32.mrb[0].mxu0
      %4968 = vmatprep.mubr.bf16.mxu0 0
      %4969 = vmatmul.mubr.bf16.gmra.mrb[0].mxu0 %v4344
      %v4970 = vpop.f32.mrb[0].mxu0
      %v4971 = vadd.f32 %v4826, %v4970
      %v4972 = vpop.f32.mrb[0].mxu0
      %v4973 = vpop.f32.mrb[0].mxu0
      %v4974 = vadd.f32 %v4829, %v4973
      %v4975 = vpop.f32.mrb[0].mxu0
      %4976 = vmatprep.mubr.bf16.mxu0 0
      %4977 = vmatmul.mubr.bf16.gmra.mrb[0].mxu0 %v4347
      %v4978 = vpop.f32.mrb[0].mxu0
      %v4979 = vadd.f32 %v4834, %v4978
      %v4980 = vpop.f32.mrb[0].mxu0
      %v4981 = vpop.f32.mrb[0].mxu0
      %v4982 = vadd.f32 %v4837, %v4981
      %v4983 = vpop.f32.mrb[0].mxu0
      %4984 = vdwg.mxu0
      %v4985 = vadd.f32 %v3416, %v4557
      %v4986 = vadd.f32 %v3418, %v4559
      %v4987 = vadd.f32 %v3734, %v4875
      %v4988 = vadd.f32 %v3420, %v4561
      %v4989 = vadd.f32 %v3422, %v4563
      %v4990 = vadd.f32 %v3737, %v4878
      %v4991 = vadd.f32 %v3426, %v4567
      %v4992 = vadd.f32 %v3428, %v4569
      %v4993 = vadd.f32 %v3742, %v4883
      %v4994 = vadd.f32 %v3430, %v4571
      %v4995 = vadd.f32 %v3432, %v4573
      %v4996 = vadd.f32 %v3745, %v4886
      %v4997 = vadd.f32 %v3436, %v4577
      %v4998 = vadd.f32 %v3438, %v4579
      %v4999 = vadd.f32 %v3750, %v4891
      %v5000 = vadd.f32 %v3440, %v4581
      %v5001 = vadd.f32 %v3442, %v4583
      %v5002 = vadd.f32 %v3753, %v4894
      %v5003 = vadd.f32 %v3446, %v4587
      %v5004 = vadd.f32 %v3448, %v4589
      %v5005 = vadd.f32 %v3758, %v4899
      %v5006 = vadd.f32 %v3450, %v4591
      %v5007 = vadd.f32 %v3452, %v4593
      %v5008 = vadd.f32 %v3761, %v4902
      %v5009 = vadd.f32 %v3456, %v4597
      %v5010 = vadd.f32 %v3458, %v4599
      %v5011 = vadd.f32 %v3766, %v4907
      %v5012 = vadd.f32 %v3460, %v4601
      %v5013 = vadd.f32 %v3462, %v4603
      %v5014 = vadd.f32 %v3769, %v4910
      %v5015 = vadd.f32 %v3466, %v4607
      %v5016 = vadd.f32 %v3468, %v4609
      %v5017 = vadd.f32 %v3774, %v4915
      %v5018 = vadd.f32 %v3470, %v4611
      %v5019 = vadd.f32 %v3472, %v4613
      %v5020 = vadd.f32 %v3777, %v4918
      %v5021 = vadd.f32 %v3476, %v4617
      %v5022 = vadd.f32 %v3478, %v4619
      %v5023 = vadd.f32 %v3782, %v4923
      %v5024 = vadd.f32 %v3480, %v4621
      %v5025 = vadd.f32 %v3482, %v4623
      %v5026 = vadd.f32 %v3785, %v4926
      %v5027 = vadd.f32 %v3486, %v4627
      %v5028 = vadd.f32 %v3488, %v4629
      %v5029 = vadd.f32 %v3790, %v4931
      %v5030 = vadd.f32 %v3490, %v4631
      %v5031 = vadd.f32 %v3492, %v4633
      %v5032 = vadd.f32 %v3793, %v4934
      %v5033 = vadd.f32 %v3496, %v4637
      %v5034 = vadd.f32 %v3498, %v4639
      %v5035 = vadd.f32 %v3798, %v4939
      %v5036 = vadd.f32 %v3500, %v4641
      %v5037 = vadd.f32 %v3502, %v4643
      %v5038 = vadd.f32 %v3801, %v4942
      %v5039 = vadd.f32 %v3506, %v4647
      %v5040 = vadd.f32 %v3508, %v4649
      %v5041 = vadd.f32 %v3806, %v4947
      %v5042 = vadd.f32 %v3510, %v4651
      %v5043 = vadd.f32 %v3512, %v4653
      %v5044 = vadd.f32 %v3809, %v4950
      %v5045 = vadd.f32 %v3516, %v4657
      %v5046 = vadd.f32 %v3518, %v4659
      %v5047 = vadd.f32 %v3814, %v4955
      %v5048 = vadd.f32 %v3520, %v4661
      %v5049 = vadd.f32 %v3522, %v4663
      %v5050 = vadd.f32 %v3817, %v4958
      %v5051 = vadd.f32 %v3526, %v4667
      %v5052 = vadd.f32 %v3528, %v4669
      %v5053 = vadd.f32 %v3822, %v4963
      %v5054 = vadd.f32 %v3530, %v4671
      %v5055 = vadd.f32 %v3532, %v4673
      %v5056 = vadd.f32 %v3825, %v4966
      %v5057 = vadd.f32 %v3536, %v4677
      %v5058 = vadd.f32 %v3538, %v4679
      %v5059 = vadd.f32 %v3830, %v4971
      %v5060 = vadd.f32 %v3540, %v4681
      %v5061 = vadd.f32 %v3542, %v4683
      %v5062 = vadd.f32 %v3833, %v4974
      %v5063 = vadd.f32 %v3546, %v4687
      %v5064 = vadd.f32 %v3548, %v4689
      %v5065 = vadd.f32 %v3838, %v4979
      %v5066 = vadd.f32 %v3550, %v4691
      %v5067 = vadd.f32 %v3552, %v4693
      %v5068 = vadd.f32 %v3841, %v4982
      %v5069 = vld [vmem:[%s2] sm:$0x7]
      %v5071 = vlaneseq
      %v5072 = vshrl.u32 %v5071, 7
      %v5073 = vsub.s32 0, %v5072
      %v5074 = vrot.slane %v5069, %v5073
      %v5075 = vlaneseq
      %v5076 = vshrl.u32 %v5075, 7
      %v5077 = vsub.s32 1, %v5076
      %v5078 = vrot.slane %v5069, %v5077
      %v5079 = vlaneseq
      %v5080 = vshrl.u32 %v5079, 7
      %v5081 = vsub.s32 2, %v5080
      %v5082 = vrot.slane %v5069, %v5081
      %v5086 = vadd.f32 %v4985, %v5074
      %v5087 = vadd.f32 %v4986, %v5078
      %v5088 = vadd.f32 %v4987, %v5082
      %v5089 = vadd.f32 %v4988, %v5074
      %v5090 = vadd.f32 %v4989, %v5078
      %v5091 = vadd.f32 %v4990, %v5082
      %v5092 = vadd.f32 %v4991, %v5074
      %v5093 = vadd.f32 %v4992, %v5078
      %v5094 = vadd.f32 %v4993, %v5082
      %v5095 = vadd.f32 %v4994, %v5074
      %v5096 = vadd.f32 %v4995, %v5078
      %v5097 = vadd.f32 %v4996, %v5082
      %v5098 = vadd.f32 %v4997, %v5074
      %v5099 = vadd.f32 %v4998, %v5078
      %v5100 = vadd.f32 %v4999, %v5082
      %v5101 = vadd.f32 %v5000, %v5074
      %v5102 = vadd.f32 %v5001, %v5078
      %v5103 = vadd.f32 %v5002, %v5082
      %v5104 = vadd.f32 %v5003, %v5074
      %v5105 = vadd.f32 %v5004, %v5078
      %v5106 = vadd.f32 %v5005, %v5082
      %v5107 = vadd.f32 %v5006, %v5074
      %v5108 = vadd.f32 %v5007, %v5078
      %v5109 = vadd.f32 %v5008, %v5082
      %v5110 = vadd.f32 %v5009, %v5074
      %v5111 = vadd.f32 %v5010, %v5078
      %v5112 = vadd.f32 %v5011, %v5082
      %v5113 = vadd.f32 %v5012, %v5074
      %v5114 = vadd.f32 %v5013, %v5078
      %v5115 = vadd.f32 %v5014, %v5082
      %v5116 = vadd.f32 %v5015, %v5074
      %v5117 = vadd.f32 %v5016, %v5078
      %v5118 = vadd.f32 %v5017, %v5082
      %v5119 = vadd.f32 %v5018, %v5074
      %v5120 = vadd.f32 %v5019, %v5078
      %v5121 = vadd.f32 %v5020, %v5082
      %v5122 = vadd.f32 %v5021, %v5074
      %v5123 = vadd.f32 %v5022, %v5078
      %v5124 = vadd.f32 %v5023, %v5082
      %v5125 = vadd.f32 %v5024, %v5074
      %v5126 = vadd.f32 %v5025, %v5078
      %v5127 = vadd.f32 %v5026, %v5082
      %v5128 = vadd.f32 %v5027, %v5074
      %v5129 = vadd.f32 %v5028, %v5078
      %v5130 = vadd.f32 %v5029, %v5082
      %v5131 = vadd.f32 %v5030, %v5074
      %v5132 = vadd.f32 %v5031, %v5078
      %v5133 = vadd.f32 %v5032, %v5082
      %v5134 = vadd.f32 %v5033, %v5074
      %v5135 = vadd.f32 %v5034, %v5078
      %v5136 = vadd.f32 %v5035, %v5082
      %v5137 = vadd.f32 %v5036, %v5074
      %v5138 = vadd.f32 %v5037, %v5078
      %v5139 = vadd.f32 %v5038, %v5082
      %v5140 = vadd.f32 %v5039, %v5074
      %v5141 = vadd.f32 %v5040, %v5078
      %v5142 = vadd.f32 %v5041, %v5082
      %v5143 = vadd.f32 %v5042, %v5074
      %v5144 = vadd.f32 %v5043, %v5078
      %v5145 = vadd.f32 %v5044, %v5082
      %v5146 = vadd.f32 %v5045, %v5074
      %v5147 = vadd.f32 %v5046, %v5078
      %v5148 = vadd.f32 %v5047, %v5082
      %v5149 = vadd.f32 %v5048, %v5074
      %v5150 = vadd.f32 %v5049, %v5078
      %v5151 = vadd.f32 %v5050, %v5082
      %v5152 = vadd.f32 %v5051, %v5074
      %v5153 = vadd.f32 %v5052, %v5078
      %v5154 = vadd.f32 %v5053, %v5082
      %v5155 = vadd.f32 %v5054, %v5074
      %v5156 = vadd.f32 %v5055, %v5078
      %v5157 = vadd.f32 %v5056, %v5082
      %v5158 = vadd.f32 %v5057, %v5074
      %v5159 = vadd.f32 %v5058, %v5078
      %v5160 = vadd.f32 %v5059, %v5082
      %v5161 = vadd.f32 %v5060, %v5074
      %v5162 = vadd.f32 %v5061, %v5078
      %v5163 = vadd.f32 %v5062, %v5082
      %v5164 = vadd.f32 %v5063, %v5074
      %v5165 = vadd.f32 %v5064, %v5078
      %v5166 = vadd.f32 %v5065, %v5082
      %v5167 = vadd.f32 %v5066, %v5074
      %v5168 = vadd.f32 %v5067, %v5078
      %v5169 = vadd.f32 %v5068, %v5082
      %v5170 = vmax.f32 %v5086, 0.0
      %v5171 = vmax.f32 %v5087, 0.0
      %v5172 = vmax.f32 %v5088, 0.0
      %v5173 = vmax.f32 %v5089, 0.0
      %v5174 = vmax.f32 %v5090, 0.0
      %v5175 = vmax.f32 %v5091, 0.0
      %v5176 = vmax.f32 %v5092, 0.0
      %v5177 = vmax.f32 %v5093, 0.0
      %v5178 = vmax.f32 %v5094, 0.0
      %v5179 = vmax.f32 %v5095, 0.0
      %v5180 = vmax.f32 %v5096, 0.0
      %v5181 = vmax.f32 %v5097, 0.0
      %v5182 = vmax.f32 %v5098, 0.0
      %v5183 = vmax.f32 %v5099, 0.0
      %v5184 = vmax.f32 %v5100, 0.0
      %v5185 = vmax.f32 %v5101, 0.0
      %v5186 = vmax.f32 %v5102, 0.0
      %v5187 = vmax.f32 %v5103, 0.0
      %v5188 = vmax.f32 %v5104, 0.0
      %v5189 = vmax.f32 %v5105, 0.0
      %v5190 = vmax.f32 %v5106, 0.0
      %v5191 = vmax.f32 %v5107, 0.0
      %v5192 = vmax.f32 %v5108, 0.0
      %v5193 = vmax.f32 %v5109, 0.0
      %v5194 = vmax.f32 %v5110, 0.0
      %v5195 = vmax.f32 %v5111, 0.0
      %v5196 = vmax.f32 %v5112, 0.0
      %v5197 = vmax.f32 %v5113, 0.0
      %v5198 = vmax.f32 %v5114, 0.0
      %v5199 = vmax.f32 %v5115, 0.0
      %v5200 = vmax.f32 %v5116, 0.0
      %v5201 = vmax.f32 %v5117, 0.0
      %v5202 = vmax.f32 %v5118, 0.0
      %v5203 = vmax.f32 %v5119, 0.0
      %v5204 = vmax.f32 %v5120, 0.0
      %v5205 = vmax.f32 %v5121, 0.0
      %v5206 = vmax.f32 %v5122, 0.0
      %v5207 = vmax.f32 %v5123, 0.0
      %v5208 = vmax.f32 %v5124, 0.0
      %v5209 = vmax.f32 %v5125, 0.0
      %v5210 = vmax.f32 %v5126, 0.0
      %v5211 = vmax.f32 %v5127, 0.0
      %v5212 = vmax.f32 %v5128, 0.0
      %v5213 = vmax.f32 %v5129, 0.0
      %v5214 = vmax.f32 %v5130, 0.0
      %v5215 = vmax.f32 %v5131, 0.0
      %v5216 = vmax.f32 %v5132, 0.0
      %v5217 = vmax.f32 %v5133, 0.0
      %v5218 = vmax.f32 %v5134, 0.0
      %v5219 = vmax.f32 %v5135, 0.0
      %v5220 = vmax.f32 %v5136, 0.0
      %v5221 = vmax.f32 %v5137, 0.0
      %v5222 = vmax.f32 %v5138, 0.0
      %v5223 = vmax.f32 %v5139, 0.0
      %v5224 = vmax.f32 %v5140, 0.0
      %v5225 = vmax.f32 %v5141, 0.0
      %v5226 = vmax.f32 %v5142, 0.0
      %v5227 = vmax.f32 %v5143, 0.0
      %v5228 = vmax.f32 %v5144, 0.0
      %v5229 = vmax.f32 %v5145, 0.0
      %v5230 = vmax.f32 %v5146, 0.0
      %v5231 = vmax.f32 %v5147, 0.0
      %v5232 = vmax.f32 %v5148, 0.0
      %v5233 = vmax.f32 %v5149, 0.0
      %v5234 = vmax.f32 %v5150, 0.0
      %v5235 = vmax.f32 %v5151, 0.0
      %v5236 = vmax.f32 %v5152, 0.0
      %v5237 = vmax.f32 %v5153, 0.0
      %v5238 = vmax.f32 %v5154, 0.0
      %v5239 = vmax.f32 %v5155, 0.0
      %v5240 = vmax.f32 %v5156, 0.0
      %v5241 = vmax.f32 %v5157, 0.0
      %v5242 = vmax.f32 %v5158, 0.0
      %v5243 = vmax.f32 %v5159, 0.0
      %v5244 = vmax.f32 %v5160, 0.0
      %v5245 = vmax.f32 %v5161, 0.0
      %v5246 = vmax.f32 %v5162, 0.0
      %v5247 = vmax.f32 %v5163, 0.0
      %v5248 = vmax.f32 %v5164, 0.0
      %v5249 = vmax.f32 %v5165, 0.0
      %v5250 = vmax.f32 %v5166, 0.0
      %v5251 = vmax.f32 %v5167, 0.0
      %v5252 = vmax.f32 %v5168, 0.0
      %v5253 = vmax.f32 %v5169, 0.0
      %v5254 = vrot.slane %v5170, 1
      %v5255 = vrot.slane %v5171, 1
      %v5256 = vrot.slane %v5172, 1
      %v5257 = vrot.slane %v5173, 1
      %v5258 = vrot.slane %v5174, 1
      %v5259 = vrot.slane %v5175, 1
      %v5260 = vrot.slane %v5176, 1
      %v5261 = vrot.slane %v5177, 1
      %v5262 = vrot.slane %v5178, 1
      %v5263 = vrot.slane %v5179, 1
      %v5264 = vrot.slane %v5180, 1
      %v5265 = vrot.slane %v5181, 1
      %v5266 = vrot.slane %v5182, 1
      %v5267 = vrot.slane %v5183, 1
      %v5268 = vrot.slane %v5184, 1
      %v5269 = vrot.slane %v5185, 1
      %v5270 = vrot.slane %v5186, 1
      %v5271 = vrot.slane %v5187, 1
      %v5272 = vrot.slane %v5188, 1
      %v5273 = vrot.slane %v5189, 1
      %v5274 = vrot.slane %v5190, 1
      %v5275 = vrot.slane %v5191, 1
      %v5276 = vrot.slane %v5192, 1
      %v5277 = vrot.slane %v5193, 1
      %v5278 = vrot.slane %v5194, 1
      %v5279 = vrot.slane %v5195, 1
      %v5280 = vrot.slane %v5196, 1
      %v5281 = vrot.slane %v5197, 1
      %v5282 = vrot.slane %v5198, 1
      %v5283 = vrot.slane %v5199, 1
      %v5284 = vrot.slane %v5200, 1
      %v5285 = vrot.slane %v5201, 1
      %v5286 = vrot.slane %v5202, 1
      %v5287 = vrot.slane %v5203, 1
      %v5288 = vrot.slane %v5204, 1
      %v5289 = vrot.slane %v5205, 1
      %v5290 = vrot.slane %v5206, 1
      %v5291 = vrot.slane %v5207, 1
      %v5292 = vrot.slane %v5208, 1
      %v5293 = vrot.slane %v5209, 1
      %v5294 = vrot.slane %v5210, 1
      %v5295 = vrot.slane %v5211, 1
      %v5296 = vrot.slane %v5212, 1
      %v5297 = vrot.slane %v5213, 1
      %v5298 = vrot.slane %v5214, 1
      %v5299 = vrot.slane %v5215, 1
      %v5300 = vrot.slane %v5216, 1
      %v5301 = vrot.slane %v5217, 1
      %v5302 = vrot.slane %v5218, 1
      %v5303 = vrot.slane %v5219, 1
      %v5304 = vrot.slane %v5220, 1
      %v5305 = vrot.slane %v5221, 1
      %v5306 = vrot.slane %v5222, 1
      %v5307 = vrot.slane %v5223, 1
      %v5308 = vrot.slane %v5224, 1
      %v5309 = vrot.slane %v5225, 1
      %v5310 = vrot.slane %v5226, 1
      %v5311 = vrot.slane %v5227, 1
      %v5312 = vrot.slane %v5228, 1
      %v5313 = vrot.slane %v5229, 1
      %v5314 = vrot.slane %v5230, 1
      %v5315 = vrot.slane %v5231, 1
      %v5316 = vrot.slane %v5232, 1
      %v5317 = vrot.slane %v5233, 1
      %v5318 = vrot.slane %v5234, 1
      %v5319 = vrot.slane %v5235, 1
      %v5320 = vrot.slane %v5236, 1
      %v5321 = vrot.slane %v5237, 1
      %v5322 = vrot.slane %v5238, 1
      %v5323 = vrot.slane %v5239, 1
      %v5324 = vrot.slane %v5240, 1
      %v5325 = vrot.slane %v5241, 1
      %v5326 = vrot.slane %v5242, 1
      %v5327 = vrot.slane %v5243, 1
      %v5328 = vrot.slane %v5244, 1
      %v5329 = vrot.slane %v5245, 1
      %v5330 = vrot.slane %v5246, 1
      %v5331 = vrot.slane %v5247, 1
      %v5332 = vrot.slane %v5248, 1
      %v5333 = vrot.slane %v5249, 1
      %v5334 = vrot.slane %v5250, 1
      %v5335 = vrot.slane %v5251, 1
      %v5336 = vrot.slane %v5252, 1
      %v5337 = vrot.slane %v5253, 1
      %v5338 = vsel %vm1225, %v5332, %v5335
      %v5339 = vsel %vm1225, %v5333, %v5336
      %v5340 = vsel %vm1225, %v5334, %v5337
      %v5341 = vsel %vm1225, %v5329, %v5332
      %v5342 = vsel %vm1225, %v5330, %v5333
      %v5343 = vsel %vm1225, %v5331, %v5334
      %v5344 = vsel %vm1225, %v5326, %v5329
      %v5345 = vsel %vm1225, %v5327, %v5330
      %v5346 = vsel %vm1225, %v5328, %v5331
      %v5347 = vsel %vm1225, %v5323, %v5326
      %v5348 = vsel %vm1225, %v5324, %v5327
      %v5349 = vsel %vm1225, %v5325, %v5328
      %v5350 = vsel %vm1225, %v5320, %v5323
      %v5351 = vsel %vm1225, %v5321, %v5324
      %v5352 = vsel %vm1225, %v5322, %v5325
      %v5353 = vsel %vm1225, %v5317, %v5320
      %v5354 = vsel %vm1225, %v5318, %v5321
      %v5355 = vsel %vm1225, %v5319, %v5322
      %v5356 = vsel %vm1225, %v5314, %v5317
      %v5357 = vsel %vm1225, %v5315, %v5318
      %v5358 = vsel %vm1225, %v5316, %v5319
      %v5359 = vsel %vm1225, %v5311, %v5314
      %v5360 = vsel %vm1225, %v5312, %v5315
      %v5361 = vsel %vm1225, %v5313, %v5316
      %v5362 = vsel %vm1225, %v5308, %v5311
      %v5363 = vsel %vm1225, %v5309, %v5312
      %v5364 = vsel %vm1225, %v5310, %v5313
      %v5365 = vsel %vm1225, %v5305, %v5308
      %v5366 = vsel %vm1225, %v5306, %v5309
      %v5367 = vsel %vm1225, %v5307, %v5310
      %v5368 = vsel %vm1225, %v5302, %v5305
      %v5369 = vsel %vm1225, %v5303, %v5306
      %v5370 = vsel %vm1225, %v5304, %v5307
      %v5371 = vsel %vm1225, %v5299, %v5302
      %v5372 = vsel %vm1225, %v5300, %v5303
      %v5373 = vsel %vm1225, %v5301, %v5304
      %v5374 = vsel %vm1225, %v5296, %v5299
      %v5375 = vsel %vm1225, %v5297, %v5300
      %v5376 = vsel %vm1225, %v5298, %v5301
      %v5377 = vsel %vm1225, %v5293, %v5296
      %v5378 = vsel %vm1225, %v5294, %v5297
      %v5379 = vsel %vm1225, %v5295, %v5298
      %v5380 = vsel %vm1225, %v5290, %v5293
      %v5381 = vsel %vm1225, %v5291, %v5294
      %v5382 = vsel %vm1225, %v5292, %v5295
      %v5383 = vsel %vm1225, %v5287, %v5290
      %v5384 = vsel %vm1225, %v5288, %v5291
      %v5385 = vsel %vm1225, %v5289, %v5292
      %v5386 = vsel %vm1225, %v5284, %v5287
      %v5387 = vsel %vm1225, %v5285, %v5288
      %v5388 = vsel %vm1225, %v5286, %v5289
      %v5389 = vsel %vm1225, %v5281, %v5284
      %v5390 = vsel %vm1225, %v5282, %v5285
      %v5391 = vsel %vm1225, %v5283, %v5286
      %v5392 = vsel %vm1225, %v5278, %v5281
      %v5393 = vsel %vm1225, %v5279, %v5282
      %v5394 = vsel %vm1225, %v5280, %v5283
      %v5395 = vsel %vm1225, %v5275, %v5278
      %v5396 = vsel %vm1225, %v5276, %v5279
      %v5397 = vsel %vm1225, %v5277, %v5280
      %v5398 = vsel %vm1225, %v5272, %v5275
      %v5399 = vsel %vm1225, %v5273, %v5276
      %v5400 = vsel %vm1225, %v5274, %v5277
      %v5401 = vsel %vm1225, %v5269, %v5272
      %v5402 = vsel %vm1225, %v5270, %v5273
      %v5403 = vsel %vm1225, %v5271, %v5274
      %v5404 = vsel %vm1225, %v5266, %v5269
      %v5405 = vsel %vm1225, %v5267, %v5270
      %v5406 = vsel %vm1225, %v5268, %v5271
      %v5407 = vsel %vm1225, %v5263, %v5266
      %v5408 = vsel %vm1225, %v5264, %v5267
      %v5409 = vsel %vm1225, %v5265, %v5268
      %v5410 = vsel %vm1225, %v5260, %v5263
      %v5411 = vsel %vm1225, %v5261, %v5264
      %v5412 = vsel %vm1225, %v5262, %v5265
      %v5413 = vsel %vm1225, %v5257, %v5260
      %v5414 = vsel %vm1225, %v5258, %v5261
      %v5415 = vsel %vm1225, %v5259, %v5262
      %v5416 = vsel %vm1225, %v5254, %v5257
      %v5417 = vsel %vm1225, %v5255, %v5258
      %v5418 = vsel %vm1225, %v5256, %v5259
      %v5419 = vsel %vm1225, %v5335, %v5254
      %v5420 = vsel %vm1225, %v5336, %v5255
      %v5421 = vsel %vm1225, %v5337, %v5256
      %v5422 = vmax.f32 %v5170, %v5416
      %v5423 = vmax.f32 %v5171, %v5417
      %v5424 = vmax.f32 %v5172, %v5418
      %v5425 = vmax.f32 %v5173, %v5413
      %v5426 = vmax.f32 %v5174, %v5414
      %v5427 = vmax.f32 %v5175, %v5415
      %v5428 = vmax.f32 %v5176, %v5410
      %v5429 = vmax.f32 %v5177, %v5411
      %v5430 = vmax.f32 %v5178, %v5412
      %v5431 = vmax.f32 %v5179, %v5407
      %v5432 = vmax.f32 %v5180, %v5408
      %v5433 = vmax.f32 %v5181, %v5409
      %v5434 = vmax.f32 %v5182, %v5404
      %v5435 = vmax.f32 %v5183, %v5405
      %v5436 = vmax.f32 %v5184, %v5406
      %v5437 = vmax.f32 %v5185, %v5401
      %v5438 = vmax.f32 %v5186, %v5402
      %v5439 = vmax.f32 %v5187, %v5403
      %v5440 = vmax.f32 %v5188, %v5398
      %v5441 = vmax.f32 %v5189, %v5399
      %v5442 = vmax.f32 %v5190, %v5400
      %v5443 = vmax.f32 %v5191, %v5395
      %v5444 = vmax.f32 %v5192, %v5396
      %v5445 = vmax.f32 %v5193, %v5397
      %v5446 = vmax.f32 %v5194, %v5392
      %v5447 = vmax.f32 %v5195, %v5393
      %v5448 = vmax.f32 %v5196, %v5394
      %v5449 = vmax.f32 %v5197, %v5389
      %v5450 = vmax.f32 %v5198, %v5390
      %v5451 = vmax.f32 %v5199, %v5391
      %v5452 = vmax.f32 %v5200, %v5386
      %v5453 = vmax.f32 %v5201, %v5387
      %v5454 = vmax.f32 %v5202, %v5388
      %v5455 = vmax.f32 %v5203, %v5383
      %v5456 = vmax.f32 %v5204, %v5384
      %v5457 = vmax.f32 %v5205, %v5385
      %v5458 = vmax.f32 %v5206, %v5380
      %v5459 = vmax.f32 %v5207, %v5381
      %v5460 = vmax.f32 %v5208, %v5382
      %v5461 = vmax.f32 %v5209, %v5377
      %v5462 = vmax.f32 %v5210, %v5378
      %v5463 = vmax.f32 %v5211, %v5379
      %v5464 = vmax.f32 %v5212, %v5374
      %v5465 = vmax.f32 %v5213, %v5375
      %v5466 = vmax.f32 %v5214, %v5376
      %v5467 = vmax.f32 %v5215, %v5371
      %v5468 = vmax.f32 %v5216, %v5372
      %v5469 = vmax.f32 %v5217, %v5373
      %v5470 = vmax.f32 %v5218, %v5368
      %v5471 = vmax.f32 %v5219, %v5369
      %v5472 = vmax.f32 %v5220, %v5370
      %v5473 = vmax.f32 %v5221, %v5365
      %v5474 = vmax.f32 %v5222, %v5366
      %v5475 = vmax.f32 %v5223, %v5367
      %v5476 = vmax.f32 %v5224, %v5362
      %v5477 = vmax.f32 %v5225, %v5363
      %v5478 = vmax.f32 %v5226, %v5364
      %v5479 = vmax.f32 %v5227, %v5359
      %v5480 = vmax.f32 %v5228, %v5360
      %v5481 = vmax.f32 %v5229, %v5361
      %v5482 = vmax.f32 %v5230, %v5356
      %v5483 = vmax.f32 %v5231, %v5357
      %v5484 = vmax.f32 %v5232, %v5358
      %v5485 = vmax.f32 %v5233, %v5353
      %v5486 = vmax.f32 %v5234, %v5354
      %v5487 = vmax.f32 %v5235, %v5355
      %v5488 = vmax.f32 %v5236, %v5350
      %v5489 = vmax.f32 %v5237, %v5351
      %v5490 = vmax.f32 %v5238, %v5352
      %v5491 = vmax.f32 %v5239, %v5347
      %v5492 = vmax.f32 %v5240, %v5348
      %v5493 = vmax.f32 %v5241, %v5349
      %v5494 = vmax.f32 %v5242, %v5344
      %v5495 = vmax.f32 %v5243, %v5345
      %v5496 = vmax.f32 %v5244, %v5346
      %v5497 = vmax.f32 %v5245, %v5341
      %v5498 = vmax.f32 %v5246, %v5342
      %v5499 = vmax.f32 %v5247, %v5343
      %v5500 = vmax.f32 %v5248, %v5338
      %v5501 = vmax.f32 %v5249, %v5339
      %v5502 = vmax.f32 %v5250, %v5340
      %v5503 = vmax.f32 %v5251, %v5419
      %v5504 = vmax.f32 %v5252, %v5420
      %v5505 = vmax.f32 %v5253, %v5421
      %v5506 = vld [vmem:[%s5] sm:$0xff]
      %v5507 = vld [vmem:[%s5 + $0x8] sm:$0xff]
      %v5508 = vld [vmem:[%s5 + $0x10] sm:$0xff]
      %v5509 = vld [vmem:[%s5 + $0x18] sm:$0xff]
      %v5510 = vld [vmem:[%s5 + $0x20] sm:$0xff]
      %v5511 = vld [vmem:[%s5 + $0x28] sm:$0xff]
      %v5512 = vld [vmem:[%s5 + $0x30] sm:$0xff]
      %v5513 = vld [vmem:[%s5 + $0x38] sm:$0xff]
      %v5514 = vld [vmem:[%s5 + $0x40] sm:$0xff]
      %v5515 = vld [vmem:[%s5 + $0x48] sm:$0xff]
      %v5516 = vld [vmem:[%s5 + $0x50] sm:$0xff]
      %v5517 = vld [vmem:[%s5 + $0x58] sm:$0xff]
      %v5518 = vld [vmem:[%s5 + $0x60] sm:$0xff]
      %v5519 = vld [vmem:[%s5 + $0x68] sm:$0xff]
      %v5520 = vpack.c.bf16 %v5425, %v5422
      %v5521 = vpack.c.bf16 %v5426, %v5423
      %v5522 = vpack.c.bf16 %v5427, %v5424
      %v5523 = vpack.c.bf16 %v5431, %v5428
      %v5524 = vpack.c.bf16 %v5432, %v5429
      %v5525 = vpack.c.bf16 %v5433, %v5430
      %v5526 = vpack.c.bf16 %v5437, %v5434
      %v5527 = vpack.c.bf16 %v5438, %v5435
      %v5528 = vpack.c.bf16 %v5439, %v5436
      %v5529 = vpack.c.bf16 %v5443, %v5440
      %v5530 = vpack.c.bf16 %v5444, %v5441
      %v5531 = vpack.c.bf16 %v5445, %v5442
      %v5532 = vpack.c.bf16 %v5449, %v5446
      %v5533 = vpack.c.bf16 %v5450, %v5447
      %v5534 = vpack.c.bf16 %v5451, %v5448
      %v5535 = vpack.c.bf16 %v5455, %v5452
      %v5536 = vpack.c.bf16 %v5456, %v5453
      %v5537 = vpack.c.bf16 %v5457, %v5454
      %v5538 = vpack.c.bf16 %v5461, %v5458
      %v5539 = vpack.c.bf16 %v5462, %v5459
      %v5540 = vpack.c.bf16 %v5463, %v5460
      %v5541 = vpack.c.bf16 %v5467, %v5464
      %v5542 = vpack.c.bf16 %v5468, %v5465
      %v5543 = vpack.c.bf16 %v5469, %v5466
      %v5544 = vpack.c.bf16 %v5473, %v5470
      %v5545 = vpack.c.bf16 %v5474, %v5471
      %v5546 = vpack.c.bf16 %v5475, %v5472
      %v5547 = vpack.c.bf16 %v5479, %v5476
      %v5548 = vpack.c.bf16 %v5480, %v5477
      %v5549 = vpack.c.bf16 %v5481, %v5478
      %v5550 = vpack.c.bf16 %v5485, %v5482
      %v5551 = vpack.c.bf16 %v5486, %v5483
      %v5552 = vpack.c.bf16 %v5487, %v5484
      %v5553 = vpack.c.bf16 %v5491, %v5488
      %v5554 = vpack.c.bf16 %v5492, %v5489
      %v5555 = vpack.c.bf16 %v5493, %v5490
      %v5556 = vpack.c.bf16 %v5497, %v5494
      %v5557 = vpack.c.bf16 %v5498, %v5495
      %v5558 = vpack.c.bf16 %v5499, %v5496
      %v5559 = vpack.c.bf16 %v5503, %v5500
      %v5560 = vpack.c.bf16 %v5504, %v5501
      %v5561 = vpack.c.bf16 %v5505, %v5502
      %v5576 = vunpack.c.l.b16 %v5506
      %v5577 = vunpack.c.h.b16 %v5506
      %v5578 = vunpack.c.l.b16 %v5507
      %v5579 = vunpack.c.h.b16 %v5507
      %v5580 = vunpack.c.l.b16 %v5508
      %v5581 = vunpack.c.h.b16 %v5508
      %v5582 = vunpack.c.l.b16 %v5509
      %v5583 = vunpack.c.h.b16 %v5509
      %v5584 = vunpack.c.l.b16 %v5510
      %v5585 = vunpack.c.h.b16 %v5510
      %v5586 = vunpack.c.l.b16 %v5511
      %v5587 = vunpack.c.h.b16 %v5511
      %v5588 = vunpack.c.l.b16 %v5512
      %v5589 = vunpack.c.h.b16 %v5512
      %v5590 = vunpack.c.l.b16 %v5513
      %v5591 = vunpack.c.h.b16 %v5513
      %v5592 = vunpack.c.l.b16 %v5514
      %v5593 = vunpack.c.h.b16 %v5514
      %v5594 = vunpack.c.l.b16 %v5515
      %v5595 = vunpack.c.h.b16 %v5515
      %v5596 = vunpack.c.l.b16 %v5516
      %v5597 = vunpack.c.h.b16 %v5516
      %v5598 = vunpack.c.l.b16 %v5517
      %v5599 = vunpack.c.h.b16 %v5517
      %v5600 = vunpack.c.l.b16 %v5518
      %v5601 = vunpack.c.h.b16 %v5518
      %v5602 = vunpack.c.l.b16 %v5519
      %v5603 = vunpack.c.h.b16 %v5519
      %v5604 = vpack.c.b16 %v5578, %v5576
      %v5605 = vpack.c.b16 %v5579, %v5577
      %v5606 = vpack.c.b16 %v5582, %v5580
      %v5607 = vpack.c.b16 %v5583, %v5581
      %v5608 = vpack.c.b16 %v5586, %v5584
      %v5609 = vpack.c.b16 %v5587, %v5585
      %v5610 = vpack.c.b16 %v5590, %v5588
      %v5611 = vpack.c.b16 %v5591, %v5589
      %v5612 = vpack.c.b16 %v5594, %v5592
      %v5613 = vpack.c.b16 %v5595, %v5593
      %v5614 = vpack.c.b16 %v5598, %v5596
      %v5615 = vpack.c.b16 %v5599, %v5597
      %v5616 = vpack.c.b16 %v5602, %v5600
      %v5617 = vpack.c.b16 %v5603, %v5601
      %vm5625 = vcmask 785408
      %v5627 = vsel %vm5625, %v5605, 0
      %v5630 = vsel %vm5625, %v5607, 0
      %v5633 = vsel %vm5625, %v5609, 0
      %v5636 = vsel %vm5625, %v5611, 0
      %v5639 = vsel %vm5625, %v5613, 0
      %v5642 = vsel %vm5625, %v5615, 0
      %v5645 = vsel %vm5625, %v5617, 0
      %5647 = vmatprep.subr.bf16.mxu0 %v5521
      %5648 = vmatpush1.bf16.msra.mxu0 %v5520
      %5649 = vmatprep.subr.bf16.mxu0 %v5524
      %5650 = vmatpush1.bf16.msra.mxu0 %v5523
      %5651 = vmatprep.subr.bf16.mxu0 %v5527
      %5652 = vmatpush1.bf16.msra.mxu0 %v5526
      %5653 = vmatprep.subr.bf16.mxu0 %v5530
      %5654 = vmatpush1.bf16.msra.mxu0 %v5529
      %5655 = vmatprep.subr.bf16.mxu0 %v5533
      %5656 = vmatpush1.bf16.msra.mxu0 %v5532
      %5657 = vmatprep.subr.bf16.mxu0 %v5536
      %5658 = vmatpush1.bf16.msra.mxu0 %v5535
      %5659 = vmatprep.subr.bf16.mxu0 %v5539
      %5660 = vmatpush1.bf16.msra.mxu0 %v5538
      %5661 = vmatprep.subr.bf16.mxu0 %v5542
      %5662 = vmatpush1.bf16.msra.mxu0 %v5541
      %5663 = vmatprep.subr.bf16.mxu0 %v5545
      %5664 = vmatpush1.bf16.msra.mxu0 %v5544
      %5665 = vmatprep.subr.bf16.mxu0 %v5548
      %5666 = vmatpush1.bf16.msra.mxu0 %v5547
      %5667 = vmatprep.subr.bf16.mxu0 %v5551
      %5668 = vmatpush1.bf16.msra.mxu0 %v5550
      %5669 = vmatprep.subr.bf16.mxu0 %v5554
      %5670 = vmatpush1.bf16.msra.mxu0 %v5553
      %5671 = vmatprep.subr.bf16.mxu0 %v5557
      %5672 = vmatpush1.bf16.msra.mxu0 %v5556
      %5673 = vmatprep.subr.bf16.mxu0 %v5560
      %5674 = vmatpush1.bf16.msra.mxu0 %v5559
      %5675 = vmatprep.subr.bf16.mxu0 0
      %5676 = vmatpush1.bf16.msra.mxu0 0
      %5677 = vmatprep.subr.bf16.mxu0 0
      %5678 = vmatpush1.bf16.msra.mxu0 0
      %5679 = vmatprep.mubr.bf16.mxu0 %v5627
      %5680 = vmatmul.mubr.bf16.gmra.mrb[0].mxu0 %v5604
      %v5681 = vpop.f32.mrb[0].mxu0
      %v5682 = vadd.f32 0.0, %v5681
      %v5683 = vpop.f32.mrb[0].mxu0
      %v5684 = vadd.f32 0.0, %v5683
      %v5685 = vpop.f32.mrb[0].mxu0
      %v5686 = vadd.f32 0.0, %v5685
      %v5687 = vpop.f32.mrb[0].mxu0
      %v5688 = vadd.f32 0.0, %v5687
      %5689 = vmatprep.mubr.bf16.mxu0 %v5630
      %5690 = vmatmul.mubr.bf16.gmra.mrb[0].mxu0 %v5606
      %v5691 = vpop.f32.mrb[0].mxu0
      %v5692 = vadd.f32 0.0, %v5691
      %v5693 = vpop.f32.mrb[0].mxu0
      %v5694 = vadd.f32 0.0, %v5693
      %v5695 = vpop.f32.mrb[0].mxu0
      %v5696 = vadd.f32 0.0, %v5695
      %v5697 = vpop.f32.mrb[0].mxu0
      %v5698 = vadd.f32 0.0, %v5697
      %5699 = vmatprep.mubr.bf16.mxu0 %v5633
      %5700 = vmatmul.mubr.bf16.gmra.mrb[0].mxu0 %v5608
      %v5701 = vpop.f32.mrb[0].mxu0
      %v5702 = vadd.f32 0.0, %v5701
      %v5703 = vpop.f32.mrb[0].mxu0
      %v5704 = vadd.f32 0.0, %v5703
      %v5705 = vpop.f32.mrb[0].mxu0
      %v5706 = vadd.f32 0.0, %v5705
      %v5707 = vpop.f32.mrb[0].mxu0
      %v5708 = vadd.f32 0.0, %v5707
      %5709 = vmatprep.mubr.bf16.mxu0 %v5636
      %5710 = vmatmul.mubr.bf16.gmra.mrb[0].mxu0 %v5610
      %v5711 = vpop.f32.mrb[0].mxu0
      %v5712 = vadd.f32 0.0, %v5711
      %v5713 = vpop.f32.mrb[0].mxu0
      %v5714 = vadd.f32 0.0, %v5713
      %v5715 = vpop.f32.mrb[0].mxu0
      %v5716 = vadd.f32 0.0, %v5715
      %v5717 = vpop.f32.mrb[0].mxu0
      %v5718 = vadd.f32 0.0, %v5717
      %5719 = vmatprep.mubr.bf16.mxu0 %v5639
      %5720 = vmatmul.mubr.bf16.gmra.mrb[0].mxu0 %v5612
      %v5721 = vpop.f32.mrb[0].mxu0
      %v5722 = vadd.f32 0.0, %v5721
      %v5723 = vpop.f32.mrb[0].mxu0
      %v5724 = vadd.f32 0.0, %v5723
      %v5725 = vpop.f32.mrb[0].mxu0
      %v5726 = vadd.f32 0.0, %v5725
      %v5727 = vpop.f32.mrb[0].mxu0
      %v5728 = vadd.f32 0.0, %v5727
      %5729 = vmatprep.mubr.bf16.mxu0 %v5642
      %5730 = vmatmul.mubr.bf16.gmra.mrb[0].mxu0 %v5614
      %v5731 = vpop.f32.mrb[0].mxu0
      %v5732 = vadd.f32 0.0, %v5731
      %v5733 = vpop.f32.mrb[0].mxu0
      %v5734 = vadd.f32 0.0, %v5733
      %v5735 = vpop.f32.mrb[0].mxu0
      %v5736 = vadd.f32 0.0, %v5735
      %v5737 = vpop.f32.mrb[0].mxu0
      %v5738 = vadd.f32 0.0, %v5737
      %5739 = vmatprep.mubr.bf16.mxu0 %v5645
      %5740 = vmatmul.mubr.bf16.gmra.mrb[0].mxu0 %v5616
      %v5741 = vpop.f32.mrb[0].mxu0
      %v5742 = vadd.f32 0.0, %v5741
      %v5743 = vpop.f32.mrb[0].mxu0
      %v5744 = vadd.f32 0.0, %v5743
      %v5745 = vpop.f32.mrb[0].mxu0
      %v5746 = vadd.f32 0.0, %v5745
      %v5747 = vpop.f32.mrb[0].mxu0
      %v5748 = vadd.f32 0.0, %v5747
      %5749 = vdwg.mxu0
      %5750 = vmatprep.subr.bf16.mxu0 0
      %5751 = vmatpush1.bf16.msra.mxu0 %v5522
      %5752 = vmatprep.subr.bf16.mxu0 0
      %5753 = vmatpush1.bf16.msra.mxu0 %v5525
      %5754 = vmatprep.subr.bf16.mxu0 0
      %5755 = vmatpush1.bf16.msra.mxu0 %v5528
      %5756 = vmatprep.subr.bf16.mxu0 0
      %5757 = vmatpush1.bf16.msra.mxu0 %v5531
      %5758 = vmatprep.subr.bf16.mxu0 0
      %5759 = vmatpush1.bf16.msra.mxu0 %v5534
      %5760 = vmatprep.subr.bf16.mxu0 0
      %5761 = vmatpush1.bf16.msra.mxu0 %v5537
      %5762 = vmatprep.subr.bf16.mxu0 0
      %5763 = vmatpush1.bf16.msra.mxu0 %v5540
      %5764 = vmatprep.subr.bf16.mxu0 0
      %5765 = vmatpush1.bf16.msra.mxu0 %v5543
      %5766 = vmatprep.subr.bf16.mxu0 0
      %5767 = vmatpush1.bf16.msra.mxu0 %v5546
      %5768 = vmatprep.subr.bf16.mxu0 0
      %5769 = vmatpush1.bf16.msra.mxu0 %v5549
      %5770 = vmatprep.subr.bf16.mxu0 0
      %5771 = vmatpush1.bf16.msra.mxu0 %v5552
      %5772 = vmatprep.subr.bf16.mxu0 0
      %5773 = vmatpush1.bf16.msra.mxu0 %v5555
      %5774 = vmatprep.subr.bf16.mxu0 0
      %5775 = vmatpush1.bf16.msra.mxu0 %v5558
      %5776 = vmatprep.subr.bf16.mxu0 0
      %5777 = vmatpush1.bf16.msra.mxu0 %v5561
      %5778 = vmatprep.subr.bf16.mxu0 0
      %5779 = vmatpush1.bf16.msra.mxu0 0
      %5780 = vmatprep.subr.bf16.mxu0 0
      %5781 = vmatpush1.bf16.msra.mxu0 0
      %5782 = vmatprep.mubr.bf16.mxu0 %v5627
      %5783 = vmatmul.mubr.bf16.gmra.mrb[0].mxu0 %v5604
      %v5784 = vpop.f32.mrb[0].mxu0
      %v5785 = vadd.f32 0.0, %v5784
      %v5786 = vpop.f32.mrb[0].mxu0
      %v5787 = vpop.f32.mrb[0].mxu0
      %v5788 = vadd.f32 0.0, %v5787
      %v5789 = vpop.f32.mrb[0].mxu0
      %5790 = vmatprep.mubr.bf16.mxu0 %v5630
      %5791 = vmatmul.mubr.bf16.gmra.mrb[0].mxu0 %v5606
      %v5792 = vpop.f32.mrb[0].mxu0
      %v5793 = vadd.f32 0.0, %v5792
      %v5794 = vpop.f32.mrb[0].mxu0
      %v5795 = vpop.f32.mrb[0].mxu0
      %v5796 = vadd.f32 0.0, %v5795
      %v5797 = vpop.f32.mrb[0].mxu0
      %5798 = vmatprep.mubr.bf16.mxu0 %v5633
      %5799 = vmatmul.mubr.bf16.gmra.mrb[0].mxu0 %v5608
      %v5800 = vpop.f32.mrb[0].mxu0
      %v5801 = vadd.f32 0.0, %v5800
      %v5802 = vpop.f32.mrb[0].mxu0
      %v5803 = vpop.f32.mrb[0].mxu0
      %v5804 = vadd.f32 0.0, %v5803
      %v5805 = vpop.f32.mrb[0].mxu0
      %5806 = vmatprep.mubr.bf16.mxu0 %v5636
      %5807 = vmatmul.mubr.bf16.gmra.mrb[0].mxu0 %v5610
      %v5808 = vpop.f32.mrb[0].mxu0
      %v5809 = vadd.f32 0.0, %v5808
      %v5810 = vpop.f32.mrb[0].mxu0
      %v5811 = vpop.f32.mrb[0].mxu0
      %v5812 = vadd.f32 0.0, %v5811
      %v5813 = vpop.f32.mrb[0].mxu0
      %5814 = vmatprep.mubr.bf16.mxu0 %v5639
      %5815 = vmatmul.mubr.bf16.gmra.mrb[0].mxu0 %v5612
      %v5816 = vpop.f32.mrb[0].mxu0
      %v5817 = vadd.f32 0.0, %v5816
      %v5818 = vpop.f32.mrb[0].mxu0
      %v5819 = vpop.f32.mrb[0].mxu0
      %v5820 = vadd.f32 0.0, %v5819
      %v5821 = vpop.f32.mrb[0].mxu0
      %5822 = vmatprep.mubr.bf16.mxu0 %v5642
      %5823 = vmatmul.mubr.bf16.gmra.mrb[0].mxu0 %v5614
      %v5824 = vpop.f32.mrb[0].mxu0
      %v5825 = vadd.f32 0.0, %v5824
      %v5826 = vpop.f32.mrb[0].mxu0
      %v5827 = vpop.f32.mrb[0].mxu0
      %v5828 = vadd.f32 0.0, %v5827
      %v5829 = vpop.f32.mrb[0].mxu0
      %5830 = vmatprep.mubr.bf16.mxu0 %v5645
      %5831 = vmatmul.mubr.bf16.gmra.mrb[0].mxu0 %v5616
      %v5832 = vpop.f32.mrb[0].mxu0
      %v5833 = vadd.f32 0.0, %v5832
      %v5834 = vpop.f32.mrb[0].mxu0
      %v5835 = vpop.f32.mrb[0].mxu0
      %v5836 = vadd.f32 0.0, %v5835
      %v5837 = vpop.f32.mrb[0].mxu0
      %5838 = vdwg.mxu0
      %v5839 = vpack.c.bf16 %v5686, %v5682
      %v5840 = vpack.c.bf16 %v5688, %v5684
      %v5841 = vpack.c.bf16 %v5788, %v5785
      %v5842 = vpack.c.bf16 %v5696, %v5692
      %v5843 = vpack.c.bf16 %v5698, %v5694
      %v5844 = vpack.c.bf16 %v5796, %v5793
      %v5845 = vpack.c.bf16 %v5706, %v5702
      %v5846 = vpack.c.bf16 %v5708, %v5704
      %v5847 = vpack.c.bf16 %v5804, %v5801
      %v5848 = vpack.c.bf16 %v5716, %v5712
      %v5849 = vpack.c.bf16 %v5718, %v5714
      %v5850 = vpack.c.bf16 %v5812, %v5809
      %v5851 = vpack.c.bf16 %v5726, %v5722
      %v5852 = vpack.c.bf16 %v5728, %v5724
      %v5853 = vpack.c.bf16 %v5820, %v5817
      %v5854 = vpack.c.bf16 %v5736, %v5732
      %v5855 = vpack.c.bf16 %v5738, %v5734
      %v5856 = vpack.c.bf16 %v5828, %v5825
      %v5857 = vpack.c.bf16 %v5746, %v5742
      %v5858 = vpack.c.bf16 %v5748, %v5744
      %v5859 = vpack.c.bf16 %v5836, %v5833
      %v5860 = vld [vmem:[%s6] sm:$0xff]
      %v5861 = vld [vmem:[%s6 + $0x8] sm:$0xff]
      %v5862 = vld [vmem:[%s6 + $0x10] sm:$0xff]
      %v5863 = vld [vmem:[%s6 + $0x18] sm:$0xff]
      %v5864 = vld [vmem:[%s6 + $0x20] sm:$0xff]
      %v5865 = vld [vmem:[%s6 + $0x28] sm:$0xff]
      %v5866 = vld [vmem:[%s6 + $0x30] sm:$0xff]
      %v5867 = vld [vmem:[%s6 + $0x38] sm:$0xff]
      %v5868 = vld [vmem:[%s6 + $0x40] sm:$0xff]
      %v5869 = vld [vmem:[%s6 + $0x48] sm:$0xff]
      %v5870 = vld [vmem:[%s6 + $0x50] sm:$0xff]
      %v5871 = vld [vmem:[%s6 + $0x58] sm:$0xff]
      %v5872 = vld [vmem:[%s6 + $0x60] sm:$0xff]
      %v5873 = vld [vmem:[%s6 + $0x68] sm:$0xff]
      %v5874 = vld [vmem:[%s6 + $0x70] sm:$0xff]
      %v5875 = vld [vmem:[%s6 + $0x78] sm:$0xff]
      %v5876 = vld [vmem:[%s6 + $0x80] sm:$0xff]
      %v5877 = vld [vmem:[%s6 + $0x88] sm:$0xff]
      %v5878 = vld [vmem:[%s6 + $0x90] sm:$0xff]
      %v5879 = vld [vmem:[%s6 + $0x98] sm:$0xff]
      %v5880 = vld [vmem:[%s6 + $0xa0] sm:$0xff]
      %v5881 = vld [vmem:[%s6 + $0xa8] sm:$0xff]
      %v5882 = vld [vmem:[%s6 + $0xb0] sm:$0xff]
      %v5883 = vld [vmem:[%s6 + $0xb8] sm:$0xff]
      %v5884 = vld [vmem:[%s6 + $0xc0] sm:$0xff]
      %v5885 = vld [vmem:[%s6 + $0xc8] sm:$0xff]
      %v5886 = vld [vmem:[%s6 + $0xd0] sm:$0xff]
      %v5887 = vld [vmem:[%s6 + $0xd8] sm:$0xff]
      %v5888 = vld [vmem:[%s6 + $0xe0] sm:$0xff]
      %v5889 = vld [vmem:[%s6 + $0xe8] sm:$0xff]
      %v5890 = vld [vmem:[%s6 + $0xf0] sm:$0xff]
      %v5891 = vld [vmem:[%s6 + $0xf8] sm:$0xff]
      %v5892 = vld [vmem:[%s6 + $0x100] sm:$0xff]
      %v5893 = vld [vmem:[%s6 + $0x108] sm:$0xff]
      %v5894 = vld [vmem:[%s6 + $0x110] sm:$0xff]
      %v5895 = vld [vmem:[%s6 + $0x118] sm:$0xff]
      %v5896 = vld [vmem:[%s6 + $0x120] sm:$0xff]
      %v5897 = vld [vmem:[%s6 + $0x128] sm:$0xff]
      %v5898 = vld [vmem:[%s6 + $0x130] sm:$0xff]
      %v5899 = vld [vmem:[%s6 + $0x138] sm:$0xff]
      %v5900 = vld [vmem:[%s6 + $0x140] sm:$0xff]
      %v5901 = vld [vmem:[%s6 + $0x148] sm:$0xff]
      %v5944 = vunpack.c.l.b16 %v5860
      %v5945 = vunpack.c.h.b16 %v5860
      %v5946 = vunpack.c.l.b16 %v5861
      %v5947 = vunpack.c.h.b16 %v5861
      %v5948 = vunpack.c.l.b16 %v5862
      %v5949 = vunpack.c.h.b16 %v5862
      %v5950 = vunpack.c.l.b16 %v5863
      %v5951 = vunpack.c.h.b16 %v5863
      %v5952 = vunpack.c.l.b16 %v5864
      %v5953 = vunpack.c.h.b16 %v5864
      %v5954 = vunpack.c.l.b16 %v5865
      %v5955 = vunpack.c.h.b16 %v5865
      %v5956 = vunpack.c.l.b16 %v5866
      %v5957 = vunpack.c.h.b16 %v5866
      %v5958 = vunpack.c.l.b16 %v5867
      %v5959 = vunpack.c.h.b16 %v5867
      %v5960 = vunpack.c.l.b16 %v5868
      %v5961 = vunpack.c.h.b16 %v5868
      %v5962 = vunpack.c.l.b16 %v5869
      %v5963 = vunpack.c.h.b16 %v5869
      %v5964 = vunpack.c.l.b16 %v5870
      %v5965 = vunpack.c.h.b16 %v5870
      %v5966 = vunpack.c.l.b16 %v5871
      %v5967 = vunpack.c.h.b16 %v5871
      %v5968 = vunpack.c.l.b16 %v5872
      %v5969 = vunpack.c.h.b16 %v5872
      %v5970 = vunpack.c.l.b16 %v5873
      %v5971 = vunpack.c.h.b16 %v5873
      %v5972 = vunpack.c.l.b16 %v5874
      %v5973 = vunpack.c.h.b16 %v5874
      %v5974 = vunpack.c.l.b16 %v5875
      %v5975 = vunpack.c.h.b16 %v5875
      %v5976 = vunpack.c.l.b16 %v5876
      %v5977 = vunpack.c.h.b16 %v5876
      %v5978 = vunpack.c.l.b16 %v5877
      %v5979 = vunpack.c.h.b16 %v5877
      %v5980 = vunpack.c.l.b16 %v5878
      %v5981 = vunpack.c.h.b16 %v5878
      %v5982 = vunpack.c.l.b16 %v5879
      %v5983 = vunpack.c.h.b16 %v5879
      %v5984 = vunpack.c.l.b16 %v5880
      %v5985 = vunpack.c.h.b16 %v5880
      %v5986 = vunpack.c.l.b16 %v5881
      %v5987 = vunpack.c.h.b16 %v5881
      %v5988 = vunpack.c.l.b16 %v5882
      %v5989 = vunpack.c.h.b16 %v5882
      %v5990 = vunpack.c.l.b16 %v5883
      %v5991 = vunpack.c.h.b16 %v5883
      %v5992 = vunpack.c.l.b16 %v5884
      %v5993 = vunpack.c.h.b16 %v5884
      %v5994 = vunpack.c.l.b16 %v5885
      %v5995 = vunpack.c.h.b16 %v5885
      %v5996 = vunpack.c.l.b16 %v5886
      %v5997 = vunpack.c.h.b16 %v5886
      %v5998 = vunpack.c.l.b16 %v5887
      %v5999 = vunpack.c.h.b16 %v5887
      %v6000 = vunpack.c.l.b16 %v5888
      %v6001 = vunpack.c.h.b16 %v5888
      %v6002 = vunpack.c.l.b16 %v5889
      %v6003 = vunpack.c.h.b16 %v5889
      %v6004 = vunpack.c.l.b16 %v5890
      %v6005 = vunpack.c.h.b16 %v5890
      %v6006 = vunpack.c.l.b16 %v5891
      %v6007 = vunpack.c.h.b16 %v5891
      %v6008 = vunpack.c.l.b16 %v5892
      %v6009 = vunpack.c.h.b16 %v5892
      %v6010 = vunpack.c.l.b16 %v5893
      %v6011 = vunpack.c.h.b16 %v5893
      %v6012 = vunpack.c.l.b16 %v5894
      %v6013 = vunpack.c.h.b16 %v5894
      %v6014 = vunpack.c.l.b16 %v5895
      %v6015 = vunpack.c.h.b16 %v5895
      %v6016 = vunpack.c.l.b16 %v5896
      %v6017 = vunpack.c.h.b16 %v5896
      %v6018 = vunpack.c.l.b16 %v5897
      %v6019 = vunpack.c.h.b16 %v5897
      %v6020 = vunpack.c.l.b16 %v5898
      %v6021 = vunpack.c.h.b16 %v5898
      %v6022 = vunpack.c.l.b16 %v5899
      %v6023 = vunpack.c.h.b16 %v5899
      %v6024 = vunpack.c.l.b16 %v5900
      %v6025 = vunpack.c.h.b16 %v5900
      %v6026 = vunpack.c.l.b16 %v5901
      %v6027 = vunpack.c.h.b16 %v5901
      %v6028 = vpack.c.b16 %v5946, %v5944
      %v6029 = vpack.c.b16 %v5947, %v5945
      %v6030 = vpack.c.b16 %v5950, %v5948
      %v6031 = vpack.c.b16 %v5951, %v5949
      %v6032 = vpack.c.b16 %v5954, %v5952
      %v6033 = vpack.c.b16 %v5955, %v5953
      %v6034 = vpack.c.b16 %v5958, %v5956
      %v6035 = vpack.c.b16 %v5959, %v5957
      %v6036 = vpack.c.b16 %v5962, %v5960
      %v6037 = vpack.c.b16 %v5963, %v5961
      %v6038 = vpack.c.b16 %v5966, %v5964
      %v6039 = vpack.c.b16 %v5967, %v5965
      %v6040 = vpack.c.b16 %v5970, %v5968
      %v6041 = vpack.c.b16 %v5971, %v5969
      %v6042 = vpack.c.b16 %v5974, %v5972
      %v6043 = vpack.c.b16 %v5975, %v5973
      %v6044 = vpack.c.b16 %v5978, %v5976
      %v6045 = vpack.c.b16 %v5979, %v5977
      %v6046 = vpack.c.b16 %v5982, %v5980
      %v6047 = vpack.c.b16 %v5983, %v5981
      %v6048 = vpack.c.b16 %v5986, %v5984
      %v6049 = vpack.c.b16 %v5987, %v5985
      %v6050 = vpack.c.b16 %v5990, %v5988
      %v6051 = vpack.c.b16 %v5991, %v5989
      %v6052 = vpack.c.b16 %v5994, %v5992
      %v6053 = vpack.c.b16 %v5995, %v5993
      %v6054 = vpack.c.b16 %v5998, %v5996
      %v6055 = vpack.c.b16 %v5999, %v5997
      %v6056 = vpack.c.b16 %v6002, %v6000
      %v6057 = vpack.c.b16 %v6003, %v6001
      %v6058 = vpack.c.b16 %v6006, %v6004
      %v6059 = vpack.c.b16 %v6007, %v6005
      %v6060 = vpack.c.b16 %v6010, %v6008
      %v6061 = vpack.c.b16 %v6011, %v6009
      %v6062 = vpack.c.b16 %v6014, %v6012
      %v6063 = vpack.c.b16 %v6015, %v6013
      %v6064 = vpack.c.b16 %v6018, %v6016
      %v6065 = vpack.c.b16 %v6019, %v6017
      %v6066 = vpack.c.b16 %v6022, %v6020
      %v6067 = vpack.c.b16 %v6023, %v6021
      %v6068 = vpack.c.b16 %v6026, %v6024
      %v6069 = vpack.c.b16 %v6027, %v6025
      %v6113 = vsel %vm2151, %v5841, 0
      %v6116 = vsel %vm2151, %v5844, 0
      %v6119 = vsel %vm2151, %v5847, 0
      %v6122 = vsel %vm2151, %v5850, 0
      %v6125 = vsel %vm2151, %v5853, 0
      %v6128 = vsel %vm2151, %v5856, 0
      %v6131 = vsel %vm2151, %v5859, 0
      %6133 = vmatprep.subr.bf16.mxu0 %v6029
      %6134 = vmatpush1.bf16.msra.mxu0 %v6028
      %6135 = vmatprep.subr.bf16.mxu0 %v6031
      %6136 = vmatpush1.bf16.msra.mxu0 %v6030
      %6137 = vmatprep.subr.bf16.mxu0 %v6033
      %6138 = vmatpush1.bf16.msra.mxu0 %v6032
      %6139 = vmatprep.subr.bf16.mxu0 %v6035
      %6140 = vmatpush1.bf16.msra.mxu0 %v6034
      %6141 = vmatprep.subr.bf16.mxu0 %v6037
      %6142 = vmatpush1.bf16.msra.mxu0 %v6036
      %6143 = vmatprep.subr.bf16.mxu0 %v6039
      %6144 = vmatpush1.bf16.msra.mxu0 %v6038
      %6145 = vmatprep.subr.bf16.mxu0 %v6041
      %6146 = vmatpush1.bf16.msra.mxu0 %v6040
      %6147 = vmatprep.subr.bf16.mxu0 %v6043
      %6148 = vmatpush1.bf16.msra.mxu0 %v6042
      %6149 = vmatprep.subr.bf16.mxu0 %v6045
      %6150 = vmatpush1.bf16.msra.mxu0 %v6044
      %6151 = vmatprep.subr.bf16.mxu0 %v6047
      %6152 = vmatpush1.bf16.msra.mxu0 %v6046
      %6153 = vmatprep.subr.bf16.mxu0 %v6049
      %6154 = vmatpush1.bf16.msra.mxu0 %v6048
      %6155 = vmatprep.subr.bf16.mxu0 %v6051
      %6156 = vmatpush1.bf16.msra.mxu0 %v6050
      %6157 = vmatprep.subr.bf16.mxu0 %v6053
      %6158 = vmatpush1.bf16.msra.mxu0 %v6052
      %6159 = vmatprep.subr.bf16.mxu0 %v6055
      %6160 = vmatpush1.bf16.msra.mxu0 %v6054
      %6161 = vmatprep.subr.bf16.mxu0 %v6057
      %6162 = vmatpush1.bf16.msra.mxu0 %v6056
      %6163 = vmatprep.subr.bf16.mxu0 %v6059
      %6164 = vmatpush1.bf16.msra.mxu0 %v6058
      %6165 = vmatprep.mubr.bf16.mxu0 %v5840
      %6166 = vmatmul.mubr.bf16.gmra.mrb[0].mxu0 %v5839
      %v6167 = vpop.f32.mrb[0].mxu0
      %v6168 = vadd.f32 0.0, %v6167
      %v6169 = vpop.f32.mrb[0].mxu0
      %v6170 = vadd.f32 0.0, %v6169
      %v6171 = vpop.f32.mrb[0].mxu0
      %v6172 = vadd.f32 0.0, %v6171
      %v6173 = vpop.f32.mrb[0].mxu0
      %v6174 = vadd.f32 0.0, %v6173
      %6175 = vmatprep.mubr.bf16.mxu0 %v5843
      %6176 = vmatmul.mubr.bf16.gmra.mrb[0].mxu0 %v5842
      %v6177 = vpop.f32.mrb[0].mxu0
      %v6178 = vadd.f32 0.0, %v6177
      %v6179 = vpop.f32.mrb[0].mxu0
      %v6180 = vadd.f32 0.0, %v6179
      %v6181 = vpop.f32.mrb[0].mxu0
      %v6182 = vadd.f32 0.0, %v6181
      %v6183 = vpop.f32.mrb[0].mxu0
      %v6184 = vadd.f32 0.0, %v6183
      %6185 = vmatprep.mubr.bf16.mxu0 %v5846
      %6186 = vmatmul.mubr.bf16.gmra.mrb[0].mxu0 %v5845
      %v6187 = vpop.f32.mrb[0].mxu0
      %v6188 = vadd.f32 0.0, %v6187
      %v6189 = vpop.f32.mrb[0].mxu0
      %v6190 = vadd.f32 0.0, %v6189
      %v6191 = vpop.f32.mrb[0].mxu0
      %v6192 = vadd.f32 0.0, %v6191
      %v6193 = vpop.f32.mrb[0].mxu0
      %v6194 = vadd.f32 0.0, %v6193
      %6195 = vmatprep.mubr.bf16.mxu0 %v5849
      %6196 = vmatmul.mubr.bf16.gmra.mrb[0].mxu0 %v5848
      %v6197 = vpop.f32.mrb[0].mxu0
      %v6198 = vadd.f32 0.0, %v6197
      %v6199 = vpop.f32.mrb[0].mxu0
      %v6200 = vadd.f32 0.0, %v6199
      %v6201 = vpop.f32.mrb[0].mxu0
      %v6202 = vadd.f32 0.0, %v6201
      %v6203 = vpop.f32.mrb[0].mxu0
      %v6204 = vadd.f32 0.0, %v6203
      %6205 = vmatprep.mubr.bf16.mxu0 %v5852
      %6206 = vmatmul.mubr.bf16.gmra.mrb[0].mxu0 %v5851
      %v6207 = vpop.f32.mrb[0].mxu0
      %v6208 = vadd.f32 0.0, %v6207
      %v6209 = vpop.f32.mrb[0].mxu0
      %v6210 = vadd.f32 0.0, %v6209
      %v6211 = vpop.f32.mrb[0].mxu0
      %v6212 = vadd.f32 0.0, %v6211
      %v6213 = vpop.f32.mrb[0].mxu0
      %v6214 = vadd.f32 0.0, %v6213
      %6215 = vmatprep.mubr.bf16.mxu0 %v5855
      %6216 = vmatmul.mubr.bf16.gmra.mrb[0].mxu0 %v5854
      %v6217 = vpop.f32.mrb[0].mxu0
      %v6218 = vadd.f32 0.0, %v6217
      %v6219 = vpop.f32.mrb[0].mxu0
      %v6220 = vadd.f32 0.0, %v6219
      %v6221 = vpop.f32.mrb[0].mxu0
      %v6222 = vadd.f32 0.0, %v6221
      %v6223 = vpop.f32.mrb[0].mxu0
      %v6224 = vadd.f32 0.0, %v6223
      %6225 = vmatprep.mubr.bf16.mxu0 %v5858
      %6226 = vmatmul.mubr.bf16.gmra.mrb[0].mxu0 %v5857
      %v6227 = vpop.f32.mrb[0].mxu0
      %v6228 = vadd.f32 0.0, %v6227
      %v6229 = vpop.f32.mrb[0].mxu0
      %v6230 = vadd.f32 0.0, %v6229
      %v6231 = vpop.f32.mrb[0].mxu0
      %v6232 = vadd.f32 0.0, %v6231
      %v6233 = vpop.f32.mrb[0].mxu0
      %v6234 = vadd.f32 0.0, %v6233
      %6235 = vdwg.mxu0
      %6236 = vmatprep.subr.bf16.mxu0 %v6061
      %6237 = vmatpush1.bf16.msra.mxu0 %v6060
      %6238 = vmatprep.subr.bf16.mxu0 %v6063
      %6239 = vmatpush1.bf16.msra.mxu0 %v6062
      %6240 = vmatprep.subr.bf16.mxu0 %v6065
      %6241 = vmatpush1.bf16.msra.mxu0 %v6064
      %6242 = vmatprep.subr.bf16.mxu0 %v6067
      %6243 = vmatpush1.bf16.msra.mxu0 %v6066
      %6244 = vmatprep.subr.bf16.mxu0 %v6069
      %6245 = vmatpush1.bf16.msra.mxu0 %v6068
      %6246 = vmatprep.subr.bf16.mxu0 0
      %6247 = vmatpush1.bf16.msra.mxu0 0
      %6248 = vmatprep.subr.bf16.mxu0 0
      %6249 = vmatpush1.bf16.msra.mxu0 0
      %6250 = vmatprep.subr.bf16.mxu0 0
      %6251 = vmatpush1.bf16.msra.mxu0 0
      %6252 = vmatprep.subr.bf16.mxu0 0
      %6253 = vmatpush1.bf16.msra.mxu0 0
      %6254 = vmatprep.subr.bf16.mxu0 0
      %6255 = vmatpush1.bf16.msra.mxu0 0
      %6256 = vmatprep.subr.bf16.mxu0 0
      %6257 = vmatpush1.bf16.msra.mxu0 0
      %6258 = vmatprep.subr.bf16.mxu0 0
      %6259 = vmatpush1.bf16.msra.mxu0 0
      %6260 = vmatprep.subr.bf16.mxu0 0
      %6261 = vmatpush1.bf16.msra.mxu0 0
      %6262 = vmatprep.subr.bf16.mxu0 0
      %6263 = vmatpush1.bf16.msra.mxu0 0
      %6264 = vmatprep.subr.bf16.mxu0 0
      %6265 = vmatpush1.bf16.msra.mxu0 0
      %6266 = vmatprep.subr.bf16.mxu0 0
      %6267 = vmatpush1.bf16.msra.mxu0 0
      %6268 = vmatprep.mubr.bf16.mxu0 0
      %6269 = vmatmul.mubr.bf16.gmra.mrb[0].mxu0 %v6113
      %v6270 = vpop.f32.mrb[0].mxu0
      %v6271 = vadd.f32 %v6168, %v6270
      %v6272 = vpop.f32.mrb[0].mxu0
      %v6273 = vadd.f32 %v6170, %v6272
      %v6274 = vpop.f32.mrb[0].mxu0
      %v6275 = vadd.f32 %v6172, %v6274
      %v6276 = vpop.f32.mrb[0].mxu0
      %v6277 = vadd.f32 %v6174, %v6276
      %6278 = vmatprep.mubr.bf16.mxu0 0
      %6279 = vmatmul.mubr.bf16.gmra.mrb[0].mxu0 %v6116
      %v6280 = vpop.f32.mrb[0].mxu0
      %v6281 = vadd.f32 %v6178, %v6280
      %v6282 = vpop.f32.mrb[0].mxu0
      %v6283 = vadd.f32 %v6180, %v6282
      %v6284 = vpop.f32.mrb[0].mxu0
      %v6285 = vadd.f32 %v6182, %v6284
      %v6286 = vpop.f32.mrb[0].mxu0
      %v6287 = vadd.f32 %v6184, %v6286
      %6288 = vmatprep.mubr.bf16.mxu0 0
      %6289 = vmatmul.mubr.bf16.gmra.mrb[0].mxu0 %v6119
      %v6290 = vpop.f32.mrb[0].mxu0
      %v6291 = vadd.f32 %v6188, %v6290
      %v6292 = vpop.f32.mrb[0].mxu0
      %v6293 = vadd.f32 %v6190, %v6292
      %v6294 = vpop.f32.mrb[0].mxu0
      %v6295 = vadd.f32 %v6192, %v6294
      %v6296 = vpop.f32.mrb[0].mxu0
      %v6297 = vadd.f32 %v6194, %v6296
      %6298 = vmatprep.mubr.bf16.mxu0 0
      %6299 = vmatmul.mubr.bf16.gmra.mrb[0].mxu0 %v6122
      %v6300 = vpop.f32.mrb[0].mxu0
      %v6301 = vadd.f32 %v6198, %v6300
      %v6302 = vpop.f32.mrb[0].mxu0
      %v6303 = vadd.f32 %v6200, %v6302
      %v6304 = vpop.f32.mrb[0].mxu0
      %v6305 = vadd.f32 %v6202, %v6304
      %v6306 = vpop.f32.mrb[0].mxu0
      %v6307 = vadd.f32 %v6204, %v6306
      %6308 = vmatprep.mubr.bf16.mxu0 0
      %6309 = vmatmul.mubr.bf16.gmra.mrb[0].mxu0 %v6125
      %v6310 = vpop.f32.mrb[0].mxu0
      %v6311 = vadd.f32 %v6208, %v6310
      %v6312 = vpop.f32.mrb[0].mxu0
      %v6313 = vadd.f32 %v6210, %v6312
      %v6314 = vpop.f32.mrb[0].mxu0
      %v6315 = vadd.f32 %v6212, %v6314
      %v6316 = vpop.f32.mrb[0].mxu0
      %v6317 = vadd.f32 %v6214, %v6316
      %6318 = vmatprep.mubr.bf16.mxu0 0
      %6319 = vmatmul.mubr.bf16.gmra.mrb[0].mxu0 %v6128
      %v6320 = vpop.f32.mrb[0].mxu0
      %v6321 = vadd.f32 %v6218, %v6320
      %v6322 = vpop.f32.mrb[0].mxu0
      %v6323 = vadd.f32 %v6220, %v6322
      %v6324 = vpop.f32.mrb[0].mxu0
      %v6325 = vadd.f32 %v6222, %v6324
      %v6326 = vpop.f32.mrb[0].mxu0
      %v6327 = vadd.f32 %v6224, %v6326
      %6328 = vmatprep.mubr.bf16.mxu0 0
      %6329 = vmatmul.mubr.bf16.gmra.mrb[0].mxu0 %v6131
      %v6330 = vpop.f32.mrb[0].mxu0
      %v6331 = vadd.f32 %v6228, %v6330
      %v6332 = vpop.f32.mrb[0].mxu0
      %v6333 = vadd.f32 %v6230, %v6332
      %v6334 = vpop.f32.mrb[0].mxu0
      %v6335 = vadd.f32 %v6232, %v6334
      %v6336 = vpop.f32.mrb[0].mxu0
      %v6337 = vadd.f32 %v6234, %v6336
      %6338 = vdwg.mxu0
      %v6339 = vld [vmem:[%s7] sm:$0xff]
      %v6340 = vld [vmem:[%s7 + $0x8] sm:$0xff]
      %v6341 = vld [vmem:[%s7 + $0x10] sm:$0xff]
      %v6342 = vld [vmem:[%s7 + $0x18] sm:$0xff]
      %v6343 = vld [vmem:[%s7 + $0x20] sm:$0xff]
      %v6344 = vld [vmem:[%s7 + $0x28] sm:$0xff]
      %v6345 = vld [vmem:[%s7 + $0x30] sm:$0xff]
      %v6346 = vld [vmem:[%s7 + $0x38] sm:$0xff]
      %v6347 = vld [vmem:[%s7 + $0x40] sm:$0xff]
      %v6348 = vld [vmem:[%s7 + $0x48] sm:$0xff]
      %v6349 = vld [vmem:[%s7 + $0x50] sm:$0xff]
      %v6350 = vld [vmem:[%s7 + $0x58] sm:$0xff]
      %v6351 = vld [vmem:[%s7 + $0x60] sm:$0xff]
      %v6352 = vld [vmem:[%s7 + $0x68] sm:$0xff]
      %v6353 = vld [vmem:[%s7 + $0x70] sm:$0xff]
      %v6354 = vld [vmem:[%s7 + $0x78] sm:$0xff]
      %v6355 = vld [vmem:[%s7 + $0x80] sm:$0xff]
      %v6356 = vld [vmem:[%s7 + $0x88] sm:$0xff]
      %v6357 = vld [vmem:[%s7 + $0x90] sm:$0xff]
      %v6358 = vld [vmem:[%s7 + $0x98] sm:$0xff]
      %v6359 = vld [vmem:[%s7 + $0xa0] sm:$0xff]
      %v6360 = vld [vmem:[%s7 + $0xa8] sm:$0xff]
      %v6361 = vld [vmem:[%s7 + $0xb0] sm:$0xff]
      %v6362 = vld [vmem:[%s7 + $0xb8] sm:$0xff]
      %v6363 = vld [vmem:[%s7 + $0xc0] sm:$0xff]
      %v6364 = vld [vmem:[%s7 + $0xc8] sm:$0xff]
      %v6365 = vld [vmem:[%s7 + $0xd0] sm:$0xff]
      %v6366 = vld [vmem:[%s7 + $0xd8] sm:$0xff]
      %v6367 = vld [vmem:[%s7 + $0xe0] sm:$0xff]
      %v6368 = vld [vmem:[%s7 + $0xe8] sm:$0xff]
      %v6369 = vld [vmem:[%s7 + $0xf0] sm:$0xff]
      %v6370 = vld [vmem:[%s7 + $0xf8] sm:$0xff]
      %v6371 = vld [vmem:[%s7 + $0x100] sm:$0xff]
      %v6372 = vld [vmem:[%s7 + $0x108] sm:$0xff]
      %v6373 = vld [vmem:[%s7 + $0x110] sm:$0xff]
      %v6374 = vld [vmem:[%s7 + $0x118] sm:$0xff]
      %v6375 = vld [vmem:[%s7 + $0x120] sm:$0xff]
      %v6376 = vld [vmem:[%s7 + $0x128] sm:$0xff]
      %v6377 = vld [vmem:[%s7 + $0x130] sm:$0xff]
      %v6378 = vld [vmem:[%s7 + $0x138] sm:$0xff]
      %v6379 = vld [vmem:[%s7 + $0x140] sm:$0xff]
      %v6380 = vld [vmem:[%s7 + $0x148] sm:$0xff]
      %v6423 = vunpack.c.l.b16 %v6339
      %v6424 = vunpack.c.h.b16 %v6339
      %v6425 = vunpack.c.l.b16 %v6340
      %v6426 = vunpack.c.h.b16 %v6340
      %v6427 = vunpack.c.l.b16 %v6341
      %v6428 = vunpack.c.h.b16 %v6341
      %v6429 = vunpack.c.l.b16 %v6342
      %v6430 = vunpack.c.h.b16 %v6342
      %v6431 = vunpack.c.l.b16 %v6343
      %v6432 = vunpack.c.h.b16 %v6343
      %v6433 = vunpack.c.l.b16 %v6344
      %v6434 = vunpack.c.h.b16 %v6344
      %v6435 = vunpack.c.l.b16 %v6345
      %v6436 = vunpack.c.h.b16 %v6345
      %v6437 = vunpack.c.l.b16 %v6346
      %v6438 = vunpack.c.h.b16 %v6346
      %v6439 = vunpack.c.l.b16 %v6347
      %v6440 = vunpack.c.h.b16 %v6347
      %v6441 = vunpack.c.l.b16 %v6348
      %v6442 = vunpack.c.h.b16 %v6348
      %v6443 = vunpack.c.l.b16 %v6349
      %v6444 = vunpack.c.h.b16 %v6349
      %v6445 = vunpack.c.l.b16 %v6350
      %v6446 = vunpack.c.h.b16 %v6350
      %v6447 = vunpack.c.l.b16 %v6351
      %v6448 = vunpack.c.h.b16 %v6351
      %v6449 = vunpack.c.l.b16 %v6352
      %v6450 = vunpack.c.h.b16 %v6352
      %v6451 = vunpack.c.l.b16 %v6353
      %v6452 = vunpack.c.h.b16 %v6353
      %v6453 = vunpack.c.l.b16 %v6354
      %v6454 = vunpack.c.h.b16 %v6354
      %v6455 = vunpack.c.l.b16 %v6355
      %v6456 = vunpack.c.h.b16 %v6355
      %v6457 = vunpack.c.l.b16 %v6356
      %v6458 = vunpack.c.h.b16 %v6356
      %v6459 = vunpack.c.l.b16 %v6357
      %v6460 = vunpack.c.h.b16 %v6357
      %v6461 = vunpack.c.l.b16 %v6358
      %v6462 = vunpack.c.h.b16 %v6358
      %v6463 = vunpack.c.l.b16 %v6359
      %v6464 = vunpack.c.h.b16 %v6359
      %v6465 = vunpack.c.l.b16 %v6360
      %v6466 = vunpack.c.h.b16 %v6360
      %v6467 = vunpack.c.l.b16 %v6361
      %v6468 = vunpack.c.h.b16 %v6361
      %v6469 = vunpack.c.l.b16 %v6362
      %v6470 = vunpack.c.h.b16 %v6362
      %v6471 = vunpack.c.l.b16 %v6363
      %v6472 = vunpack.c.h.b16 %v6363
      %v6473 = vunpack.c.l.b16 %v6364
      %v6474 = vunpack.c.h.b16 %v6364
      %v6475 = vunpack.c.l.b16 %v6365
      %v6476 = vunpack.c.h.b16 %v6365
      %v6477 = vunpack.c.l.b16 %v6366
      %v6478 = vunpack.c.h.b16 %v6366
      %v6479 = vunpack.c.l.b16 %v6367
      %v6480 = vunpack.c.h.b16 %v6367
      %v6481 = vunpack.c.l.b16 %v6368
      %v6482 = vunpack.c.h.b16 %v6368
      %v6483 = vunpack.c.l.b16 %v6369
      %v6484 = vunpack.c.h.b16 %v6369
      %v6485 = vunpack.c.l.b16 %v6370
      %v6486 = vunpack.c.h.b16 %v6370
      %v6487 = vunpack.c.l.b16 %v6371
      %v6488 = vunpack.c.h.b16 %v6371
      %v6489 = vunpack.c.l.b16 %v6372
      %v6490 = vunpack.c.h.b16 %v6372
      %v6491 = vunpack.c.l.b16 %v6373
      %v6492 = vunpack.c.h.b16 %v6373
      %v6493 = vunpack.c.l.b16 %v6374
      %v6494 = vunpack.c.h.b16 %v6374
      %v6495 = vunpack.c.l.b16 %v6375
      %v6496 = vunpack.c.h.b16 %v6375
      %v6497 = vunpack.c.l.b16 %v6376
      %v6498 = vunpack.c.h.b16 %v6376
      %v6499 = vunpack.c.l.b16 %v6377
      %v6500 = vunpack.c.h.b16 %v6377
      %v6501 = vunpack.c.l.b16 %v6378
      %v6502 = vunpack.c.h.b16 %v6378
      %v6503 = vunpack.c.l.b16 %v6379
      %v6504 = vunpack.c.h.b16 %v6379
      %v6505 = vunpack.c.l.b16 %v6380
      %v6506 = vunpack.c.h.b16 %v6380
      %v6507 = vpack.c.b16 %v6425, %v6423
      %v6508 = vpack.c.b16 %v6426, %v6424
      %v6509 = vpack.c.b16 %v6429, %v6427
      %v6510 = vpack.c.b16 %v6430, %v6428
      %v6511 = vpack.c.b16 %v6433, %v6431
      %v6512 = vpack.c.b16 %v6434, %v6432
      %v6513 = vpack.c.b16 %v6437, %v6435
      %v6514 = vpack.c.b16 %v6438, %v6436
      %v6515 = vpack.c.b16 %v6441, %v6439
      %v6516 = vpack.c.b16 %v6442, %v6440
      %v6517 = vpack.c.b16 %v6445, %v6443
      %v6518 = vpack.c.b16 %v6446, %v6444
      %v6519 = vpack.c.b16 %v6449, %v6447
      %v6520 = vpack.c.b16 %v6450, %v6448
      %v6521 = vpack.c.b16 %v6453, %v6451
      %v6522 = vpack.c.b16 %v6454, %v6452
      %v6523 = vpack.c.b16 %v6457, %v6455
      %v6524 = vpack.c.b16 %v6458, %v6456
      %v6525 = vpack.c.b16 %v6461, %v6459
      %v6526 = vpack.c.b16 %v6462, %v6460
      %v6527 = vpack.c.b16 %v6465, %v6463
      %v6528 = vpack.c.b16 %v6466, %v6464
      %v6529 = vpack.c.b16 %v6469, %v6467
      %v6530 = vpack.c.b16 %v6470, %v6468
      %v6531 = vpack.c.b16 %v6473, %v6471
      %v6532 = vpack.c.b16 %v6474, %v6472
      %v6533 = vpack.c.b16 %v6477, %v6475
      %v6534 = vpack.c.b16 %v6478, %v6476
      %v6535 = vpack.c.b16 %v6481, %v6479
      %v6536 = vpack.c.b16 %v6482, %v6480
      %v6537 = vpack.c.b16 %v6485, %v6483
      %v6538 = vpack.c.b16 %v6486, %v6484
      %v6539 = vpack.c.b16 %v6489, %v6487
      %v6540 = vpack.c.b16 %v6490, %v6488
      %v6541 = vpack.c.b16 %v6493, %v6491
      %v6542 = vpack.c.b16 %v6494, %v6492
      %v6543 = vpack.c.b16 %v6497, %v6495
      %v6544 = vpack.c.b16 %v6498, %v6496
      %v6545 = vpack.c.b16 %v6501, %v6499
      %v6546 = vpack.c.b16 %v6502, %v6500
      %v6547 = vpack.c.b16 %v6505, %v6503
      %v6548 = vpack.c.b16 %v6506, %v6504
      %6591 = vmatprep.subr.bf16.mxu0 %v6508
      %6592 = vmatpush1.bf16.msra.mxu0 %v6507
      %6593 = vmatprep.subr.bf16.mxu0 %v6510
      %6594 = vmatpush1.bf16.msra.mxu0 %v6509
      %6595 = vmatprep.subr.bf16.mxu0 %v6512
      %6596 = vmatpush1.bf16.msra.mxu0 %v6511
      %6597 = vmatprep.subr.bf16.mxu0 %v6514
      %6598 = vmatpush1.bf16.msra.mxu0 %v6513
      %6599 = vmatprep.subr.bf16.mxu0 %v6516
      %6600 = vmatpush1.bf16.msra.mxu0 %v6515
      %6601 = vmatprep.subr.bf16.mxu0 %v6518
      %6602 = vmatpush1.bf16.msra.mxu0 %v6517
      %6603 = vmatprep.subr.bf16.mxu0 %v6520
      %6604 = vmatpush1.bf16.msra.mxu0 %v6519
      %6605 = vmatprep.subr.bf16.mxu0 %v6522
      %6606 = vmatpush1.bf16.msra.mxu0 %v6521
      %6607 = vmatprep.subr.bf16.mxu0 %v6524
      %6608 = vmatpush1.bf16.msra.mxu0 %v6523
      %6609 = vmatprep.subr.bf16.mxu0 %v6526
      %6610 = vmatpush1.bf16.msra.mxu0 %v6525
      %6611 = vmatprep.subr.bf16.mxu0 %v6528
      %6612 = vmatpush1.bf16.msra.mxu0 %v6527
      %6613 = vmatprep.subr.bf16.mxu0 %v6530
      %6614 = vmatpush1.bf16.msra.mxu0 %v6529
      %6615 = vmatprep.subr.bf16.mxu0 %v6532
      %6616 = vmatpush1.bf16.msra.mxu0 %v6531
      %6617 = vmatprep.subr.bf16.mxu0 %v6534
      %6618 = vmatpush1.bf16.msra.mxu0 %v6533
      %6619 = vmatprep.subr.bf16.mxu0 %v6536
      %6620 = vmatpush1.bf16.msra.mxu0 %v6535
      %6621 = vmatprep.subr.bf16.mxu0 %v6538
      %6622 = vmatpush1.bf16.msra.mxu0 %v6537
      %6623 = vmatprep.mubr.bf16.mxu0 %v5840
      %6624 = vmatmul.mubr.bf16.gmra.mrb[0].mxu0 %v5839
      %v6625 = vpop.f32.mrb[0].mxu0
      %v6626 = vadd.f32 0.0, %v6625
      %v6627 = vpop.f32.mrb[0].mxu0
      %v6628 = vadd.f32 0.0, %v6627
      %v6629 = vpop.f32.mrb[0].mxu0
      %v6630 = vadd.f32 0.0, %v6629
      %v6631 = vpop.f32.mrb[0].mxu0
      %v6632 = vadd.f32 0.0, %v6631
      %6633 = vmatprep.mubr.bf16.mxu0 %v5843
      %6634 = vmatmul.mubr.bf16.gmra.mrb[0].mxu0 %v5842
      %v6635 = vpop.f32.mrb[0].mxu0
      %v6636 = vadd.f32 0.0, %v6635
      %v6637 = vpop.f32.mrb[0].mxu0
      %v6638 = vadd.f32 0.0, %v6637
      %v6639 = vpop.f32.mrb[0].mxu0
      %v6640 = vadd.f32 0.0, %v6639
      %v6641 = vpop.f32.mrb[0].mxu0
      %v6642 = vadd.f32 0.0, %v6641
      %6643 = vmatprep.mubr.bf16.mxu0 %v5846
      %6644 = vmatmul.mubr.bf16.gmra.mrb[0].mxu0 %v5845
      %v6645 = vpop.f32.mrb[0].mxu0
      %v6646 = vadd.f32 0.0, %v6645
      %v6647 = vpop.f32.mrb[0].mxu0
      %v6648 = vadd.f32 0.0, %v6647
      %v6649 = vpop.f32.mrb[0].mxu0
      %v6650 = vadd.f32 0.0, %v6649
      %v6651 = vpop.f32.mrb[0].mxu0
      %v6652 = vadd.f32 0.0, %v6651
      %6653 = vmatprep.mubr.bf16.mxu0 %v5849
      %6654 = vmatmul.mubr.bf16.gmra.mrb[0].mxu0 %v5848
      %v6655 = vpop.f32.mrb[0].mxu0
      %v6656 = vadd.f32 0.0, %v6655
      %v6657 = vpop.f32.mrb[0].mxu0
      %v6658 = vadd.f32 0.0, %v6657
      %v6659 = vpop.f32.mrb[0].mxu0
      %v6660 = vadd.f32 0.0, %v6659
      %v6661 = vpop.f32.mrb[0].mxu0
      %v6662 = vadd.f32 0.0, %v6661
      %6663 = vmatprep.mubr.bf16.mxu0 %v5852
      %6664 = vmatmul.mubr.bf16.gmra.mrb[0].mxu0 %v5851
      %v6665 = vpop.f32.mrb[0].mxu0
      %v6666 = vadd.f32 0.0, %v6665
      %v6667 = vpop.f32.mrb[0].mxu0
      %v6668 = vadd.f32 0.0, %v6667
      %v6669 = vpop.f32.mrb[0].mxu0
      %v6670 = vadd.f32 0.0, %v6669
      %v6671 = vpop.f32.mrb[0].mxu0
      %v6672 = vadd.f32 0.0, %v6671
      %6673 = vmatprep.mubr.bf16.mxu0 %v5855
      %6674 = vmatmul.mubr.bf16.gmra.mrb[0].mxu0 %v5854
      %v6675 = vpop.f32.mrb[0].mxu0
      %v6676 = vadd.f32 0.0, %v6675
      %v6677 = vpop.f32.mrb[0].mxu0
      %v6678 = vadd.f32 0.0, %v6677
      %v6679 = vpop.f32.mrb[0].mxu0
      %v6680 = vadd.f32 0.0, %v6679
      %v6681 = vpop.f32.mrb[0].mxu0
      %v6682 = vadd.f32 0.0, %v6681
      %6683 = vmatprep.mubr.bf16.mxu0 %v5858
      %6684 = vmatmul.mubr.bf16.gmra.mrb[0].mxu0 %v5857
      %v6685 = vpop.f32.mrb[0].mxu0
      %v6686 = vadd.f32 0.0, %v6685
      %v6687 = vpop.f32.mrb[0].mxu0
      %v6688 = vadd.f32 0.0, %v6687
      %v6689 = vpop.f32.mrb[0].mxu0
      %v6690 = vadd.f32 0.0, %v6689
      %v6691 = vpop.f32.mrb[0].mxu0
      %v6692 = vadd.f32 0.0, %v6691
      %6693 = vdwg.mxu0
      %6694 = vmatprep.subr.bf16.mxu0 %v6540
      %6695 = vmatpush1.bf16.msra.mxu0 %v6539
      %6696 = vmatprep.subr.bf16.mxu0 %v6542
      %6697 = vmatpush1.bf16.msra.mxu0 %v6541
      %6698 = vmatprep.subr.bf16.mxu0 %v6544
      %6699 = vmatpush1.bf16.msra.mxu0 %v6543
      %6700 = vmatprep.subr.bf16.mxu0 %v6546
      %6701 = vmatpush1.bf16.msra.mxu0 %v6545
      %6702 = vmatprep.subr.bf16.mxu0 %v6548
      %6703 = vmatpush1.bf16.msra.mxu0 %v6547
      %6704 = vmatprep.subr.bf16.mxu0 0
      %6705 = vmatpush1.bf16.msra.mxu0 0
      %6706 = vmatprep.subr.bf16.mxu0 0
      %6707 = vmatpush1.bf16.msra.mxu0 0
      %6708 = vmatprep.subr.bf16.mxu0 0
      %6709 = vmatpush1.bf16.msra.mxu0 0
      %6710 = vmatprep.subr.bf16.mxu0 0
      %6711 = vmatpush1.bf16.msra.mxu0 0
      %6712 = vmatprep.subr.bf16.mxu0 0
      %6713 = vmatpush1.bf16.msra.mxu0 0
      %6714 = vmatprep.subr.bf16.mxu0 0
      %6715 = vmatpush1.bf16.msra.mxu0 0
      %6716 = vmatprep.subr.bf16.mxu0 0
      %6717 = vmatpush1.bf16.msra.mxu0 0
      %6718 = vmatprep.subr.bf16.mxu0 0
      %6719 = vmatpush1.bf16.msra.mxu0 0
      %6720 = vmatprep.subr.bf16.mxu0 0
      %6721 = vmatpush1.bf16.msra.mxu0 0
      %6722 = vmatprep.subr.bf16.mxu0 0
      %6723 = vmatpush1.bf16.msra.mxu0 0
      %6724 = vmatprep.subr.bf16.mxu0 0
      %6725 = vmatpush1.bf16.msra.mxu0 0
      %6726 = vmatprep.mubr.bf16.mxu0 0
      %6727 = vmatmul.mubr.bf16.gmra.mrb[0].mxu0 %v6113
      %v6728 = vpop.f32.mrb[0].mxu0
      %v6729 = vadd.f32 %v6626, %v6728
      %v6730 = vpop.f32.mrb[0].mxu0
      %v6731 = vadd.f32 %v6628, %v6730
      %v6732 = vpop.f32.mrb[0].mxu0
      %v6733 = vadd.f32 %v6630, %v6732
      %v6734 = vpop.f32.mrb[0].mxu0
      %v6735 = vadd.f32 %v6632, %v6734
      %6736 = vmatprep.mubr.bf16.mxu0 0
      %6737 = vmatmul.mubr.bf16.gmra.mrb[0].mxu0 %v6116
      %v6738 = vpop.f32.mrb[0].mxu0
      %v6739 = vadd.f32 %v6636, %v6738
      %v6740 = vpop.f32.mrb[0].mxu0
      %v6741 = vadd.f32 %v6638, %v6740
      %v6742 = vpop.f32.mrb[0].mxu0
      %v6743 = vadd.f32 %v6640, %v6742
      %v6744 = vpop.f32.mrb[0].mxu0
      %v6745 = vadd.f32 %v6642, %v6744
      %6746 = vmatprep.mubr.bf16.mxu0 0
      %6747 = vmatmul.mubr.bf16.gmra.mrb[0].mxu0 %v6119
      %v6748 = vpop.f32.mrb[0].mxu0
      %v6749 = vadd.f32 %v6646, %v6748
      %v6750 = vpop.f32.mrb[0].mxu0
      %v6751 = vadd.f32 %v6648, %v6750
      %v6752 = vpop.f32.mrb[0].mxu0
      %v6753 = vadd.f32 %v6650, %v6752
      %v6754 = vpop.f32.mrb[0].mxu0
      %v6755 = vadd.f32 %v6652, %v6754
      %6756 = vmatprep.mubr.bf16.mxu0 0
      %6757 = vmatmul.mubr.bf16.gmra.mrb[0].mxu0 %v6122
      %v6758 = vpop.f32.mrb[0].mxu0
      %v6759 = vadd.f32 %v6656, %v6758
      %v6760 = vpop.f32.mrb[0].mxu0
      %v6761 = vadd.f32 %v6658, %v6760
      %v6762 = vpop.f32.mrb[0].mxu0
      %v6763 = vadd.f32 %v6660, %v6762
      %v6764 = vpop.f32.mrb[0].mxu0
      %v6765 = vadd.f32 %v6662, %v6764
      %6766 = vmatprep.mubr.bf16.mxu0 0
      %6767 = vmatmul.mubr.bf16.gmra.mrb[0].mxu0 %v6125
      %v6768 = vpop.f32.mrb[0].mxu0
      %v6769 = vadd.f32 %v6666, %v6768
      %v6770 = vpop.f32.mrb[0].mxu0
      %v6771 = vadd.f32 %v6668, %v6770
      %v6772 = vpop.f32.mrb[0].mxu0
      %v6773 = vadd.f32 %v6670, %v6772
      %v6774 = vpop.f32.mrb[0].mxu0
      %v6775 = vadd.f32 %v6672, %v6774
      %6776 = vmatprep.mubr.bf16.mxu0 0
      %6777 = vmatmul.mubr.bf16.gmra.mrb[0].mxu0 %v6128
      %v6778 = vpop.f32.mrb[0].mxu0
      %v6779 = vadd.f32 %v6676, %v6778
      %v6780 = vpop.f32.mrb[0].mxu0
      %v6781 = vadd.f32 %v6678, %v6780
      %v6782 = vpop.f32.mrb[0].mxu0
      %v6783 = vadd.f32 %v6680, %v6782
      %v6784 = vpop.f32.mrb[0].mxu0
      %v6785 = vadd.f32 %v6682, %v6784
      %6786 = vmatprep.mubr.bf16.mxu0 0
      %6787 = vmatmul.mubr.bf16.gmra.mrb[0].mxu0 %v6131
      %v6788 = vpop.f32.mrb[0].mxu0
      %v6789 = vadd.f32 %v6686, %v6788
      %v6790 = vpop.f32.mrb[0].mxu0
      %v6791 = vadd.f32 %v6688, %v6790
      %v6792 = vpop.f32.mrb[0].mxu0
      %v6793 = vadd.f32 %v6690, %v6792
      %v6794 = vpop.f32.mrb[0].mxu0
      %v6795 = vadd.f32 %v6692, %v6794
      %6796 = vdwg.mxu0
      %v6797 = vmax.f32 %v6271, %v6729
      %v6798 = vmax.f32 %v6273, %v6731
      %v6799 = vmax.f32 %v6275, %v6733
      %v6800 = vmax.f32 %v6277, %v6735
      %v6801 = vmax.f32 %v6281, %v6739
      %v6802 = vmax.f32 %v6283, %v6741
      %v6803 = vmax.f32 %v6285, %v6743
      %v6804 = vmax.f32 %v6287, %v6745
      %v6805 = vmax.f32 %v6291, %v6749
      %v6806 = vmax.f32 %v6293, %v6751
      %v6807 = vmax.f32 %v6295, %v6753
      %v6808 = vmax.f32 %v6297, %v6755
      %v6809 = vmax.f32 %v6301, %v6759
      %v6810 = vmax.f32 %v6303, %v6761
      %v6811 = vmax.f32 %v6305, %v6763
      %v6812 = vmax.f32 %v6307, %v6765
      %v6813 = vmax.f32 %v6311, %v6769
      %v6814 = vmax.f32 %v6313, %v6771
      %v6815 = vmax.f32 %v6315, %v6773
      %v6816 = vmax.f32 %v6317, %v6775
      %v6817 = vmax.f32 %v6321, %v6779
      %v6818 = vmax.f32 %v6323, %v6781
      %v6819 = vmax.f32 %v6325, %v6783
      %v6820 = vmax.f32 %v6327, %v6785
      %v6821 = vmax.f32 %v6331, %v6789
      %v6822 = vmax.f32 %v6333, %v6791
      %v6823 = vmax.f32 %v6335, %v6793
      %v6824 = vmax.f32 %v6337, %v6795
      %v6825 = vrot.slane %v6797, 7
      %v6826 = vrot.slane %v6798, 7
      %v6827 = vrot.slane %v6799, 7
      %v6828 = vrot.slane %v6800, 7
      %v6829 = vrot.slane %v6801, 7
      %v6830 = vrot.slane %v6802, 7
      %v6831 = vrot.slane %v6803, 7
      %v6832 = vrot.slane %v6804, 7
      %v6833 = vrot.slane %v6805, 7
      %v6834 = vrot.slane %v6806, 7
      %v6835 = vrot.slane %v6807, 7
      %v6836 = vrot.slane %v6808, 7
      %v6837 = vrot.slane %v6809, 7
      %v6838 = vrot.slane %v6810, 7
      %v6839 = vrot.slane %v6811, 7
      %v6840 = vrot.slane %v6812, 7
      %v6841 = vrot.slane %v6813, 7
      %v6842 = vrot.slane %v6814, 7
      %v6843 = vrot.slane %v6815, 7
      %v6844 = vrot.slane %v6816, 7
      %v6845 = vrot.slane %v6817, 7
      %v6846 = vrot.slane %v6818, 7
      %v6847 = vrot.slane %v6819, 7
      %v6848 = vrot.slane %v6820, 7
      %v6849 = vrot.slane %v6821, 7
      %v6850 = vrot.slane %v6822, 7
      %v6851 = vrot.slane %v6823, 7
      %v6852 = vrot.slane %v6824, 7
      %v6853 = vsel %vm804, %v6849, %v6851
      %v6854 = vsel %vm804, %v6850, %v6852
      %v6855 = vsel %vm804, %v6847, %v6849
      %v6856 = vsel %vm804, %v6848, %v6850
      %v6857 = vsel %vm804, %v6845, %v6847
      %v6858 = vsel %vm804, %v6846, %v6848
      %v6859 = vsel %vm804, %v6843, %v6845
      %v6860 = vsel %vm804, %v6844, %v6846
      %v6861 = vsel %vm804, %v6841, %v6843
      %v6862 = vsel %vm804, %v6842, %v6844
      %v6863 = vsel %vm804, %v6839, %v6841
      %v6864 = vsel %vm804, %v6840, %v6842
      %v6865 = vsel %vm804, %v6837, %v6839
      %v6866 = vsel %vm804, %v6838, %v6840
      %v6867 = vsel %vm804, %v6835, %v6837
      %v6868 = vsel %vm804, %v6836, %v6838
      %v6869 = vsel %vm804, %v6833, %v6835
      %v6870 = vsel %vm804, %v6834, %v6836
      %v6871 = vsel %vm804, %v6831, %v6833
      %v6872 = vsel %vm804, %v6832, %v6834
      %v6873 = vsel %vm804, %v6829, %v6831
      %v6874 = vsel %vm804, %v6830, %v6832
      %v6875 = vsel %vm804, %v6827, %v6829
      %v6876 = vsel %vm804, %v6828, %v6830
      %v6877 = vsel %vm804, %v6825, %v6827
      %v6878 = vsel %vm804, %v6826, %v6828
      %v6879 = vsel %vm804, %v6851, %v6825
      %v6880 = vsel %vm804, %v6852, %v6826
      %v6881 = vld [vmem:[%s10] sm:$0xff]
      %v6882 = vld [vmem:[%s10 + $0x8] sm:$0xff]
      %v6883 = vld [vmem:[%s10 + $0x10] sm:$0xff]
      %v6884 = vld [vmem:[%s10 + $0x18] sm:$0xff]
      %v6885 = vld [vmem:[%s10 + $0x20] sm:$0xff]
      %v6886 = vld [vmem:[%s10 + $0x28] sm:$0xff]
      %v6887 = vld [vmem:[%s10 + $0x30] sm:$0xff]
      %v6888 = vld [vmem:[%s10 + $0x38] sm:$0xff]
      %v6889 = vld [vmem:[%s10 + $0x40] sm:$0xff]
      %v6890 = vld [vmem:[%s10 + $0x48] sm:$0xff]
      %v6891 = vld [vmem:[%s10 + $0x50] sm:$0xff]
      %v6892 = vld [vmem:[%s10 + $0x58] sm:$0xff]
      %v6893 = vld [vmem:[%s10 + $0x60] sm:$0xff]
      %v6894 = vld [vmem:[%s10 + $0x68] sm:$0xff]
      %6896 = vset.pattern.permute.xlu0 0
      %6897 = vperm.xlu0 %6896, %v6881
      %v6898 = vpop.permute.xlu0 %6897
      %6901 = vset.pattern.permute.xlu0 0
      %6902 = vperm.xlu0 %6901, %v6882
      %v6903 = vpop.permute.xlu0 %6902
      %6906 = vset.pattern.permute.xlu0 0
      %6907 = vperm.xlu0 %6906, %v6883
      %v6908 = vpop.permute.xlu0 %6907
      %6911 = vset.pattern.permute.xlu0 0
      %6912 = vperm.xlu0 %6911, %v6884
      %v6913 = vpop.permute.xlu0 %6912
      %6916 = vset.pattern.permute.xlu0 0
      %6917 = vperm.xlu0 %6916, %v6885
      %v6918 = vpop.permute.xlu0 %6917
      %6921 = vset.pattern.permute.xlu0 0
      %6922 = vperm.xlu0 %6921, %v6886
      %v6923 = vpop.permute.xlu0 %6922
      %6926 = vset.pattern.permute.xlu0 0
      %6927 = vperm.xlu0 %6926, %v6887
      %v6928 = vpop.permute.xlu0 %6927
      %6931 = vset.pattern.permute.xlu0 0
      %6932 = vperm.xlu0 %6931, %v6888
      %v6933 = vpop.permute.xlu0 %6932
      %6936 = vset.pattern.permute.xlu0 0
      %6937 = vperm.xlu0 %6936, %v6889
      %v6938 = vpop.permute.xlu0 %6937
      %6941 = vset.pattern.permute.xlu0 0
      %6942 = vperm.xlu0 %6941, %v6890
      %v6943 = vpop.permute.xlu0 %6942
      %6946 = vset.pattern.permute.xlu0 0
      %6947 = vperm.xlu0 %6946, %v6891
      %v6948 = vpop.permute.xlu0 %6947
      %6951 = vset.pattern.permute.xlu0 0
      %6952 = vperm.xlu0 %6951, %v6892
      %v6953 = vpop.permute.xlu0 %6952
      %6956 = vset.pattern.permute.xlu0 0
      %6957 = vperm.xlu0 %6956, %v6893
      %v6958 = vpop.permute.xlu0 %6957
      %6961 = vset.pattern.permute.xlu0 0
      %6962 = vperm.xlu0 %6961, %v6894
      %v6963 = vpop.permute.xlu0 %6962
      %v6965 = vmul.f32 %v6879, %v6898
      %v6966 = vmul.f32 %v6880, %v6898
      %v6967 = vmul.f32 %v6877, %v6903
      %v6968 = vmul.f32 %v6878, %v6903
      %v6969 = vmul.f32 %v6875, %v6908
      %v6970 = vmul.f32 %v6876, %v6908
      %v6971 = vmul.f32 %v6873, %v6913
      %v6972 = vmul.f32 %v6874, %v6913
      %v6973 = vmul.f32 %v6871, %v6918
      %v6974 = vmul.f32 %v6872, %v6918
      %v6975 = vmul.f32 %v6869, %v6923
      %v6976 = vmul.f32 %v6870, %v6923
      %v6977 = vmul.f32 %v6867, %v6928
      %v6978 = vmul.f32 %v6868, %v6928
      %v6979 = vmul.f32 %v6865, %v6933
      %v6980 = vmul.f32 %v6866, %v6933
      %v6981 = vmul.f32 %v6863, %v6938
      %v6982 = vmul.f32 %v6864, %v6938
      %v6983 = vmul.f32 %v6861, %v6943
      %v6984 = vmul.f32 %v6862, %v6943
      %v6985 = vmul.f32 %v6859, %v6948
      %v6986 = vmul.f32 %v6860, %v6948
      %v6987 = vmul.f32 %v6857, %v6953
      %v6988 = vmul.f32 %v6858, %v6953
      %v6989 = vmul.f32 %v6855, %v6958
      %v6990 = vmul.f32 %v6856, %v6958
      %v6991 = vmul.f32 %v6853, %v6963
      %v6992 = vmul.f32 %v6854, %v6963
      %v6993 = vrot.slane %v6797, 1
      %v6994 = vrot.slane %v6798, 1
      %v6995 = vrot.slane %v6799, 1
      %v6996 = vrot.slane %v6800, 1
      %v6997 = vrot.slane %v6801, 1
      %v6998 = vrot.slane %v6802, 1
      %v6999 = vrot.slane %v6803, 1
      %v7000 = vrot.slane %v6804, 1
      %v7001 = vrot.slane %v6805, 1
      %v7002 = vrot.slane %v6806, 1
      %v7003 = vrot.slane %v6807, 1
      %v7004 = vrot.slane %v6808, 1
      %v7005 = vrot.slane %v6809, 1
      %v7006 = vrot.slane %v6810, 1
      %v7007 = vrot.slane %v6811, 1
      %v7008 = vrot.slane %v6812, 1
      %v7009 = vrot.slane %v6813, 1
      %v7010 = vrot.slane %v6814, 1
      %v7011 = vrot.slane %v6815, 1
      %v7012 = vrot.slane %v6816, 1
      %v7013 = vrot.slane %v6817, 1
      %v7014 = vrot.slane %v6818, 1
      %v7015 = vrot.slane %v6819, 1
      %v7016 = vrot.slane %v6820, 1
      %v7017 = vrot.slane %v6821, 1
      %v7018 = vrot.slane %v6822, 1
      %v7019 = vrot.slane %v6823, 1
      %v7020 = vrot.slane %v6824, 1
      %v7021 = vsel %vm1225, %v7017, %v7019
      %v7022 = vsel %vm1225, %v7018, %v7020
      %v7023 = vsel %vm1225, %v7015, %v7017
      %v7024 = vsel %vm1225, %v7016, %v7018
      %v7025 = vsel %vm1225, %v7013, %v7015
      %v7026 = vsel %vm1225, %v7014, %v7016
      %v7027 = vsel %vm1225, %v7011, %v7013
      %v7028 = vsel %vm1225, %v7012, %v7014
      %v7029 = vsel %vm1225, %v7009, %v7011
      %v7030 = vsel %vm1225, %v7010, %v7012
      %v7031 = vsel %vm1225, %v7007, %v7009
      %v7032 = vsel %vm1225, %v7008, %v7010
      %v7033 = vsel %vm1225, %v7005, %v7007
      %v7034 = vsel %vm1225, %v7006, %v7008
      %v7035 = vsel %vm1225, %v7003, %v7005
      %v7036 = vsel %vm1225, %v7004, %v7006
      %v7037 = vsel %vm1225, %v7001, %v7003
      %v7038 = vsel %vm1225, %v7002, %v7004
      %v7039 = vsel %vm1225, %v6999, %v7001
      %v7040 = vsel %vm1225, %v7000, %v7002
      %v7041 = vsel %vm1225, %v6997, %v6999
      %v7042 = vsel %vm1225, %v6998, %v7000
      %v7043 = vsel %vm1225, %v6995, %v6997
      %v7044 = vsel %vm1225, %v6996, %v6998
      %v7045 = vsel %vm1225, %v6993, %v6995
      %v7046 = vsel %vm1225, %v6994, %v6996
      %v7047 = vsel %vm1225, %v7019, %v6993
      %v7048 = vsel %vm1225, %v7020, %v6994
      %v7049 = vld [vmem:[%s11] sm:$0xff]
      %v7050 = vld [vmem:[%s11 + $0x8] sm:$0xff]
      %v7051 = vld [vmem:[%s11 + $0x10] sm:$0xff]
      %v7052 = vld [vmem:[%s11 + $0x18] sm:$0xff]
      %v7053 = vld [vmem:[%s11 + $0x20] sm:$0xff]
      %v7054 = vld [vmem:[%s11 + $0x28] sm:$0xff]
      %v7055 = vld [vmem:[%s11 + $0x30] sm:$0xff]
      %v7056 = vld [vmem:[%s11 + $0x38] sm:$0xff]
      %v7057 = vld [vmem:[%s11 + $0x40] sm:$0xff]
      %v7058 = vld [vmem:[%s11 + $0x48] sm:$0xff]
      %v7059 = vld [vmem:[%s11 + $0x50] sm:$0xff]
      %v7060 = vld [vmem:[%s11 + $0x58] sm:$0xff]
      %v7061 = vld [vmem:[%s11 + $0x60] sm:$0xff]
      %v7062 = vld [vmem:[%s11 + $0x68] sm:$0xff]
      %7064 = vset.pattern.permute.xlu0 0
      %7065 = vperm.xlu0 %7064, %v7049
      %v7066 = vpop.permute.xlu0 %7065
      %7069 = vset.pattern.permute.xlu0 0
      %7070 = vperm.xlu0 %7069, %v7050
      %v7071 = vpop.permute.xlu0 %7070
      %7074 = vset.pattern.permute.xlu0 0
      %7075 = vperm.xlu0 %7074, %v7051
      %v7076 = vpop.permute.xlu0 %7075
      %7079 = vset.pattern.permute.xlu0 0
      %7080 = vperm.xlu0 %7079, %v7052
      %v7081 = vpop.permute.xlu0 %7080
      %7084 = vset.pattern.permute.xlu0 0
      %7085 = vperm.xlu0 %7084, %v7053
      %v7086 = vpop.permute.xlu0 %7085
      %7089 = vset.pattern.permute.xlu0 0
      %7090 = vperm.xlu0 %7089, %v7054
      %v7091 = vpop.permute.xlu0 %7090
      %7094 = vset.pattern.permute.xlu0 0
      %7095 = vperm.xlu0 %7094, %v7055
      %v7096 = vpop.permute.xlu0 %7095
      %7099 = vset.pattern.permute.xlu0 0
      %7100 = vperm.xlu0 %7099, %v7056
      %v7101 = vpop.permute.xlu0 %7100
      %7104 = vset.pattern.permute.xlu0 0
      %7105 = vperm.xlu0 %7104, %v7057
      %v7106 = vpop.permute.xlu0 %7105
      %7109 = vset.pattern.permute.xlu0 0
      %7110 = vperm.xlu0 %7109, %v7058
      %v7111 = vpop.permute.xlu0 %7110
      %7114 = vset.pattern.permute.xlu0 0
      %7115 = vperm.xlu0 %7114, %v7059
      %v7116 = vpop.permute.xlu0 %7115
      %7119 = vset.pattern.permute.xlu0 0
      %7120 = vperm.xlu0 %7119, %v7060
      %v7121 = vpop.permute.xlu0 %7120
      %7124 = vset.pattern.permute.xlu0 0
      %7125 = vperm.xlu0 %7124, %v7061
      %v7126 = vpop.permute.xlu0 %7125
      %7129 = vset.pattern.permute.xlu0 0
      %7130 = vperm.xlu0 %7129, %v7062
      %v7131 = vpop.permute.xlu0 %7130
      %v7133 = vmul.f32 %v7045, %v7066
      %v7134 = vmul.f32 %v7046, %v7066
      %v7135 = vmul.f32 %v7043, %v7071
      %v7136 = vmul.f32 %v7044, %v7071
      %v7137 = vmul.f32 %v7041, %v7076
      %v7138 = vmul.f32 %v7042, %v7076
      %v7139 = vmul.f32 %v7039, %v7081
      %v7140 = vmul.f32 %v7040, %v7081
      %v7141 = vmul.f32 %v7037, %v7086
      %v7142 = vmul.f32 %v7038, %v7086
      %v7143 = vmul.f32 %v7035, %v7091
      %v7144 = vmul.f32 %v7036, %v7091
      %v7145 = vmul.f32 %v7033, %v7096
      %v7146 = vmul.f32 %v7034, %v7096
      %v7147 = vmul.f32 %v7031, %v7101
      %v7148 = vmul.f32 %v7032, %v7101
      %v7149 = vmul.f32 %v7029, %v7106
      %v7150 = vmul.f32 %v7030, %v7106
      %v7151 = vmul.f32 %v7027, %v7111
      %v7152 = vmul.f32 %v7028, %v7111
      %v7153 = vmul.f32 %v7025, %v7116
      %v7154 = vmul.f32 %v7026, %v7116
      %v7155 = vmul.f32 %v7023, %v7121
      %v7156 = vmul.f32 %v7024, %v7121
      %v7157 = vmul.f32 %v7021, %v7126
      %v7158 = vmul.f32 %v7022, %v7126
      %v7159 = vmul.f32 %v7047, %v7131
      %v7160 = vmul.f32 %v7048, %v7131
      %v7161 = vpack.c.bf16 %v6967, %v6965
      %v7162 = vpack.c.bf16 %v6968, %v6966
      %v7163 = vpack.c.bf16 %v6971, %v6969
      %v7164 = vpack.c.bf16 %v6972, %v6970
      %v7165 = vpack.c.bf16 %v6975, %v6973
      %v7166 = vpack.c.bf16 %v6976, %v6974
      %v7167 = vpack.c.bf16 %v6979, %v6977
      %v7168 = vpack.c.bf16 %v6980, %v6978
      %v7169 = vpack.c.bf16 %v6983, %v6981
      %v7170 = vpack.c.bf16 %v6984, %v6982
      %v7171 = vpack.c.bf16 %v6987, %v6985
      %v7172 = vpack.c.bf16 %v6988, %v6986
      %v7173 = vpack.c.bf16 %v6991, %v6989
      %v7174 = vpack.c.bf16 %v6992, %v6990
      %v7175 = vld [vmem:[%s8] sm:$0xff]
      %v7176 = vld [vmem:[%s8 + $0x8] sm:$0xff]
      %v7177 = vld [vmem:[%s8 + $0x10] sm:$0xff]
      %v7178 = vld [vmem:[%s8 + $0x18] sm:$0xff]
      %v7179 = vld [vmem:[%s8 + $0x20] sm:$0xff]
      %v7180 = vld [vmem:[%s8 + $0x28] sm:$0xff]
      %v7181 = vld [vmem:[%s8 + $0x30] sm:$0xff]
      %v7182 = vld [vmem:[%s8 + $0x38] sm:$0xff]
      %v7183 = vld [vmem:[%s8 + $0x40] sm:$0xff]
      %v7184 = vld [vmem:[%s8 + $0x48] sm:$0xff]
      %v7185 = vld [vmem:[%s8 + $0x50] sm:$0xff]
      %v7186 = vld [vmem:[%s8 + $0x58] sm:$0xff]
      %v7187 = vld [vmem:[%s8 + $0x60] sm:$0xff]
      %v7188 = vld [vmem:[%s8 + $0x68] sm:$0xff]
      %v7189 = vld [vmem:[%s8 + $0x70] sm:$0xff]
      %v7190 = vld [vmem:[%s8 + $0x78] sm:$0xff]
      %v7191 = vld [vmem:[%s8 + $0x80] sm:$0xff]
      %v7192 = vld [vmem:[%s8 + $0x88] sm:$0xff]
      %v7193 = vld [vmem:[%s8 + $0x90] sm:$0xff]
      %v7194 = vld [vmem:[%s8 + $0x98] sm:$0xff]
      %v7195 = vld [vmem:[%s8 + $0xa0] sm:$0xff]
      %v7196 = vpack.c.bf16 %v6799, %v6797
      %v7197 = vpack.c.bf16 %v6800, %v6798
      %v7198 = vpack.c.bf16 %v6803, %v6801
      %v7199 = vpack.c.bf16 %v6804, %v6802
      %v7200 = vpack.c.bf16 %v6807, %v6805
      %v7201 = vpack.c.bf16 %v6808, %v6806
      %v7202 = vpack.c.bf16 %v6811, %v6809
      %v7203 = vpack.c.bf16 %v6812, %v6810
      %v7204 = vpack.c.bf16 %v6815, %v6813
      %v7205 = vpack.c.bf16 %v6816, %v6814
      %v7206 = vpack.c.bf16 %v6819, %v6817
      %v7207 = vpack.c.bf16 %v6820, %v6818
      %v7208 = vpack.c.bf16 %v6823, %v6821
      %v7209 = vpack.c.bf16 %v6824, %v6822
      %s7210 = scalar_lea.vmem %s8, 168
      %v7211 = vld [vmem:[%s7210] sm:$0xff]
      %v7212 = vld [vmem:[%s7210 + $0x8] sm:$0xff]
      %v7213 = vld [vmem:[%s7210 + $0x10] sm:$0xff]
      %v7214 = vld [vmem:[%s7210 + $0x18] sm:$0xff]
      %v7215 = vld [vmem:[%s7210 + $0x20] sm:$0xff]
      %v7216 = vld [vmem:[%s7210 + $0x28] sm:$0xff]
      %v7217 = vld [vmem:[%s7210 + $0x30] sm:$0xff]
      %v7218 = vld [vmem:[%s7210 + $0x38] sm:$0xff]
      %v7219 = vld [vmem:[%s7210 + $0x40] sm:$0xff]
      %v7220 = vld [vmem:[%s7210 + $0x48] sm:$0xff]
      %v7221 = vld [vmem:[%s7210 + $0x50] sm:$0xff]
      %v7222 = vld [vmem:[%s7210 + $0x58] sm:$0xff]
      %v7223 = vld [vmem:[%s7210 + $0x60] sm:$0xff]
      %v7224 = vld [vmem:[%s7210 + $0x68] sm:$0xff]
      %v7225 = vld [vmem:[%s7210 + $0x70] sm:$0xff]
      %v7226 = vld [vmem:[%s7210 + $0x78] sm:$0xff]
      %v7227 = vld [vmem:[%s7210 + $0x80] sm:$0xff]
      %v7228 = vld [vmem:[%s7210 + $0x88] sm:$0xff]
      %v7229 = vld [vmem:[%s7210 + $0x90] sm:$0xff]
      %v7230 = vld [vmem:[%s7210 + $0x98] sm:$0xff]
      %v7231 = vld [vmem:[%s7210 + $0xa0] sm:$0xff]
      %v7253 = vunpack.c.l.b16 %v7211
      %v7254 = vunpack.c.h.b16 %v7211
      %v7255 = vunpack.c.l.b16 %v7212
      %v7256 = vunpack.c.h.b16 %v7212
      %v7257 = vunpack.c.l.b16 %v7213
      %v7258 = vunpack.c.h.b16 %v7213
      %v7259 = vunpack.c.l.b16 %v7214
      %v7260 = vunpack.c.h.b16 %v7214
      %v7261 = vunpack.c.l.b16 %v7215
      %v7262 = vunpack.c.h.b16 %v7215
      %v7263 = vunpack.c.l.b16 %v7216
      %v7264 = vunpack.c.h.b16 %v7216
      %v7265 = vunpack.c.l.b16 %v7217
      %v7266 = vunpack.c.h.b16 %v7217
      %v7267 = vunpack.c.l.b16 %v7218
      %v7268 = vunpack.c.h.b16 %v7218
      %v7269 = vunpack.c.l.b16 %v7219
      %v7270 = vunpack.c.h.b16 %v7219
      %v7271 = vunpack.c.l.b16 %v7220
      %v7272 = vunpack.c.h.b16 %v7220
      %v7273 = vunpack.c.l.b16 %v7221
      %v7274 = vunpack.c.h.b16 %v7221
      %v7275 = vunpack.c.l.b16 %v7222
      %v7276 = vunpack.c.h.b16 %v7222
      %v7277 = vunpack.c.l.b16 %v7223
      %v7278 = vunpack.c.h.b16 %v7223
      %v7279 = vunpack.c.l.b16 %v7224
      %v7280 = vunpack.c.h.b16 %v7224
      %v7281 = vunpack.c.l.b16 %v7225
      %v7282 = vunpack.c.h.b16 %v7225
      %v7283 = vunpack.c.l.b16 %v7226
      %v7284 = vunpack.c.h.b16 %v7226
      %v7285 = vunpack.c.l.b16 %v7227
      %v7286 = vunpack.c.h.b16 %v7227
      %v7287 = vunpack.c.l.b16 %v7228
      %v7288 = vunpack.c.h.b16 %v7228
      %v7289 = vunpack.c.l.b16 %v7229
      %v7290 = vunpack.c.h.b16 %v7229
      %v7291 = vunpack.c.l.b16 %v7230
      %v7292 = vunpack.c.h.b16 %v7230
      %v7293 = vunpack.c.l.b16 %v7231
      %v7294 = vunpack.c.h.b16 %v7231
      %v7295 = vpack.c.b16 %v7255, %v7253
      %v7296 = vpack.c.b16 %v7256, %v7254
      %v7297 = vpack.c.b16 %v7259, %v7257
      %v7298 = vpack.c.b16 %v7260, %v7258
      %v7299 = vpack.c.b16 %v7263, %v7261
      %v7300 = vpack.c.b16 %v7264, %v7262
      %v7301 = vpack.c.b16 %v7267, %v7265
      %v7302 = vpack.c.b16 %v7268, %v7266
      %v7303 = vpack.c.b16 %v7271, %v7269
      %v7304 = vpack.c.b16 %v7272, %v7270
      %v7305 = vpack.c.b16 %v7275, %v7273
      %v7306 = vpack.c.b16 %v7276, %v7274
      %v7307 = vpack.c.b16 %v7279, %v7277
      %v7308 = vpack.c.b16 %v7280, %v7278
      %v7309 = vpack.c.b16 %v7283, %v7281
      %v7310 = vpack.c.b16 %v7284, %v7282
      %v7311 = vpack.c.b16 %v7287, %v7285
      %v7312 = vpack.c.b16 %v7288, %v7286
      %v7313 = vpack.c.b16 %v7291, %v7289
      %v7314 = vpack.c.b16 %v7292, %v7290
      %v7315 = vpack.c.b16 %v7293, %v7293
      %v7316 = vpack.c.b16 %v7294, %v7294
      %vm7337 = vcmask 326656
      %v7339 = vsel %vm7337, %v7197, 0
      %v7342 = vsel %vm7337, %v7199, 0
      %v7345 = vsel %vm7337, %v7201, 0
      %v7348 = vsel %vm7337, %v7203, 0
      %v7351 = vsel %vm7337, %v7205, 0
      %v7354 = vsel %vm7337, %v7207, 0
      %v7357 = vsel %vm7337, %v7209, 0
      %vm7359 = vcmask 1043456
      %v7361 = vsel %vm7359, %v7315, 0
      %v7364 = vsel %vm7359, %v7316, 0
      %7366 = vmatprep.subr.bf16.mxu0 %v7296
      %7367 = vmatpush1.bf16.msra.mxu0 %v7295
      %7368 = vmatprep.subr.bf16.mxu0 %v7298
      %7369 = vmatpush1.bf16.msra.mxu0 %v7297
      %7370 = vmatprep.subr.bf16.mxu0 %v7300
      %7371 = vmatpush1.bf16.msra.mxu0 %v7299
      %7372 = vmatprep.subr.bf16.mxu0 %v7302
      %7373 = vmatpush1.bf16.msra.mxu0 %v7301
      %7374 = vmatprep.subr.bf16.mxu0 %v7304
      %7375 = vmatpush1.bf16.msra.mxu0 %v7303
      %7376 = vmatprep.subr.bf16.mxu0 %v7306
      %7377 = vmatpush1.bf16.msra.mxu0 %v7305
      %7378 = vmatprep.subr.bf16.mxu0 %v7308
      %7379 = vmatpush1.bf16.msra.mxu0 %v7307
      %7380 = vmatprep.subr.bf16.mxu0 %v7310
      %7381 = vmatpush1.bf16.msra.mxu0 %v7309
      %7382 = vmatprep.subr.bf16.mxu0 %v7312
      %7383 = vmatpush1.bf16.msra.mxu0 %v7311
      %7384 = vmatprep.subr.bf16.mxu0 %v7314
      %7385 = vmatpush1.bf16.msra.mxu0 %v7313
      %7386 = vmatprep.subr.bf16.mxu0 %v7364
      %7387 = vmatpush1.bf16.msra.mxu0 %v7361
      %7388 = vmatprep.subr.bf16.mxu0 0
      %7389 = vmatpush1.bf16.msra.mxu0 0
      %7390 = vmatprep.subr.bf16.mxu0 0
      %7391 = vmatpush1.bf16.msra.mxu0 0
      %7392 = vmatprep.subr.bf16.mxu0 0
      %7393 = vmatpush1.bf16.msra.mxu0 0
      %7394 = vmatprep.subr.bf16.mxu0 0
      %7395 = vmatpush1.bf16.msra.mxu0 0
      %7396 = vmatprep.subr.bf16.mxu0 0
      %7397 = vmatpush1.bf16.msra.mxu0 0
      %7398 = vmatprep.mubr.bf16.mxu0 %v7339
      %7399 = vmatmul.mubr.bf16.gmra.mrb[0].mxu0 %v7196
      %v7400 = vpop.f32.mrb[0].mxu0
      %v7401 = vadd.f32 0.0, %v7400
      %v7402 = vpop.f32.mrb[0].mxu0
      %v7403 = vadd.f32 0.0, %v7402
      %v7404 = vpop.f32.mrb[0].mxu0
      %v7405 = vadd.f32 0.0, %v7404
      %v7406 = vpop.f32.mrb[0].mxu0
      %v7407 = vadd.f32 0.0, %v7406
      %7408 = vmatprep.mubr.bf16.mxu0 %v7342
      %7409 = vmatmul.mubr.bf16.gmra.mrb[0].mxu0 %v7198
      %v7410 = vpop.f32.mrb[0].mxu0
      %v7411 = vadd.f32 0.0, %v7410
      %v7412 = vpop.f32.mrb[0].mxu0
      %v7413 = vadd.f32 0.0, %v7412
      %v7414 = vpop.f32.mrb[0].mxu0
      %v7415 = vadd.f32 0.0, %v7414
      %v7416 = vpop.f32.mrb[0].mxu0
      %v7417 = vadd.f32 0.0, %v7416
      %7418 = vmatprep.mubr.bf16.mxu0 %v7345
      %7419 = vmatmul.mubr.bf16.gmra.mrb[0].mxu0 %v7200
      %v7420 = vpop.f32.mrb[0].mxu0
      %v7421 = vadd.f32 0.0, %v7420
      %v7422 = vpop.f32.mrb[0].mxu0
      %v7423 = vadd.f32 0.0, %v7422
      %v7424 = vpop.f32.mrb[0].mxu0
      %v7425 = vadd.f32 0.0, %v7424
      %v7426 = vpop.f32.mrb[0].mxu0
      %v7427 = vadd.f32 0.0, %v7426
      %7428 = vmatprep.mubr.bf16.mxu0 %v7348
      %7429 = vmatmul.mubr.bf16.gmra.mrb[0].mxu0 %v7202
      %v7430 = vpop.f32.mrb[0].mxu0
      %v7431 = vadd.f32 0.0, %v7430
      %v7432 = vpop.f32.mrb[0].mxu0
      %v7433 = vadd.f32 0.0, %v7432
      %v7434 = vpop.f32.mrb[0].mxu0
      %v7435 = vadd.f32 0.0, %v7434
      %v7436 = vpop.f32.mrb[0].mxu0
      %v7437 = vadd.f32 0.0, %v7436
      %7438 = vmatprep.mubr.bf16.mxu0 %v7351
      %7439 = vmatmul.mubr.bf16.gmra.mrb[0].mxu0 %v7204
      %v7440 = vpop.f32.mrb[0].mxu0
      %v7441 = vadd.f32 0.0, %v7440
      %v7442 = vpop.f32.mrb[0].mxu0
      %v7443 = vadd.f32 0.0, %v7442
      %v7444 = vpop.f32.mrb[0].mxu0
      %v7445 = vadd.f32 0.0, %v7444
      %v7446 = vpop.f32.mrb[0].mxu0
      %v7447 = vadd.f32 0.0, %v7446
      %7448 = vmatprep.mubr.bf16.mxu0 %v7354
      %7449 = vmatmul.mubr.bf16.gmra.mrb[0].mxu0 %v7206
      %v7450 = vpop.f32.mrb[0].mxu0
      %v7451 = vadd.f32 0.0, %v7450
      %v7452 = vpop.f32.mrb[0].mxu0
      %v7453 = vadd.f32 0.0, %v7452
      %v7454 = vpop.f32.mrb[0].mxu0
      %v7455 = vadd.f32 0.0, %v7454
      %v7456 = vpop.f32.mrb[0].mxu0
      %v7457 = vadd.f32 0.0, %v7456
      %7458 = vmatprep.mubr.bf16.mxu0 %v7357
      %7459 = vmatmul.mubr.bf16.gmra.mrb[0].mxu0 %v7208
      %v7460 = vpop.f32.mrb[0].mxu0
      %v7461 = vadd.f32 0.0, %v7460
      %v7462 = vpop.f32.mrb[0].mxu0
      %v7463 = vadd.f32 0.0, %v7462
      %v7464 = vpop.f32.mrb[0].mxu0
      %v7465 = vadd.f32 0.0, %v7464
      %v7466 = vpop.f32.mrb[0].mxu0
      %v7467 = vadd.f32 0.0, %v7466
      %7468 = vdwg.mxu0
      %v7490 = vunpack.c.l.b16 %v7175
      %v7491 = vunpack.c.h.b16 %v7175
      %v7492 = vunpack.c.l.b16 %v7176
      %v7493 = vunpack.c.h.b16 %v7176
      %v7494 = vunpack.c.l.b16 %v7177
      %v7495 = vunpack.c.h.b16 %v7177
      %v7496 = vunpack.c.l.b16 %v7178
      %v7497 = vunpack.c.h.b16 %v7178
      %v7498 = vunpack.c.l.b16 %v7179
      %v7499 = vunpack.c.h.b16 %v7179
      %v7500 = vunpack.c.l.b16 %v7180
      %v7501 = vunpack.c.h.b16 %v7180
      %v7502 = vunpack.c.l.b16 %v7181
      %v7503 = vunpack.c.h.b16 %v7181
      %v7504 = vunpack.c.l.b16 %v7182
      %v7505 = vunpack.c.h.b16 %v7182
      %v7506 = vunpack.c.l.b16 %v7183
      %v7507 = vunpack.c.h.b16 %v7183
      %v7508 = vunpack.c.l.b16 %v7184
      %v7509 = vunpack.c.h.b16 %v7184
      %v7510 = vunpack.c.l.b16 %v7185
      %v7511 = vunpack.c.h.b16 %v7185
      %v7512 = vunpack.c.l.b16 %v7186
      %v7513 = vunpack.c.h.b16 %v7186
      %v7514 = vunpack.c.l.b16 %v7187
      %v7515 = vunpack.c.h.b16 %v7187
      %v7516 = vunpack.c.l.b16 %v7188
      %v7517 = vunpack.c.h.b16 %v7188
      %v7518 = vunpack.c.l.b16 %v7189
      %v7519 = vunpack.c.h.b16 %v7189
      %v7520 = vunpack.c.l.b16 %v7190
      %v7521 = vunpack.c.h.b16 %v7190
      %v7522 = vunpack.c.l.b16 %v7191
      %v7523 = vunpack.c.h.b16 %v7191
      %v7524 = vunpack.c.l.b16 %v7192
      %v7525 = vunpack.c.h.b16 %v7192
      %v7526 = vunpack.c.l.b16 %v7193
      %v7527 = vunpack.c.h.b16 %v7193
      %v7528 = vunpack.c.l.b16 %v7194
      %v7529 = vunpack.c.h.b16 %v7194
      %v7530 = vunpack.c.l.b16 %v7195
      %v7531 = vunpack.c.h.b16 %v7195
      %v7532 = vpack.c.b16 %v7492, %v7490
      %v7533 = vpack.c.b16 %v7493, %v7491
      %v7534 = vpack.c.b16 %v7496, %v7494
      %v7535 = vpack.c.b16 %v7497, %v7495
      %v7536 = vpack.c.b16 %v7500, %v7498
      %v7537 = vpack.c.b16 %v7501, %v7499
      %v7538 = vpack.c.b16 %v7504, %v7502
      %v7539 = vpack.c.b16 %v7505, %v7503
      %v7540 = vpack.c.b16 %v7508, %v7506
      %v7541 = vpack.c.b16 %v7509, %v7507
      %v7542 = vpack.c.b16 %v7512, %v7510
      %v7543 = vpack.c.b16 %v7513, %v7511
      %v7544 = vpack.c.b16 %v7516, %v7514
      %v7545 = vpack.c.b16 %v7517, %v7515
      %v7546 = vpack.c.b16 %v7520, %v7518
      %v7547 = vpack.c.b16 %v7521, %v7519
      %v7548 = vpack.c.b16 %v7524, %v7522
      %v7549 = vpack.c.b16 %v7525, %v7523
      %v7550 = vpack.c.b16 %v7528, %v7526
      %v7551 = vpack.c.b16 %v7529, %v7527
      %v7552 = vpack.c.b16 %v7530, %v7530
      %v7553 = vpack.c.b16 %v7531, %v7531
      %v7575 = vsel %vm7337, %v7162, 0
      %v7578 = vsel %vm7337, %v7164, 0
      %v7581 = vsel %vm7337, %v7166, 0
      %v7584 = vsel %vm7337, %v7168, 0
      %v7587 = vsel %vm7337, %v7170, 0
      %v7590 = vsel %vm7337, %v7172, 0
      %v7593 = vsel %vm7337, %v7174, 0
      %v7596 = vsel %vm7359, %v7552, 0
      %v7599 = vsel %vm7359, %v7553, 0
      %7601 = vmatprep.subr.bf16.mxu0 %v7533
      %7602 = vmatpush1.bf16.msra.mxu0 %v7532
      %7603 = vmatprep.subr.bf16.mxu0 %v7535
      %7604 = vmatpush1.bf16.msra.mxu0 %v7534
      %7605 = vmatprep.subr.bf16.mxu0 %v7537
      %7606 = vmatpush1.bf16.msra.mxu0 %v7536
      %7607 = vmatprep.subr.bf16.mxu0 %v7539
      %7608 = vmatpush1.bf16.msra.mxu0 %v7538
      %7609 = vmatprep.subr.bf16.mxu0 %v7541
      %7610 = vmatpush1.bf16.msra.mxu0 %v7540
      %7611 = vmatprep.subr.bf16.mxu0 %v7543
      %7612 = vmatpush1.bf16.msra.mxu0 %v7542
      %7613 = vmatprep.subr.bf16.mxu0 %v7545
      %7614 = vmatpush1.bf16.msra.mxu0 %v7544
      %7615 = vmatprep.subr.bf16.mxu0 %v7547
      %7616 = vmatpush1.bf16.msra.mxu0 %v7546
      %7617 = vmatprep.subr.bf16.mxu0 %v7549
      %7618 = vmatpush1.bf16.msra.mxu0 %v7548
      %7619 = vmatprep.subr.bf16.mxu0 %v7551
      %7620 = vmatpush1.bf16.msra.mxu0 %v7550
      %7621 = vmatprep.subr.bf16.mxu0 %v7599
      %7622 = vmatpush1.bf16.msra.mxu0 %v7596
      %7623 = vmatprep.subr.bf16.mxu0 0
      %7624 = vmatpush1.bf16.msra.mxu0 0
      %7625 = vmatprep.subr.bf16.mxu0 0
      %7626 = vmatpush1.bf16.msra.mxu0 0
      %7627 = vmatprep.subr.bf16.mxu0 0
      %7628 = vmatpush1.bf16.msra.mxu0 0
      %7629 = vmatprep.subr.bf16.mxu0 0
      %7630 = vmatpush1.bf16.msra.mxu0 0
      %7631 = vmatprep.subr.bf16.mxu0 0
      %7632 = vmatpush1.bf16.msra.mxu0 0
      %7633 = vmatprep.mubr.bf16.mxu0 %v7575
      %7634 = vmatmul.mubr.bf16.gmra.mrb[0].mxu0 %v7161
      %v7635 = vpop.f32.mrb[0].mxu0
      %v7636 = vadd.f32 %v7401, %v7635
      %v7637 = vpop.f32.mrb[0].mxu0
      %v7638 = vadd.f32 %v7403, %v7637
      %v7639 = vpop.f32.mrb[0].mxu0
      %v7640 = vadd.f32 %v7405, %v7639
      %v7641 = vpop.f32.mrb[0].mxu0
      %v7642 = vadd.f32 %v7407, %v7641
      %7643 = vmatprep.mubr.bf16.mxu0 %v7578
      %7644 = vmatmul.mubr.bf16.gmra.mrb[0].mxu0 %v7163
      %v7645 = vpop.f32.mrb[0].mxu0
      %v7646 = vadd.f32 %v7411, %v7645
      %v7647 = vpop.f32.mrb[0].mxu0
      %v7648 = vadd.f32 %v7413, %v7647
      %v7649 = vpop.f32.mrb[0].mxu0
      %v7650 = vadd.f32 %v7415, %v7649
      %v7651 = vpop.f32.mrb[0].mxu0
      %v7652 = vadd.f32 %v7417, %v7651
      %7653 = vmatprep.mubr.bf16.mxu0 %v7581
      %7654 = vmatmul.mubr.bf16.gmra.mrb[0].mxu0 %v7165
      %v7655 = vpop.f32.mrb[0].mxu0
      %v7656 = vadd.f32 %v7421, %v7655
      %v7657 = vpop.f32.mrb[0].mxu0
      %v7658 = vadd.f32 %v7423, %v7657
      %v7659 = vpop.f32.mrb[0].mxu0
      %v7660 = vadd.f32 %v7425, %v7659
      %v7661 = vpop.f32.mrb[0].mxu0
      %v7662 = vadd.f32 %v7427, %v7661
      %7663 = vmatprep.mubr.bf16.mxu0 %v7584
      %7664 = vmatmul.mubr.bf16.gmra.mrb[0].mxu0 %v7167
      %v7665 = vpop.f32.mrb[0].mxu0
      %v7666 = vadd.f32 %v7431, %v7665
      %v7667 = vpop.f32.mrb[0].mxu0
      %v7668 = vadd.f32 %v7433, %v7667
      %v7669 = vpop.f32.mrb[0].mxu0
      %v7670 = vadd.f32 %v7435, %v7669
      %v7671 = vpop.f32.mrb[0].mxu0
      %v7672 = vadd.f32 %v7437, %v7671
      %7673 = vmatprep.mubr.bf16.mxu0 %v7587
      %7674 = vmatmul.mubr.bf16.gmra.mrb[0].mxu0 %v7169
      %v7675 = vpop.f32.mrb[0].mxu0
      %v7676 = vadd.f32 %v7441, %v7675
      %v7677 = vpop.f32.mrb[0].mxu0
      %v7678 = vadd.f32 %v7443, %v7677
      %v7679 = vpop.f32.mrb[0].mxu0
      %v7680 = vadd.f32 %v7445, %v7679
      %v7681 = vpop.f32.mrb[0].mxu0
      %v7682 = vadd.f32 %v7447, %v7681
      %7683 = vmatprep.mubr.bf16.mxu0 %v7590
      %7684 = vmatmul.mubr.bf16.gmra.mrb[0].mxu0 %v7171
      %v7685 = vpop.f32.mrb[0].mxu0
      %v7686 = vadd.f32 %v7451, %v7685
      %v7687 = vpop.f32.mrb[0].mxu0
      %v7688 = vadd.f32 %v7453, %v7687
      %v7689 = vpop.f32.mrb[0].mxu0
      %v7690 = vadd.f32 %v7455, %v7689
      %v7691 = vpop.f32.mrb[0].mxu0
      %v7692 = vadd.f32 %v7457, %v7691
      %7693 = vmatprep.mubr.bf16.mxu0 %v7593
      %7694 = vmatmul.mubr.bf16.gmra.mrb[0].mxu0 %v7173
      %v7695 = vpop.f32.mrb[0].mxu0
      %v7696 = vadd.f32 %v7461, %v7695
      %v7697 = vpop.f32.mrb[0].mxu0
      %v7698 = vadd.f32 %v7463, %v7697
      %v7699 = vpop.f32.mrb[0].mxu0
      %v7700 = vadd.f32 %v7465, %v7699
      %v7701 = vpop.f32.mrb[0].mxu0
      %v7702 = vadd.f32 %v7467, %v7701
      %7703 = vdwg.mxu0
      %v7704 = vpack.c.bf16 %v7135, %v7133
      %v7705 = vpack.c.bf16 %v7136, %v7134
      %v7706 = vpack.c.bf16 %v7139, %v7137
      %v7707 = vpack.c.bf16 %v7140, %v7138
      %v7708 = vpack.c.bf16 %v7143, %v7141
      %v7709 = vpack.c.bf16 %v7144, %v7142
      %v7710 = vpack.c.bf16 %v7147, %v7145
      %v7711 = vpack.c.bf16 %v7148, %v7146
      %v7712 = vpack.c.bf16 %v7151, %v7149
      %v7713 = vpack.c.bf16 %v7152, %v7150
      %v7714 = vpack.c.bf16 %v7155, %v7153
      %v7715 = vpack.c.bf16 %v7156, %v7154
      %v7716 = vpack.c.bf16 %v7159, %v7157
      %v7717 = vpack.c.bf16 %v7160, %v7158
      %s7718 = scalar_lea.vmem %s8, 336
      %v7719 = vld [vmem:[%s7718] sm:$0xff]
      %v7720 = vld [vmem:[%s7718 + $0x8] sm:$0xff]
      %v7721 = vld [vmem:[%s7718 + $0x10] sm:$0xff]
      %v7722 = vld [vmem:[%s7718 + $0x18] sm:$0xff]
      %v7723 = vld [vmem:[%s7718 + $0x20] sm:$0xff]
      %v7724 = vld [vmem:[%s7718 + $0x28] sm:$0xff]
      %v7725 = vld [vmem:[%s7718 + $0x30] sm:$0xff]
      %v7726 = vld [vmem:[%s7718 + $0x38] sm:$0xff]
      %v7727 = vld [vmem:[%s7718 + $0x40] sm:$0xff]
      %v7728 = vld [vmem:[%s7718 + $0x48] sm:$0xff]
      %v7729 = vld [vmem:[%s7718 + $0x50] sm:$0xff]
      %v7730 = vld [vmem:[%s7718 + $0x58] sm:$0xff]
      %v7731 = vld [vmem:[%s7718 + $0x60] sm:$0xff]
      %v7732 = vld [vmem:[%s7718 + $0x68] sm:$0xff]
      %v7733 = vld [vmem:[%s7718 + $0x70] sm:$0xff]
      %v7734 = vld [vmem:[%s7718 + $0x78] sm:$0xff]
      %v7735 = vld [vmem:[%s7718 + $0x80] sm:$0xff]
      %v7736 = vld [vmem:[%s7718 + $0x88] sm:$0xff]
      %v7737 = vld [vmem:[%s7718 + $0x90] sm:$0xff]
      %v7738 = vld [vmem:[%s7718 + $0x98] sm:$0xff]
      %v7739 = vld [vmem:[%s7718 + $0xa0] sm:$0xff]
      %v7761 = vunpack.c.l.b16 %v7719
      %v7762 = vunpack.c.h.b16 %v7719
      %v7763 = vunpack.c.l.b16 %v7720
      %v7764 = vunpack.c.h.b16 %v7720
      %v7765 = vunpack.c.l.b16 %v7721
      %v7766 = vunpack.c.h.b16 %v7721
      %v7767 = vunpack.c.l.b16 %v7722
      %v7768 = vunpack.c.h.b16 %v7722
      %v7769 = vunpack.c.l.b16 %v7723
      %v7770 = vunpack.c.h.b16 %v7723
      %v7771 = vunpack.c.l.b16 %v7724
      %v7772 = vunpack.c.h.b16 %v7724
      %v7773 = vunpack.c.l.b16 %v7725
      %v7774 = vunpack.c.h.b16 %v7725
      %v7775 = vunpack.c.l.b16 %v7726
      %v7776 = vunpack.c.h.b16 %v7726
      %v7777 = vunpack.c.l.b16 %v7727
      %v7778 = vunpack.c.h.b16 %v7727
      %v7779 = vunpack.c.l.b16 %v7728
      %v7780 = vunpack.c.h.b16 %v7728
      %v7781 = vunpack.c.l.b16 %v7729
      %v7782 = vunpack.c.h.b16 %v7729
      %v7783 = vunpack.c.l.b16 %v7730
      %v7784 = vunpack.c.h.b16 %v7730
      %v7785 = vunpack.c.l.b16 %v7731
      %v7786 = vunpack.c.h.b16 %v7731
      %v7787 = vunpack.c.l.b16 %v7732
      %v7788 = vunpack.c.h.b16 %v7732
      %v7789 = vunpack.c.l.b16 %v7733
      %v7790 = vunpack.c.h.b16 %v7733
      %v7791 = vunpack.c.l.b16 %v7734
      %v7792 = vunpack.c.h.b16 %v7734
      %v7793 = vunpack.c.l.b16 %v7735
      %v7794 = vunpack.c.h.b16 %v7735
      %v7795 = vunpack.c.l.b16 %v7736
      %v7796 = vunpack.c.h.b16 %v7736
      %v7797 = vunpack.c.l.b16 %v7737
      %v7798 = vunpack.c.h.b16 %v7737
      %v7799 = vunpack.c.l.b16 %v7738
      %v7800 = vunpack.c.h.b16 %v7738
      %v7801 = vunpack.c.l.b16 %v7739
      %v7802 = vunpack.c.h.b16 %v7739
      %v7803 = vpack.c.b16 %v7763, %v7761
      %v7804 = vpack.c.b16 %v7764, %v7762
      %v7805 = vpack.c.b16 %v7767, %v7765
      %v7806 = vpack.c.b16 %v7768, %v7766
      %v7807 = vpack.c.b16 %v7771, %v7769
      %v7808 = vpack.c.b16 %v7772, %v7770
      %v7809 = vpack.c.b16 %v7775, %v7773
      %v7810 = vpack.c.b16 %v7776, %v7774
      %v7811 = vpack.c.b16 %v7779, %v7777
      %v7812 = vpack.c.b16 %v7780, %v7778
      %v7813 = vpack.c.b16 %v7783, %v7781
      %v7814 = vpack.c.b16 %v7784, %v7782
      %v7815 = vpack.c.b16 %v7787, %v7785
      %v7816 = vpack.c.b16 %v7788, %v7786
      %v7817 = vpack.c.b16 %v7791, %v7789
      %v7818 = vpack.c.b16 %v7792, %v7790
      %v7819 = vpack.c.b16 %v7795, %v7793
      %v7820 = vpack.c.b16 %v7796, %v7794
      %v7821 = vpack.c.b16 %v7799, %v7797
      %v7822 = vpack.c.b16 %v7800, %v7798
      %v7823 = vpack.c.b16 %v7801, %v7801
      %v7824 = vpack.c.b16 %v7802, %v7802
      %v7846 = vsel %vm7337, %v7705, 0
      %v7849 = vsel %vm7337, %v7707, 0
      %v7852 = vsel %vm7337, %v7709, 0
      %v7855 = vsel %vm7337, %v7711, 0
      %v7858 = vsel %vm7337, %v7713, 0
      %v7861 = vsel %vm7337, %v7715, 0
      %v7864 = vsel %vm7337, %v7717, 0
      %v7867 = vsel %vm7359, %v7823, 0
      %v7870 = vsel %vm7359, %v7824, 0
      %7872 = vmatprep.subr.bf16.mxu0 %v7804
      %7873 = vmatpush1.bf16.msra.mxu0 %v7803
      %7874 = vmatprep.subr.bf16.mxu0 %v7806
      %7875 = vmatpush1.bf16.msra.mxu0 %v7805
      %7876 = vmatprep.subr.bf16.mxu0 %v7808
      %7877 = vmatpush1.bf16.msra.mxu0 %v7807
      %7878 = vmatprep.subr.bf16.mxu0 %v7810
      %7879 = vmatpush1.bf16.msra.mxu0 %v7809
      %7880 = vmatprep.subr.bf16.mxu0 %v7812
      %7881 = vmatpush1.bf16.msra.mxu0 %v7811
      %7882 = vmatprep.subr.bf16.mxu0 %v7814
      %7883 = vmatpush1.bf16.msra.mxu0 %v7813
      %7884 = vmatprep.subr.bf16.mxu0 %v7816
      %7885 = vmatpush1.bf16.msra.mxu0 %v7815
      %7886 = vmatprep.subr.bf16.mxu0 %v7818
      %7887 = vmatpush1.bf16.msra.mxu0 %v7817
      %7888 = vmatprep.subr.bf16.mxu0 %v7820
      %7889 = vmatpush1.bf16.msra.mxu0 %v7819
      %7890 = vmatprep.subr.bf16.mxu0 %v7822
      %7891 = vmatpush1.bf16.msra.mxu0 %v7821
      %7892 = vmatprep.subr.bf16.mxu0 %v7870
      %7893 = vmatpush1.bf16.msra.mxu0 %v7867
      %7894 = vmatprep.subr.bf16.mxu0 0
      %7895 = vmatpush1.bf16.msra.mxu0 0
      %7896 = vmatprep.subr.bf16.mxu0 0
      %7897 = vmatpush1.bf16.msra.mxu0 0
      %7898 = vmatprep.subr.bf16.mxu0 0
      %7899 = vmatpush1.bf16.msra.mxu0 0
      %7900 = vmatprep.subr.bf16.mxu0 0
      %7901 = vmatpush1.bf16.msra.mxu0 0
      %7902 = vmatprep.subr.bf16.mxu0 0
      %7903 = vmatpush1.bf16.msra.mxu0 0
      %7904 = vmatprep.mubr.bf16.mxu0 %v7846
      %7905 = vmatmul.mubr.bf16.gmra.mrb[0].mxu0 %v7704
      %v7906 = vpop.f32.mrb[0].mxu0
      %v7907 = vadd.f32 0.0, %v7906
      %v7908 = vpop.f32.mrb[0].mxu0
      %v7909 = vadd.f32 0.0, %v7908
      %v7910 = vpop.f32.mrb[0].mxu0
      %v7911 = vadd.f32 0.0, %v7910
      %v7912 = vpop.f32.mrb[0].mxu0
      %v7913 = vadd.f32 0.0, %v7912
      %7914 = vmatprep.mubr.bf16.mxu0 %v7849
      %7915 = vmatmul.mubr.bf16.gmra.mrb[0].mxu0 %v7706
      %v7916 = vpop.f32.mrb[0].mxu0
      %v7917 = vadd.f32 0.0, %v7916
      %v7918 = vpop.f32.mrb[0].mxu0
      %v7919 = vadd.f32 0.0, %v7918
      %v7920 = vpop.f32.mrb[0].mxu0
      %v7921 = vadd.f32 0.0, %v7920
      %v7922 = vpop.f32.mrb[0].mxu0
      %v7923 = vadd.f32 0.0, %v7922
      %7924 = vmatprep.mubr.bf16.mxu0 %v7852
      %7925 = vmatmul.mubr.bf16.gmra.mrb[0].mxu0 %v7708
      %v7926 = vpop.f32.mrb[0].mxu0
      %v7927 = vadd.f32 0.0, %v7926
      %v7928 = vpop.f32.mrb[0].mxu0
      %v7929 = vadd.f32 0.0, %v7928
      %v7930 = vpop.f32.mrb[0].mxu0
      %v7931 = vadd.f32 0.0, %v7930
      %v7932 = vpop.f32.mrb[0].mxu0
      %v7933 = vadd.f32 0.0, %v7932
      %7934 = vmatprep.mubr.bf16.mxu0 %v7855
      %7935 = vmatmul.mubr.bf16.gmra.mrb[0].mxu0 %v7710
      %v7936 = vpop.f32.mrb[0].mxu0
      %v7937 = vadd.f32 0.0, %v7936
      %v7938 = vpop.f32.mrb[0].mxu0
      %v7939 = vadd.f32 0.0, %v7938
      %v7940 = vpop.f32.mrb[0].mxu0
      %v7941 = vadd.f32 0.0, %v7940
      %v7942 = vpop.f32.mrb[0].mxu0
      %v7943 = vadd.f32 0.0, %v7942
      %7944 = vmatprep.mubr.bf16.mxu0 %v7858
      %7945 = vmatmul.mubr.bf16.gmra.mrb[0].mxu0 %v7712
      %v7946 = vpop.f32.mrb[0].mxu0
      %v7947 = vadd.f32 0.0, %v7946
      %v7948 = vpop.f32.mrb[0].mxu0
      %v7949 = vadd.f32 0.0, %v7948
      %v7950 = vpop.f32.mrb[0].mxu0
      %v7951 = vadd.f32 0.0, %v7950
      %v7952 = vpop.f32.mrb[0].mxu0
      %v7953 = vadd.f32 0.0, %v7952
      %7954 = vmatprep.mubr.bf16.mxu0 %v7861
      %7955 = vmatmul.mubr.bf16.gmra.mrb[0].mxu0 %v7714
      %v7956 = vpop.f32.mrb[0].mxu0
      %v7957 = vadd.f32 0.0, %v7956
      %v7958 = vpop.f32.mrb[0].mxu0
      %v7959 = vadd.f32 0.0, %v7958
      %v7960 = vpop.f32.mrb[0].mxu0
      %v7961 = vadd.f32 0.0, %v7960
      %v7962 = vpop.f32.mrb[0].mxu0
      %v7963 = vadd.f32 0.0, %v7962
      %7964 = vmatprep.mubr.bf16.mxu0 %v7864
      %7965 = vmatmul.mubr.bf16.gmra.mrb[0].mxu0 %v7716
      %v7966 = vpop.f32.mrb[0].mxu0
      %v7967 = vadd.f32 0.0, %v7966
      %v7968 = vpop.f32.mrb[0].mxu0
      %v7969 = vadd.f32 0.0, %v7968
      %v7970 = vpop.f32.mrb[0].mxu0
      %v7971 = vadd.f32 0.0, %v7970
      %v7972 = vpop.f32.mrb[0].mxu0
      %v7973 = vadd.f32 0.0, %v7972
      %7974 = vdwg.mxu0
      %v7975 = vadd.f32 %v7636, %v7907
      %v7976 = vadd.f32 %v7638, %v7909
      %v7977 = vadd.f32 %v7640, %v7911
      %v7978 = vadd.f32 %v7642, %v7913
      %v7979 = vadd.f32 %v7646, %v7917
      %v7980 = vadd.f32 %v7648, %v7919
      %v7981 = vadd.f32 %v7650, %v7921
      %v7982 = vadd.f32 %v7652, %v7923
      %v7983 = vadd.f32 %v7656, %v7927
      %v7984 = vadd.f32 %v7658, %v7929
      %v7985 = vadd.f32 %v7660, %v7931
      %v7986 = vadd.f32 %v7662, %v7933
      %v7987 = vadd.f32 %v7666, %v7937
      %v7988 = vadd.f32 %v7668, %v7939
      %v7989 = vadd.f32 %v7670, %v7941
      %v7990 = vadd.f32 %v7672, %v7943
      %v7991 = vadd.f32 %v7676, %v7947
      %v7992 = vadd.f32 %v7678, %v7949
      %v7993 = vadd.f32 %v7680, %v7951
      %v7994 = vadd.f32 %v7682, %v7953
      %v7995 = vadd.f32 %v7686, %v7957
      %v7996 = vadd.f32 %v7688, %v7959
      %v7997 = vadd.f32 %v7690, %v7961
      %v7998 = vadd.f32 %v7692, %v7963
      %v7999 = vadd.f32 %v7696, %v7967
      %v8000 = vadd.f32 %v7698, %v7969
      %v8001 = vadd.f32 %v7700, %v7971
      %v8002 = vadd.f32 %v7702, %v7973
      %v8003 = vld [vmem:[%s9] sm:$0x3]
      %v8005 = vlaneseq
      %v8006 = vshrl.u32 %v8005, 7
      %v8007 = vsub.s32 0, %v8006
      %v8008 = vrot.slane %v8003, %v8007
      %v8009 = vlaneseq
      %v8010 = vshrl.u32 %v8009, 7
      %v8011 = vsub.s32 1, %v8010
      %v8012 = vrot.slane %v8003, %v8011
      %v8015 = vadd.f32 %v7975, %v8008
      %v8016 = vadd.f32 %v7976, %v8012
      %v8017 = vadd.f32 %v7977, %v8008
      %v8018 = vadd.f32 %v7978, %v8012
      %v8019 = vadd.f32 %v7979, %v8008
      %v8020 = vadd.f32 %v7980, %v8012
      %v8021 = vadd.f32 %v7981, %v8008
      %v8022 = vadd.f32 %v7982, %v8012
      %v8023 = vadd.f32 %v7983, %v8008
      %v8024 = vadd.f32 %v7984, %v8012
      %v8025 = vadd.f32 %v7985, %v8008
      %v8026 = vadd.f32 %v7986, %v8012
      %v8027 = vadd.f32 %v7987, %v8008
      %v8028 = vadd.f32 %v7988, %v8012
      %v8029 = vadd.f32 %v7989, %v8008
      %v8030 = vadd.f32 %v7990, %v8012
      %v8031 = vadd.f32 %v7991, %v8008
      %v8032 = vadd.f32 %v7992, %v8012
      %v8033 = vadd.f32 %v7993, %v8008
      %v8034 = vadd.f32 %v7994, %v8012
      %v8035 = vadd.f32 %v7995, %v8008
      %v8036 = vadd.f32 %v7996, %v8012
      %v8037 = vadd.f32 %v7997, %v8008
      %v8038 = vadd.f32 %v7998, %v8012
      %v8039 = vadd.f32 %v7999, %v8008
      %v8040 = vadd.f32 %v8000, %v8012
      %v8041 = vadd.f32 %v8001, %v8008
      %v8042 = vadd.f32 %v8002, %v8012
      %v8043 = vmax.f32 %v8015, 0.0
      %v8044 = vmax.f32 %v8016, 0.0
      %v8045 = vmax.f32 %v8017, 0.0
      %v8046 = vmax.f32 %v8018, 0.0
      %v8047 = vmax.f32 %v8019, 0.0
      %v8048 = vmax.f32 %v8020, 0.0
      %v8049 = vmax.f32 %v8021, 0.0
      %v8050 = vmax.f32 %v8022, 0.0
      %v8051 = vmax.f32 %v8023, 0.0
      %v8052 = vmax.f32 %v8024, 0.0
      %v8053 = vmax.f32 %v8025, 0.0
      %v8054 = vmax.f32 %v8026, 0.0
      %v8055 = vmax.f32 %v8027, 0.0
      %v8056 = vmax.f32 %v8028, 0.0
      %v8057 = vmax.f32 %v8029, 0.0
      %v8058 = vmax.f32 %v8030, 0.0
      %v8059 = vmax.f32 %v8031, 0.0
      %v8060 = vmax.f32 %v8032, 0.0
      %v8061 = vmax.f32 %v8033, 0.0
      %v8062 = vmax.f32 %v8034, 0.0
      %v8063 = vmax.f32 %v8035, 0.0
      %v8064 = vmax.f32 %v8036, 0.0
      %v8065 = vmax.f32 %v8037, 0.0
      %v8066 = vmax.f32 %v8038, 0.0
      %v8067 = vmax.f32 %v8039, 0.0
      %v8068 = vmax.f32 %v8040, 0.0
      %v8069 = vmax.f32 %v8041, 0.0
      %v8070 = vmax.f32 %v8042, 0.0
      %v8071 = vrot.slane %v8043, 1
      %v8072 = vrot.slane %v8044, 1
      %v8073 = vrot.slane %v8045, 1
      %v8074 = vrot.slane %v8046, 1
      %v8075 = vrot.slane %v8047, 1
      %v8076 = vrot.slane %v8048, 1
      %v8077 = vrot.slane %v8049, 1
      %v8078 = vrot.slane %v8050, 1
      %v8079 = vrot.slane %v8051, 1
      %v8080 = vrot.slane %v8052, 1
      %v8081 = vrot.slane %v8053, 1
      %v8082 = vrot.slane %v8054, 1
      %v8083 = vrot.slane %v8055, 1
      %v8084 = vrot.slane %v8056, 1
      %v8085 = vrot.slane %v8057, 1
      %v8086 = vrot.slane %v8058, 1
      %v8087 = vrot.slane %v8059, 1
      %v8088 = vrot.slane %v8060, 1
      %v8089 = vrot.slane %v8061, 1
      %v8090 = vrot.slane %v8062, 1
      %v8091 = vrot.slane %v8063, 1
      %v8092 = vrot.slane %v8064, 1
      %v8093 = vrot.slane %v8065, 1
      %v8094 = vrot.slane %v8066, 1
      %v8095 = vrot.slane %v8067, 1
      %v8096 = vrot.slane %v8068, 1
      %v8097 = vrot.slane %v8069, 1
      %v8098 = vrot.slane %v8070, 1
      %v8099 = vsel %vm1225, %v8095, %v8097
      %v8100 = vsel %vm1225, %v8096, %v8098
      %v8101 = vsel %vm1225, %v8093, %v8095
      %v8102 = vsel %vm1225, %v8094, %v8096
      %v8103 = vsel %vm1225, %v8091, %v8093
      %v8104 = vsel %vm1225, %v8092, %v8094
      %v8105 = vsel %vm1225, %v8089, %v8091
      %v8106 = vsel %vm1225, %v8090, %v8092
      %v8107 = vsel %vm1225, %v8087, %v8089
      %v8108 = vsel %vm1225, %v8088, %v8090
      %v8109 = vsel %vm1225, %v8085, %v8087
      %v8110 = vsel %vm1225, %v8086, %v8088
      %v8111 = vsel %vm1225, %v8083, %v8085
      %v8112 = vsel %vm1225, %v8084, %v8086
      %v8113 = vsel %vm1225, %v8081, %v8083
      %v8114 = vsel %vm1225, %v8082, %v8084
      %v8115 = vsel %vm1225, %v8079, %v8081
      %v8116 = vsel %vm1225, %v8080, %v8082
      %v8117 = vsel %vm1225, %v8077, %v8079
      %v8118 = vsel %vm1225, %v8078, %v8080
      %v8119 = vsel %vm1225, %v8075, %v8077
      %v8120 = vsel %vm1225, %v8076, %v8078
      %v8121 = vsel %vm1225, %v8073, %v8075
      %v8122 = vsel %vm1225, %v8074, %v8076
      %v8123 = vsel %vm1225, %v8071, %v8073
      %v8124 = vsel %vm1225, %v8072, %v8074
      %v8125 = vsel %vm1225, %v8097, %v8071
      %v8126 = vsel %vm1225, %v8098, %v8072
      %v8127 = vmax.f32 %v8043, %v8123
      %v8128 = vmax.f32 %v8044, %v8124
      %v8129 = vmax.f32 %v8045, %v8121
      %v8130 = vmax.f32 %v8046, %v8122
      %v8131 = vmax.f32 %v8047, %v8119
      %v8132 = vmax.f32 %v8048, %v8120
      %v8133 = vmax.f32 %v8049, %v8117
      %v8134 = vmax.f32 %v8050, %v8118
      %v8135 = vmax.f32 %v8051, %v8115
      %v8136 = vmax.f32 %v8052, %v8116
      %v8137 = vmax.f32 %v8053, %v8113
      %v8138 = vmax.f32 %v8054, %v8114
      %v8139 = vmax.f32 %v8055, %v8111
      %v8140 = vmax.f32 %v8056, %v8112
      %v8141 = vmax.f32 %v8057, %v8109
      %v8142 = vmax.f32 %v8058, %v8110
      %v8143 = vmax.f32 %v8059, %v8107
      %v8144 = vmax.f32 %v8060, %v8108
      %v8145 = vmax.f32 %v8061, %v8105
      %v8146 = vmax.f32 %v8062, %v8106
      %v8147 = vmax.f32 %v8063, %v8103
      %v8148 = vmax.f32 %v8064, %v8104
      %v8149 = vmax.f32 %v8065, %v8101
      %v8150 = vmax.f32 %v8066, %v8102
      %v8151 = vmax.f32 %v8067, %v8099
      %v8152 = vmax.f32 %v8068, %v8100
      %v8153 = vmax.f32 %v8069, %v8125
      %v8154 = vmax.f32 %v8070, %v8126
      %v8155 = vld [vmem:[%s12] sm:$0xf]
      %v8156 = vld [vmem:[%s12 + $0x4] sm:$0xf]
      %v8157 = vld [vmem:[%s12 + $0x8] sm:$0xf]
      %v8158 = vld [vmem:[%s12 + $0xc] sm:$0xf]
      %v8159 = vld [vmem:[%s12 + $0x10] sm:$0xf]
      %v8160 = vld [vmem:[%s12 + $0x14] sm:$0xf]
      %v8161 = vld [vmem:[%s12 + $0x18] sm:$0xf]
      %v8162 = vpack.c.bf16 %v8129, %v8127
      %v8163 = vpack.c.bf16 %v8130, %v8128
      %v8164 = vpack.c.bf16 %v8133, %v8131
      %v8165 = vpack.c.bf16 %v8134, %v8132
      %v8166 = vpack.c.bf16 %v8137, %v8135
      %v8167 = vpack.c.bf16 %v8138, %v8136
      %v8168 = vpack.c.bf16 %v8141, %v8139
      %v8169 = vpack.c.bf16 %v8142, %v8140
      %v8170 = vpack.c.bf16 %v8145, %v8143
      %v8171 = vpack.c.bf16 %v8146, %v8144
      %v8172 = vpack.c.bf16 %v8149, %v8147
      %v8173 = vpack.c.bf16 %v8150, %v8148
      %v8174 = vpack.c.bf16 %v8153, %v8151
      %v8175 = vpack.c.bf16 %v8154, %v8152
      %v8183 = vunpack.c.l.b16 %v8155
      %v8184 = vunpack.c.l.b16 %v8156
      %v8185 = vunpack.c.l.b16 %v8157
      %v8186 = vunpack.c.l.b16 %v8158
      %v8187 = vunpack.c.l.b16 %v8159
      %v8188 = vunpack.c.l.b16 %v8160
      %v8189 = vunpack.c.l.b16 %v8161
      %v8190 = vpack.c.b16 %v8184, %v8183
      %v8191 = vpack.c.b16 %v8186, %v8185
      %v8192 = vpack.c.b16 %v8188, %v8187
      %v8193 = vpack.c.b16 %v8189, %v8189
      %vm8194 = vcmask 916480
      %v8196 = vsel %vm8194, %v8190, 0
      %v8199 = vsel %vm8194, %v8191, 0
      %v8202 = vsel %vm8194, %v8192, 0
      %v8205 = vsel %vm8194, %v8193, 0
      %8207 = vmatprep.subr.bf16.mxu0 %v8163
      %8208 = vmatpush1.bf16.msra.mxu0 %v8162
      %8209 = vmatprep.subr.bf16.mxu0 %v8165
      %8210 = vmatpush1.bf16.msra.mxu0 %v8164
      %8211 = vmatprep.subr.bf16.mxu0 %v8167
      %8212 = vmatpush1.bf16.msra.mxu0 %v8166
      %8213 = vmatprep.subr.bf16.mxu0 %v8169
      %8214 = vmatpush1.bf16.msra.mxu0 %v8168
      %8215 = vmatprep.subr.bf16.mxu0 %v8171
      %8216 = vmatpush1.bf16.msra.mxu0 %v8170
      %8217 = vmatprep.subr.bf16.mxu0 %v8173
      %8218 = vmatpush1.bf16.msra.mxu0 %v8172
      %8219 = vmatprep.subr.bf16.mxu0 %v8175
      %8220 = vmatpush1.bf16.msra.mxu0 %v8174
      %8221 = vmatprep.subr.bf16.mxu0 0
      %8222 = vmatpush1.bf16.msra.mxu0 0
      %8223 = vmatprep.subr.bf16.mxu0 0
      %8224 = vmatpush1.bf16.msra.mxu0 0
      %8225 = vmatprep.subr.bf16.mxu0 0
      %8226 = vmatpush1.bf16.msra.mxu0 0
      %8227 = vmatprep.subr.bf16.mxu0 0
      %8228 = vmatpush1.bf16.msra.mxu0 0
      %8229 = vmatprep.subr.bf16.mxu0 0
      %8230 = vmatpush1.bf16.msra.mxu0 0
      %8231 = vmatprep.subr.bf16.mxu0 0
      %8232 = vmatpush1.bf16.msra.mxu0 0
      %8233 = vmatprep.subr.bf16.mxu0 0
      %8234 = vmatpush1.bf16.msra.mxu0 0
      %8235 = vmatprep.subr.bf16.mxu0 0
      %8236 = vmatpush1.bf16.msra.mxu0 0
      %8237 = vmatprep.subr.bf16.mxu0 0
      %8238 = vmatpush1.bf16.msra.mxu0 0
      %8239 = vmatprep.mubr.bf16.mxu0 0
      %8240 = vmatmul.mubr.bf16.gmra.mrb[0].mxu0 %v8196
      %v8241 = vpop.f32.mrb[0].mxu0
      %v8242 = vadd.f32 0.0, %v8241
      %v8243 = vpop.f32.mrb[0].mxu0
      %v8244 = vadd.f32 0.0, %v8243
      %v8245 = vpop.f32.mrb[0].mxu0
      %v8246 = vadd.f32 0.0, %v8245
      %v8247 = vpop.f32.mrb[0].mxu0
      %v8248 = vadd.f32 0.0, %v8247
      %8249 = vmatprep.mubr.bf16.mxu0 0
      %8250 = vmatmul.mubr.bf16.gmra.mrb[0].mxu0 %v8199
      %v8251 = vpop.f32.mrb[0].mxu0
      %v8252 = vadd.f32 0.0, %v8251
      %v8253 = vpop.f32.mrb[0].mxu0
      %v8254 = vadd.f32 0.0, %v8253
      %v8255 = vpop.f32.mrb[0].mxu0
      %v8256 = vadd.f32 0.0, %v8255
      %v8257 = vpop.f32.mrb[0].mxu0
      %v8258 = vadd.f32 0.0, %v8257
      %8259 = vmatprep.mubr.bf16.mxu0 0
      %8260 = vmatmul.mubr.bf16.gmra.mrb[0].mxu0 %v8202
      %v8261 = vpop.f32.mrb[0].mxu0
      %v8262 = vadd.f32 0.0, %v8261
      %v8263 = vpop.f32.mrb[0].mxu0
      %v8264 = vadd.f32 0.0, %v8263
      %v8265 = vpop.f32.mrb[0].mxu0
      %v8266 = vadd.f32 0.0, %v8265
      %v8267 = vpop.f32.mrb[0].mxu0
      %v8268 = vadd.f32 0.0, %v8267
      %8269 = vmatprep.mubr.bf16.mxu0 0
      %8270 = vmatmul.mubr.bf16.gmra.mrb[0].mxu0 %v8205
      %v8271 = vpop.f32.mrb[0].mxu0
      %v8272 = vadd.f32 0.0, %v8271
      %v8273 = vpop.f32.mrb[0].mxu0
      %v8274 = vadd.f32 0.0, %v8273
      %v8275 = vpop.f32.mrb[0].mxu0
      %v8276 = vpop.f32.mrb[0].mxu0
      %8277 = vdwg.mxu0
      %v8278 = vpack.c.bf16 %v8246, %v8242
      %v8279 = vpack.c.bf16 %v8248, %v8244
      %v8280 = vpack.c.bf16 %v8256, %v8252
      %v8281 = vpack.c.bf16 %v8258, %v8254
      %v8282 = vpack.c.bf16 %v8266, %v8262
      %v8283 = vpack.c.bf16 %v8268, %v8264
      %v8284 = vpack.c.bf16 %v8272, %v8272
      %v8285 = vpack.c.bf16 %v8274, %v8274
      %v8286 = vld [vmem:[%s13] sm:$0xf]
      %v8287 = vld [vmem:[%s13 + $0x4] sm:$0xf]
      %v8288 = vld [vmem:[%s13 + $0x8] sm:$0xf]
      %v8289 = vld [vmem:[%s13 + $0xc] sm:$0xf]
      %v8290 = vld [vmem:[%s13 + $0x10] sm:$0xf]
      %v8291 = vld [vmem:[%s13 + $0x14] sm:$0xf]
      %v8292 = vld [vmem:[%s13 + $0x18] sm:$0xf]
      %v8293 = vld [vmem:[%s13 + $0x1c] sm:$0xf]
      %v8294 = vld [vmem:[%s13 + $0x20] sm:$0xf]
      %v8295 = vld [vmem:[%s13 + $0x24] sm:$0xf]
      %v8296 = vld [vmem:[%s13 + $0x28] sm:$0xf]
      %v8297 = vld [vmem:[%s13 + $0x2c] sm:$0xf]
      %v8298 = vld [vmem:[%s13 + $0x30] sm:$0xf]
      %v8299 = vld [vmem:[%s13 + $0x34] sm:$0xf]
      %v8300 = vld [vmem:[%s13 + $0x38] sm:$0xf]
      %v8301 = vld [vmem:[%s13 + $0x3c] sm:$0xf]
      %v8302 = vld [vmem:[%s13 + $0x40] sm:$0xf]
      %v8303 = vld [vmem:[%s13 + $0x44] sm:$0xf]
      %v8304 = vld [vmem:[%s13 + $0x48] sm:$0xf]
      %v8305 = vld [vmem:[%s13 + $0x4c] sm:$0xf]
      %v8306 = vld [vmem:[%s13 + $0x50] sm:$0xf]
      %v8328 = vunpack.c.l.b16 %v8286
      %v8329 = vunpack.c.l.b16 %v8287
      %v8330 = vunpack.c.l.b16 %v8288
      %v8331 = vunpack.c.l.b16 %v8289
      %v8332 = vunpack.c.l.b16 %v8290
      %v8333 = vunpack.c.l.b16 %v8291
      %v8334 = vunpack.c.l.b16 %v8292
      %v8335 = vunpack.c.l.b16 %v8293
      %v8336 = vunpack.c.l.b16 %v8294
      %v8337 = vunpack.c.l.b16 %v8295
      %v8338 = vunpack.c.l.b16 %v8296
      %v8339 = vunpack.c.l.b16 %v8297
      %v8340 = vunpack.c.l.b16 %v8298
      %v8341 = vunpack.c.l.b16 %v8299
      %v8342 = vunpack.c.l.b16 %v8300
      %v8343 = vunpack.c.l.b16 %v8301
      %v8344 = vunpack.c.l.b16 %v8302
      %v8345 = vunpack.c.l.b16 %v8303
      %v8346 = vunpack.c.l.b16 %v8304
      %v8347 = vunpack.c.l.b16 %v8305
      %v8348 = vunpack.c.l.b16 %v8306
      %v8349 = vpack.c.b16 %v8329, %v8328
      %v8350 = vpack.c.b16 %v8331, %v8330
      %v8351 = vpack.c.b16 %v8333, %v8332
      %v8352 = vpack.c.b16 %v8335, %v8334
      %v8353 = vpack.c.b16 %v8337, %v8336
      %v8354 = vpack.c.b16 %v8339, %v8338
      %v8355 = vpack.c.b16 %v8341, %v8340
      %v8356 = vpack.c.b16 %v8343, %v8342
      %v8357 = vpack.c.b16 %v8345, %v8344
      %v8358 = vpack.c.b16 %v8347, %v8346
      %v8359 = vpack.c.b16 %v8348, %v8348
      %v8371 = vsel %vm7337, %v8279, 0
      %v8374 = vsel %vm7337, %v8281, 0
      %v8377 = vsel %vm7337, %v8283, 0
      %v8380 = vsel %vm7337, %v8285, 0
      %v8383 = vsel %vm7359, %v8359, 0
      %8385 = vmatprep.subr.bf16.mxu0 0
      %8386 = vmatpush1.bf16.msra.mxu0 %v8349
      %8387 = vmatprep.subr.bf16.mxu0 0
      %8388 = vmatpush1.bf16.msra.mxu0 %v8350
      %8389 = vmatprep.subr.bf16.mxu0 0
      %8390 = vmatpush1.bf16.msra.mxu0 %v8351
      %8391 = vmatprep.subr.bf16.mxu0 0
      %8392 = vmatpush1.bf16.msra.mxu0 %v8352
      %8393 = vmatprep.subr.bf16.mxu0 0
      %8394 = vmatpush1.bf16.msra.mxu0 %v8353
      %8395 = vmatprep.subr.bf16.mxu0 0
      %8396 = vmatpush1.bf16.msra.mxu0 %v8354
      %8397 = vmatprep.subr.bf16.mxu0 0
      %8398 = vmatpush1.bf16.msra.mxu0 %v8355
      %8399 = vmatprep.subr.bf16.mxu0 0
      %8400 = vmatpush1.bf16.msra.mxu0 %v8356
      %8401 = vmatprep.subr.bf16.mxu0 0
      %8402 = vmatpush1.bf16.msra.mxu0 %v8357
      %8403 = vmatprep.subr.bf16.mxu0 0
      %8404 = vmatpush1.bf16.msra.mxu0 %v8358
      %8405 = vmatprep.subr.bf16.mxu0 0
      %8406 = vmatpush1.bf16.msra.mxu0 %v8383
      %8407 = vmatprep.subr.bf16.mxu0 0
      %8408 = vmatpush1.bf16.msra.mxu0 0
      %8409 = vmatprep.subr.bf16.mxu0 0
      %8410 = vmatpush1.bf16.msra.mxu0 0
      %8411 = vmatprep.subr.bf16.mxu0 0
      %8412 = vmatpush1.bf16.msra.mxu0 0
      %8413 = vmatprep.subr.bf16.mxu0 0
      %8414 = vmatpush1.bf16.msra.mxu0 0
      %8415 = vmatprep.subr.bf16.mxu0 0
      %8416 = vmatpush1.bf16.msra.mxu0 0
      %8417 = vmatprep.mubr.bf16.mxu0 %v8371
      %8418 = vmatmul.mubr.bf16.gmra.mrb[0].mxu0 %v8278
      %v8419 = vpop.f32.mrb[0].mxu0
      %v8420 = vadd.f32 0.0, %v8419
      %v8421 = vpop.f32.mrb[0].mxu0
      %v8422 = vpop.f32.mrb[0].mxu0
      %v8423 = vadd.f32 0.0, %v8422
      %v8424 = vpop.f32.mrb[0].mxu0
      %8425 = vmatprep.mubr.bf16.mxu0 %v8374
      %8426 = vmatmul.mubr.bf16.gmra.mrb[0].mxu0 %v8280
      %v8427 = vpop.f32.mrb[0].mxu0
      %v8428 = vadd.f32 0.0, %v8427
      %v8429 = vpop.f32.mrb[0].mxu0
      %v8430 = vpop.f32.mrb[0].mxu0
      %v8431 = vadd.f32 0.0, %v8430
      %v8432 = vpop.f32.mrb[0].mxu0
      %8433 = vmatprep.mubr.bf16.mxu0 %v8377
      %8434 = vmatmul.mubr.bf16.gmra.mrb[0].mxu0 %v8282
      %v8435 = vpop.f32.mrb[0].mxu0
      %v8436 = vadd.f32 0.0, %v8435
      %v8437 = vpop.f32.mrb[0].mxu0
      %v8438 = vpop.f32.mrb[0].mxu0
      %v8439 = vadd.f32 0.0, %v8438
      %v8440 = vpop.f32.mrb[0].mxu0
      %8441 = vmatprep.mubr.bf16.mxu0 %v8380
      %8442 = vmatmul.mubr.bf16.gmra.mrb[0].mxu0 %v8284
      %v8443 = vpop.f32.mrb[0].mxu0
      %v8444 = vadd.f32 0.0, %v8443
      %v8445 = vpop.f32.mrb[0].mxu0
      %v8446 = vpop.f32.mrb[0].mxu0
      %v8447 = vpop.f32.mrb[0].mxu0
      %8448 = vdwg.mxu0
      %v8449 = vld [vmem:[%s14] sm:$0xf]
      %v8450 = vld [vmem:[%s14 + $0x4] sm:$0xf]
      %v8451 = vld [vmem:[%s14 + $0x8] sm:$0xf]
      %v8452 = vld [vmem:[%s14 + $0xc] sm:$0xf]
      %v8453 = vld [vmem:[%s14 + $0x10] sm:$0xf]
      %v8454 = vld [vmem:[%s14 + $0x14] sm:$0xf]
      %v8455 = vld [vmem:[%s14 + $0x18] sm:$0xf]
      %v8456 = vld [vmem:[%s14 + $0x1c] sm:$0xf]
      %v8457 = vld [vmem:[%s14 + $0x20] sm:$0xf]
      %v8458 = vld [vmem:[%s14 + $0x24] sm:$0xf]
      %v8459 = vld [vmem:[%s14 + $0x28] sm:$0xf]
      %v8460 = vld [vmem:[%s14 + $0x2c] sm:$0xf]
      %v8461 = vld [vmem:[%s14 + $0x30] sm:$0xf]
      %v8462 = vld [vmem:[%s14 + $0x34] sm:$0xf]
      %v8463 = vld [vmem:[%s14 + $0x38] sm:$0xf]
      %v8464 = vld [vmem:[%s14 + $0x3c] sm:$0xf]
      %v8465 = vld [vmem:[%s14 + $0x40] sm:$0xf]
      %v8466 = vld [vmem:[%s14 + $0x44] sm:$0xf]
      %v8467 = vld [vmem:[%s14 + $0x48] sm:$0xf]
      %v8468 = vld [vmem:[%s14 + $0x4c] sm:$0xf]
      %v8469 = vld [vmem:[%s14 + $0x50] sm:$0xf]
      %v8491 = vunpack.c.l.b16 %v8449
      %v8492 = vunpack.c.l.b16 %v8450
      %v8493 = vunpack.c.l.b16 %v8451
      %v8494 = vunpack.c.l.b16 %v8452
      %v8495 = vunpack.c.l.b16 %v8453
      %v8496 = vunpack.c.l.b16 %v8454
      %v8497 = vunpack.c.l.b16 %v8455
      %v8498 = vunpack.c.l.b16 %v8456
      %v8499 = vunpack.c.l.b16 %v8457
      %v8500 = vunpack.c.l.b16 %v8458
      %v8501 = vunpack.c.l.b16 %v8459
      %v8502 = vunpack.c.l.b16 %v8460
      %v8503 = vunpack.c.l.b16 %v8461
      %v8504 = vunpack.c.l.b16 %v8462
      %v8505 = vunpack.c.l.b16 %v8463
      %v8506 = vunpack.c.l.b16 %v8464
      %v8507 = vunpack.c.l.b16 %v8465
      %v8508 = vunpack.c.l.b16 %v8466
      %v8509 = vunpack.c.l.b16 %v8467
      %v8510 = vunpack.c.l.b16 %v8468
      %v8511 = vunpack.c.l.b16 %v8469
      %v8512 = vpack.c.b16 %v8492, %v8491
      %v8513 = vpack.c.b16 %v8494, %v8493
      %v8514 = vpack.c.b16 %v8496, %v8495
      %v8515 = vpack.c.b16 %v8498, %v8497
      %v8516 = vpack.c.b16 %v8500, %v8499
      %v8517 = vpack.c.b16 %v8502, %v8501
      %v8518 = vpack.c.b16 %v8504, %v8503
      %v8519 = vpack.c.b16 %v8506, %v8505
      %v8520 = vpack.c.b16 %v8508, %v8507
      %v8521 = vpack.c.b16 %v8510, %v8509
      %v8522 = vpack.c.b16 %v8511, %v8511
      %v8534 = vsel %vm7359, %v8522, 0
      %8536 = vmatprep.subr.bf16.mxu0 0
      %8537 = vmatpush1.bf16.msra.mxu0 %v8512
      %8538 = vmatprep.subr.bf16.mxu0 0
      %8539 = vmatpush1.bf16.msra.mxu0 %v8513
      %8540 = vmatprep.subr.bf16.mxu0 0
      %8541 = vmatpush1.bf16.msra.mxu0 %v8514
      %8542 = vmatprep.subr.bf16.mxu0 0
      %8543 = vmatpush1.bf16.msra.mxu0 %v8515
      %8544 = vmatprep.subr.bf16.mxu0 0
      %8545 = vmatpush1.bf16.msra.mxu0 %v8516
      %8546 = vmatprep.subr.bf16.mxu0 0
      %8547 = vmatpush1.bf16.msra.mxu0 %v8517
      %8548 = vmatprep.subr.bf16.mxu0 0
      %8549 = vmatpush1.bf16.msra.mxu0 %v8518
      %8550 = vmatprep.subr.bf16.mxu0 0
      %8551 = vmatpush1.bf16.msra.mxu0 %v8519
      %8552 = vmatprep.subr.bf16.mxu0 0
      %8553 = vmatpush1.bf16.msra.mxu0 %v8520
      %8554 = vmatprep.subr.bf16.mxu0 0
      %8555 = vmatpush1.bf16.msra.mxu0 %v8521
      %8556 = vmatprep.subr.bf16.mxu0 0
      %8557 = vmatpush1.bf16.msra.mxu0 %v8534
      %8558 = vmatprep.subr.bf16.mxu0 0
      %8559 = vmatpush1.bf16.msra.mxu0 0
      %8560 = vmatprep.subr.bf16.mxu0 0
      %8561 = vmatpush1.bf16.msra.mxu0 0
      %8562 = vmatprep.subr.bf16.mxu0 0
      %8563 = vmatpush1.bf16.msra.mxu0 0
      %8564 = vmatprep.subr.bf16.mxu0 0
      %8565 = vmatpush1.bf16.msra.mxu0 0
      %8566 = vmatprep.subr.bf16.mxu0 0
      %8567 = vmatpush1.bf16.msra.mxu0 0
      %8568 = vmatprep.mubr.bf16.mxu0 %v8371
      %8569 = vmatmul.mubr.bf16.gmra.mrb[0].mxu0 %v8278
      %v8570 = vpop.f32.mrb[0].mxu0
      %v8571 = vadd.f32 0.0, %v8570
      %v8572 = vpop.f32.mrb[0].mxu0
      %v8573 = vpop.f32.mrb[0].mxu0
      %v8574 = vadd.f32 0.0, %v8573
      %v8575 = vpop.f32.mrb[0].mxu0
      %8576 = vmatprep.mubr.bf16.mxu0 %v8374
      %8577 = vmatmul.mubr.bf16.gmra.mrb[0].mxu0 %v8280
      %v8578 = vpop.f32.mrb[0].mxu0
      %v8579 = vadd.f32 0.0, %v8578
      %v8580 = vpop.f32.mrb[0].mxu0
      %v8581 = vpop.f32.mrb[0].mxu0
      %v8582 = vadd.f32 0.0, %v8581
      %v8583 = vpop.f32.mrb[0].mxu0
      %8584 = vmatprep.mubr.bf16.mxu0 %v8377
      %8585 = vmatmul.mubr.bf16.gmra.mrb[0].mxu0 %v8282
      %v8586 = vpop.f32.mrb[0].mxu0
      %v8587 = vadd.f32 0.0, %v8586
      %v8588 = vpop.f32.mrb[0].mxu0
      %v8589 = vpop.f32.mrb[0].mxu0
      %v8590 = vadd.f32 0.0, %v8589
      %v8591 = vpop.f32.mrb[0].mxu0
      %8592 = vmatprep.mubr.bf16.mxu0 %v8380
      %8593 = vmatmul.mubr.bf16.gmra.mrb[0].mxu0 %v8284
      %v8594 = vpop.f32.mrb[0].mxu0
      %v8595 = vadd.f32 0.0, %v8594
      %v8596 = vpop.f32.mrb[0].mxu0
      %v8597 = vpop.f32.mrb[0].mxu0
      %v8598 = vpop.f32.mrb[0].mxu0
      %8599 = vdwg.mxu0
      %v8600 = vmax.f32 %v8420, %v8571
      %v8601 = vmax.f32 %v8423, %v8574
      %v8602 = vmax.f32 %v8428, %v8579
      %v8603 = vmax.f32 %v8431, %v8582
      %v8604 = vmax.f32 %v8436, %v8587
      %v8605 = vmax.f32 %v8439, %v8590
      %v8606 = vmax.f32 %v8444, %v8595
      %v8607 = vld [vmem:[%s15] sm:$0xff]
      %v8608 = vld [vmem:[%s15 + $0x8] sm:$0xff]
      %v8609 = vld [vmem:[%s15 + $0x10] sm:$0xff]
      %v8610 = vld [vmem:[%s15 + $0x18] sm:$0xff]
      %v8611 = vld [vmem:[%s15 + $0x20] sm:$0xff]
      %v8612 = vld [vmem:[%s15 + $0x28] sm:$0xff]
      %v8613 = vld [vmem:[%s15 + $0x30] sm:$0xff]
      %v8614 = vld [vmem:[%s15 + $0x38] sm:$0xff]
      %v8615 = vld [vmem:[%s15 + $0x40] sm:$0xff]
      %v8616 = vld [vmem:[%s15 + $0x48] sm:$0xff]
      %v8617 = vld [vmem:[%s15 + $0x50] sm:$0xff]
      %v8618 = vld [vmem:[%s15 + $0x58] sm:$0xff]
      %v8619 = vld [vmem:[%s15 + $0x60] sm:$0xff]
      %v8620 = vld [vmem:[%s15 + $0x68] sm:$0xff]
      %v8621 = vld [vmem:[%s15 + $0x70] sm:$0xff]
      %v8622 = vld [vmem:[%s15 + $0x78] sm:$0xff]
      %v8623 = vld [vmem:[%s15 + $0x80] sm:$0xff]
      %v8624 = vld [vmem:[%s15 + $0x88] sm:$0xff]
      %v8625 = vld [vmem:[%s15 + $0x90] sm:$0xff]
      %v8626 = vld [vmem:[%s15 + $0x98] sm:$0xff]
      %v8627 = vld [vmem:[%s15 + $0xa0] sm:$0xff]
      %v8628 = vld [vmem:[%s15 + $0xa8] sm:$0xff]
      %v8629 = vld [vmem:[%s15 + $0xb0] sm:$0xff]
      %v8630 = vld [vmem:[%s15 + $0xb8] sm:$0xff]
      %v8631 = vld [vmem:[%s15 + $0xc0] sm:$0xff]
      %v8632 = vld [vmem:[%s15 + $0xc8] sm:$0xff]
      %v8633 = vld [vmem:[%s15 + $0xd0] sm:$0xff]
      %v8634 = vld [vmem:[%s15 + $0xd8] sm:$0xff]
      %v8635 = vld [vmem:[%s15 + $0xe0] sm:$0xff]
      %v8636 = vld [vmem:[%s15 + $0xe8] sm:$0xff]
      %v8637 = vld [vmem:[%s15 + $0xf0] sm:$0xf]
      %v8638 = vld [vmem:[%s15 + $0xf8] sm:$0xf]
      %v8639 = vld [vmem:[%s15 + $0x100] sm:$0xf]
      %vm8640 = vcmask 687104
      %v8642 = vsel %vm8640, %v8600, 0
      %v8645 = vsel %vm8640, %v8601, 0
      %v8648 = vsel %vm8640, %v8602, 0
      %v8651 = vsel %vm8640, %v8603, 0
      %v8654 = vsel %vm8640, %v8604, 0
      %v8657 = vsel %vm8640, %v8605, 0
      %v8660 = vsel %vm8640, %v8606, 0
      %v8663 = vsel %vm7359, %v8637, 0
      %v8666 = vsel %vm7359, %v8638, 0
      %v8669 = vsel %vm7359, %v8639, 0
      %8671 = vmatprep.subr.mxu0 %v8608
      %8672 = vmatpush1.msra.mxu0 %v8607
      %8673 = vmatprep.subr.mxu0 %v8611
      %8674 = vmatpush1.msra.mxu0 %v8610
      %8675 = vmatprep.subr.mxu0 %v8614
      %8676 = vmatpush1.msra.mxu0 %v8613
      %8677 = vmatprep.subr.mxu0 %v8617
      %8678 = vmatpush1.msra.mxu0 %v8616
      %8679 = vmatprep.subr.mxu0 %v8620
      %8680 = vmatpush1.msra.mxu0 %v8619
      %8681 = vmatprep.subr.mxu0 %v8623
      %8682 = vmatpush1.msra.mxu0 %v8622
      %8683 = vmatprep.subr.mxu0 %v8626
      %8684 = vmatpush1.msra.mxu0 %v8625
      %8685 = vmatprep.subr.mxu0 %v8629
      %8686 = vmatpush1.msra.mxu0 %v8628
      %8687 = vmatprep.subr.mxu0 %v8632
      %8688 = vmatpush1.msra.mxu0 %v8631
      %8689 = vmatprep.subr.mxu0 %v8635
      %8690 = vmatpush1.msra.mxu0 %v8634
      %8691 = vmatprep.subr.mxu0 %v8666
      %8692 = vmatpush1.msra.mxu0 %v8663
      %8693 = vmatprep.subr.mxu0 0.0
      %8694 = vmatpush1.msra.mxu0 0.0
      %8695 = vmatprep.subr.mxu0 0.0
      %8696 = vmatpush1.msra.mxu0 0.0
      %8697 = vmatprep.subr.mxu0 0.0
      %8698 = vmatpush1.msra.mxu0 0.0
      %8699 = vmatprep.subr.mxu0 0.0
      %8700 = vmatpush1.msra.mxu0 0.0
      %8701 = vmatprep.subr.mxu0 0.0
      %8702 = vmatpush1.msra.mxu0 0.0
      %8703 = vmatprep.subr.mxu0 0.0
      %8704 = vmatpush1.msra.mxu0 0.0
      %8705 = vmatprep.subr.mxu0 0.0
      %8706 = vmatpush1.msra.mxu0 0.0
      %8707 = vmatprep.subr.mxu0 0.0
      %8708 = vmatpush1.msra.mxu0 0.0
      %8709 = vmatprep.subr.mxu0 0.0
      %8710 = vmatpush1.msra.mxu0 0.0
      %8711 = vmatprep.subr.mxu0 0.0
      %8712 = vmatpush1.msra.mxu0 0.0
      %8713 = vmatprep.subr.mxu0 0.0
      %8714 = vmatpush1.msra.mxu0 0.0
      %8715 = vmatprep.subr.mxu0 0.0
      %8716 = vmatpush1.msra.mxu0 0.0
      %8717 = vmatprep.subr.mxu0 0.0
      %8718 = vmatpush1.msra.mxu0 0.0
      %8719 = vmatprep.subr.mxu0 0.0
      %8720 = vmatpush1.msra.mxu0 0.0
      %8721 = vmatprep.subr.mxu0 0.0
      %8722 = vmatpush1.msra.mxu0 0.0
      %8723 = vmatprep.subr.mxu0 0.0
      %8724 = vmatpush1.msra.mxu0 0.0
      %8725 = vmatprep.subr.mxu0 0.0
      %8726 = vmatpush1.msra.mxu0 0.0
      %8727 = vmatprep.subr.mxu0 0.0
      %8728 = vmatpush1.msra.mxu0 0.0
      %8729 = vmatprep.subr.mxu0 0.0
      %8730 = vmatpush1.msra.mxu0 0.0
      %8731 = vmatprep.subr.mxu0 0.0
      %8732 = vmatpush1.msra.mxu0 0.0
      %8733 = vmatprep.subr.mxu0 0.0
      %8734 = vmatpush1.msra.mxu0 0.0
      %8735 = vmatprep.mubr.f32.mxu0 0.0
      %8736 = vmatmul.mubr.f32.gmra.mrb[0].mxu0 %v8642
      %v8737 = vpop.f32.mrb[0].mxu0
      %v8738 = vadd.f32 0.0, %v8737
      %v8739 = vpop.f32.mrb[0].mxu0
      %v8740 = vadd.f32 0.0, %v8739
      %8741 = vmatprep.mubr.f32.mxu0 0.0
      %8742 = vmatmul.mubr.f32.gmra.mrb[0].mxu0 %v8645
      %v8743 = vpop.f32.mrb[0].mxu0
      %v8744 = vadd.f32 0.0, %v8743
      %v8745 = vpop.f32.mrb[0].mxu0
      %v8746 = vadd.f32 0.0, %v8745
      %8747 = vmatprep.mubr.f32.mxu0 0.0
      %8748 = vmatmul.mubr.f32.gmra.mrb[0].mxu0 %v8648
      %v8749 = vpop.f32.mrb[0].mxu0
      %v8750 = vadd.f32 0.0, %v8749
      %v8751 = vpop.f32.mrb[0].mxu0
      %v8752 = vadd.f32 0.0, %v8751
      %8753 = vmatprep.mubr.f32.mxu0 0.0
      %8754 = vmatmul.mubr.f32.gmra.mrb[0].mxu0 %v8651
      %v8755 = vpop.f32.mrb[0].mxu0
      %v8756 = vadd.f32 0.0, %v8755
      %v8757 = vpop.f32.mrb[0].mxu0
      %v8758 = vadd.f32 0.0, %v8757
      %8759 = vmatprep.mubr.f32.mxu0 0.0
      %8760 = vmatmul.mubr.f32.gmra.mrb[0].mxu0 %v8654
      %v8761 = vpop.f32.mrb[0].mxu0
      %v8762 = vadd.f32 0.0, %v8761
      %v8763 = vpop.f32.mrb[0].mxu0
      %v8764 = vadd.f32 0.0, %v8763
      %8765 = vmatprep.mubr.f32.mxu0 0.0
      %8766 = vmatmul.mubr.f32.gmra.mrb[0].mxu0 %v8657
      %v8767 = vpop.f32.mrb[0].mxu0
      %v8768 = vadd.f32 0.0, %v8767
      %v8769 = vpop.f32.mrb[0].mxu0
      %v8770 = vadd.f32 0.0, %v8769
      %8771 = vmatprep.mubr.f32.mxu0 0.0
      %8772 = vmatmul.mubr.f32.gmra.mrb[0].mxu0 %v8660
      %v8773 = vpop.f32.mrb[0].mxu0
      %v8774 = vadd.f32 0.0, %v8773
      %v8775 = vpop.f32.mrb[0].mxu0
      %v8776 = vadd.f32 0.0, %v8775
      %8777 = vdwg.mxu0
      %8778 = vmatprep.subr.mxu0 0.0
      %8779 = vmatpush1.msra.mxu0 %v8609
      %8780 = vmatprep.subr.mxu0 0.0
      %8781 = vmatpush1.msra.mxu0 %v8612
      %8782 = vmatprep.subr.mxu0 0.0
      %8783 = vmatpush1.msra.mxu0 %v8615
      %8784 = vmatprep.subr.mxu0 0.0
      %8785 = vmatpush1.msra.mxu0 %v8618
      %8786 = vmatprep.subr.mxu0 0.0
      %8787 = vmatpush1.msra.mxu0 %v8621
      %8788 = vmatprep.subr.mxu0 0.0
      %8789 = vmatpush1.msra.mxu0 %v8624
      %8790 = vmatprep.subr.mxu0 0.0
      %8791 = vmatpush1.msra.mxu0 %v8627
      %8792 = vmatprep.subr.mxu0 0.0
      %8793 = vmatpush1.msra.mxu0 %v8630
      %8794 = vmatprep.subr.mxu0 0.0
      %8795 = vmatpush1.msra.mxu0 %v8633
      %8796 = vmatprep.subr.mxu0 0.0
      %8797 = vmatpush1.msra.mxu0 %v8636
      %8798 = vmatprep.subr.mxu0 0.0
      %8799 = vmatpush1.msra.mxu0 %v8669
      %8800 = vmatprep.subr.mxu0 0.0
      %8801 = vmatpush1.msra.mxu0 0.0
      %8802 = vmatprep.subr.mxu0 0.0
      %8803 = vmatpush1.msra.mxu0 0.0
      %8804 = vmatprep.subr.mxu0 0.0
      %8805 = vmatpush1.msra.mxu0 0.0
      %8806 = vmatprep.subr.mxu0 0.0
      %8807 = vmatpush1.msra.mxu0 0.0
      %8808 = vmatprep.subr.mxu0 0.0
      %8809 = vmatpush1.msra.mxu0 0.0
      %8810 = vmatprep.subr.mxu0 0.0
      %8811 = vmatpush1.msra.mxu0 0.0
      %8812 = vmatprep.subr.mxu0 0.0
      %8813 = vmatpush1.msra.mxu0 0.0
      %8814 = vmatprep.subr.mxu0 0.0
      %8815 = vmatpush1.msra.mxu0 0.0
      %8816 = vmatprep.subr.mxu0 0.0
      %8817 = vmatpush1.msra.mxu0 0.0
      %8818 = vmatprep.subr.mxu0 0.0
      %8819 = vmatpush1.msra.mxu0 0.0
      %8820 = vmatprep.subr.mxu0 0.0
      %8821 = vmatpush1.msra.mxu0 0.0
      %8822 = vmatprep.subr.mxu0 0.0
      %8823 = vmatpush1.msra.mxu0 0.0
      %8824 = vmatprep.subr.mxu0 0.0
      %8825 = vmatpush1.msra.mxu0 0.0
      %8826 = vmatprep.subr.mxu0 0.0
      %8827 = vmatpush1.msra.mxu0 0.0
      %8828 = vmatprep.subr.mxu0 0.0
      %8829 = vmatpush1.msra.mxu0 0.0
      %8830 = vmatprep.subr.mxu0 0.0
      %8831 = vmatpush1.msra.mxu0 0.0
      %8832 = vmatprep.subr.mxu0 0.0
      %8833 = vmatpush1.msra.mxu0 0.0
      %8834 = vmatprep.subr.mxu0 0.0
      %8835 = vmatpush1.msra.mxu0 0.0
      %8836 = vmatprep.subr.mxu0 0.0
      %8837 = vmatpush1.msra.mxu0 0.0
      %8838 = vmatprep.subr.mxu0 0.0
      %8839 = vmatpush1.msra.mxu0 0.0
      %8840 = vmatprep.subr.mxu0 0.0
      %8841 = vmatpush1.msra.mxu0 0.0
      %8842 = vmatprep.mubr.f32.mxu0 0.0
      %8843 = vmatmul.mubr.f32.gmra.mrb[0].mxu0 %v8642
      %v8844 = vpop.f32.mrb[0].mxu0
      %v8845 = vadd.f32 0.0, %v8844
      %v8846 = vpop.f32.mrb[0].mxu0
      %8847 = vmatprep.mubr.f32.mxu0 0.0
      %8848 = vmatmul.mubr.f32.gmra.mrb[0].mxu0 %v8645
      %v8849 = vpop.f32.mrb[0].mxu0
      %v8850 = vadd.f32 0.0, %v8849
      %v8851 = vpop.f32.mrb[0].mxu0
      %8852 = vmatprep.mubr.f32.mxu0 0.0
      %8853 = vmatmul.mubr.f32.gmra.mrb[0].mxu0 %v8648
      %v8854 = vpop.f32.mrb[0].mxu0
      %v8855 = vadd.f32 0.0, %v8854
      %v8856 = vpop.f32.mrb[0].mxu0
      %8857 = vmatprep.mubr.f32.mxu0 0.0
      %8858 = vmatmul.mubr.f32.gmra.mrb[0].mxu0 %v8651
      %v8859 = vpop.f32.mrb[0].mxu0
      %v8860 = vadd.f32 0.0, %v8859
      %v8861 = vpop.f32.mrb[0].mxu0
      %8862 = vmatprep.mubr.f32.mxu0 0.0
      %8863 = vmatmul.mubr.f32.gmra.mrb[0].mxu0 %v8654
      %v8864 = vpop.f32.mrb[0].mxu0
      %v8865 = vadd.f32 0.0, %v8864
      %v8866 = vpop.f32.mrb[0].mxu0
      %8867 = vmatprep.mubr.f32.mxu0 0.0
      %8868 = vmatmul.mubr.f32.gmra.mrb[0].mxu0 %v8657
      %v8869 = vpop.f32.mrb[0].mxu0
      %v8870 = vadd.f32 0.0, %v8869
      %v8871 = vpop.f32.mrb[0].mxu0
      %8872 = vmatprep.mubr.f32.mxu0 0.0
      %8873 = vmatmul.mubr.f32.gmra.mrb[0].mxu0 %v8660
      %v8874 = vpop.f32.mrb[0].mxu0
      %v8875 = vadd.f32 0.0, %v8874
      %v8876 = vpop.f32.mrb[0].mxu0
      %8877 = vdwg.mxu0
      %v8878 = vld [vmem:[%s16] sm:$0xff]
      %v8879 = vld [vmem:[%s16 + $0x8] sm:$0xff]
      %v8880 = vld [vmem:[%s16 + $0x10] sm:$0xff]
      %v8881 = vld [vmem:[%s16 + $0x18] sm:$0xff]
      %v8882 = vld [vmem:[%s16 + $0x20] sm:$0xff]
      %v8883 = vld [vmem:[%s16 + $0x28] sm:$0xff]
      %v8884 = vld [vmem:[%s16 + $0x30] sm:$0xff]
      %v8885 = vld [vmem:[%s16 + $0x38] sm:$0xff]
      %v8886 = vld [vmem:[%s16 + $0x40] sm:$0xff]
      %v8887 = vld [vmem:[%s16 + $0x48] sm:$0xff]
      %v8888 = vld [vmem:[%s16 + $0x50] sm:$0xff]
      %v8889 = vld [vmem:[%s16 + $0x58] sm:$0xff]
      %v8890 = vld [vmem:[%s16 + $0x60] sm:$0xff]
      %v8891 = vld [vmem:[%s16 + $0x68] sm:$0xff]
      %v8892 = vld [vmem:[%s16 + $0x70] sm:$0xff]
      %v8893 = vld [vmem:[%s16 + $0x78] sm:$0xff]
      %v8894 = vld [vmem:[%s16 + $0x80] sm:$0xff]
      %v8895 = vld [vmem:[%s16 + $0x88] sm:$0xff]
      %v8896 = vld [vmem:[%s16 + $0x90] sm:$0xff]
      %v8897 = vld [vmem:[%s16 + $0x98] sm:$0xff]
      %v8898 = vld [vmem:[%s16 + $0xa0] sm:$0xff]
      %v8899 = vmul.f32 %v8738, %v8878
      %v8900 = vmul.f32 %v8740, %v8879
      %v8901 = vmul.f32 %v8845, %v8880
      %v8902 = vmul.f32 %v8744, %v8881
      %v8903 = vmul.f32 %v8746, %v8882
      %v8904 = vmul.f32 %v8850, %v8883
      %v8905 = vmul.f32 %v8750, %v8884
      %v8906 = vmul.f32 %v8752, %v8885
      %v8907 = vmul.f32 %v8855, %v8886
      %v8908 = vmul.f32 %v8756, %v8887
      %v8909 = vmul.f32 %v8758, %v8888
      %v8910 = vmul.f32 %v8860, %v8889
      %v8911 = vmul.f32 %v8762, %v8890
      %v8912 = vmul.f32 %v8764, %v8891
      %v8913 = vmul.f32 %v8865, %v8892
      %v8914 = vmul.f32 %v8768, %v8893
      %v8915 = vmul.f32 %v8770, %v8894
      %v8916 = vmul.f32 %v8870, %v8895
      %v8917 = vmul.f32 %v8774, %v8896
      %v8918 = vmul.f32 %v8776, %v8897
      %v8919 = vmul.f32 %v8875, %v8898
      %v8920 = vld [vmem:[%s18] sm:$0xff]
      %vm8921 = vcmask 457728
      %v8923 = vsel %vm8921, %v8920, 0
      %8925 = vmatprep.subr.mxu0 %v8900
      %8926 = vmatpush1.msra.mxu0 %v8899
      %8927 = vmatprep.subr.mxu0 %v8903
      %8928 = vmatpush1.msra.mxu0 %v8902
      %8929 = vmatprep.subr.mxu0 %v8906
      %8930 = vmatpush1.msra.mxu0 %v8905
      %8931 = vmatprep.subr.mxu0 %v8909
      %8932 = vmatpush1.msra.mxu0 %v8908
      %8933 = vmatprep.subr.mxu0 %v8912
      %8934 = vmatpush1.msra.mxu0 %v8911
      %8935 = vmatprep.subr.mxu0 %v8915
      %8936 = vmatpush1.msra.mxu0 %v8914
      %8937 = vmatprep.subr.mxu0 %v8918
      %8938 = vmatpush1.msra.mxu0 %v8917
      %8939 = vmatprep.subr.mxu0 0.0
      %8940 = vmatpush1.msra.mxu0 0.0
      %8941 = vmatprep.subr.mxu0 0.0
      %8942 = vmatpush1.msra.mxu0 0.0
      %8943 = vmatprep.subr.mxu0 0.0
      %8944 = vmatpush1.msra.mxu0 0.0
      %8945 = vmatprep.subr.mxu0 0.0
      %8946 = vmatpush1.msra.mxu0 0.0
      %8947 = vmatprep.subr.mxu0 0.0
      %8948 = vmatpush1.msra.mxu0 0.0
      %8949 = vmatprep.subr.mxu0 0.0
      %8950 = vmatpush1.msra.mxu0 0.0
      %8951 = vmatprep.subr.mxu0 0.0
      %8952 = vmatpush1.msra.mxu0 0.0
      %8953 = vmatprep.subr.mxu0 0.0
      %8954 = vmatpush1.msra.mxu0 0.0
      %8955 = vmatprep.subr.mxu0 0.0
      %8956 = vmatpush1.msra.mxu0 0.0
      %8957 = vmatprep.subr.mxu0 0.0
      %8958 = vmatpush1.msra.mxu0 0.0
      %8959 = vmatprep.subr.mxu0 0.0
      %8960 = vmatpush1.msra.mxu0 0.0
      %8961 = vmatprep.subr.mxu0 0.0
      %8962 = vmatpush1.msra.mxu0 0.0
      %8963 = vmatprep.subr.mxu0 0.0
      %8964 = vmatpush1.msra.mxu0 0.0
      %8965 = vmatprep.subr.mxu0 0.0
      %8966 = vmatpush1.msra.mxu0 0.0
      %8967 = vmatprep.subr.mxu0 0.0
      %8968 = vmatpush1.msra.mxu0 0.0
      %8969 = vmatprep.subr.mxu0 0.0
      %8970 = vmatpush1.msra.mxu0 0.0
      %8971 = vmatprep.subr.mxu0 0.0
      %8972 = vmatpush1.msra.mxu0 0.0
      %8973 = vmatprep.subr.mxu0 0.0
      %8974 = vmatpush1.msra.mxu0 0.0
      %8975 = vmatprep.subr.mxu0 0.0
      %8976 = vmatpush1.msra.mxu0 0.0
      %8977 = vmatprep.subr.mxu0 0.0
      %8978 = vmatpush1.msra.mxu0 0.0
      %8979 = vmatprep.subr.mxu0 0.0
      %8980 = vmatpush1.msra.mxu0 0.0
      %8981 = vmatprep.subr.mxu0 0.0
      %8982 = vmatpush1.msra.mxu0 0.0
      %8983 = vmatprep.subr.mxu0 0.0
      %8984 = vmatpush1.msra.mxu0 0.0
      %8985 = vmatprep.subr.mxu0 0.0
      %8986 = vmatpush1.msra.mxu0 0.0
      %8987 = vmatprep.subr.mxu0 0.0
      %8988 = vmatpush1.msra.mxu0 0.0
      %8989 = vmatprep.mubr.f32.mxu0 0.0
      %8990 = vmatmul.mubr.f32.gmra.mrb[0].mxu0 %v8923
      %v8991 = vpop.f32.mrb[0].mxu0
      %v8992 = vadd.f32 0.0, %v8991
      %v8993 = vpop.f32.mrb[0].mxu0
      %v8994 = vadd.f32 0.0, %v8993
      %8995 = vdwg.mxu0
      %8996 = vmatprep.subr.mxu0 0.0
      %8997 = vmatpush1.msra.mxu0 %v8901
      %8998 = vmatprep.subr.mxu0 0.0
      %8999 = vmatpush1.msra.mxu0 %v8904
      %9000 = vmatprep.subr.mxu0 0.0
      %9001 = vmatpush1.msra.mxu0 %v8907
      %9002 = vmatprep.subr.mxu0 0.0
      %9003 = vmatpush1.msra.mxu0 %v8910
      %9004 = vmatprep.subr.mxu0 0.0
      %9005 = vmatpush1.msra.mxu0 %v8913
      %9006 = vmatprep.subr.mxu0 0.0
      %9007 = vmatpush1.msra.mxu0 %v8916
      %9008 = vmatprep.subr.mxu0 0.0
      %9009 = vmatpush1.msra.mxu0 %v8919
      %9010 = vmatprep.subr.mxu0 0.0
      %9011 = vmatpush1.msra.mxu0 0.0
      %9012 = vmatprep.subr.mxu0 0.0
      %9013 = vmatpush1.msra.mxu0 0.0
      %9014 = vmatprep.subr.mxu0 0.0
      %9015 = vmatpush1.msra.mxu0 0.0
      %9016 = vmatprep.subr.mxu0 0.0
      %9017 = vmatpush1.msra.mxu0 0.0
      %9018 = vmatprep.subr.mxu0 0.0
      %9019 = vmatpush1.msra.mxu0 0.0
      %9020 = vmatprep.subr.mxu0 0.0
      %9021 = vmatpush1.msra.mxu0 0.0
      %9022 = vmatprep.subr.mxu0 0.0
      %9023 = vmatpush1.msra.mxu0 0.0
      %9024 = vmatprep.subr.mxu0 0.0
      %9025 = vmatpush1.msra.mxu0 0.0
      %9026 = vmatprep.subr.mxu0 0.0
      %9027 = vmatpush1.msra.mxu0 0.0
      %9028 = vmatprep.subr.mxu0 0.0
      %9029 = vmatpush1.msra.mxu0 0.0
      %9030 = vmatprep.subr.mxu0 0.0
      %9031 = vmatpush1.msra.mxu0 0.0
      %9032 = vmatprep.subr.mxu0 0.0
      %9033 = vmatpush1.msra.mxu0 0.0
      %9034 = vmatprep.subr.mxu0 0.0
      %9035 = vmatpush1.msra.mxu0 0.0
      %9036 = vmatprep.subr.mxu0 0.0
      %9037 = vmatpush1.msra.mxu0 0.0
      %9038 = vmatprep.subr.mxu0 0.0
      %9039 = vmatpush1.msra.mxu0 0.0
      %9040 = vmatprep.subr.mxu0 0.0
      %9041 = vmatpush1.msra.mxu0 0.0
      %9042 = vmatprep.subr.mxu0 0.0
      %9043 = vmatpush1.msra.mxu0 0.0
      %9044 = vmatprep.subr.mxu0 0.0
      %9045 = vmatpush1.msra.mxu0 0.0
      %9046 = vmatprep.subr.mxu0 0.0
      %9047 = vmatpush1.msra.mxu0 0.0
      %9048 = vmatprep.subr.mxu0 0.0
      %9049 = vmatpush1.msra.mxu0 0.0
      %9050 = vmatprep.subr.mxu0 0.0
      %9051 = vmatpush1.msra.mxu0 0.0
      %9052 = vmatprep.subr.mxu0 0.0
      %9053 = vmatpush1.msra.mxu0 0.0
      %9054 = vmatprep.subr.mxu0 0.0
      %9055 = vmatpush1.msra.mxu0 0.0
      %9056 = vmatprep.subr.mxu0 0.0
      %9057 = vmatpush1.msra.mxu0 0.0
      %9058 = vmatprep.subr.mxu0 0.0
      %9059 = vmatpush1.msra.mxu0 0.0
      %9060 = vmatprep.mubr.f32.mxu0 0.0
      %9061 = vmatmul.mubr.f32.gmra.mrb[0].mxu0 %v8923
      %v9062 = vpop.f32.mrb[0].mxu0
      %v9063 = vadd.f32 0.0, %v9062
      %v9064 = vpop.f32.mrb[0].mxu0
      %9065 = vdwg.mxu0
      %v9066 = vld [vmem:[%s17] sm:$0xff]
      %v9067 = vld [vmem:[%s17 + $0x8] sm:$0xff]
      %v9068 = vld [vmem:[%s17 + $0x10] sm:$0xff]
      %v9069 = vld [vmem:[%s17 + $0x18] sm:$0xff]
      %v9070 = vld [vmem:[%s17 + $0x20] sm:$0xff]
      %v9071 = vld [vmem:[%s17 + $0x28] sm:$0xff]
      %v9072 = vld [vmem:[%s17 + $0x30] sm:$0xff]
      %v9073 = vld [vmem:[%s17 + $0x38] sm:$0xff]
      %v9074 = vld [vmem:[%s17 + $0x40] sm:$0xff]
      %v9075 = vld [vmem:[%s17 + $0x48] sm:$0xff]
      %v9076 = vld [vmem:[%s17 + $0x50] sm:$0xff]
      %v9077 = vld [vmem:[%s17 + $0x58] sm:$0xff]
      %v9078 = vld [vmem:[%s17 + $0x60] sm:$0xff]
      %v9079 = vld [vmem:[%s17 + $0x68] sm:$0xff]
      %v9080 = vld [vmem:[%s17 + $0x70] sm:$0xff]
      %v9081 = vld [vmem:[%s17 + $0x78] sm:$0xff]
      %v9082 = vld [vmem:[%s17 + $0x80] sm:$0xff]
      %v9083 = vld [vmem:[%s17 + $0x88] sm:$0xff]
      %v9084 = vld [vmem:[%s17 + $0x90] sm:$0xff]
      %v9085 = vld [vmem:[%s17 + $0x98] sm:$0xff]
      %v9086 = vld [vmem:[%s17 + $0xa0] sm:$0xff]
      %v9087 = vld [vmem:[%s17 + $0xa8] sm:$0xff]
      %v9088 = vld [vmem:[%s17 + $0xb0] sm:$0xff]
      %v9089 = vld [vmem:[%s17 + $0xb8] sm:$0xff]
      %v9090 = vld [vmem:[%s17 + $0xc0] sm:$0xff]
      %v9091 = vld [vmem:[%s17 + $0xc8] sm:$0xff]
      %v9092 = vld [vmem:[%s17 + $0xd0] sm:$0xff]
      %v9093 = vld [vmem:[%s17 + $0xd8] sm:$0xff]
      %v9094 = vld [vmem:[%s17 + $0xe0] sm:$0xff]
      %v9095 = vld [vmem:[%s17 + $0xe8] sm:$0xff]
      %v9096 = vld [vmem:[%s17 + $0xf0] sm:$0xff]
      %v9097 = vld [vmem:[%s17 + $0xf8] sm:$0xff]
      %v9098 = vld [vmem:[%s17 + $0x100] sm:$0xff]
      %v9099 = vld [vmem:[%s17 + $0x108] sm:$0xff]
      %v9100 = vld [vmem:[%s17 + $0x110] sm:$0xff]
      %v9101 = vld [vmem:[%s19] sm:$0x1]
      %v9103 = vlaneseq
      %v9104 = vshrl.u32 %v9103, 7
      %v9105 = vsub.s32 0, %v9104
      %v9106 = vrot.slane %v9101, %v9105
      %vm9108 = vcmask 195584
      %v9110 = vsel %vm9108, %v9063, 0
      %9112 = vmatprep.subr.mxu0 0.0
      %9113 = vmatpush1.msra.mxu0 %v9066
      %9114 = vmatprep.subr.mxu0 0.0
      %9115 = vmatpush1.msra.mxu0 %v9067
      %9116 = vmatprep.subr.mxu0 0.0
      %9117 = vmatpush1.msra.mxu0 %v9068
      %9118 = vmatprep.subr.mxu0 0.0
      %9119 = vmatpush1.msra.mxu0 %v9069
      %9120 = vmatprep.subr.mxu0 0.0
      %9121 = vmatpush1.msra.mxu0 %v9070
      %9122 = vmatprep.subr.mxu0 0.0
      %9123 = vmatpush1.msra.mxu0 %v9071
      %9124 = vmatprep.subr.mxu0 0.0
      %9125 = vmatpush1.msra.mxu0 %v9072
      %9126 = vmatprep.subr.mxu0 0.0
      %9127 = vmatpush1.msra.mxu0 %v9073
      %9128 = vmatprep.subr.mxu0 0.0
      %9129 = vmatpush1.msra.mxu0 %v9074
      %9130 = vmatprep.subr.mxu0 0.0
      %9131 = vmatpush1.msra.mxu0 %v9075
      %9132 = vmatprep.subr.mxu0 0.0
      %9133 = vmatpush1.msra.mxu0 %v9076
      %9134 = vmatprep.subr.mxu0 0.0
      %9135 = vmatpush1.msra.mxu0 %v9077
      %9136 = vmatprep.subr.mxu0 0.0
      %9137 = vmatpush1.msra.mxu0 %v9078
      %9138 = vmatprep.subr.mxu0 0.0
      %9139 = vmatpush1.msra.mxu0 %v9079
      %9140 = vmatprep.subr.mxu0 0.0
      %9141 = vmatpush1.msra.mxu0 %v9080
      %9142 = vmatprep.subr.mxu0 0.0
      %9143 = vmatpush1.msra.mxu0 %v9081
      %9144 = vmatprep.subr.mxu0 0.0
      %9145 = vmatpush1.msra.mxu0 %v9082
      %9146 = vmatprep.subr.mxu0 0.0
      %9147 = vmatpush1.msra.mxu0 %v9083
      %9148 = vmatprep.subr.mxu0 0.0
      %9149 = vmatpush1.msra.mxu0 %v9084
      %9150 = vmatprep.subr.mxu0 0.0
      %9151 = vmatpush1.msra.mxu0 %v9085
      %9152 = vmatprep.subr.mxu0 0.0
      %9153 = vmatpush1.msra.mxu0 %v9086
      %9154 = vmatprep.subr.mxu0 0.0
      %9155 = vmatpush1.msra.mxu0 %v9087
      %9156 = vmatprep.subr.mxu0 0.0
      %9157 = vmatpush1.msra.mxu0 %v9088
      %9158 = vmatprep.subr.mxu0 0.0
      %9159 = vmatpush1.msra.mxu0 %v9089
      %9160 = vmatprep.subr.mxu0 0.0
      %9161 = vmatpush1.msra.mxu0 %v9090
      %9162 = vmatprep.subr.mxu0 0.0
      %9163 = vmatpush1.msra.mxu0 %v9091
      %9164 = vmatprep.subr.mxu0 0.0
      %9165 = vmatpush1.msra.mxu0 %v9092
      %9166 = vmatprep.subr.mxu0 0.0
      %9167 = vmatpush1.msra.mxu0 %v9093
      %9168 = vmatprep.subr.mxu0 0.0
      %9169 = vmatpush1.msra.mxu0 %v9094
      %9170 = vmatprep.subr.mxu0 0.0
      %9171 = vmatpush1.msra.mxu0 %v9095
      %9172 = vmatprep.subr.mxu0 0.0
      %9173 = vmatpush1.msra.mxu0 %v9096
      %9174 = vmatprep.subr.mxu0 0.0
      %9175 = vmatpush1.msra.mxu0 %v9097
      %9176 = vmatprep.mubr.f32.mxu0 %v8994
      %9177 = vmatmul.mubr.f32.gmra.mrb[0].mxu0 %v8992
      %v9178 = vpop.f32.mrb[0].mxu0
      %v9179 = vadd.f32 %v9106, %v9178
      %v9180 = vpop.f32.mrb[0].mxu0
      %9181 = vdwg.mxu0
      %9182 = vmatprep.subr.mxu0 0.0
      %9183 = vmatpush1.msra.mxu0 %v9098
      %9184 = vmatprep.subr.mxu0 0.0
      %9185 = vmatpush1.msra.mxu0 %v9099
      %9186 = vmatprep.subr.mxu0 0.0
      %9187 = vmatpush1.msra.mxu0 %v9100
      %9188 = vmatprep.subr.mxu0 0.0
      %9189 = vmatpush1.msra.mxu0 0.0
      %9190 = vmatprep.subr.mxu0 0.0
      %9191 = vmatpush1.msra.mxu0 0.0
      %9192 = vmatprep.subr.mxu0 0.0
      %9193 = vmatpush1.msra.mxu0 0.0
      %9194 = vmatprep.subr.mxu0 0.0
      %9195 = vmatpush1.msra.mxu0 0.0
      %9196 = vmatprep.subr.mxu0 0.0
      %9197 = vmatpush1.msra.mxu0 0.0
      %9198 = vmatprep.subr.mxu0 0.0
      %9199 = vmatpush1.msra.mxu0 0.0
      %9200 = vmatprep.subr.mxu0 0.0
      %9201 = vmatpush1.msra.mxu0 0.0
      %9202 = vmatprep.subr.mxu0 0.0
      %9203 = vmatpush1.msra.mxu0 0.0
      %9204 = vmatprep.subr.mxu0 0.0
      %9205 = vmatpush1.msra.mxu0 0.0
      %9206 = vmatprep.subr.mxu0 0.0
      %9207 = vmatpush1.msra.mxu0 0.0
      %9208 = vmatprep.subr.mxu0 0.0
      %9209 = vmatpush1.msra.mxu0 0.0
      %9210 = vmatprep.subr.mxu0 0.0
      %9211 = vmatpush1.msra.mxu0 0.0
      %9212 = vmatprep.subr.mxu0 0.0
      %9213 = vmatpush1.msra.mxu0 0.0
      %9214 = vmatprep.subr.mxu0 0.0
      %9215 = vmatpush1.msra.mxu0 0.0
      %9216 = vmatprep.subr.mxu0 0.0
      %9217 = vmatpush1.msra.mxu0 0.0
      %9218 = vmatprep.subr.mxu0 0.0
      %9219 = vmatpush1.msra.mxu0 0.0
      %9220 = vmatprep.subr.mxu0 0.0
      %9221 = vmatpush1.msra.mxu0 0.0
      %9222 = vmatprep.subr.mxu0 0.0
      %9223 = vmatpush1.msra.mxu0 0.0
      %9224 = vmatprep.subr.mxu0 0.0
      %9225 = vmatpush1.msra.mxu0 0.0
      %9226 = vmatprep.subr.mxu0 0.0
      %9227 = vmatpush1.msra.mxu0 0.0
      %9228 = vmatprep.subr.mxu0 0.0
      %9229 = vmatpush1.msra.mxu0 0.0
      %9230 = vmatprep.subr.mxu0 0.0
      %9231 = vmatpush1.msra.mxu0 0.0
      %9232 = vmatprep.subr.mxu0 0.0
      %9233 = vmatpush1.msra.mxu0 0.0
      %9234 = vmatprep.subr.mxu0 0.0
      %9235 = vmatpush1.msra.mxu0 0.0
      %9236 = vmatprep.subr.mxu0 0.0
      %9237 = vmatpush1.msra.mxu0 0.0
      %9238 = vmatprep.subr.mxu0 0.0
      %9239 = vmatpush1.msra.mxu0 0.0
      %9240 = vmatprep.subr.mxu0 0.0
      %9241 = vmatpush1.msra.mxu0 0.0
      %9242 = vmatprep.subr.mxu0 0.0
      %9243 = vmatpush1.msra.mxu0 0.0
      %9244 = vmatprep.subr.mxu0 0.0
      %9245 = vmatpush1.msra.mxu0 0.0
      %9246 = vmatprep.mubr.f32.mxu0 0.0
      %9247 = vmatmul.mubr.f32.gmra.mrb[0].mxu0 %v9110
      %v9248 = vpop.f32.mrb[0].mxu0
      %v9249 = vadd.f32 %v9179, %v9248
      %v9250 = vpop.f32.mrb[0].mxu0
      %9251 = vdwg.mxu0
      %9252 = vst [vmem:[%s632] sm:$0xff] %v9249
      %p9253 = scmp.lt.s32.totalorder %s31, 1
      %s9254 = scalar_select %p9253, %s31, 1
      %s9255 = smul.addr %s9254, 8
      %s9256 = scalar_lea.vmem %s20, %s9255
      // Predicated region
      $region101: #{cnn_forward.1} parent=99 // pred_check
        %p9257 = pneg %p474
      $region102: #{cnn_forward.1} parent=99 // pred_check_branch
        %9259 = sbr.rel (%p9257) target = $region104
      $region103: #{cnn_forward.1} parent=99 // pred_region
        _
      $region104: #{cnn_forward.1} parent=99 // pred_fallthru
        _
    $region100: #{cnn_forward.1} parent=5 // pred_fallthru
      _
    %p9260 = scmp.le.s32.totalorder 2, %s26
    // Predicated region
    $region105: #{cnn_forward.1} parent=5 // pred_check
      %p9261 = pneg %p9260
    $region106: #{cnn_forward.1} parent=5 // pred_check_branch
      %9263 = sbr.rel (%p9261) target = $region108
    $region107: #{cnn_forward.1} parent=5 // pred_region
      %s9264 = ssub.s32 %s26, 2
      // Predicated region
      $region109: #{cnn_forward.1} parent=107 // pred_check
        %p9265 = pneg %p480
      $region110: #{cnn_forward.1} parent=107 // pred_check_branch
        %9267 = sbr.rel (%p9265) target = $region112
      $region111: #{cnn_forward.1} parent=107 // pred_region
        %p9268 = scmp.lt.s32.totalorder %s32, 1
        %s9269 = scalar_select %p9268, %s32, 1
        %s9270 = smul.addr %s9269, 8
        %s9271 = scalar_lea.vmem %s20, %s9270
      $region112: #{cnn_forward.1} parent=107 // pred_fallthru
        _
    $region108: #{cnn_forward.1} parent=5 // pred_fallthru
      _
  $region6: #{cnn_forward.1} parent=0 // loop_footer
    %s30 = sadd.s32 1, %s26
  $region7: #{cnn_forward.1} parent=0 // loop_footer_branch
    %25 = sbr.rel target = $region3
  $region8: #{cnn_forward.1} parent=0 // loop_exit
    _

</llo_original>
